<compile_context>
chip_gen: v7x
topology: tpu7x:2x2x1
jax: 0.10.0
libtpu: 0.0.40
codegen_flags: <defaults>
</compile_context>

<pallas_src>
import math

import jax
import jax.numpy as jnp
from jax.experimental import pallas as pl
from jax.experimental.pallas import tpu as pltpu


def _round_up(x, m):
    return ((x + m - 1) // m) * m


def _vmem_tile_rows(M8, in_row_bytes, out_row_bytes, weight_bytes, cap=512):
    """Pick the largest row-tile (multiple of 8, <= cap) that keeps the
    double-buffered working set under a conservative VMEM budget."""
    budget = 10 * 1024 * 1024
    avail = budget - 2 * weight_bytes
    denom = max(1, 2 * (in_row_bytes + out_row_bytes))
    tm = (avail // denom) // 8 * 8 if avail > 0 else 8
    return int(max(8, min(cap, M8, max(8, tm))))


# ----------------------------------------------------------------------------
# Activations (computed in f32 inside the kernels)
# ----------------------------------------------------------------------------
def _apply_act(y, act):
    if act == "leaky_relu":
        return jnp.where(y > 0, y, 0.01 * y)
    if act == "relu":
        return jnp.maximum(y, 0.0)
    if act == "sigmoid":
        return 1.0 / (1.0 + jnp.exp(-y))
    return y  # 'none'


# ----------------------------------------------------------------------------
# Fused matmul kernel:  out = act(pre_act(X) @ W + b) [+ residual]
# ----------------------------------------------------------------------------
def _make_mm_kernel(pre_act, act, has_res):
    def compute(x_ref, w_ref, b_ref, r_ref):
        x = x_ref[...]
        if pre_act != "none":
            x = _apply_act(x.astype(jnp.float32), pre_act)
        y = jnp.dot(x.astype(jnp.bfloat16), w_ref[...],
                    preferred_element_type=jnp.float32)
        y = _apply_act(y + b_ref[...], act)
        if r_ref is not None:
            y = y + r_ref[...].astype(jnp.float32)
        return y

    if has_res:
        def kernel(x_ref, w_ref, b_ref, r_ref, o_ref):
            o_ref[...] = compute(x_ref, w_ref, b_ref, r_ref).astype(o_ref.dtype)
    else:
        def kernel(x_ref, w_ref, b_ref, o_ref):
            o_ref[...] = compute(x_ref, w_ref, b_ref, None).astype(o_ref.dtype)
    return kernel


def fused_matmul(x, w, b, *, pre_act="none", act="none", res=None,
                 out_dtype=jnp.bfloat16):
    """x: [M, K]; w: [K, Np] with Np % 128 == 0; b: [Np]; res: [M, Np] or None."""
    M, K = x.shape
    Kw, Np = w.shape
    assert Kw == K and Np % 128 == 0

    M8 = _round_up(M, 8)
    if M8 != M:  # never hit in this model; kept for safety
        x = jnp.pad(x, ((0, M8 - M), (0, 0)))
        if res is not None:
            res = jnp.pad(res, ((0, M8 - M), (0, 0)))

    in_row = 2 * (K + (Np if res is not None else 0))
    out_row = 2 * Np
    wbytes = 2 * K * Np + 4 * Np
    tm = _vmem_tile_rows(M8, in_row, out_row, wbytes)
    grid = (pl.cdiv(M8, tm),)

    inputs = [x.astype(jnp.bfloat16), w.astype(jnp.bfloat16),
              b.reshape(1, Np).astype(jnp.float32)]
    in_specs = [
        pl.BlockSpec((tm, K), lambda i: (i, 0)),
        pl.BlockSpec((K, Np), lambda i: (0, 0)),
        pl.BlockSpec((1, Np), lambda i: (0, 0)),
    ]
    if res is not None:
        inputs.append(res.astype(jnp.bfloat16))
        in_specs.append(pl.BlockSpec((tm, Np), lambda i: (i, 0)))

    out = pl.pallas_call(
        _make_mm_kernel(pre_act, act, res is not None),
        out_shape=jax.ShapeDtypeStruct((M8, Np), out_dtype),
        grid=grid,
        in_specs=in_specs,
        out_specs=pl.BlockSpec((tm, Np), lambda i: (i, 0)),
        compiler_params=pltpu.CompilerParams(dimension_semantics=("parallel",)),
    )(*inputs)
    return out if M8 == M else out[:M]


# ----------------------------------------------------------------------------
# Grouped fused matmul:  out[g] = act(pre_act(X[g]) @ W[g] + b)
# Used to batch the stride^2 sub-pixel phases of a transposed conv into one
# pallas_call (leading grid axis over phases).
# ----------------------------------------------------------------------------
def _make_gmm_kernel(pre_act, act):
    def kernel(x_ref, w_ref, b_ref, o_ref):
        x = x_ref[0]
        if pre_act != "none":
            x = _apply_act(x.astype(jnp.float32), pre_act).astype(jnp.bfloat16)
        y = jnp.dot(x, w_ref[0], preferred_element_type=jnp.float32)
        y = _apply_act(y + b_ref[...], act)
        o_ref[0] = y.astype(o_ref.dtype)
    return kernel


def fused_matmul_grouped(x, w, b, *, pre_act="none", act="none",
                         out_dtype=jnp.bfloat16):
    """x: [G, M, K]; w: [G, K, Np] with Np % 128 == 0; b: [Np]."""
    G, M, K = x.shape
    _, Kw, Np = w.shape
    assert Kw == K and Np % 128 == 0
    M8 = _round_up(M, 8)
    if M8 != M:
        x = jnp.pad(x, ((0, 0), (0, M8 - M), (0, 0)))

    in_row = 2 * K
    out_row = 2 * Np
    wbytes = 2 * K * Np + 4 * Np
    tm = _vmem_tile_rows(M8, in_row, out_row, wbytes)
    grid = (G, pl.cdiv(M8, tm))   # row tiles iterate fastest -> W reused per g

    out = pl.pallas_call(
        _make_gmm_kernel(pre_act, act),
        out_shape=jax.ShapeDtypeStruct((G, M8, Np), out_dtype),
        grid=grid,
        in_specs=[
            pl.BlockSpec((1, tm, K), lambda g, i: (g, i, 0)),
            pl.BlockSpec((1, K, Np), lambda g, i: (g, 0, 0)),
            pl.BlockSpec((1, Np), lambda g, i: (0, 0)),
        ],
        out_specs=pl.BlockSpec((1, tm, Np), lambda g, i: (g, i, 0)),
        compiler_params=pltpu.CompilerParams(
            dimension_semantics=("parallel", "parallel")),
    )(x.astype(jnp.bfloat16), w.astype(jnp.bfloat16),
      b.reshape(1, Np).astype(jnp.float32))
    return out if M8 == M else out[:, :M]


# ----------------------------------------------------------------------------
# Convolutions (im2col glue in JAX, fused Pallas matmul on the MXU)
# ----------------------------------------------------------------------------
def _extract_patches(x, kh, kw, stride, pad):
    """x: [B, H, W, C] -> patches [B, Ho, Wo, kh*kw*C] (slicing glue only)."""
    B, H, W, C = x.shape
    xp = jnp.pad(x, ((0, 0), (pad, pad), (pad, pad), (0, 0)))
    Ho = (H + 2 * pad - kh) // stride + 1
    Wo = (W + 2 * pad - kw) // stride + 1
    cols = []
    for i in range(kh):
        for j in range(kw):
            cols.append(xp[:, i:i + (Ho - 1) * stride + 1:stride,
                              j:j + (Wo - 1) * stride + 1:stride, :])
    return jnp.concatenate(cols, axis=-1), Ho, Wo


def conv2d(x, w, b, stride, pad, *, pre_act="none", act="none", res=None):
    """x: [B,H,W,Cact] NHWC (Cact >= Cin, padded channels are zero);
       w: PyTorch layout [Cout, Cin, kh, kw]. Output channels padded to 128."""
    B, H, W, Cact = x.shape
    Cout, Cin, kh, kw = w.shape
    assert Cact >= Cin
    Np = _round_up(Cout, 128)

    # Pad weight: Cin -> Cact (zero rows for padded input channels),
    #             Cout -> Np  (zero cols -> padded output channels stay zero).
    w_p = jnp.pad(w.astype(jnp.float32),
                  ((0, Np - Cout), (0, Cact - Cin), (0, 0), (0, 0)))
    Wm = jnp.transpose(w_p, (2, 3, 1, 0)).reshape(kh * kw * Cact, Np)
    b_p = (jnp.zeros((Np,), jnp.float32) if b is None
           else jnp.pad(b.astype(jnp.float32), (0, Np - Cout)))

    patches, Ho, Wo = _extract_patches(x, kh, kw, stride, pad)
    Xm = patches.reshape(B * Ho * Wo, kh * kw * Cact)
    resm = None
    if res is not None:
        assert res.shape[-1] == Np
        resm = res.reshape(B * Ho * Wo, Np)
    y = fused_matmul(Xm, Wm, b_p, pre_act=pre_act, act=act, res=resm)
    return y.reshape(B, Ho, Wo, Np)


# ----------------------------------------------------------------------------
# Fully fused ResidualBlock:  x + Conv1x1(ReLU(Conv3x3(x)))  (one pallas_call)
# ----------------------------------------------------------------------------
def _resblock_kernel(p_ref, w1_ref, w2_ref, x_ref, o_ref):
    h = jnp.dot(p_ref[...], w1_ref[...], preferred_element_type=jnp.float32)
    h = jnp.maximum(h, 0.0).astype(jnp.bfloat16)
    y = jnp.dot(h, w2_ref[...], preferred_element_type=jnp.float32)
    o_ref[...] = (y + x_ref[...].astype(jnp.float32)).astype(o_ref.dtype)


def residual_block(x, w1, w2):
    """x: [B,H,W,Cp]; w1: [C,C,3,3]; w2: [C,C,1,1] (both bias-free)."""
    B, H, W, Cp = x.shape
    Cout, Cin, kh, kw = w1.shape
    assert Cout == Cin and kh == 3 and kw == 3 and Cp >= Cin and Cp % 128 == 0

    w1_p = jnp.pad(w1.astype(jnp.float32),
                   ((0, Cp - Cout), (0, Cp - Cin), (0, 0), (0, 0)))
    W1 = jnp.transpose(w1_p, (2, 3, 1, 0)).reshape(9 * Cp, Cp)
    w2_p = jnp.pad(w2.astype(jnp.float32),
                   ((0, Cp - w2.shape[0]), (0, Cp - w2.shape[1]), (0, 0), (0, 0)))
    W2 = jnp.transpose(w2_p, (2, 3, 1, 0)).reshape(Cp, Cp)

    patches, Ho, Wo = _extract_patches(x, 3, 3, 1, 1)
    M = B * Ho * Wo
    Xm = patches.reshape(M, 9 * Cp)
    Rm = x.reshape(M, Cp)
    M8 = _round_up(M, 8)
    if M8 != M:
        Xm = jnp.pad(Xm, ((0, M8 - M), (0, 0)))
        Rm = jnp.pad(Rm, ((0, M8 - M), (0, 0)))

    in_row = 2 * (9 * Cp + Cp)
    out_row = 2 * Cp
    wbytes = 2 * (9 * Cp * Cp + Cp * Cp)
    tm = _vmem_tile_rows(M8, in_row, out_row, wbytes)
    grid = (pl.cdiv(M8, tm),)

    out = pl.pallas_call(
        _resblock_kernel,
        out_shape=jax.ShapeDtypeStruct((M8, Cp), jnp.bfloat16),
        grid=grid,
        in_specs=[
            pl.BlockSpec((tm, 9 * Cp), lambda i: (i, 0)),
            pl.BlockSpec((9 * Cp, Cp), lambda i: (0, 0)),
            pl.BlockSpec((Cp, Cp), lambda i: (0, 0)),
            pl.BlockSpec((tm, Cp), lambda i: (i, 0)),
        ],
        out_specs=pl.BlockSpec((tm, Cp), lambda i: (i, 0)),
        compiler_params=pltpu.CompilerParams(dimension_semantics=("parallel",)),
    )(Xm.astype(jnp.bfloat16), W1.astype(jnp.bfloat16),
      W2.astype(jnp.bfloat16), Rm.astype(jnp.bfloat16))
    out = out if M8 == M else out[:M]
    return out.reshape(B, Ho, Wo, Cp)


# ----------------------------------------------------------------------------
# Transposed conv via sub-pixel phase decomposition; all phases in one call.
# ----------------------------------------------------------------------------
def conv_transpose2d(x, w, b, stride, pad, *, pre_act="none", act="none"):
    """x: NHWC with padded channels; w: PyTorch layout [Cin, Cout, kh, kw]."""
    B, H, W, Cact = x.shape
    Cin, Cout, kh, kw = w.shape
    assert Cact >= Cin
    assert kh == kw and (kh - 2 * pad) == stride, "supports the k=4,s=2,p=1 case"
    Np = _round_up(Cout, 128)

    w32 = jnp.pad(w.astype(jnp.float32),
                  ((0, Cact - Cin), (0, 0), (0, 0), (0, 0)))  # [Cact,Cout,kh,kw]
    b_p = (jnp.zeros((Np,), jnp.float32) if b is None
           else jnp.pad(b.astype(jnp.float32), (0, Np - Cout)))

    Hout = (H - 1) * stride - 2 * pad + kh
    Wout = (W - 1) * stride - 2 * pad + kw
    Hph, Wph = Hout // stride, Wout // stride

    # Per-phase taps:  out[m*s+py] gets x[m+dy] * w[ky]  with dy=(py+pad-ky)/s.
    def taps_1d(p):
        ks = [k for k in range(kh) if (p + pad - k) % stride == 0]
        return [(k, (p + pad - k) // stride) for k in ks]

    all_d = [d for p in range(stride) for (_, d) in taps_1d(p)]
    lo, hi = max(0, -min(all_d)), max(0, max(all_d))
    xp = jnp.pad(x, ((0, 0), (lo, hi), (lo, hi), (0, 0)))

    M = B * Hph * Wph
    xs, ws = [], []
    for py in range(stride):
        for px in range(stride):
            slabs, wrows = [], []
            for (ky, dy) in taps_1d(py):
                for (kx, dx) in taps_1d(px):
                    slabs.append(xp[:, lo + dy: lo + dy + Hph,
                                       lo + dx: lo + dx + Wph, :])
                    wrows.append(w32[:, :, ky, kx])          # (Cact, Cout)
            slab = jnp.concatenate(slabs, axis=-1)           # (B,Hph,Wph,T*Cact)
            Wm = jnp.pad(jnp.concatenate(wrows, axis=0), ((0, 0), (0, Np - Cout)))
            xs.append(slab.reshape(M, -1))
            ws.append(Wm)
    assert len({a.shape[1] for a in xs}) == 1                # same K per phase

    Xg = jnp.stack(xs, axis=0)                               # (s*s, M, K)
    Wg = jnp.stack(ws, axis=0)                               # (s*s, K, Np)
    Yg = fused_matmul_grouped(Xg, Wg, b_p, pre_act=pre_act, act=act)
    Y = Yg.reshape(stride, stride, B, Hph, Wph, Np)
    # out[b, m*s+py, n*s+px, :] = Y[py, px, b, m, n, :]
    out = jnp.transpose(Y, (2, 3, 0, 4, 1, 5)).reshape(B, Hout, Wout, Np)
    return out


# ----------------------------------------------------------------------------
# Vector quantizer kernel (tiled over latent rows, matmul-form distances)
# ----------------------------------------------------------------------------
def _make_vq_kernel(n_total, tn):
    def kernel(z_ref, et_ref, e_ref, e2_ref, idx_ref, q_ref, sse_ref):
        i = pl.program_id(0)
        z = z_ref[...].astype(jnp.float32)                       # (tn, Dp)
        z2 = jnp.sum(z * z, axis=1, keepdims=True)               # (tn, 1)
        cross = jnp.dot(z, et_ref[...],
                        preferred_element_type=jnp.float32)      # (tn, Kp)
        dist = z2 - 2.0 * cross + e2_ref[...]                    # (tn, Kp)
        Kp = dist.shape[1]
        col = jax.lax.broadcasted_iota(jnp.int32, dist.shape, 1)
        min_d = jnp.min(dist, axis=1, keepdims=True)
        idx = jnp.min(jnp.where(dist == min_d, col, Kp),
                      axis=1, keepdims=True)                     # (tn, 1)
        onehot = (col == idx).astype(jnp.float32)                # (tn, Kp)
        q = jnp.dot(onehot, e_ref[...],
                    preferred_element_type=jnp.float32)          # (tn, Dp)
        idx_ref[...] = idx.astype(jnp.int32)
        q_ref[...] = q.astype(q_ref.dtype)
        # per-tile SSE partial sum, masking rows beyond N (ragged last tile)
        row = jax.lax.broadcasted_iota(jnp.int32, (tn, 1), 0) + i * tn
        d = jnp.where(row < n_total, q - z, 0.0)
        sse_ref[...] = jnp.broadcast_to(jnp.sum(d * d), sse_ref.shape)
    return kernel


def vector_quantize(h, emb, beta, emb_dim):
    """h: [B,H,W,Dp] (Dp = 128-padded emb_dim, padded channels zero);
       emb: [K, emb_dim] codebook."""
    B, H, W, Dp = h.shape
    Kc, De = emb.shape
    assert De == emb_dim and Dp >= De and Dp % 128 == 0
    z = h.reshape(-1, Dp)
    N = z.shape[0]
    Kp = _round_up(Kc, 128)

    e_pad = jnp.zeros((Kp, Dp), jnp.float32).at[:Kc, :De].set(
        emb.astype(jnp.float32))
    e_t = e_pad.T                                                # (Dp, Kp)
    e2 = jnp.sum(e_pad * e_pad, axis=1)
    e2 = jnp.where(jnp.arange(Kp) < Kc, e2, 1e30).reshape(1, Kp)  # mask pad rows

    tn = N if N <= 128 else 128
    grid_n = pl.cdiv(N, tn)

    idx, q, sse = pl.pallas_call(
        _make_vq_kernel(N, tn),
        out_shape=(
            jax.ShapeDtypeStruct((N, 1), jnp.int32),
            jax.ShapeDtypeStruct((N, Dp), jnp.bfloat16),
            jax.ShapeDtypeStruct((grid_n, 8, 128), jnp.float32),
        ),
        grid=(grid_n,),
        in_specs=[
            pl.BlockSpec((tn, Dp), lambda i: (i, 0)),
            pl.BlockSpec((Dp, Kp), lambda i: (0, 0)),
            pl.BlockSpec((Kp, Dp), lambda i: (0, 0)),
            pl.BlockSpec((1, Kp), lambda i: (0, 0)),
        ],
        out_specs=(
            pl.BlockSpec((tn, 1), lambda i: (i, 0)),
            pl.BlockSpec((tn, Dp), lambda i: (i, 0)),
            pl.BlockSpec((1, 8, 128), lambda i: (i, 0, 0)),
        ),
        compiler_params=pltpu.CompilerParams(dimension_semantics=("parallel",)),
    )(z, e_t, e_pad, e2)

    mse = jnp.sum(sse[:, 0, 0]) / (N * De)
    vq_loss = (1.0 + beta) * mse        # commitment*beta + emb loss (fwd value)
    q = q.reshape(B, H, W, Dp)          # straight-through fwd value == q
    idxes = idx.reshape(B, H, W)        # int32 (PyTorch uses int64)
    return idxes, q, vq_loss


# ----------------------------------------------------------------------------
# Parameter init (deterministic, PyTorch-default-like uniform fan-in bounds)
# ----------------------------------------------------------------------------
def make_params(key, inputC, hidden_dims, emb_dim, emb_num):
    keys = iter(jax.random.split(key, 128))

    def u(shape, bound):
        return jax.random.uniform(next(keys), shape, jnp.float32, -bound, bound)

    def conv_w(cout, cin, kh, kw):
        return u((cout, cin, kh, kw), 1.0 / math.sqrt(cin * kh * kw))

    def convT_w(cin, cout, kh, kw):
        return u((cin, cout, kh, kw), 1.0 / math.sqrt(cout * kh * kw))

    def bias_v(cout, fan_in):
        return u((cout,), 1.0 / math.sqrt(fan_in))

    p = {}
    cin = inputC
    for li, h in enumerate(hidden_dims):
        p[f"enc{li}_w"] = conv_w(h, cin, 4, 4)
        p[f"enc{li}_b"] = bias_v(h, cin * 16)
        cin = h
    for i in range(6):
        p[f"enc_res{i}_w1"] = conv_w(cin, cin, 3, 3)
        p[f"enc_res{i}_w2"] = conv_w(cin, cin, 1, 1)
    p["enc_out_w"] = conv_w(emb_dim, cin, 1, 1)
    p["enc_out_b"] = bias_v(emb_dim, cin)
    p["emb"] = jax.random.uniform(next(keys), (emb_num, emb_dim), jnp.float32,
                                  -1.0 / emb_num, 1.0 / emb_num)
    hd = hidden_dims[-1]
    p["dec_in_w"] = conv_w(hd, emb_dim, 3, 3)
    p["dec_in_b"] = bias_v(hd, emb_dim * 9)
    for i in range(6):
        p[f"dec_res{i}_w1"] = conv_w(hd, hd, 3, 3)
        p[f"dec_res{i}_w2"] = conv_w(hd, hd, 1, 1)
    rev = list(reversed(hidden_dims))
    for i in range(len(rev) - 1):
        p[f"dec_t{i}_w"] = convT_w(rev[i], rev[i + 1], 4, 4)
        p[f"dec_t{i}_b"] = bias_v(rev[i + 1], rev[i + 1] * 16)
    p["dec_out_w"] = convT_w(rev[-1], 3, 4, 4)
    p["dec_out_b"] = bias_v(3, 3 * 16)
    return p


# ----------------------------------------------------------------------------
# VQVAE forward
# ----------------------------------------------------------------------------
def vqvae_forward(x_nchw, params, hidden_dims, beta=0.25, emb_dim=None):
    if emb_dim is None:
        emb_dim = params["emb"].shape[1]
    x = jnp.transpose(x_nchw, (0, 2, 3, 1)).astype(jnp.bfloat16)  # NCHW -> NHWC

    # ---- encoder ----
    h = x
    for li in range(len(hidden_dims)):
        h = conv2d(h, params[f"enc{li}_w"], params[f"enc{li}_b"], 2, 1,
                   act="leaky_relu")
    for i in range(6):
        h = residual_block(h, params[f"enc_res{i}_w1"], params[f"enc_res{i}_w2"])
    # standalone LeakyReLU fused as pre-activation of the 1x1 output conv
    h = conv2d(h, params["enc_out_w"], params["enc_out_b"], 1, 0,
               pre_act="leaky_relu", act="leaky_relu")

    # ---- vector quantizer ----
    idxes, q, vq_loss = vector_quantize(h, params["emb"], beta, emb_dim)

    # ---- decoder ----
    d = conv2d(q, params["dec_in_w"], params["dec_in_b"], 1, 1, act="leaky_relu")
    for i in range(6):
        d = residual_block(d, params[f"dec_res{i}_w1"], params[f"dec_res{i}_w2"])
    rev = list(reversed(hidden_dims))
    n_up = len(rev) - 1
    for i in range(n_up):
        pre = "leaky_relu" if i == 0 else "none"   # standalone LeakyReLU fused
        d = conv_transpose2d(d, params[f"dec_t{i}_w"], params[f"dec_t{i}_b"],
                             2, 1, pre_act=pre, act="leaky_relu")
    final_pre = "leaky_relu" if n_up == 0 else "none"
    d = conv_transpose2d(d, params["dec_out_w"], params["dec_out_b"], 2, 1,
                         pre_act=final_pre, act="sigmoid")

    # slice real output channels, back to NCHW; celeb_T (Resize+CenterCrop to
    # img_size) is the identity since the decoder already emits img_size.
    d = d[..., :3]
    d = jnp.transpose(d, (0, 3, 1, 2)).astype(jnp.float32)
    recon = jnp.nan_to_num(d.reshape(d.shape[0], -1))
    return recon, vq_loss, idxes


if __name__ == "__main__":
    # small config consistent with the module
    B, inputC, img_size = 2, 3, 16
    hidden_dims = [32, 64]
    emb_num, emb_dim, beta = 8, 8, 0.25

    key = jax.random.PRNGKey(0)
    kx, kp = jax.random.split(key)
    x = jax.random.normal(kx, (B, inputC, img_size, img_size), jnp.float32)
    params = make_params(kp, inputC, hidden_dims, emb_dim, emb_num)

    fwd = jax.jit(lambda xx, pp: vqvae_forward(xx, pp, hidden_dims, beta, emb_dim))
    recon, vq_loss, idxes = fwd(x, params)
    jax.block_until_ready((recon, vq_loss, idxes))

    assert recon.shape == (B, 3 * img_size * img_size)
    assert idxes.shape == (B, img_size // 4, img_size // 4)
    assert vq_loss.shape == ()
    assert bool(jnp.all(jnp.isfinite(recon)))
    assert bool(jnp.isfinite(vq_loss))
    print("KERNEL_OK")
</pallas_src>

<mosaic_0001>
module attributes {stable_mosaic.version = 11 : i64} {
  func.func @kernel(%arg0: i32, %arg1: memref<128x48xbf16, #tpu.memory_space<vmem>>, %arg2: memref<48x128xbf16, #tpu.memory_space<vmem>>, %arg3: memref<1x128xf32, #tpu.memory_space<vmem>>, %arg4: memref<128x128xbf16, #tpu.memory_space<vmem>>) attributes {dimension_semantics = [#tpu.dimension_semantics<parallel>], iteration_bounds = array<i64: 1>, scalar_prefetch = 0 : i64, scratch_operands = 0 : i64, tpu.core_type = #tpu.core_type<tc>, window_params = [{transform_indices = @transform_0, window_bounds = array<i64: 128, 48>}, {pipeline_mode = #tpu.pipeline_mode<synchronous>, transform_indices = @transform_1, window_bounds = array<i64: 48, 128>}, {pipeline_mode = #tpu.pipeline_mode<synchronous>, transform_indices = @transform_2, window_bounds = array<i64: 1, 128>}, {transform_indices = @transform_3, window_bounds = array<i64: 128, 128>}]} {
    %c0 = arith.constant 0 : index
    %c0_0 = arith.constant 0 : index
    %0 = vector.load %arg1[%c0, %c0_0] : memref<128x48xbf16, #tpu.memory_space<vmem>>, vector<128x48xbf16>
    %c0_1 = arith.constant 0 : index
    %c0_2 = arith.constant 0 : index
    %1 = vector.load %arg2[%c0_1, %c0_2] : memref<48x128xbf16, #tpu.memory_space<vmem>>, vector<48x128xbf16>
    %cst = arith.constant dense<0.000000e+00> : vector<128x128xf32>
    %2 = tpu.matmul %0, %1, %cst {dimension_numbers = #tpu.dot_dimension_numbers<[1], [0], [0], [1], [0, 0, 1, 1], [], []>} : vector<128x48xbf16>, vector<48x128xbf16>, vector<128x128xf32> -> vector<128x128xf32>
    %c0_3 = arith.constant 0 : index
    %c0_4 = arith.constant 0 : index
    %3 = vector.load %arg3[%c0_3, %c0_4] : memref<1x128xf32, #tpu.memory_space<vmem>>, vector<1x128xf32>
    %4 = vector.broadcast %3 : vector<1x128xf32> to vector<128x128xf32>
    %5 = arith.addf %2, %4 : vector<128x128xf32>
    %cst_5 = arith.constant 0.000000e+00 : f32
    %6 = vector.broadcast %cst_5 : f32 to vector<128x128xf32>
    %7 = arith.cmpf ogt, %5, %6 : vector<128x128xf32>
    %cst_6 = arith.constant 0.00999999977 : f32
    %8 = vector.broadcast %cst_6 : f32 to vector<128x128xf32>
    %9 = arith.mulf %8, %5 : vector<128x128xf32>
    %10 = arith.select %7, %5, %9 : vector<128x128xi1>, vector<128x128xf32>
    %11 = arith.truncf %10 : vector<128x128xf32> to vector<128x128xbf16>
    %c0_7 = arith.constant 0 : index
    %c0_8 = arith.constant 0 : index
    %12 = vector.load %arg4[%c0_7, %c0_8] : memref<128x128xbf16, #tpu.memory_space<vmem>>, vector<128x128xbf16>
    tpu.vector_store %arg4[%c0_7, %c0_8], %11 {strides = array<i32>} : memref<128x128xbf16, #tpu.memory_space<vmem>>, vector<128x128xbf16>,
    return
  }
  func.func @transform_0(%arg0: i32) -> (i32, i32) {
    %c0_i32 = arith.constant 0 : i32
    %c0_i32_0 = arith.constant 0 : i32
    return %arg0, %c0_i32 : i32, i32
  }
  func.func @transform_1(%arg0: i32) -> (i32, i32) {
    %c0_i32 = arith.constant 0 : i32
    %c0_i32_0 = arith.constant 0 : i32
    %c0_i32_1 = arith.constant 0 : i32
    return %c0_i32, %c0_i32_0 : i32, i32
  }
  func.func @transform_2(%arg0: i32) -> (i32, i32) {
    %c0_i32 = arith.constant 0 : i32
    %c0_i32_0 = arith.constant 0 : i32
    %c0_i32_1 = arith.constant 0 : i32
    return %c0_i32, %c0_i32_0 : i32, i32
  }
  func.func @transform_3(%arg0: i32) -> (i32, i32) {
    %c0_i32 = arith.constant 0 : i32
    %c0_i32_0 = arith.constant 0 : i32
    return %arg0, %c0_i32 : i32, i32
  }
}

module attributes {stable_mosaic.version = 11 : i64} {
  func.func @kernel(%arg0: i32, %arg1: memref<32x2048xbf16, #tpu.memory_space<vmem>>, %arg2: memref<2048x128xbf16, #tpu.memory_space<vmem>>, %arg3: memref<1x128xf32, #tpu.memory_space<vmem>>, %arg4: memref<32x128xbf16, #tpu.memory_space<vmem>>) attributes {dimension_semantics = [#tpu.dimension_semantics<parallel>], iteration_bounds = array<i64: 1>, scalar_prefetch = 0 : i64, scratch_operands = 0 : i64, tpu.core_type = #tpu.core_type<tc>, window_params = [{transform_indices = @transform_0, window_bounds = array<i64: 32, 2048>}, {pipeline_mode = #tpu.pipeline_mode<synchronous>, transform_indices = @transform_1, window_bounds = array<i64: 2048, 128>}, {pipeline_mode = #tpu.pipeline_mode<synchronous>, transform_indices = @transform_2, window_bounds = array<i64: 1, 128>}, {transform_indices = @transform_3, window_bounds = array<i64: 32, 128>}]} {
    %c0 = arith.constant 0 : index
    %c0_0 = arith.constant 0 : index
    %0 = vector.load %arg1[%c0, %c0_0] : memref<32x2048xbf16, #tpu.memory_space<vmem>>, vector<32x2048xbf16>
    %c0_1 = arith.constant 0 : index
    %c0_2 = arith.constant 0 : index
    %1 = vector.load %arg2[%c0_1, %c0_2] : memref<2048x128xbf16, #tpu.memory_space<vmem>>, vector<2048x128xbf16>
    %cst = arith.constant dense<0.000000e+00> : vector<32x128xf32>
    %2 = tpu.matmul %0, %1, %cst {dimension_numbers = #tpu.dot_dimension_numbers<[1], [0], [0], [1], [0, 0, 1, 1], [], []>} : vector<32x2048xbf16>, vector<2048x128xbf16>, vector<32x128xf32> -> vector<32x128xf32>
    %c0_3 = arith.constant 0 : index
    %c0_4 = arith.constant 0 : index
    %3 = vector.load %arg3[%c0_3, %c0_4] : memref<1x128xf32, #tpu.memory_space<vmem>>, vector<1x128xf32>
    %4 = vector.broadcast %3 : vector<1x128xf32> to vector<32x128xf32>
    %5 = arith.addf %2, %4 : vector<32x128xf32>
    %cst_5 = arith.constant 0.000000e+00 : f32
    %6 = vector.broadcast %cst_5 : f32 to vector<32x128xf32>
    %7 = arith.cmpf ogt, %5, %6 : vector<32x128xf32>
    %cst_6 = arith.constant 0.00999999977 : f32
    %8 = vector.broadcast %cst_6 : f32 to vector<32x128xf32>
    %9 = arith.mulf %8, %5 : vector<32x128xf32>
    %10 = arith.select %7, %5, %9 : vector<32x128xi1>, vector<32x128xf32>
    %11 = arith.truncf %10 : vector<32x128xf32> to vector<32x128xbf16>
    %c0_7 = arith.constant 0 : index
    %c0_8 = arith.constant 0 : index
    %12 = vector.load %arg4[%c0_7, %c0_8] : memref<32x128xbf16, #tpu.memory_space<vmem>>, vector<32x128xbf16>
    tpu.vector_store %arg4[%c0_7, %c0_8], %11 {strides = array<i32>} : memref<32x128xbf16, #tpu.memory_space<vmem>>, vector<32x128xbf16>,
    return
  }
  func.func @transform_0(%arg0: i32) -> (i32, i32) {
    %c0_i32 = arith.constant 0 : i32
    %c0_i32_0 = arith.constant 0 : i32
    return %arg0, %c0_i32 : i32, i32
  }
  func.func @transform_1(%arg0: i32) -> (i32, i32) {
    %c0_i32 = arith.constant 0 : i32
    %c0_i32_0 = arith.constant 0 : i32
    %c0_i32_1 = arith.constant 0 : i32
    return %c0_i32, %c0_i32_0 : i32, i32
  }
  func.func @transform_2(%arg0: i32) -> (i32, i32) {
    %c0_i32 = arith.constant 0 : i32
    %c0_i32_0 = arith.constant 0 : i32
    %c0_i32_1 = arith.constant 0 : i32
    return %c0_i32, %c0_i32_0 : i32, i32
  }
  func.func @transform_3(%arg0: i32) -> (i32, i32) {
    %c0_i32 = arith.constant 0 : i32
    %c0_i32_0 = arith.constant 0 : i32
    return %arg0, %c0_i32 : i32, i32
  }
}

module attributes {stable_mosaic.version = 11 : i64} {
  func.func @_resblock_kernel(%arg0: i32, %arg1: memref<32x1152xbf16, #tpu.memory_space<vmem>>, %arg2: memref<1152x128xbf16, #tpu.memory_space<vmem>>, %arg3: memref<128x128xbf16, #tpu.memory_space<vmem>>, %arg4: memref<32x128xbf16, #tpu.memory_space<vmem>>, %arg5: memref<32x128xbf16, #tpu.memory_space<vmem>>) attributes {dimension_semantics = [#tpu.dimension_semantics<parallel>], iteration_bounds = array<i64: 1>, scalar_prefetch = 0 : i64, scratch_operands = 0 : i64, tpu.core_type = #tpu.core_type<tc>, window_params = [{transform_indices = @transform_0, window_bounds = array<i64: 32, 1152>}, {pipeline_mode = #tpu.pipeline_mode<synchronous>, transform_indices = @transform_1, window_bounds = array<i64: 1152, 128>}, {pipeline_mode = #tpu.pipeline_mode<synchronous>, transform_indices = @transform_2, window_bounds = array<i64: 128, 128>}, {transform_indices = @transform_3, window_bounds = array<i64: 32, 128>}, {transform_indices = @transform_4, window_bounds = array<i64: 32, 128>}]} {
    %c0 = arith.constant 0 : index
    %c0_0 = arith.constant 0 : index
    %0 = vector.load %arg1[%c0, %c0_0] : memref<32x1152xbf16, #tpu.memory_space<vmem>>, vector<32x1152xbf16>
    %c0_1 = arith.constant 0 : index
    %c0_2 = arith.constant 0 : index
    %1 = vector.load %arg2[%c0_1, %c0_2] : memref<1152x128xbf16, #tpu.memory_space<vmem>>, vector<1152x128xbf16>
    %cst = arith.constant dense<0.000000e+00> : vector<32x128xf32>
    %2 = tpu.matmul %0, %1, %cst {dimension_numbers = #tpu.dot_dimension_numbers<[1], [0], [0], [1], [0, 0, 1, 1], [], []>} : vector<32x1152xbf16>, vector<1152x128xbf16>, vector<32x128xf32> -> vector<32x128xf32>
    %cst_3 = arith.constant 0.000000e+00 : f32
    %3 = vector.broadcast %cst_3 : f32 to vector<32x128xf32>
    %4 = arith.maximumf %2, %3 : vector<32x128xf32>
    %5 = arith.truncf %4 : vector<32x128xf32> to vector<32x128xbf16>
    %c0_4 = arith.constant 0 : index
    %c0_5 = arith.constant 0 : index
    %6 = vector.load %arg3[%c0_4, %c0_5] : memref<128x128xbf16, #tpu.memory_space<vmem>>, vector<128x128xbf16>
    %cst_6 = arith.constant dense<0.000000e+00> : vector<32x128xf32>
    %7 = tpu.matmul %5, %6, %cst_6 {dimension_numbers = #tpu.dot_dimension_numbers<[1], [0], [0], [1], [0, 0, 1, 1], [], []>} : vector<32x128xbf16>, vector<128x128xbf16>, vector<32x128xf32> -> vector<32x128xf32>
    %c0_7 = arith.constant 0 : index
    %c0_8 = arith.constant 0 : index
    %8 = vector.load %arg4[%c0_7, %c0_8] : memref<32x128xbf16, #tpu.memory_space<vmem>>, vector<32x128xbf16>
    %9 = arith.extf %8 : vector<32x128xbf16> to vector<32x128xf32>
    %10 = arith.addf %7, %9 : vector<32x128xf32>
    %11 = arith.truncf %10 : vector<32x128xf32> to vector<32x128xbf16>
    %c0_9 = arith.constant 0 : index
    %c0_10 = arith.constant 0 : index
    %12 = vector.load %arg5[%c0_9, %c0_10] : memref<32x128xbf16, #tpu.memory_space<vmem>>, vector<32x128xbf16>
    tpu.vector_store %arg5[%c0_9, %c0_10], %11 {strides = array<i32>} : memref<32x128xbf16, #tpu.memory_space<vmem>>, vector<32x128xbf16>,
    return
  }
  func.func @transform_0(%arg0: i32) -> (i32, i32) {
    %c0_i32 = arith.constant 0 : i32
    %c0_i32_0 = arith.constant 0 : i32
    return %arg0, %c0_i32 : i32, i32
  }
  func.func @transform_1(%arg0: i32) -> (i32, i32) {
    %c0_i32 = arith.constant 0 : i32
    %c0_i32_0 = arith.constant 0 : i32
    %c0_i32_1 = arith.constant 0 : i32
    return %c0_i32, %c0_i32_0 : i32, i32
  }
  func.func @transform_2(%arg0: i32) -> (i32, i32) {
    %c0_i32 = arith.constant 0 : i32
    %c0_i32_0 = arith.constant 0 : i32
    %c0_i32_1 = arith.constant 0 : i32
    return %c0_i32, %c0_i32_0 : i32, i32
  }
  func.func @transform_3(%arg0: i32) -> (i32, i32) {
    %c0_i32 = arith.constant 0 : i32
    %c0_i32_0 = arith.constant 0 : i32
    return %arg0, %c0_i32 : i32, i32
  }
  func.func @transform_4(%arg0: i32) -> (i32, i32) {
    %c0_i32 = arith.constant 0 : i32
    %c0_i32_0 = arith.constant 0 : i32
    return %arg0, %c0_i32 : i32, i32
  }
}

module attributes {stable_mosaic.version = 11 : i64} {
  func.func @kernel(%arg0: i32, %arg1: memref<32x128xbf16, #tpu.memory_space<vmem>>, %arg2: memref<128x128xbf16, #tpu.memory_space<vmem>>, %arg3: memref<1x128xf32, #tpu.memory_space<vmem>>, %arg4: memref<32x128xbf16, #tpu.memory_space<vmem>>) attributes {dimension_semantics = [#tpu.dimension_semantics<parallel>], iteration_bounds = array<i64: 1>, scalar_prefetch = 0 : i64, scratch_operands = 0 : i64, tpu.core_type = #tpu.core_type<tc>, window_params = [{transform_indices = @transform_0, window_bounds = array<i64: 32, 128>}, {pipeline_mode = #tpu.pipeline_mode<synchronous>, transform_indices = @transform_1, window_bounds = array<i64: 128, 128>}, {pipeline_mode = #tpu.pipeline_mode<synchronous>, transform_indices = @transform_2, window_bounds = array<i64: 1, 128>}, {transform_indices = @transform_3, window_bounds = array<i64: 32, 128>}]} {
    %c0 = arith.constant 0 : index
    %c0_0 = arith.constant 0 : index
    %0 = vector.load %arg1[%c0, %c0_0] : memref<32x128xbf16, #tpu.memory_space<vmem>>, vector<32x128xbf16>
    %1 = arith.extf %0 : vector<32x128xbf16> to vector<32x128xf32>
    %cst = arith.constant 0.000000e+00 : f32
    %2 = vector.broadcast %cst : f32 to vector<32x128xf32>
    %3 = arith.cmpf ogt, %1, %2 : vector<32x128xf32>
    %cst_1 = arith.constant 0.00999999977 : f32
    %4 = vector.broadcast %cst_1 : f32 to vector<32x128xf32>
    %5 = arith.mulf %4, %1 : vector<32x128xf32>
    %6 = arith.select %3, %1, %5 : vector<32x128xi1>, vector<32x128xf32>
    %7 = arith.truncf %6 : vector<32x128xf32> to vector<32x128xbf16>
    %c0_2 = arith.constant 0 : index
    %c0_3 = arith.constant 0 : index
    %8 = vector.load %arg2[%c0_2, %c0_3] : memref<128x128xbf16, #tpu.memory_space<vmem>>, vector<128x128xbf16>
    %cst_4 = arith.constant dense<0.000000e+00> : vector<32x128xf32>
    %9 = tpu.matmul %7, %8, %cst_4 {dimension_numbers = #tpu.dot_dimension_numbers<[1], [0], [0], [1], [0, 0, 1, 1], [], []>} : vector<32x128xbf16>, vector<128x128xbf16>, vector<32x128xf32> -> vector<32x128xf32>
    %c0_5 = arith.constant 0 : index
    %c0_6 = arith.constant 0 : index
    %10 = vector.load %arg3[%c0_5, %c0_6] : memref<1x128xf32, #tpu.memory_space<vmem>>, vector<1x128xf32>
    %11 = vector.broadcast %10 : vector<1x128xf32> to vector<32x128xf32>
    %12 = arith.addf %9, %11 : vector<32x128xf32>
    %cst_7 = arith.constant 0.000000e+00 : f32
    %13 = vector.broadcast %cst_7 : f32 to vector<32x128xf32>
    %14 = arith.cmpf ogt, %12, %13 : vector<32x128xf32>
    %cst_8 = arith.constant 0.00999999977 : f32
    %15 = vector.broadcast %cst_8 : f32 to vector<32x128xf32>
    %16 = arith.mulf %15, %12 : vector<32x128xf32>
    %17 = arith.select %14, %12, %16 : vector<32x128xi1>, vector<32x128xf32>
    %18 = arith.truncf %17 : vector<32x128xf32> to vector<32x128xbf16>
    %c0_9 = arith.constant 0 : index
    %c0_10 = arith.constant 0 : index
    %19 = vector.load %arg4[%c0_9, %c0_10] : memref<32x128xbf16, #tpu.memory_space<vmem>>, vector<32x128xbf16>
    tpu.vector_store %arg4[%c0_9, %c0_10], %18 {strides = array<i32>} : memref<32x128xbf16, #tpu.memory_space<vmem>>, vector<32x128xbf16>,
    return
  }
  func.func @transform_0(%arg0: i32) -> (i32, i32) {
    %c0_i32 = arith.constant 0 : i32
    %c0_i32_0 = arith.constant 0 : i32
    return %arg0, %c0_i32 : i32, i32
  }
  func.func @transform_1(%arg0: i32) -> (i32, i32) {
    %c0_i32 = arith.constant 0 : i32
    %c0_i32_0 = arith.constant 0 : i32
    %c0_i32_1 = arith.constant 0 : i32
    return %c0_i32, %c0_i32_0 : i32, i32
  }
  func.func @transform_2(%arg0: i32) -> (i32, i32) {
    %c0_i32 = arith.constant 0 : i32
    %c0_i32_0 = arith.constant 0 : i32
    %c0_i32_1 = arith.constant 0 : i32
    return %c0_i32, %c0_i32_0 : i32, i32
  }
  func.func @transform_3(%arg0: i32) -> (i32, i32) {
    %c0_i32 = arith.constant 0 : i32
    %c0_i32_0 = arith.constant 0 : i32
    return %arg0, %c0_i32 : i32, i32
  }
}

module attributes {stable_mosaic.version = 11 : i64} {
  func.func @kernel(%arg0: i32, %arg1: memref<32x128xbf16, #tpu.memory_space<vmem>>, %arg2: memref<128x128xf32, #tpu.memory_space<vmem>>, %arg3: memref<128x128xf32, #tpu.memory_space<vmem>>, %arg4: memref<1x128xf32, #tpu.memory_space<vmem>>, %arg5: memref<32x1xi32, #tpu.memory_space<vmem>>, %arg6: memref<32x128xbf16, #tpu.memory_space<vmem>>, %arg7: memref<1x8x128xf32, #tpu.memory_space<vmem>>) attributes {dimension_semantics = [#tpu.dimension_semantics<parallel>], iteration_bounds = array<i64: 1>, scalar_prefetch = 0 : i64, scratch_operands = 0 : i64, tpu.core_type = #tpu.core_type<tc>, window_params = [{transform_indices = @transform_0, window_bounds = array<i64: 32, 128>}, {pipeline_mode = #tpu.pipeline_mode<synchronous>, transform_indices = @transform_1, window_bounds = array<i64: 128, 128>}, {pipeline_mode = #tpu.pipeline_mode<synchronous>, transform_indices = @transform_2, window_bounds = array<i64: 128, 128>}, {pipeline_mode = #tpu.pipeline_mode<synchronous>, transform_indices = @transform_3, window_bounds = array<i64: 1, 128>}, {transform_indices = @transform_4, window_bounds = array<i64: 32, 1>}, {transform_indices = @transform_5, window_bounds = array<i64: 32, 128>}, {transform_indices = @transform_6, window_bounds = array<i64: 1, 8, 128>}]} {
    %c0 = arith.constant 0 : index
    %c0_0 = arith.constant 0 : index
    %0 = vector.load %arg1[%c0, %c0_0] : memref<32x128xbf16, #tpu.memory_space<vmem>>, vector<32x128xbf16>
    %1 = arith.extf %0 : vector<32x128xbf16> to vector<32x128xf32>
    %2 = arith.mulf %1, %1 : vector<32x128xf32>
    %cst = arith.constant dense<0.000000e+00> : vector<32xf32>
    %3 = vector.multi_reduction <add>, %2, %cst [1] : vector<32x128xf32> to vector<32xf32>
    %4 = vector.shape_cast %3 : vector<32xf32> to vector<32x1xf32>
    %c0_1 = arith.constant 0 : index
    %c0_2 = arith.constant 0 : index
    %5 = vector.load %arg2[%c0_1, %c0_2] : memref<128x128xf32, #tpu.memory_space<vmem>>, vector<128x128xf32>
    %cst_3 = arith.constant dense<0.000000e+00> : vector<32x128xf32>
    %6 = tpu.matmul %1, %5, %cst_3 {dimension_numbers = #tpu.dot_dimension_numbers<[1], [0], [0], [1], [0, 0, 1, 1], [], []>} : vector<32x128xf32>, vector<128x128xf32>, vector<32x128xf32> -> vector<32x128xf32>
    %cst_4 = arith.constant 2.000000e+00 : f32
    %7 = vector.broadcast %cst_4 : f32 to vector<32x128xf32>
    %8 = arith.mulf %7, %6 : vector<32x128xf32>
    %9 = vector.broadcast %4 : vector<32x1xf32> to vector<32x128xf32>
    %10 = arith.subf %9, %8 : vector<32x128xf32>
    %c0_5 = arith.constant 0 : index
    %c0_6 = arith.constant 0 : index
    %11 = vector.load %arg4[%c0_5, %c0_6] : memref<1x128xf32, #tpu.memory_space<vmem>>, vector<1x128xf32>
    %12 = vector.broadcast %11 : vector<1x128xf32> to vector<32x128xf32>
    %13 = arith.addf %10, %12 : vector<32x128xf32>
    %14 = tpu.iota {dimensions = array<i32: 1>} : vector<32x128xi32>
    %cst_7 = arith.constant dense<0x7F800000> : vector<32xf32>
    %15 = vector.multi_reduction <minimumf>, %13, %cst_7 [1] : vector<32x128xf32> to vector<32xf32>
    %16 = vector.shape_cast %15 : vector<32xf32> to vector<32x1xf32>
    %17 = vector.broadcast %16 : vector<32x1xf32> to vector<32x128xf32>
    %18 = arith.cmpf oeq, %13, %17 : vector<32x128xf32>
    %c128_i32 = arith.constant 128 : i32
    %19 = vector.broadcast %c128_i32 : i32 to vector<32x128xi32>
    %20 = arith.select %18, %14, %19 : vector<32x128xi1>, vector<32x128xi32>
    %cst_8 = arith.constant dense<2147483647> : vector<32xi32>
    %21 = vector.multi_reduction <minsi>, %20, %cst_8 [1] : vector<32x128xi32> to vector<32xi32>
    %22 = vector.shape_cast %21 : vector<32xi32> to vector<32x1xi32>
    %23 = vector.broadcast %22 : vector<32x1xi32> to vector<32x128xi32>
    %24 = arith.cmpi eq, %14, %23 : vector<32x128xi32>
    %25 = arith.extui %24 : vector<32x128xi1> to vector<32x128xi32>
    %26 = arith.sitofp %25 : vector<32x128xi32> to vector<32x128xf32>
    %c0_9 = arith.constant 0 : index
    %c0_10 = arith.constant 0 : index
    %27 = vector.load %arg3[%c0_9, %c0_10] : memref<128x128xf32, #tpu.memory_space<vmem>>, vector<128x128xf32>
    %cst_11 = arith.constant dense<0.000000e+00> : vector<32x128xf32>
    %28 = tpu.matmul %26, %27, %cst_11 {dimension_numbers = #tpu.dot_dimension_numbers<[1], [0], [0], [1], [0, 0, 1, 1], [], []>} : vector<32x128xf32>, vector<128x128xf32>, vector<32x128xf32> -> vector<32x128xf32>
    %c0_12 = arith.constant 0 : index
    %c0_13 = arith.constant 0 : index
    %29 = vector.load %arg5[%c0_12, %c0_13] : memref<32x1xi32, #tpu.memory_space<vmem>>, vector<32x1xi32>
    tpu.vector_store %arg5[%c0_12, %c0_13], %22 {strides = array<i32>} : memref<32x1xi32, #tpu.memory_space<vmem>>, vector<32x1xi32>,
    %30 = arith.truncf %28 : vector<32x128xf32> to vector<32x128xbf16>
    %c0_14 = arith.constant 0 : index
    %c0_15 = arith.constant 0 : index
    %31 = vector.load %arg6[%c0_14, %c0_15] : memref<32x128xbf16, #tpu.memory_space<vmem>>, vector<32x128xbf16>
    tpu.vector_store %arg6[%c0_14, %c0_15], %30 {strides = array<i32>} : memref<32x128xbf16, #tpu.memory_space<vmem>>, vector<32x128xbf16>,
    %32 = tpu.iota {dimensions = array<i32: 0>} : vector<32x1xi32>
    %c32_i32 = arith.constant 32 : i32
    %33 = arith.muli %arg0, %c32_i32 : i32
    %34 = vector.broadcast %33 : i32 to vector<32x1xi32>
    %35 = arith.addi %32, %34 : vector<32x1xi32>
    %c32_i32_16 = arith.constant 32 : i32
    %36 = vector.broadcast %c32_i32_16 : i32 to vector<32x1xi32>
    %37 = arith.cmpi slt, %35, %36 : vector<32x1xi32>
    %38 = arith.subf %28, %1 : vector<32x128xf32>
    %cst_17 = arith.constant 0.000000e+00 : f32
    %39 = vector.shape_cast %37 : vector<32x1xi1> to vector<32x1xi1>
    %40 = vector.broadcast %39 : vector<32x1xi1> to vector<32x128xi1>
    %41 = vector.broadcast %cst_17 : f32 to vector<32x128xf32>
    %42 = arith.select %40, %38, %41 : vector<32x128xi1>, vector<32x128xf32>
    %43 = arith.mulf %42, %42 : vector<32x128xf32>
    %44 = vector.shape_cast %43 : vector<32x128xf32> to vector<1x32x128xf32>
    %cst_18 = arith.constant dense<0.000000e+00> : vector<1xf32>
    %45 = vector.multi_reduction <add>, %44, %cst_18 [1, 2] : vector<1x32x128xf32> to vector<1xf32>
    %46 = vector.shape_cast %45 : vector<1xf32> to vector<1x1x1xf32>
    %47 = vector.extract %46[0, 0, 0] : f32 from vector<1x1x1xf32>
    %48 = vector.broadcast %47 : f32 to vector<1x8x128xf32>
    %c0_19 = arith.constant 0 : index
    %c0_20 = arith.constant 0 : index
    %c0_21 = arith.constant 0 : index
    %49 = vector.load %arg7[%c0_19, %c0_20, %c0_21] : memref<1x8x128xf32, #tpu.memory_space<vmem>>, vector<1x8x128xf32>
    tpu.vector_store %arg7[%c0_19, %c0_20, %c0_21], %48 {strides = array<i32>} : memref<1x8x128xf32, #tpu.memory_space<vmem>>, vector<1x8x128xf32>,
    return
  }
  func.func @transform_0(%arg0: i32) -> (i32, i32) {
    %c0_i32 = arith.constant 0 : i32
    %c0_i32_0 = arith.constant 0 : i32
    return %arg0, %c0_i32 : i32, i32
  }
  func.func @transform_1(%arg0: i32) -> (i32, i32) {
    %c0_i32 = arith.constant 0 : i32
    %c0_i32_0 = arith.constant 0 : i32
    %c0_i32_1 = arith.constant 0 : i32
    return %c0_i32, %c0_i32_0 : i32, i32
  }
  func.func @transform_2(%arg0: i32) -> (i32, i32) {
    %c0_i32 = arith.constant 0 : i32
    %c0_i32_0 = arith.constant 0 : i32
    %c0_i32_1 = arith.constant 0 : i32
    return %c0_i32, %c0_i32_0 : i32, i32
  }
  func.func @transform_3(%arg0: i32) -> (i32, i32) {
    %c0_i32 = arith.constant 0 : i32
    %c0_i32_0 = arith.constant 0 : i32
    %c0_i32_1 = arith.constant 0 : i32
    return %c0_i32, %c0_i32_0 : i32, i32
  }
  func.func @transform_4(%arg0: i32) -> (i32, i32) {
    %c0_i32 = arith.constant 0 : i32
    %c0_i32_0 = arith.constant 0 : i32
    return %arg0, %c0_i32 : i32, i32
  }
  func.func @transform_5(%arg0: i32) -> (i32, i32) {
    %c0_i32 = arith.constant 0 : i32
    %c0_i32_0 = arith.constant 0 : i32
    return %arg0, %c0_i32 : i32, i32
  }
  func.func @transform_6(%arg0: i32) -> (i32, i32, i32) {
    %c0_i32 = arith.constant 0 : i32
    %c0_i32_0 = arith.constant 0 : i32
    %c0_i32_1 = arith.constant 0 : i32
    return %arg0, %c0_i32, %c0_i32_0 : i32, i32, i32
  }
}

module attributes {stable_mosaic.version = 11 : i64} {
  func.func @kernel(%arg0: i32, %arg1: memref<32x1152xbf16, #tpu.memory_space<vmem>>, %arg2: memref<1152x128xbf16, #tpu.memory_space<vmem>>, %arg3: memref<1x128xf32, #tpu.memory_space<vmem>>, %arg4: memref<32x128xbf16, #tpu.memory_space<vmem>>) attributes {dimension_semantics = [#tpu.dimension_semantics<parallel>], iteration_bounds = array<i64: 1>, scalar_prefetch = 0 : i64, scratch_operands = 0 : i64, tpu.core_type = #tpu.core_type<tc>, window_params = [{transform_indices = @transform_0, window_bounds = array<i64: 32, 1152>}, {pipeline_mode = #tpu.pipeline_mode<synchronous>, transform_indices = @transform_1, window_bounds = array<i64: 1152, 128>}, {pipeline_mode = #tpu.pipeline_mode<synchronous>, transform_indices = @transform_2, window_bounds = array<i64: 1, 128>}, {transform_indices = @transform_3, window_bounds = array<i64: 32, 128>}]} {
    %c0 = arith.constant 0 : index
    %c0_0 = arith.constant 0 : index
    %0 = vector.load %arg1[%c0, %c0_0] : memref<32x1152xbf16, #tpu.memory_space<vmem>>, vector<32x1152xbf16>
    %c0_1 = arith.constant 0 : index
    %c0_2 = arith.constant 0 : index
    %1 = vector.load %arg2[%c0_1, %c0_2] : memref<1152x128xbf16, #tpu.memory_space<vmem>>, vector<1152x128xbf16>
    %cst = arith.constant dense<0.000000e+00> : vector<32x128xf32>
    %2 = tpu.matmul %0, %1, %cst {dimension_numbers = #tpu.dot_dimension_numbers<[1], [0], [0], [1], [0, 0, 1, 1], [], []>} : vector<32x1152xbf16>, vector<1152x128xbf16>, vector<32x128xf32> -> vector<32x128xf32>
    %c0_3 = arith.constant 0 : index
    %c0_4 = arith.constant 0 : index
    %3 = vector.load %arg3[%c0_3, %c0_4] : memref<1x128xf32, #tpu.memory_space<vmem>>, vector<1x128xf32>
    %4 = vector.broadcast %3 : vector<1x128xf32> to vector<32x128xf32>
    %5 = arith.addf %2, %4 : vector<32x128xf32>
    %cst_5 = arith.constant 0.000000e+00 : f32
    %6 = vector.broadcast %cst_5 : f32 to vector<32x128xf32>
    %7 = arith.cmpf ogt, %5, %6 : vector<32x128xf32>
    %cst_6 = arith.constant 0.00999999977 : f32
    %8 = vector.broadcast %cst_6 : f32 to vector<32x128xf32>
    %9 = arith.mulf %8, %5 : vector<32x128xf32>
    %10 = arith.select %7, %5, %9 : vector<32x128xi1>, vector<32x128xf32>
    %11 = arith.truncf %10 : vector<32x128xf32> to vector<32x128xbf16>
    %c0_7 = arith.constant 0 : index
    %c0_8 = arith.constant 0 : index
    %12 = vector.load %arg4[%c0_7, %c0_8] : memref<32x128xbf16, #tpu.memory_space<vmem>>, vector<32x128xbf16>
    tpu.vector_store %arg4[%c0_7, %c0_8], %11 {strides = array<i32>} : memref<32x128xbf16, #tpu.memory_space<vmem>>, vector<32x128xbf16>,
    return
  }
  func.func @transform_0(%arg0: i32) -> (i32, i32) {
    %c0_i32 = arith.constant 0 : i32
    %c0_i32_0 = arith.constant 0 : i32
    return %arg0, %c0_i32 : i32, i32
  }
  func.func @transform_1(%arg0: i32) -> (i32, i32) {
    %c0_i32 = arith.constant 0 : i32
    %c0_i32_0 = arith.constant 0 : i32
    %c0_i32_1 = arith.constant 0 : i32
    return %c0_i32, %c0_i32_0 : i32, i32
  }
  func.func @transform_2(%arg0: i32) -> (i32, i32) {
    %c0_i32 = arith.constant 0 : i32
    %c0_i32_0 = arith.constant 0 : i32
    %c0_i32_1 = arith.constant 0 : i32
    return %c0_i32, %c0_i32_0 : i32, i32
  }
  func.func @transform_3(%arg0: i32) -> (i32, i32) {
    %c0_i32 = arith.constant 0 : i32
    %c0_i32_0 = arith.constant 0 : i32
    return %arg0, %c0_i32 : i32, i32
  }
}

module attributes {stable_mosaic.version = 11 : i64} {
  func.func @_resblock_kernel(%arg0: i32, %arg1: memref<32x1152xbf16, #tpu.memory_space<vmem>>, %arg2: memref<1152x128xbf16, #tpu.memory_space<vmem>>, %arg3: memref<128x128xbf16, #tpu.memory_space<vmem>>, %arg4: memref<32x128xbf16, #tpu.memory_space<vmem>>, %arg5: memref<32x128xbf16, #tpu.memory_space<vmem>>) attributes {dimension_semantics = [#tpu.dimension_semantics<parallel>], iteration_bounds = array<i64: 1>, scalar_prefetch = 0 : i64, scratch_operands = 0 : i64, tpu.core_type = #tpu.core_type<tc>, window_params = [{transform_indices = @transform_0, window_bounds = array<i64: 32, 1152>}, {pipeline_mode = #tpu.pipeline_mode<synchronous>, transform_indices = @transform_1, window_bounds = array<i64: 1152, 128>}, {pipeline_mode = #tpu.pipeline_mode<synchronous>, transform_indices = @transform_2, window_bounds = array<i64: 128, 128>}, {transform_indices = @transform_3, window_bounds = array<i64: 32, 128>}, {transform_indices = @transform_4, window_bounds = array<i64: 32, 128>}]} {
    %c0 = arith.constant 0 : index
    %c0_0 = arith.constant 0 : index
    %0 = vector.load %arg1[%c0, %c0_0] : memref<32x1152xbf16, #tpu.memory_space<vmem>>, vector<32x1152xbf16>
    %c0_1 = arith.constant 0 : index
    %c0_2 = arith.constant 0 : index
    %1 = vector.load %arg2[%c0_1, %c0_2] : memref<1152x128xbf16, #tpu.memory_space<vmem>>, vector<1152x128xbf16>
    %cst = arith.constant dense<0.000000e+00> : vector<32x128xf32>
    %2 = tpu.matmul %0, %1, %cst {dimension_numbers = #tpu.dot_dimension_numbers<[1], [0], [0], [1], [0, 0, 1, 1], [], []>} : vector<32x1152xbf16>, vector<1152x128xbf16>, vector<32x128xf32> -> vector<32x128xf32>
    %cst_3 = arith.constant 0.000000e+00 : f32
    %3 = vector.broadcast %cst_3 : f32 to vector<32x128xf32>
    %4 = arith.maximumf %2, %3 : vector<32x128xf32>
    %5 = arith.truncf %4 : vector<32x128xf32> to vector<32x128xbf16>
    %c0_4 = arith.constant 0 : index
    %c0_5 = arith.constant 0 : index
    %6 = vector.load %arg3[%c0_4, %c0_5] : memref<128x128xbf16, #tpu.memory_space<vmem>>, vector<128x128xbf16>
    %cst_6 = arith.constant dense<0.000000e+00> : vector<32x128xf32>
    %7 = tpu.matmul %5, %6, %cst_6 {dimension_numbers = #tpu.dot_dimension_numbers<[1], [0], [0], [1], [0, 0, 1, 1], [], []>} : vector<32x128xbf16>, vector<128x128xbf16>, vector<32x128xf32> -> vector<32x128xf32>
    %c0_7 = arith.constant 0 : index
    %c0_8 = arith.constant 0 : index
    %8 = vector.load %arg4[%c0_7, %c0_8] : memref<32x128xbf16, #tpu.memory_space<vmem>>, vector<32x128xbf16>
    %9 = arith.extf %8 : vector<32x128xbf16> to vector<32x128xf32>
    %10 = arith.addf %7, %9 : vector<32x128xf32>
    %11 = arith.truncf %10 : vector<32x128xf32> to vector<32x128xbf16>
    %c0_9 = arith.constant 0 : index
    %c0_10 = arith.constant 0 : index
    %12 = vector.load %arg5[%c0_9, %c0_10] : memref<32x128xbf16, #tpu.memory_space<vmem>>, vector<32x128xbf16>
    tpu.vector_store %arg5[%c0_9, %c0_10], %11 {strides = array<i32>} : memref<32x128xbf16, #tpu.memory_space<vmem>>, vector<32x128xbf16>,
    return
  }
  func.func @transform_0(%arg0: i32) -> (i32, i32) {
    %c0_i32 = arith.constant 0 : i32
    %c0_i32_0 = arith.constant 0 : i32
    return %arg0, %c0_i32 : i32, i32
  }
  func.func @transform_1(%arg0: i32) -> (i32, i32) {
    %c0_i32 = arith.constant 0 : i32
    %c0_i32_0 = arith.constant 0 : i32
    %c0_i32_1 = arith.constant 0 : i32
    return %c0_i32, %c0_i32_0 : i32, i32
  }
  func.func @transform_2(%arg0: i32) -> (i32, i32) {
    %c0_i32 = arith.constant 0 : i32
    %c0_i32_0 = arith.constant 0 : i32
    %c0_i32_1 = arith.constant 0 : i32
    return %c0_i32, %c0_i32_0 : i32, i32
  }
  func.func @transform_3(%arg0: i32) -> (i32, i32) {
    %c0_i32 = arith.constant 0 : i32
    %c0_i32_0 = arith.constant 0 : i32
    return %arg0, %c0_i32 : i32, i32
  }
  func.func @transform_4(%arg0: i32) -> (i32, i32) {
    %c0_i32 = arith.constant 0 : i32
    %c0_i32_0 = arith.constant 0 : i32
    return %arg0, %c0_i32 : i32, i32
  }
}

module attributes {stable_mosaic.version = 11 : i64} {
  func.func @kernel(%arg0: i32, %arg1: i32, %arg2: memref<1x32x512xbf16, #tpu.memory_space<vmem>>, %arg3: memref<1x512x128xbf16, #tpu.memory_space<vmem>>, %arg4: memref<1x128xf32, #tpu.memory_space<vmem>>, %arg5: memref<1x32x128xbf16, #tpu.memory_space<vmem>>) attributes {dimension_semantics = [#tpu.dimension_semantics<parallel>, #tpu.dimension_semantics<parallel>], iteration_bounds = array<i64: 4, 1>, scalar_prefetch = 0 : i64, scratch_operands = 0 : i64, tpu.core_type = #tpu.core_type<tc>, window_params = [{transform_indices = @transform_0, window_bounds = array<i64: 1, 32, 512>}, {transform_indices = @transform_1, window_bounds = array<i64: 1, 512, 128>}, {pipeline_mode = #tpu.pipeline_mode<synchronous>, transform_indices = @transform_2, window_bounds = array<i64: 1, 128>}, {transform_indices = @transform_3, window_bounds = array<i64: 1, 32, 128>}]} {
    %c0 = arith.constant 0 : index
    %c0_0 = arith.constant 0 : index
    %c0_1 = arith.constant 0 : index
    %0 = vector.load %arg2[%c0, %c0_0, %c0_1] : memref<1x32x512xbf16, #tpu.memory_space<vmem>>, vector<1x32x512xbf16>
    %1 = vector.shape_cast %0 : vector<1x32x512xbf16> to vector<32x512xbf16>
    %2 = arith.extf %1 : vector<32x512xbf16> to vector<32x512xf32>
    %cst = arith.constant 0.000000e+00 : f32
    %3 = vector.broadcast %cst : f32 to vector<32x512xf32>
    %4 = arith.cmpf ogt, %2, %3 : vector<32x512xf32>
    %cst_2 = arith.constant 0.00999999977 : f32
    %5 = vector.broadcast %cst_2 : f32 to vector<32x512xf32>
    %6 = arith.mulf %5, %2 : vector<32x512xf32>
    %7 = arith.select %4, %2, %6 : vector<32x512xi1>, vector<32x512xf32>
    %8 = arith.truncf %7 : vector<32x512xf32> to vector<32x512xbf16>
    %c0_3 = arith.constant 0 : index
    %c0_4 = arith.constant 0 : index
    %c0_5 = arith.constant 0 : index
    %9 = vector.load %arg3[%c0_3, %c0_4, %c0_5] : memref<1x512x128xbf16, #tpu.memory_space<vmem>>, vector<1x512x128xbf16>
    %10 = vector.shape_cast %9 : vector<1x512x128xbf16> to vector<512x128xbf16>
    %cst_6 = arith.constant dense<0.000000e+00> : vector<32x128xf32>
    %11 = tpu.matmul %8, %10, %cst_6 {dimension_numbers = #tpu.dot_dimension_numbers<[1], [0], [0], [1], [0, 0, 1, 1], [], []>} : vector<32x512xbf16>, vector<512x128xbf16>, vector<32x128xf32> -> vector<32x128xf32>
    %c0_7 = arith.constant 0 : index
    %c0_8 = arith.constant 0 : index
    %12 = vector.load %arg4[%c0_7, %c0_8] : memref<1x128xf32, #tpu.memory_space<vmem>>, vector<1x128xf32>
    %13 = vector.broadcast %12 : vector<1x128xf32> to vector<32x128xf32>
    %14 = arith.addf %11, %13 : vector<32x128xf32>
    %cst_9 = arith.constant 0.000000e+00 : f32
    %15 = vector.broadcast %cst_9 : f32 to vector<32x128xf32>
    %16 = arith.cmpf ogt, %14, %15 : vector<32x128xf32>
    %cst_10 = arith.constant 0.00999999977 : f32
    %17 = vector.broadcast %cst_10 : f32 to vector<32x128xf32>
    %18 = arith.mulf %17, %14 : vector<32x128xf32>
    %19 = arith.select %16, %14, %18 : vector<32x128xi1>, vector<32x128xf32>
    %20 = arith.truncf %19 : vector<32x128xf32> to vector<32x128xbf16>
    %c0_11 = arith.constant 0 : index
    %c0_12 = arith.constant 0 : index
    %c0_13 = arith.constant 0 : index
    %21 = vector.load %arg5[%c0_11, %c0_12, %c0_13] : memref<1x32x128xbf16, #tpu.memory_space<vmem>>, vector<1x32x128xbf16>
    %22 = vector.shape_cast %21 : vector<1x32x128xbf16> to vector<32x128xbf16>
    %23 = vector.shape_cast %20 : vector<32x128xbf16> to vector<1x32x128xbf16>
    tpu.vector_store %arg5[%c0_11, %c0_12, %c0_13], %23 {strides = array<i32>} : memref<1x32x128xbf16, #tpu.memory_space<vmem>>, vector<1x32x128xbf16>,
    return
  }
  func.func @transform_0(%arg0: i32, %arg1: i32) -> (i32, i32, i32) {
    %c0_i32 = arith.constant 0 : i32
    %c0_i32_0 = arith.constant 0 : i32
    return %arg0, %arg1, %c0_i32 : i32, i32, i32
  }
  func.func @transform_1(%arg0: i32, %arg1: i32) -> (i32, i32, i32) {
    %c0_i32 = arith.constant 0 : i32
    %c0_i32_0 = arith.constant 0 : i32
    %c0_i32_1 = arith.constant 0 : i32
    return %arg0, %c0_i32, %c0_i32_0 : i32, i32, i32
  }
  func.func @transform_2(%arg0: i32, %arg1: i32) -> (i32, i32) {
    %c0_i32 = arith.constant 0 : i32
    %c0_i32_0 = arith.constant 0 : i32
    %c0_i32_1 = arith.constant 0 : i32
    return %c0_i32, %c0_i32_0 : i32, i32
  }
  func.func @transform_3(%arg0: i32, %arg1: i32) -> (i32, i32, i32) {
    %c0_i32 = arith.constant 0 : i32
    %c0_i32_0 = arith.constant 0 : i32
    return %arg0, %arg1, %c0_i32 : i32, i32, i32
  }
}

module attributes {stable_mosaic.version = 11 : i64} {
  func.func @kernel(%arg0: i32, %arg1: i32, %arg2: memref<1x128x512xbf16, #tpu.memory_space<vmem>>, %arg3: memref<1x512x128xbf16, #tpu.memory_space<vmem>>, %arg4: memref<1x128xf32, #tpu.memory_space<vmem>>, %arg5: memref<1x128x128xbf16, #tpu.memory_space<vmem>>) attributes {dimension_semantics = [#tpu.dimension_semantics<parallel>, #tpu.dimension_semantics<parallel>], iteration_bounds = array<i64: 4, 1>, scalar_prefetch = 0 : i64, scratch_operands = 0 : i64, tpu.core_type = #tpu.core_type<tc>, window_params = [{transform_indices = @transform_0, window_bounds = array<i64: 1, 128, 512>}, {transform_indices = @transform_1, window_bounds = array<i64: 1, 512, 128>}, {pipeline_mode = #tpu.pipeline_mode<synchronous>, transform_indices = @transform_2, window_bounds = array<i64: 1, 128>}, {transform_indices = @transform_3, window_bounds = array<i64: 1, 128, 128>}]} {
    %c0 = arith.constant 0 : index
    %c0_0 = arith.constant 0 : index
    %c0_1 = arith.constant 0 : index
    %0 = vector.load %arg2[%c0, %c0_0, %c0_1] : memref<1x128x512xbf16, #tpu.memory_space<vmem>>, vector<1x128x512xbf16>
    %1 = vector.shape_cast %0 : vector<1x128x512xbf16> to vector<128x512xbf16>
    %c0_2 = arith.constant 0 : index
    %c0_3 = arith.constant 0 : index
    %c0_4 = arith.constant 0 : index
    %2 = vector.load %arg3[%c0_2, %c0_3, %c0_4] : memref<1x512x128xbf16, #tpu.memory_space<vmem>>, vector<1x512x128xbf16>
    %3 = vector.shape_cast %2 : vector<1x512x128xbf16> to vector<512x128xbf16>
    %cst = arith.constant dense<0.000000e+00> : vector<128x128xf32>
    %4 = tpu.matmul %1, %3, %cst {dimension_numbers = #tpu.dot_dimension_numbers<[1], [0], [0], [1], [0, 0, 1, 1], [], []>} : vector<128x512xbf16>, vector<512x128xbf16>, vector<128x128xf32> -> vector<128x128xf32>
    %c0_5 = arith.constant 0 : index
    %c0_6 = arith.constant 0 : index
    %5 = vector.load %arg4[%c0_5, %c0_6] : memref<1x128xf32, #tpu.memory_space<vmem>>, vector<1x128xf32>
    %6 = vector.broadcast %5 : vector<1x128xf32> to vector<128x128xf32>
    %7 = arith.addf %4, %6 : vector<128x128xf32>
    %cst_7 = arith.constant 0.000000e+00 : f32
    %8 = vector.broadcast %cst_7 : f32 to vector<128x128xf32>
    %9 = arith.subf %8, %7 : vector<128x128xf32>
    %10 = math.exp %9 : vector<128x128xf32>
    %cst_8 = arith.constant 1.000000e+00 : f32
    %11 = vector.broadcast %cst_8 : f32 to vector<128x128xf32>
    %12 = arith.addf %11, %10 : vector<128x128xf32>
    %cst_9 = arith.constant 1.000000e+00 : f32
    %13 = vector.broadcast %cst_9 : f32 to vector<128x128xf32>
    %14 = arith.divf %13, %12 : vector<128x128xf32>
    %15 = arith.truncf %14 : vector<128x128xf32> to vector<128x128xbf16>
    %c0_10 = arith.constant 0 : index
    %c0_11 = arith.constant 0 : index
    %c0_12 = arith.constant 0 : index
    %16 = vector.load %arg5[%c0_10, %c0_11, %c0_12] : memref<1x128x128xbf16, #tpu.memory_space<vmem>>, vector<1x128x128xbf16>
    %17 = vector.shape_cast %16 : vector<1x128x128xbf16> to vector<128x128xbf16>
    %18 = vector.shape_cast %15 : vector<128x128xbf16> to vector<1x128x128xbf16>
    tpu.vector_store %arg5[%c0_10, %c0_11, %c0_12], %18 {strides = array<i32>} : memref<1x128x128xbf16, #tpu.memory_space<vmem>>, vector<1x128x128xbf16>,
    return
  }
  func.func @transform_0(%arg0: i32, %arg1: i32) -> (i32, i32, i32) {
    %c0_i32 = arith.constant 0 : i32
    %c0_i32_0 = arith.constant 0 : i32
    return %arg0, %arg1, %c0_i32 : i32, i32, i32
  }
  func.func @transform_1(%arg0: i32, %arg1: i32) -> (i32, i32, i32) {
    %c0_i32 = arith.constant 0 : i32
    %c0_i32_0 = arith.constant 0 : i32
    %c0_i32_1 = arith.constant 0 : i32
    return %arg0, %c0_i32, %c0_i32_0 : i32, i32, i32
  }
  func.func @transform_2(%arg0: i32, %arg1: i32) -> (i32, i32) {
    %c0_i32 = arith.constant 0 : i32
    %c0_i32_0 = arith.constant 0 : i32
    %c0_i32_1 = arith.constant 0 : i32
    return %c0_i32, %c0_i32_0 : i32, i32
  }
  func.func @transform_3(%arg0: i32, %arg1: i32) -> (i32, i32, i32) {
    %c0_i32 = arith.constant 0 : i32
    %c0_i32_0 = arith.constant 0 : i32
    return %arg0, %arg1, %c0_i32 : i32, i32, i32
  }
}

</mosaic_0001>

<llo_original>
// kernel: _lambda_.19
$region0: #{_lambda_.19}
  #allocation0 [shape = 'u32[]', space=smem, size = 0x4, offset = 0x4, fixed_abs, tag = 'smem constant byte address 0x4 - core index']
  #allocation1 [shape = 'u32[144,128]{1,0:T(1,128)}', space=vmem, size = 0x12000, scoped, tag = 'internal scratch']
  %s0 = inlined_call_operand.vmem [shape: bf16[128,48], index: 0, kind: input, shape index: {}]
  %s1 = inlined_call_operand.vmem [shape: bf16[48,128], index: 1, kind: input, shape index: {}]
  %s2 = inlined_call_operand.vmem [shape: f32[1,128], index: 2, kind: input, shape index: {}]
  %s3 = inlined_call_operand.vmem [shape: bf16[128,128], index: 3, kind: output, shape index: {}]
  %s4 = sld [smem:[#allocation0]]
  $region22: #{_lambda_.19} parent=0
    _
  %s6 = ssub.s32 1, %s4
  %s7 = scalar_select 0, %s6, %s4
  // Predicated region
  $region2: #{_lambda_.19} parent=0 // pred_check
    _
  $region3: #{_lambda_.19} parent=0 // pred_check_branch
    %9 = sbr.rel (0) target = $region5
  $region4: #{_lambda_.19} parent=0 // pred_region
    _
  $region5: #{_lambda_.19} parent=0 // pred_fallthru
    _
  // Predicated region
  $region6: #{_lambda_.19} parent=0 // pred_check
    _
  $region7: #{_lambda_.19} parent=0 // pred_check_branch
    %11 = sbr.rel (0) target = $region9
  $region8: #{_lambda_.19} parent=0 // pred_region
    _
  $region9: #{_lambda_.19} parent=0 // pred_fallthru
    _
  // Predicated region
  $region10: #{_lambda_.19} parent=0 // pred_check
    _
  $region11: #{_lambda_.19} parent=0 // pred_check_branch
    %13 = sbr.rel (0) target = $region13
  $region12: #{_lambda_.19} parent=0 // pred_region
    _
  $region13: #{_lambda_.19} parent=0 // pred_fallthru
    _
  %v15 = vld [vmem:[%s0] sm:$0xf]
  %v16 = vld [vmem:[%s0 + $0x4] sm:$0xf]
  %v17 = vld [vmem:[%s0 + $0x8] sm:$0xf]
  %v18 = vld [vmem:[%s0 + $0xc] sm:$0xf]
  %v19 = vld [vmem:[%s0 + $0x10] sm:$0xf]
  %v20 = vld [vmem:[%s0 + $0x14] sm:$0xf]
  %v21 = vld [vmem:[%s0 + $0x18] sm:$0xf]
  %v22 = vld [vmem:[%s0 + $0x1c] sm:$0xf]
  %v23 = vld [vmem:[%s0 + $0x20] sm:$0xf]
  %v24 = vld [vmem:[%s0 + $0x24] sm:$0xf]
  %v25 = vld [vmem:[%s0 + $0x28] sm:$0xf]
  %v26 = vld [vmem:[%s0 + $0x2c] sm:$0xf]
  %v27 = vld [vmem:[%s0 + $0x30] sm:$0xf]
  %v28 = vld [vmem:[%s0 + $0x34] sm:$0xf]
  %v29 = vld [vmem:[%s0 + $0x38] sm:$0xf]
  %v30 = vld [vmem:[%s0 + $0x3c] sm:$0xf]
  %v31 = vld [vmem:[%s1] sm:$0xf]
  %v32 = vld [vmem:[%s1 + $0x4] sm:$0xf]
  %v33 = vld [vmem:[%s1 + $0x8] sm:$0xf]
  %v34 = vld [vmem:[%s1 + $0xc] sm:$0xf]
  %v35 = vld [vmem:[%s1 + $0x10] sm:$0xf]
  %v36 = vld [vmem:[%s1 + $0x14] sm:$0xf]
  %v37 = vld [vmem:[%s2] sm:$0x1]
  %v39 = vlaneseq
  %v40 = vshrl.u32 %v39, 7
  %v41 = vsub.s32 0, %v40
  %v42 = vrot.slane %v37, %v41
  %v60 = vunpack.c.l.b16 %v15
  %v61 = vunpack.c.l.b16 %v16
  %v62 = vunpack.c.l.b16 %v17
  %v63 = vunpack.c.l.b16 %v18
  %v64 = vunpack.c.l.b16 %v19
  %v65 = vunpack.c.l.b16 %v20
  %v66 = vunpack.c.l.b16 %v21
  %v67 = vunpack.c.l.b16 %v22
  %v68 = vunpack.c.l.b16 %v23
  %v69 = vunpack.c.l.b16 %v24
  %v70 = vunpack.c.l.b16 %v25
  %v71 = vunpack.c.l.b16 %v26
  %v72 = vunpack.c.l.b16 %v27
  %v73 = vunpack.c.l.b16 %v28
  %v74 = vunpack.c.l.b16 %v29
  %v75 = vunpack.c.l.b16 %v30
  %v76 = vpack.c.b16 %v61, %v60
  %v77 = vpack.c.b16 %v63, %v62
  %v78 = vpack.c.b16 %v65, %v64
  %v79 = vpack.c.b16 %v67, %v66
  %v80 = vpack.c.b16 %v69, %v68
  %v81 = vpack.c.b16 %v71, %v70
  %v82 = vpack.c.b16 %v73, %v72
  %v83 = vpack.c.b16 %v75, %v74
  %v90 = vunpack.c.l.b16 %v31
  %v91 = vunpack.c.l.b16 %v32
  %v92 = vunpack.c.l.b16 %v33
  %v93 = vunpack.c.l.b16 %v34
  %v94 = vunpack.c.l.b16 %v35
  %v95 = vunpack.c.l.b16 %v36
  %v96 = vpack.c.b16 %v91, %v90
  %v97 = vpack.c.b16 %v93, %v92
  %v98 = vpack.c.b16 %v95, %v94
  %vm102 = vcmask 392192
  %v104 = vsel %vm102, %v76, 0
  %v107 = vsel %vm102, %v77, 0
  %v110 = vsel %vm102, %v78, 0
  %v113 = vsel %vm102, %v79, 0
  %v116 = vsel %vm102, %v80, 0
  %v119 = vsel %vm102, %v81, 0
  %v122 = vsel %vm102, %v82, 0
  %v125 = vsel %vm102, %v83, 0
  %127 = vmatprep.subr.bf16.mxu0 0
  %128 = vmatpush1.bf16.msra.mxu0 %v96
  %129 = vmatprep.subr.bf16.mxu0 0
  %130 = vmatpush1.bf16.msra.mxu0 %v97
  %131 = vmatprep.subr.bf16.mxu0 0
  %132 = vmatpush1.bf16.msra.mxu0 %v98
  %133 = vmatprep.subr.bf16.mxu0 0
  %134 = vmatpush1.bf16.msra.mxu0 0
  %135 = vmatprep.subr.bf16.mxu0 0
  %136 = vmatpush1.bf16.msra.mxu0 0
  %137 = vmatprep.subr.bf16.mxu0 0
  %138 = vmatpush1.bf16.msra.mxu0 0
  %139 = vmatprep.subr.bf16.mxu0 0
  %140 = vmatpush1.bf16.msra.mxu0 0
  %141 = vmatprep.subr.bf16.mxu0 0
  %142 = vmatpush1.bf16.msra.mxu0 0
  %143 = vmatprep.subr.bf16.mxu0 0
  %144 = vmatpush1.bf16.msra.mxu0 0
  %145 = vmatprep.subr.bf16.mxu0 0
  %146 = vmatpush1.bf16.msra.mxu0 0
  %147 = vmatprep.subr.bf16.mxu0 0
  %148 = vmatpush1.bf16.msra.mxu0 0
  %149 = vmatprep.subr.bf16.mxu0 0
  %150 = vmatpush1.bf16.msra.mxu0 0
  %151 = vmatprep.subr.bf16.mxu0 0
  %152 = vmatpush1.bf16.msra.mxu0 0
  %153 = vmatprep.subr.bf16.mxu0 0
  %154 = vmatpush1.bf16.msra.mxu0 0
  %155 = vmatprep.subr.bf16.mxu0 0
  %156 = vmatpush1.bf16.msra.mxu0 0
  %157 = vmatprep.subr.bf16.mxu0 0
  %158 = vmatpush1.bf16.msra.mxu0 0
  %159 = vmatprep.mubr.bf16.mxu0 0
  %160 = vmatmul.mubr.bf16.gmra.mrb[0].mxu0 %v104
  %v161 = vpop.f32.mrb[0].mxu0
  %v162 = vadd.f32 %v42, %v161
  %v163 = vpop.f32.mrb[0].mxu0
  %v164 = vpop.f32.mrb[0].mxu0
  %v165 = vadd.f32 %v42, %v164
  %v166 = vpop.f32.mrb[0].mxu0
  %167 = vmatprep.mubr.bf16.mxu0 0
  %168 = vmatmul.mubr.bf16.gmra.mrb[0].mxu0 %v107
  %v169 = vpop.f32.mrb[0].mxu0
  %v170 = vadd.f32 %v42, %v169
  %v171 = vpop.f32.mrb[0].mxu0
  %v172 = vpop.f32.mrb[0].mxu0
  %v173 = vadd.f32 %v42, %v172
  %v174 = vpop.f32.mrb[0].mxu0
  %175 = vmatprep.mubr.bf16.mxu0 0
  %176 = vmatmul.mubr.bf16.gmra.mrb[0].mxu0 %v110
  %v177 = vpop.f32.mrb[0].mxu0
  %v178 = vadd.f32 %v42, %v177
  %v179 = vpop.f32.mrb[0].mxu0
  %v180 = vpop.f32.mrb[0].mxu0
  %v181 = vadd.f32 %v42, %v180
  %v182 = vpop.f32.mrb[0].mxu0
  %183 = vmatprep.mubr.bf16.mxu0 0
  %184 = vmatmul.mubr.bf16.gmra.mrb[0].mxu0 %v113
  %v185 = vpop.f32.mrb[0].mxu0
  %v186 = vadd.f32 %v42, %v185
  %v187 = vpop.f32.mrb[0].mxu0
  %v188 = vpop.f32.mrb[0].mxu0
  %v189 = vadd.f32 %v42, %v188
  %v190 = vpop.f32.mrb[0].mxu0
  %191 = vmatprep.mubr.bf16.mxu0 0
  %192 = vmatmul.mubr.bf16.gmra.mrb[0].mxu0 %v116
  %v193 = vpop.f32.mrb[0].mxu0
  %v194 = vadd.f32 %v42, %v193
  %v195 = vpop.f32.mrb[0].mxu0
  %v196 = vpop.f32.mrb[0].mxu0
  %v197 = vadd.f32 %v42, %v196
  %v198 = vpop.f32.mrb[0].mxu0
  %199 = vmatprep.mubr.bf16.mxu0 0
  %200 = vmatmul.mubr.bf16.gmra.mrb[0].mxu0 %v119
  %v201 = vpop.f32.mrb[0].mxu0
  %v202 = vadd.f32 %v42, %v201
  %v203 = vpop.f32.mrb[0].mxu0
  %v204 = vpop.f32.mrb[0].mxu0
  %v205 = vadd.f32 %v42, %v204
  %v206 = vpop.f32.mrb[0].mxu0
  %207 = vmatprep.mubr.bf16.mxu0 0
  %208 = vmatmul.mubr.bf16.gmra.mrb[0].mxu0 %v122
  %v209 = vpop.f32.mrb[0].mxu0
  %v210 = vadd.f32 %v42, %v209
  %v211 = vpop.f32.mrb[0].mxu0
  %v212 = vpop.f32.mrb[0].mxu0
  %v213 = vadd.f32 %v42, %v212
  %v214 = vpop.f32.mrb[0].mxu0
  %215 = vmatprep.mubr.bf16.mxu0 0
  %216 = vmatmul.mubr.bf16.gmra.mrb[0].mxu0 %v125
  %v217 = vpop.f32.mrb[0].mxu0
  %v218 = vadd.f32 %v42, %v217
  %v219 = vpop.f32.mrb[0].mxu0
  %v220 = vpop.f32.mrb[0].mxu0
  %v221 = vadd.f32 %v42, %v220
  %v222 = vpop.f32.mrb[0].mxu0
  %223 = vdwg.mxu0
  %vm224 = vcmp.gt.f32.partialorder %v162, 0.0
  %vm225 = vcmp.gt.f32.partialorder %v165, 0.0
  %vm226 = vcmp.gt.f32.partialorder %v170, 0.0
  %vm227 = vcmp.gt.f32.partialorder %v173, 0.0
  %vm228 = vcmp.gt.f32.partialorder %v178, 0.0
  %vm229 = vcmp.gt.f32.partialorder %v181, 0.0
  %vm230 = vcmp.gt.f32.partialorder %v186, 0.0
  %vm231 = vcmp.gt.f32.partialorder %v189, 0.0
  %vm232 = vcmp.gt.f32.partialorder %v194, 0.0
  %vm233 = vcmp.gt.f32.partialorder %v197, 0.0
  %vm234 = vcmp.gt.f32.partialorder %v202, 0.0
  %vm235 = vcmp.gt.f32.partialorder %v205, 0.0
  %vm236 = vcmp.gt.f32.partialorder %v210, 0.0
  %vm237 = vcmp.gt.f32.partialorder %v213, 0.0
  %vm238 = vcmp.gt.f32.partialorder %v218, 0.0
  %vm239 = vcmp.gt.f32.partialorder %v221, 0.0
  %v240 = vmul.f32 %v162, 0.01
  %v241 = vmul.f32 %v165, 0.01
  %v242 = vmul.f32 %v170, 0.01
  %v243 = vmul.f32 %v173, 0.01
  %v244 = vmul.f32 %v178, 0.01
  %v245 = vmul.f32 %v181, 0.01
  %v246 = vmul.f32 %v186, 0.01
  %v247 = vmul.f32 %v189, 0.01
  %v248 = vmul.f32 %v194, 0.01
  %v249 = vmul.f32 %v197, 0.01
  %v250 = vmul.f32 %v202, 0.01
  %v251 = vmul.f32 %v205, 0.01
  %v252 = vmul.f32 %v210, 0.01
  %v253 = vmul.f32 %v213, 0.01
  %v254 = vmul.f32 %v218, 0.01
  %v255 = vmul.f32 %v221, 0.01
  %v256 = vsel %vm224, %v162, %v240
  %v257 = vsel %vm225, %v165, %v241
  %v258 = vsel %vm226, %v170, %v242
  %v259 = vsel %vm227, %v173, %v243
  %v260 = vsel %vm228, %v178, %v244
  %v261 = vsel %vm229, %v181, %v245
  %v262 = vsel %vm230, %v186, %v246
  %v263 = vsel %vm231, %v189, %v247
  %v264 = vsel %vm232, %v194, %v248
  %v265 = vsel %vm233, %v197, %v249
  %v266 = vsel %vm234, %v202, %v250
  %v267 = vsel %vm235, %v205, %v251
  %v268 = vsel %vm236, %v210, %v252
  %v269 = vsel %vm237, %v213, %v253
  %v270 = vsel %vm238, %v218, %v254
  %v271 = vsel %vm239, %v221, %v255
  %v272 = vpack.c.bf16 %v257, %v256
  %v273 = vpack.c.bf16 %v259, %v258
  %v274 = vpack.c.bf16 %v261, %v260
  %v275 = vpack.c.bf16 %v263, %v262
  %v276 = vpack.c.bf16 %v265, %v264
  %v277 = vpack.c.bf16 %v267, %v266
  %v278 = vpack.c.bf16 %v269, %v268
  %v279 = vpack.c.bf16 %v271, %v270
  %v288 = vunpack.c.l.b16 %v272
  %v289 = vunpack.c.h.b16 %v272
  %v290 = vunpack.c.l.b16 %v273
  %v291 = vunpack.c.h.b16 %v273
  %v292 = vunpack.c.l.b16 %v274
  %v293 = vunpack.c.h.b16 %v274
  %v294 = vunpack.c.l.b16 %v275
  %v295 = vunpack.c.h.b16 %v275
  %v296 = vunpack.c.l.b16 %v276
  %v297 = vunpack.c.h.b16 %v276
  %v298 = vunpack.c.l.b16 %v277
  %v299 = vunpack.c.h.b16 %v277
  %v300 = vunpack.c.l.b16 %v278
  %v301 = vunpack.c.h.b16 %v278
  %v302 = vunpack.c.l.b16 %v279
  %v303 = vunpack.c.h.b16 %v279
  %v304 = vpack.c.b16 %v288, %v288
  %v305 = vpack.c.b16 %v289, %v289
  %v306 = vpack.c.b16 %v290, %v290
  %v307 = vpack.c.b16 %v291, %v291
  %v308 = vpack.c.b16 %v292, %v292
  %v309 = vpack.c.b16 %v293, %v293
  %v310 = vpack.c.b16 %v294, %v294
  %v311 = vpack.c.b16 %v295, %v295
  %v312 = vpack.c.b16 %v296, %v296
  %v313 = vpack.c.b16 %v297, %v297
  %v314 = vpack.c.b16 %v298, %v298
  %v315 = vpack.c.b16 %v299, %v299
  %v316 = vpack.c.b16 %v300, %v300
  %v317 = vpack.c.b16 %v301, %v301
  %v318 = vpack.c.b16 %v302, %v302
  %v319 = vpack.c.b16 %v303, %v303
  %336 = vst [vmem:[%s3] sm:$0xf] %v304
  %337 = vst [vmem:[%s3 + $0x4] sm:$0xf] %v305
  %338 = vst [vmem:[%s3 + $0x8] sm:$0xf] %v306
  %339 = vst [vmem:[%s3 + $0xc] sm:$0xf] %v307
  %340 = vst [vmem:[%s3 + $0x10] sm:$0xf] %v308
  %341 = vst [vmem:[%s3 + $0x14] sm:$0xf] %v309
  %342 = vst [vmem:[%s3 + $0x18] sm:$0xf] %v310
  %343 = vst [vmem:[%s3 + $0x1c] sm:$0xf] %v311
  %344 = vst [vmem:[%s3 + $0x20] sm:$0xf] %v312
  %345 = vst [vmem:[%s3 + $0x24] sm:$0xf] %v313
  %346 = vst [vmem:[%s3 + $0x28] sm:$0xf] %v314
  %347 = vst [vmem:[%s3 + $0x2c] sm:$0xf] %v315
  %348 = vst [vmem:[%s3 + $0x30] sm:$0xf] %v316
  %349 = vst [vmem:[%s3 + $0x34] sm:$0xf] %v317
  %350 = vst [vmem:[%s3 + $0x38] sm:$0xf] %v318
  %351 = vst [vmem:[%s3 + $0x3c] sm:$0xf] %v319
  // Predicated region
  $region14: #{_lambda_.19} parent=0 // pred_check
    _
  $region15: #{_lambda_.19} parent=0 // pred_check_branch
    %353 = sbr.rel (0) target = $region17
  $region16: #{_lambda_.19} parent=0 // pred_region
    _
  $region17: #{_lambda_.19} parent=0 // pred_fallthru
    _
  // Predicated region
  $region18: #{_lambda_.19} parent=0 // pred_check
    _
  $region19: #{_lambda_.19} parent=0 // pred_check_branch
    %355 = sbr.rel (0) target = $region21
  $region20: #{_lambda_.19} parent=0 // pred_region
    _
  $region21: #{_lambda_.19} parent=0 // pred_fallthru
    _

// kernel: _lambda_.21
$region0: #{_lambda_.21}
  #allocation0 [shape = 'u32[]', space=smem, size = 0x4, offset = 0x4, fixed_abs, tag = 'smem constant byte address 0x4 - core index']
  #allocation1 [shape = 'u32[144,128]{1,0:T(1,128)}', space=vmem, size = 0x12000, scoped, tag = 'internal scratch']
  %s0 = inlined_call_operand.hbm [shape: bf16[32,1152], index: 0, kind: input, shape index: {}]
  %s1 = inlined_call_operand.vmem [shape: bf16[1152,128], index: 1, kind: input, shape index: {}]
  %s2 = inlined_call_operand.vmem [shape: bf16[128,128], index: 2, kind: input, shape index: {}]
  %s3 = inlined_call_operand.vmem [shape: bf16[32,128], index: 3, kind: input, shape index: {}]
  %s4 = inlined_call_operand.vmem [shape: bf16[32,128], index: 4, kind: output, shape index: {}]
  %s5 = sld [smem:[#allocation0]]
  $region30: #{_lambda_.21} parent=0
    _
  %s7 = ssub.s32 1, %s5
  %s8 = scalar_select 0, %s7, %s5
  $region1: #{_lambda_.21} parent=0
    #allocation2 [shape = 'u8[73728]{0}', space=vmem, size = 0x12000, scoped, tag = 'input window, operand 0, single buffered']
    #allocation3 [shape = 's32[1]{0}', space=sflag, size = 0x4, scoped, tag = 'scoped memory for _lambda_.21']
    %9 = vsyncpa [#allocation3], 0
    // Predicated region
    $region2: #{_lambda_.21} parent=1 // pred_check
      _
    $region3: #{_lambda_.21} parent=1 // pred_check_branch
      %11 = sbr.rel (0) target = $region5
    $region4: #{_lambda_.21} parent=1 // pred_region
      %s13 = ssub.s32 2304, 2304
      %14 = vsyncadd [#allocation3], %s13
      %s15 = sshll.u32 [#allocation2], 4
      %s16 = int_to_ptr.vmem [resolvable:$true] %s15
      %21 = dma.hbm_to_vmem [thread:$0]  %s0, 2304, %s16, [#allocation3], 576, 576, 36
    $region5: #{_lambda_.21} parent=1 // pred_fallthru
      _
    // Predicated region
    $region6: #{_lambda_.21} parent=1 // pred_check
      _
    $region7: #{_lambda_.21} parent=1 // pred_check_branch
      %23 = sbr.rel (0) target = $region9
    $region8: #{_lambda_.21} parent=1 // pred_region
      _
    $region9: #{_lambda_.21} parent=1 // pred_fallthru
      _
    // Predicated region
    $region10: #{_lambda_.21} parent=1 // pred_check
      _
    $region11: #{_lambda_.21} parent=1 // pred_check_branch
      %25 = sbr.rel (0) target = $region13
    $region12: #{_lambda_.21} parent=1 // pred_region
      _
    $region13: #{_lambda_.21} parent=1 // pred_fallthru
      _
    // Predicated region
    $region14: #{_lambda_.21} parent=1 // pred_check
      _
    $region15: #{_lambda_.21} parent=1 // pred_check_branch
      %27 = sbr.rel (0) target = $region17
    $region16: #{_lambda_.21} parent=1 // pred_region
      _
    $region17: #{_lambda_.21} parent=1 // pred_fallthru
      _
    // Predicated region
    $region18: #{_lambda_.21} parent=1 // pred_check
      _
    $region19: #{_lambda_.21} parent=1 // pred_check_branch
      %29 = sbr.rel (0) target = $region21
    $region20: #{_lambda_.21} parent=1 // pred_region
      %30 = dma.done [#allocation3], 2304
    $region21: #{_lambda_.21} parent=1 // pred_fallthru
      _
    %v32 = vld [vmem:[#allocation2] sm:$0xff]
    %v33 = vld [vmem:[#allocation2 + $0x8] sm:$0xff]
    %v34 = vld [vmem:[#allocation2 + $0x10] sm:$0xff]
    %v35 = vld [vmem:[#allocation2 + $0x18] sm:$0xff]
    %v36 = vld [vmem:[#allocation2 + $0x20] sm:$0xf]
    %v37 = vld [vmem:[#allocation2 + $0x24] sm:$0xff]
    %v38 = vld [vmem:[#allocation2 + $0x2c] sm:$0xff]
    %v39 = vld [vmem:[#allocation2 + $0x34] sm:$0xff]
    %v40 = vld [vmem:[#allocation2 + $0x3c] sm:$0xff]
    %v41 = vld [vmem:[#allocation2 + $0x44] sm:$0xf]
    %v42 = vld [vmem:[#allocation2 + $0x48] sm:$0xff]
    %v43 = vld [vmem:[#allocation2 + $0x50] sm:$0xff]
    %v44 = vld [vmem:[#allocation2 + $0x58] sm:$0xff]
    %v45 = vld [vmem:[#allocation2 + $0x60] sm:$0xff]
    %v46 = vld [vmem:[#allocation2 + $0x68] sm:$0xf]
    %v47 = vld [vmem:[#allocation2 + $0x6c] sm:$0xff]
    %v48 = vld [vmem:[#allocation2 + $0x74] sm:$0xff]
    %v49 = vld [vmem:[#allocation2 + $0x7c] sm:$0xff]
    %v50 = vld [vmem:[#allocation2 + $0x84] sm:$0xff]
    %v51 = vld [vmem:[#allocation2 + $0x8c] sm:$0xf]
    %v52 = vld [vmem:[%s1] sm:$0xf]
    %v53 = vld [vmem:[%s1 + $0x4] sm:$0xf]
    %v54 = vld [vmem:[%s1 + $0x8] sm:$0xf]
    %v55 = vld [vmem:[%s1 + $0xc] sm:$0xf]
    %v56 = vld [vmem:[%s1 + $0x10] sm:$0xf]
    %v57 = vld [vmem:[%s1 + $0x14] sm:$0xf]
    %v58 = vld [vmem:[%s1 + $0x18] sm:$0xf]
    %v59 = vld [vmem:[%s1 + $0x1c] sm:$0xf]
    %v60 = vld [vmem:[%s1 + $0x20] sm:$0xf]
    %v61 = vld [vmem:[%s1 + $0x24] sm:$0xf]
    %v62 = vld [vmem:[%s1 + $0x28] sm:$0xf]
    %v63 = vld [vmem:[%s1 + $0x2c] sm:$0xf]
    %v64 = vld [vmem:[%s1 + $0x30] sm:$0xf]
    %v65 = vld [vmem:[%s1 + $0x34] sm:$0xf]
    %v66 = vld [vmem:[%s1 + $0x38] sm:$0xf]
    %v67 = vld [vmem:[%s1 + $0x3c] sm:$0xf]
    %v68 = vld [vmem:[%s1 + $0x40] sm:$0xf]
    %v69 = vld [vmem:[%s1 + $0x44] sm:$0xf]
    %v70 = vld [vmem:[%s1 + $0x48] sm:$0xf]
    %v71 = vld [vmem:[%s1 + $0x4c] sm:$0xf]
    %v72 = vld [vmem:[%s1 + $0x50] sm:$0xf]
    %v73 = vld [vmem:[%s1 + $0x54] sm:$0xf]
    %v74 = vld [vmem:[%s1 + $0x58] sm:$0xf]
    %v75 = vld [vmem:[%s1 + $0x5c] sm:$0xf]
    %v76 = vld [vmem:[%s1 + $0x60] sm:$0xf]
    %v77 = vld [vmem:[%s1 + $0x64] sm:$0xf]
    %v78 = vld [vmem:[%s1 + $0x68] sm:$0xf]
    %v79 = vld [vmem:[%s1 + $0x6c] sm:$0xf]
    %v80 = vld [vmem:[%s1 + $0x70] sm:$0xf]
    %v81 = vld [vmem:[%s1 + $0x74] sm:$0xf]
    %v82 = vld [vmem:[%s1 + $0x78] sm:$0xf]
    %v83 = vld [vmem:[%s1 + $0x7c] sm:$0xf]
    %v84 = vld [vmem:[%s1 + $0x80] sm:$0xf]
    %v85 = vld [vmem:[%s1 + $0x84] sm:$0xf]
    %v86 = vld [vmem:[%s1 + $0x88] sm:$0xf]
    %v87 = vld [vmem:[%s1 + $0x8c] sm:$0xf]
    %v88 = vld [vmem:[%s1 + $0x90] sm:$0xf]
    %v89 = vld [vmem:[%s1 + $0x94] sm:$0xf]
    %v90 = vld [vmem:[%s1 + $0x98] sm:$0xf]
    %v91 = vld [vmem:[%s1 + $0x9c] sm:$0xf]
    %v92 = vld [vmem:[%s1 + $0xa0] sm:$0xf]
    %v93 = vld [vmem:[%s1 + $0xa4] sm:$0xf]
    %v94 = vld [vmem:[%s1 + $0xa8] sm:$0xf]
    %v95 = vld [vmem:[%s1 + $0xac] sm:$0xf]
    %v96 = vld [vmem:[%s1 + $0xb0] sm:$0xf]
    %v97 = vld [vmem:[%s1 + $0xb4] sm:$0xf]
    %v98 = vld [vmem:[%s1 + $0xb8] sm:$0xf]
    %v99 = vld [vmem:[%s1 + $0xbc] sm:$0xf]
    %v100 = vld [vmem:[%s1 + $0xc0] sm:$0xf]
    %v101 = vld [vmem:[%s1 + $0xc4] sm:$0xf]
    %v102 = vld [vmem:[%s1 + $0xc8] sm:$0xf]
    %v103 = vld [vmem:[%s1 + $0xcc] sm:$0xf]
    %v104 = vld [vmem:[%s1 + $0xd0] sm:$0xf]
    %v105 = vld [vmem:[%s1 + $0xd4] sm:$0xf]
    %v106 = vld [vmem:[%s1 + $0xd8] sm:$0xf]
    %v107 = vld [vmem:[%s1 + $0xdc] sm:$0xf]
    %v108 = vld [vmem:[%s1 + $0xe0] sm:$0xf]
    %v109 = vld [vmem:[%s1 + $0xe4] sm:$0xf]
    %v110 = vld [vmem:[%s1 + $0xe8] sm:$0xf]
    %v111 = vld [vmem:[%s1 + $0xec] sm:$0xf]
    %v112 = vld [vmem:[%s1 + $0xf0] sm:$0xf]
    %v113 = vld [vmem:[%s1 + $0xf4] sm:$0xf]
    %v114 = vld [vmem:[%s1 + $0xf8] sm:$0xf]
    %v115 = vld [vmem:[%s1 + $0xfc] sm:$0xf]
    %v116 = vld [vmem:[%s1 + $0x100] sm:$0xf]
    %v117 = vld [vmem:[%s1 + $0x104] sm:$0xf]
    %v118 = vld [vmem:[%s1 + $0x108] sm:$0xf]
    %v119 = vld [vmem:[%s1 + $0x10c] sm:$0xf]
    %v120 = vld [vmem:[%s1 + $0x110] sm:$0xf]
    %v121 = vld [vmem:[%s1 + $0x114] sm:$0xf]
    %v122 = vld [vmem:[%s1 + $0x118] sm:$0xf]
    %v123 = vld [vmem:[%s1 + $0x11c] sm:$0xf]
    %v124 = vld [vmem:[%s1 + $0x120] sm:$0xf]
    %v125 = vld [vmem:[%s1 + $0x124] sm:$0xf]
    %v126 = vld [vmem:[%s1 + $0x128] sm:$0xf]
    %v127 = vld [vmem:[%s1 + $0x12c] sm:$0xf]
    %v128 = vld [vmem:[%s1 + $0x130] sm:$0xf]
    %v129 = vld [vmem:[%s1 + $0x134] sm:$0xf]
    %v130 = vld [vmem:[%s1 + $0x138] sm:$0xf]
    %v131 = vld [vmem:[%s1 + $0x13c] sm:$0xf]
    %v132 = vld [vmem:[%s1 + $0x140] sm:$0xf]
    %v133 = vld [vmem:[%s1 + $0x144] sm:$0xf]
    %v134 = vld [vmem:[%s1 + $0x148] sm:$0xf]
    %v135 = vld [vmem:[%s1 + $0x14c] sm:$0xf]
    %v136 = vld [vmem:[%s1 + $0x150] sm:$0xf]
    %v137 = vld [vmem:[%s1 + $0x154] sm:$0xf]
    %v138 = vld [vmem:[%s1 + $0x158] sm:$0xf]
    %v139 = vld [vmem:[%s1 + $0x15c] sm:$0xf]
    %v140 = vld [vmem:[%s1 + $0x160] sm:$0xf]
    %v141 = vld [vmem:[%s1 + $0x164] sm:$0xf]
    %v142 = vld [vmem:[%s1 + $0x168] sm:$0xf]
    %v143 = vld [vmem:[%s1 + $0x16c] sm:$0xf]
    %v144 = vld [vmem:[%s1 + $0x170] sm:$0xf]
    %v145 = vld [vmem:[%s1 + $0x174] sm:$0xf]
    %v146 = vld [vmem:[%s1 + $0x178] sm:$0xf]
    %v147 = vld [vmem:[%s1 + $0x17c] sm:$0xf]
    %v148 = vld [vmem:[%s1 + $0x180] sm:$0xf]
    %v149 = vld [vmem:[%s1 + $0x184] sm:$0xf]
    %v150 = vld [vmem:[%s1 + $0x188] sm:$0xf]
    %v151 = vld [vmem:[%s1 + $0x18c] sm:$0xf]
    %v152 = vld [vmem:[%s1 + $0x190] sm:$0xf]
    %v153 = vld [vmem:[%s1 + $0x194] sm:$0xf]
    %v154 = vld [vmem:[%s1 + $0x198] sm:$0xf]
    %v155 = vld [vmem:[%s1 + $0x19c] sm:$0xf]
    %v156 = vld [vmem:[%s1 + $0x1a0] sm:$0xf]
    %v157 = vld [vmem:[%s1 + $0x1a4] sm:$0xf]
    %v158 = vld [vmem:[%s1 + $0x1a8] sm:$0xf]
    %v159 = vld [vmem:[%s1 + $0x1ac] sm:$0xf]
    %v160 = vld [vmem:[%s1 + $0x1b0] sm:$0xf]
    %v161 = vld [vmem:[%s1 + $0x1b4] sm:$0xf]
    %v162 = vld [vmem:[%s1 + $0x1b8] sm:$0xf]
    %v163 = vld [vmem:[%s1 + $0x1bc] sm:$0xf]
    %v164 = vld [vmem:[%s1 + $0x1c0] sm:$0xf]
    %v165 = vld [vmem:[%s1 + $0x1c4] sm:$0xf]
    %v166 = vld [vmem:[%s1 + $0x1c8] sm:$0xf]
    %v167 = vld [vmem:[%s1 + $0x1cc] sm:$0xf]
    %v168 = vld [vmem:[%s1 + $0x1d0] sm:$0xf]
    %v169 = vld [vmem:[%s1 + $0x1d4] sm:$0xf]
    %v170 = vld [vmem:[%s1 + $0x1d8] sm:$0xf]
    %v171 = vld [vmem:[%s1 + $0x1dc] sm:$0xf]
    %v172 = vld [vmem:[%s1 + $0x1e0] sm:$0xf]
    %v173 = vld [vmem:[%s1 + $0x1e4] sm:$0xf]
    %v174 = vld [vmem:[%s1 + $0x1e8] sm:$0xf]
    %v175 = vld [vmem:[%s1 + $0x1ec] sm:$0xf]
    %v176 = vld [vmem:[%s1 + $0x1f0] sm:$0xf]
    %v177 = vld [vmem:[%s1 + $0x1f4] sm:$0xf]
    %v178 = vld [vmem:[%s1 + $0x1f8] sm:$0xf]
    %v179 = vld [vmem:[%s1 + $0x1fc] sm:$0xf]
    %v180 = vld [vmem:[%s1 + $0x200] sm:$0xf]
    %v181 = vld [vmem:[%s1 + $0x204] sm:$0xf]
    %v182 = vld [vmem:[%s1 + $0x208] sm:$0xf]
    %v183 = vld [vmem:[%s1 + $0x20c] sm:$0xf]
    %v184 = vld [vmem:[%s1 + $0x210] sm:$0xf]
    %v185 = vld [vmem:[%s1 + $0x214] sm:$0xf]
    %v186 = vld [vmem:[%s1 + $0x218] sm:$0xf]
    %v187 = vld [vmem:[%s1 + $0x21c] sm:$0xf]
    %v188 = vld [vmem:[%s1 + $0x220] sm:$0xf]
    %v189 = vld [vmem:[%s1 + $0x224] sm:$0xf]
    %v190 = vld [vmem:[%s1 + $0x228] sm:$0xf]
    %v191 = vld [vmem:[%s1 + $0x22c] sm:$0xf]
    %v192 = vld [vmem:[%s1 + $0x230] sm:$0xf]
    %v193 = vld [vmem:[%s1 + $0x234] sm:$0xf]
    %v194 = vld [vmem:[%s1 + $0x238] sm:$0xf]
    %v195 = vld [vmem:[%s1 + $0x23c] sm:$0xf]
    %v216 = vunpack.c.l.b16 %v32
    %v217 = vunpack.c.h.b16 %v32
    %v218 = vunpack.c.l.b16 %v33
    %v219 = vunpack.c.h.b16 %v33
    %v220 = vunpack.c.l.b16 %v34
    %v221 = vunpack.c.h.b16 %v34
    %v222 = vunpack.c.l.b16 %v35
    %v223 = vunpack.c.h.b16 %v35
    %v224 = vunpack.c.l.b16 %v36
    %v225 = vunpack.c.l.b16 %v37
    %v226 = vunpack.c.h.b16 %v37
    %v227 = vunpack.c.l.b16 %v38
    %v228 = vunpack.c.h.b16 %v38
    %v229 = vunpack.c.l.b16 %v39
    %v230 = vunpack.c.h.b16 %v39
    %v231 = vunpack.c.l.b16 %v40
    %v232 = vunpack.c.h.b16 %v40
    %v233 = vunpack.c.l.b16 %v41
    %v234 = vunpack.c.l.b16 %v42
    %v235 = vunpack.c.h.b16 %v42
    %v236 = vunpack.c.l.b16 %v43
    %v237 = vunpack.c.h.b16 %v43
    %v238 = vunpack.c.l.b16 %v44
    %v239 = vunpack.c.h.b16 %v44
    %v240 = vunpack.c.l.b16 %v45
    %v241 = vunpack.c.h.b16 %v45
    %v242 = vunpack.c.l.b16 %v46
    %v243 = vunpack.c.l.b16 %v47
    %v244 = vunpack.c.h.b16 %v47
    %v245 = vunpack.c.l.b16 %v48
    %v246 = vunpack.c.h.b16 %v48
    %v247 = vunpack.c.l.b16 %v49
    %v248 = vunpack.c.h.b16 %v49
    %v249 = vunpack.c.l.b16 %v50
    %v250 = vunpack.c.h.b16 %v50
    %v251 = vunpack.c.l.b16 %v51
    %v252 = vpack.c.b16 %v225, %v216
    %v253 = vpack.c.b16 %v226, %v217
    %v254 = vpack.c.b16 %v227, %v218
    %v255 = vpack.c.b16 %v228, %v219
    %v256 = vpack.c.b16 %v229, %v220
    %v257 = vpack.c.b16 %v230, %v221
    %v258 = vpack.c.b16 %v231, %v222
    %v259 = vpack.c.b16 %v232, %v223
    %v260 = vpack.c.b16 %v233, %v224
    %v261 = vpack.c.b16 %v243, %v234
    %v262 = vpack.c.b16 %v244, %v235
    %v263 = vpack.c.b16 %v245, %v236
    %v264 = vpack.c.b16 %v246, %v237
    %v265 = vpack.c.b16 %v247, %v238
    %v266 = vpack.c.b16 %v248, %v239
    %v267 = vpack.c.b16 %v249, %v240
    %v268 = vpack.c.b16 %v250, %v241
    %v269 = vpack.c.b16 %v251, %v242
    %v432 = vunpack.c.l.b16 %v52
    %v433 = vunpack.c.l.b16 %v53
    %v434 = vunpack.c.l.b16 %v54
    %v435 = vunpack.c.l.b16 %v55
    %v436 = vunpack.c.l.b16 %v56
    %v437 = vunpack.c.l.b16 %v57
    %v438 = vunpack.c.l.b16 %v58
    %v439 = vunpack.c.l.b16 %v59
    %v440 = vunpack.c.l.b16 %v60
    %v441 = vunpack.c.l.b16 %v61
    %v442 = vunpack.c.l.b16 %v62
    %v443 = vunpack.c.l.b16 %v63
    %v444 = vunpack.c.l.b16 %v64
    %v445 = vunpack.c.l.b16 %v65
    %v446 = vunpack.c.l.b16 %v66
    %v447 = vunpack.c.l.b16 %v67
    %v448 = vunpack.c.l.b16 %v68
    %v449 = vunpack.c.l.b16 %v69
    %v450 = vunpack.c.l.b16 %v70
    %v451 = vunpack.c.l.b16 %v71
    %v452 = vunpack.c.l.b16 %v72
    %v453 = vunpack.c.l.b16 %v73
    %v454 = vunpack.c.l.b16 %v74
    %v455 = vunpack.c.l.b16 %v75
    %v456 = vunpack.c.l.b16 %v76
    %v457 = vunpack.c.l.b16 %v77
    %v458 = vunpack.c.l.b16 %v78
    %v459 = vunpack.c.l.b16 %v79
    %v460 = vunpack.c.l.b16 %v80
    %v461 = vunpack.c.l.b16 %v81
    %v462 = vunpack.c.l.b16 %v82
    %v463 = vunpack.c.l.b16 %v83
    %v464 = vunpack.c.l.b16 %v84
    %v465 = vunpack.c.l.b16 %v85
    %v466 = vunpack.c.l.b16 %v86
    %v467 = vunpack.c.l.b16 %v87
    %v468 = vunpack.c.l.b16 %v88
    %v469 = vunpack.c.l.b16 %v89
    %v470 = vunpack.c.l.b16 %v90
    %v471 = vunpack.c.l.b16 %v91
    %v472 = vunpack.c.l.b16 %v92
    %v473 = vunpack.c.l.b16 %v93
    %v474 = vunpack.c.l.b16 %v94
    %v475 = vunpack.c.l.b16 %v95
    %v476 = vunpack.c.l.b16 %v96
    %v477 = vunpack.c.l.b16 %v97
    %v478 = vunpack.c.l.b16 %v98
    %v479 = vunpack.c.l.b16 %v99
    %v480 = vunpack.c.l.b16 %v100
    %v481 = vunpack.c.l.b16 %v101
    %v482 = vunpack.c.l.b16 %v102
    %v483 = vunpack.c.l.b16 %v103
    %v484 = vunpack.c.l.b16 %v104
    %v485 = vunpack.c.l.b16 %v105
    %v486 = vunpack.c.l.b16 %v106
    %v487 = vunpack.c.l.b16 %v107
    %v488 = vunpack.c.l.b16 %v108
    %v489 = vunpack.c.l.b16 %v109
    %v490 = vunpack.c.l.b16 %v110
    %v491 = vunpack.c.l.b16 %v111
    %v492 = vunpack.c.l.b16 %v112
    %v493 = vunpack.c.l.b16 %v113
    %v494 = vunpack.c.l.b16 %v114
    %v495 = vunpack.c.l.b16 %v115
    %v496 = vunpack.c.l.b16 %v116
    %v497 = vunpack.c.l.b16 %v117
    %v498 = vunpack.c.l.b16 %v118
    %v499 = vunpack.c.l.b16 %v119
    %v500 = vunpack.c.l.b16 %v120
    %v501 = vunpack.c.l.b16 %v121
    %v502 = vunpack.c.l.b16 %v122
    %v503 = vunpack.c.l.b16 %v123
    %v504 = vunpack.c.l.b16 %v124
    %v505 = vunpack.c.l.b16 %v125
    %v506 = vunpack.c.l.b16 %v126
    %v507 = vunpack.c.l.b16 %v127
    %v508 = vunpack.c.l.b16 %v128
    %v509 = vunpack.c.l.b16 %v129
    %v510 = vunpack.c.l.b16 %v130
    %v511 = vunpack.c.l.b16 %v131
    %v512 = vunpack.c.l.b16 %v132
    %v513 = vunpack.c.l.b16 %v133
    %v514 = vunpack.c.l.b16 %v134
    %v515 = vunpack.c.l.b16 %v135
    %v516 = vunpack.c.l.b16 %v136
    %v517 = vunpack.c.l.b16 %v137
    %v518 = vunpack.c.l.b16 %v138
    %v519 = vunpack.c.l.b16 %v139
    %v520 = vunpack.c.l.b16 %v140
    %v521 = vunpack.c.l.b16 %v141
    %v522 = vunpack.c.l.b16 %v142
    %v523 = vunpack.c.l.b16 %v143
    %v524 = vunpack.c.l.b16 %v144
    %v525 = vunpack.c.l.b16 %v145
    %v526 = vunpack.c.l.b16 %v146
    %v527 = vunpack.c.l.b16 %v147
    %v528 = vunpack.c.l.b16 %v148
    %v529 = vunpack.c.l.b16 %v149
    %v530 = vunpack.c.l.b16 %v150
    %v531 = vunpack.c.l.b16 %v151
    %v532 = vunpack.c.l.b16 %v152
    %v533 = vunpack.c.l.b16 %v153
    %v534 = vunpack.c.l.b16 %v154
    %v535 = vunpack.c.l.b16 %v155
    %v536 = vunpack.c.l.b16 %v156
    %v537 = vunpack.c.l.b16 %v157
    %v538 = vunpack.c.l.b16 %v158
    %v539 = vunpack.c.l.b16 %v159
    %v540 = vunpack.c.l.b16 %v160
    %v541 = vunpack.c.l.b16 %v161
    %v542 = vunpack.c.l.b16 %v162
    %v543 = vunpack.c.l.b16 %v163
    %v544 = vunpack.c.l.b16 %v164
    %v545 = vunpack.c.l.b16 %v165
    %v546 = vunpack.c.l.b16 %v166
    %v547 = vunpack.c.l.b16 %v167
    %v548 = vunpack.c.l.b16 %v168
    %v549 = vunpack.c.l.b16 %v169
    %v550 = vunpack.c.l.b16 %v170
    %v551 = vunpack.c.l.b16 %v171
    %v552 = vunpack.c.l.b16 %v172
    %v553 = vunpack.c.l.b16 %v173
    %v554 = vunpack.c.l.b16 %v174
    %v555 = vunpack.c.l.b16 %v175
    %v556 = vunpack.c.l.b16 %v176
    %v557 = vunpack.c.l.b16 %v177
    %v558 = vunpack.c.l.b16 %v178
    %v559 = vunpack.c.l.b16 %v179
    %v560 = vunpack.c.l.b16 %v180
    %v561 = vunpack.c.l.b16 %v181
    %v562 = vunpack.c.l.b16 %v182
    %v563 = vunpack.c.l.b16 %v183
    %v564 = vunpack.c.l.b16 %v184
    %v565 = vunpack.c.l.b16 %v185
    %v566 = vunpack.c.l.b16 %v186
    %v567 = vunpack.c.l.b16 %v187
    %v568 = vunpack.c.l.b16 %v188
    %v569 = vunpack.c.l.b16 %v189
    %v570 = vunpack.c.l.b16 %v190
    %v571 = vunpack.c.l.b16 %v191
    %v572 = vunpack.c.l.b16 %v192
    %v573 = vunpack.c.l.b16 %v193
    %v574 = vunpack.c.l.b16 %v194
    %v575 = vunpack.c.l.b16 %v195
    %v576 = vpack.c.b16 %v433, %v432
    %v577 = vpack.c.b16 %v435, %v434
    %v578 = vpack.c.b16 %v437, %v436
    %v579 = vpack.c.b16 %v439, %v438
    %v580 = vpack.c.b16 %v441, %v440
    %v581 = vpack.c.b16 %v443, %v442
    %v582 = vpack.c.b16 %v445, %v444
    %v583 = vpack.c.b16 %v447, %v446
    %v584 = vpack.c.b16 %v449, %v448
    %v585 = vpack.c.b16 %v451, %v450
    %v586 = vpack.c.b16 %v453, %v452
    %v587 = vpack.c.b16 %v455, %v454
    %v588 = vpack.c.b16 %v457, %v456
    %v589 = vpack.c.b16 %v459, %v458
    %v590 = vpack.c.b16 %v461, %v460
    %v591 = vpack.c.b16 %v463, %v462
    %v592 = vpack.c.b16 %v465, %v464
    %v593 = vpack.c.b16 %v467, %v466
    %v594 = vpack.c.b16 %v469, %v468
    %v595 = vpack.c.b16 %v471, %v470
    %v596 = vpack.c.b16 %v473, %v472
    %v597 = vpack.c.b16 %v475, %v474
    %v598 = vpack.c.b16 %v477, %v476
    %v599 = vpack.c.b16 %v479, %v478
    %v600 = vpack.c.b16 %v481, %v480
    %v601 = vpack.c.b16 %v483, %v482
    %v602 = vpack.c.b16 %v485, %v484
    %v603 = vpack.c.b16 %v487, %v486
    %v604 = vpack.c.b16 %v489, %v488
    %v605 = vpack.c.b16 %v491, %v490
    %v606 = vpack.c.b16 %v493, %v492
    %v607 = vpack.c.b16 %v495, %v494
    %v608 = vpack.c.b16 %v497, %v496
    %v609 = vpack.c.b16 %v499, %v498
    %v610 = vpack.c.b16 %v501, %v500
    %v611 = vpack.c.b16 %v503, %v502
    %v612 = vpack.c.b16 %v505, %v504
    %v613 = vpack.c.b16 %v507, %v506
    %v614 = vpack.c.b16 %v509, %v508
    %v615 = vpack.c.b16 %v511, %v510
    %v616 = vpack.c.b16 %v513, %v512
    %v617 = vpack.c.b16 %v515, %v514
    %v618 = vpack.c.b16 %v517, %v516
    %v619 = vpack.c.b16 %v519, %v518
    %v620 = vpack.c.b16 %v521, %v520
    %v621 = vpack.c.b16 %v523, %v522
    %v622 = vpack.c.b16 %v525, %v524
    %v623 = vpack.c.b16 %v527, %v526
    %v624 = vpack.c.b16 %v529, %v528
    %v625 = vpack.c.b16 %v531, %v530
    %v626 = vpack.c.b16 %v533, %v532
    %v627 = vpack.c.b16 %v535, %v534
    %v628 = vpack.c.b16 %v537, %v536
    %v629 = vpack.c.b16 %v539, %v538
    %v630 = vpack.c.b16 %v541, %v540
    %v631 = vpack.c.b16 %v543, %v542
    %v632 = vpack.c.b16 %v545, %v544
    %v633 = vpack.c.b16 %v547, %v546
    %v634 = vpack.c.b16 %v549, %v548
    %v635 = vpack.c.b16 %v551, %v550
    %v636 = vpack.c.b16 %v553, %v552
    %v637 = vpack.c.b16 %v555, %v554
    %v638 = vpack.c.b16 %v557, %v556
    %v639 = vpack.c.b16 %v559, %v558
    %v640 = vpack.c.b16 %v561, %v560
    %v641 = vpack.c.b16 %v563, %v562
    %v642 = vpack.c.b16 %v565, %v564
    %v643 = vpack.c.b16 %v567, %v566
    %v644 = vpack.c.b16 %v569, %v568
    %v645 = vpack.c.b16 %v571, %v570
    %v646 = vpack.c.b16 %v573, %v572
    %v647 = vpack.c.b16 %v575, %v574
    %720 = vmatprep.subr.bf16.mxu0 0
    %721 = vmatpush1.bf16.msra.mxu0 %v576
    %722 = vmatprep.subr.bf16.mxu0 0
    %723 = vmatpush1.bf16.msra.mxu0 %v577
    %724 = vmatprep.subr.bf16.mxu0 0
    %725 = vmatpush1.bf16.msra.mxu0 %v578
    %726 = vmatprep.subr.bf16.mxu0 0
    %727 = vmatpush1.bf16.msra.mxu0 %v579
    %728 = vmatprep.subr.bf16.mxu0 0
    %729 = vmatpush1.bf16.msra.mxu0 %v580
    %730 = vmatprep.subr.bf16.mxu0 0
    %731 = vmatpush1.bf16.msra.mxu0 %v581
    %732 = vmatprep.subr.bf16.mxu0 0
    %733 = vmatpush1.bf16.msra.mxu0 %v582
    %734 = vmatprep.subr.bf16.mxu0 0
    %735 = vmatpush1.bf16.msra.mxu0 %v583
    %736 = vmatprep.subr.bf16.mxu0 0
    %737 = vmatpush1.bf16.msra.mxu0 %v584
    %738 = vmatprep.subr.bf16.mxu0 0
    %739 = vmatpush1.bf16.msra.mxu0 %v585
    %740 = vmatprep.subr.bf16.mxu0 0
    %741 = vmatpush1.bf16.msra.mxu0 %v586
    %742 = vmatprep.subr.bf16.mxu0 0
    %743 = vmatpush1.bf16.msra.mxu0 %v587
    %744 = vmatprep.subr.bf16.mxu0 0
    %745 = vmatpush1.bf16.msra.mxu0 %v588
    %746 = vmatprep.subr.bf16.mxu0 0
    %747 = vmatpush1.bf16.msra.mxu0 %v589
    %748 = vmatprep.subr.bf16.mxu0 0
    %749 = vmatpush1.bf16.msra.mxu0 %v590
    %750 = vmatprep.subr.bf16.mxu0 0
    %751 = vmatpush1.bf16.msra.mxu0 %v591
    %752 = vmatprep.mubr.bf16.mxu0 %v253
    %753 = vmatmul.mubr.bf16.gmra.mrb[0].mxu0 %v252
    %v754 = vpop.f32.mrb[0].mxu0
    %v755 = vadd.f32 0.0, %v754
    %v756 = vpop.f32.mrb[0].mxu0
    %v757 = vpop.f32.mrb[0].mxu0
    %v758 = vadd.f32 0.0, %v757
    %v759 = vpop.f32.mrb[0].mxu0
    %760 = vmatprep.mubr.bf16.mxu0 %v262
    %761 = vmatmul.mubr.bf16.gmra.mrb[0].mxu0 %v261
    %v762 = vpop.f32.mrb[0].mxu0
    %v763 = vadd.f32 0.0, %v762
    %v764 = vpop.f32.mrb[0].mxu0
    %v765 = vpop.f32.mrb[0].mxu0
    %v766 = vadd.f32 0.0, %v765
    %v767 = vpop.f32.mrb[0].mxu0
    %768 = vdwg.mxu0
    %769 = vmatprep.subr.bf16.mxu0 0
    %770 = vmatpush1.bf16.msra.mxu0 %v592
    %771 = vmatprep.subr.bf16.mxu0 0
    %772 = vmatpush1.bf16.msra.mxu0 %v593
    %773 = vmatprep.subr.bf16.mxu0 0
    %774 = vmatpush1.bf16.msra.mxu0 %v594
    %775 = vmatprep.subr.bf16.mxu0 0
    %776 = vmatpush1.bf16.msra.mxu0 %v595
    %777 = vmatprep.subr.bf16.mxu0 0
    %778 = vmatpush1.bf16.msra.mxu0 %v596
    %779 = vmatprep.subr.bf16.mxu0 0
    %780 = vmatpush1.bf16.msra.mxu0 %v597
    %781 = vmatprep.subr.bf16.mxu0 0
    %782 = vmatpush1.bf16.msra.mxu0 %v598
    %783 = vmatprep.subr.bf16.mxu0 0
    %784 = vmatpush1.bf16.msra.mxu0 %v599
    %785 = vmatprep.subr.bf16.mxu0 0
    %786 = vmatpush1.bf16.msra.mxu0 %v600
    %787 = vmatprep.subr.bf16.mxu0 0
    %788 = vmatpush1.bf16.msra.mxu0 %v601
    %789 = vmatprep.subr.bf16.mxu0 0
    %790 = vmatpush1.bf16.msra.mxu0 %v602
    %791 = vmatprep.subr.bf16.mxu0 0
    %792 = vmatpush1.bf16.msra.mxu0 %v603
    %793 = vmatprep.subr.bf16.mxu0 0
    %794 = vmatpush1.bf16.msra.mxu0 %v604
    %795 = vmatprep.subr.bf16.mxu0 0
    %796 = vmatpush1.bf16.msra.mxu0 %v605
    %797 = vmatprep.subr.bf16.mxu0 0
    %798 = vmatpush1.bf16.msra.mxu0 %v606
    %799 = vmatprep.subr.bf16.mxu0 0
    %800 = vmatpush1.bf16.msra.mxu0 %v607
    %801 = vmatprep.mubr.bf16.mxu0 %v255
    %802 = vmatmul.mubr.bf16.gmra.mrb[0].mxu0 %v254
    %v803 = vpop.f32.mrb[0].mxu0
    %v804 = vadd.f32 %v755, %v803
    %v805 = vpop.f32.mrb[0].mxu0
    %v806 = vpop.f32.mrb[0].mxu0
    %v807 = vadd.f32 %v758, %v806
    %v808 = vpop.f32.mrb[0].mxu0
    %809 = vmatprep.mubr.bf16.mxu0 %v264
    %810 = vmatmul.mubr.bf16.gmra.mrb[0].mxu0 %v263
    %v811 = vpop.f32.mrb[0].mxu0
    %v812 = vadd.f32 %v763, %v811
    %v813 = vpop.f32.mrb[0].mxu0
    %v814 = vpop.f32.mrb[0].mxu0
    %v815 = vadd.f32 %v766, %v814
    %v816 = vpop.f32.mrb[0].mxu0
    %817 = vdwg.mxu0
    %818 = vmatprep.subr.bf16.mxu0 0
    %819 = vmatpush1.bf16.msra.mxu0 %v608
    %820 = vmatprep.subr.bf16.mxu0 0
    %821 = vmatpush1.bf16.msra.mxu0 %v609
    %822 = vmatprep.subr.bf16.mxu0 0
    %823 = vmatpush1.bf16.msra.mxu0 %v610
    %824 = vmatprep.subr.bf16.mxu0 0
    %825 = vmatpush1.bf16.msra.mxu0 %v611
    %826 = vmatprep.subr.bf16.mxu0 0
    %827 = vmatpush1.bf16.msra.mxu0 %v612
    %828 = vmatprep.subr.bf16.mxu0 0
    %829 = vmatpush1.bf16.msra.mxu0 %v613
    %830 = vmatprep.subr.bf16.mxu0 0
    %831 = vmatpush1.bf16.msra.mxu0 %v614
    %832 = vmatprep.subr.bf16.mxu0 0
    %833 = vmatpush1.bf16.msra.mxu0 %v615
    %834 = vmatprep.subr.bf16.mxu0 0
    %835 = vmatpush1.bf16.msra.mxu0 %v616
    %836 = vmatprep.subr.bf16.mxu0 0
    %837 = vmatpush1.bf16.msra.mxu0 %v617
    %838 = vmatprep.subr.bf16.mxu0 0
    %839 = vmatpush1.bf16.msra.mxu0 %v618
    %840 = vmatprep.subr.bf16.mxu0 0
    %841 = vmatpush1.bf16.msra.mxu0 %v619
    %842 = vmatprep.subr.bf16.mxu0 0
    %843 = vmatpush1.bf16.msra.mxu0 %v620
    %844 = vmatprep.subr.bf16.mxu0 0
    %845 = vmatpush1.bf16.msra.mxu0 %v621
    %846 = vmatprep.subr.bf16.mxu0 0
    %847 = vmatpush1.bf16.msra.mxu0 %v622
    %848 = vmatprep.subr.bf16.mxu0 0
    %849 = vmatpush1.bf16.msra.mxu0 %v623
    %850 = vmatprep.mubr.bf16.mxu0 %v257
    %851 = vmatmul.mubr.bf16.gmra.mrb[0].mxu0 %v256
    %v852 = vpop.f32.mrb[0].mxu0
    %v853 = vadd.f32 %v804, %v852
    %v854 = vpop.f32.mrb[0].mxu0
    %v855 = vpop.f32.mrb[0].mxu0
    %v856 = vadd.f32 %v807, %v855
    %v857 = vpop.f32.mrb[0].mxu0
    %858 = vmatprep.mubr.bf16.mxu0 %v266
    %859 = vmatmul.mubr.bf16.gmra.mrb[0].mxu0 %v265
    %v860 = vpop.f32.mrb[0].mxu0
    %v861 = vadd.f32 %v812, %v860
    %v862 = vpop.f32.mrb[0].mxu0
    %v863 = vpop.f32.mrb[0].mxu0
    %v864 = vadd.f32 %v815, %v863
    %v865 = vpop.f32.mrb[0].mxu0
    %866 = vdwg.mxu0
    %867 = vmatprep.subr.bf16.mxu0 0
    %868 = vmatpush1.bf16.msra.mxu0 %v624
    %869 = vmatprep.subr.bf16.mxu0 0
    %870 = vmatpush1.bf16.msra.mxu0 %v625
    %871 = vmatprep.subr.bf16.mxu0 0
    %872 = vmatpush1.bf16.msra.mxu0 %v626
    %873 = vmatprep.subr.bf16.mxu0 0
    %874 = vmatpush1.bf16.msra.mxu0 %v627
    %875 = vmatprep.subr.bf16.mxu0 0
    %876 = vmatpush1.bf16.msra.mxu0 %v628
    %877 = vmatprep.subr.bf16.mxu0 0
    %878 = vmatpush1.bf16.msra.mxu0 %v629
    %879 = vmatprep.subr.bf16.mxu0 0
    %880 = vmatpush1.bf16.msra.mxu0 %v630
    %881 = vmatprep.subr.bf16.mxu0 0
    %882 = vmatpush1.bf16.msra.mxu0 %v631
    %883 = vmatprep.subr.bf16.mxu0 0
    %884 = vmatpush1.bf16.msra.mxu0 %v632
    %885 = vmatprep.subr.bf16.mxu0 0
    %886 = vmatpush1.bf16.msra.mxu0 %v633
    %887 = vmatprep.subr.bf16.mxu0 0
    %888 = vmatpush1.bf16.msra.mxu0 %v634
    %889 = vmatprep.subr.bf16.mxu0 0
    %890 = vmatpush1.bf16.msra.mxu0 %v635
    %891 = vmatprep.subr.bf16.mxu0 0
    %892 = vmatpush1.bf16.msra.mxu0 %v636
    %893 = vmatprep.subr.bf16.mxu0 0
    %894 = vmatpush1.bf16.msra.mxu0 %v637
    %895 = vmatprep.subr.bf16.mxu0 0
    %896 = vmatpush1.bf16.msra.mxu0 %v638
    %897 = vmatprep.subr.bf16.mxu0 0
    %898 = vmatpush1.bf16.msra.mxu0 %v639
    %899 = vmatprep.mubr.bf16.mxu0 %v259
    %900 = vmatmul.mubr.bf16.gmra.mrb[0].mxu0 %v258
    %v901 = vpop.f32.mrb[0].mxu0
    %v902 = vadd.f32 %v853, %v901
    %v903 = vpop.f32.mrb[0].mxu0
    %v904 = vpop.f32.mrb[0].mxu0
    %v905 = vadd.f32 %v856, %v904
    %v906 = vpop.f32.mrb[0].mxu0
    %907 = vmatprep.mubr.bf16.mxu0 %v268
    %908 = vmatmul.mubr.bf16.gmra.mrb[0].mxu0 %v267
    %v909 = vpop.f32.mrb[0].mxu0
    %v910 = vadd.f32 %v861, %v909
    %v911 = vpop.f32.mrb[0].mxu0
    %v912 = vpop.f32.mrb[0].mxu0
    %v913 = vadd.f32 %v864, %v912
    %v914 = vpop.f32.mrb[0].mxu0
    %915 = vdwg.mxu0
    %916 = vmatprep.subr.bf16.mxu0 0
    %917 = vmatpush1.bf16.msra.mxu0 %v640
    %918 = vmatprep.subr.bf16.mxu0 0
    %919 = vmatpush1.bf16.msra.mxu0 %v641
    %920 = vmatprep.subr.bf16.mxu0 0
    %921 = vmatpush1.bf16.msra.mxu0 %v642
    %922 = vmatprep.subr.bf16.mxu0 0
    %923 = vmatpush1.bf16.msra.mxu0 %v643
    %924 = vmatprep.subr.bf16.mxu0 0
    %925 = vmatpush1.bf16.msra.mxu0 %v644
    %926 = vmatprep.subr.bf16.mxu0 0
    %927 = vmatpush1.bf16.msra.mxu0 %v645
    %928 = vmatprep.subr.bf16.mxu0 0
    %929 = vmatpush1.bf16.msra.mxu0 %v646
    %930 = vmatprep.subr.bf16.mxu0 0
    %931 = vmatpush1.bf16.msra.mxu0 %v647
    %932 = vmatprep.subr.bf16.mxu0 0
    %933 = vmatpush1.bf16.msra.mxu0 0
    %934 = vmatprep.subr.bf16.mxu0 0
    %935 = vmatpush1.bf16.msra.mxu0 0
    %936 = vmatprep.subr.bf16.mxu0 0
    %937 = vmatpush1.bf16.msra.mxu0 0
    %938 = vmatprep.subr.bf16.mxu0 0
    %939 = vmatpush1.bf16.msra.mxu0 0
    %940 = vmatprep.subr.bf16.mxu0 0
    %941 = vmatpush1.bf16.msra.mxu0 0
    %942 = vmatprep.subr.bf16.mxu0 0
    %943 = vmatpush1.bf16.msra.mxu0 0
    %944 = vmatprep.subr.bf16.mxu0 0
    %945 = vmatpush1.bf16.msra.mxu0 0
    %946 = vmatprep.subr.bf16.mxu0 0
    %947 = vmatpush1.bf16.msra.mxu0 0
    %948 = vmatprep.mubr.bf16.mxu0 0
    %949 = vmatmul.mubr.bf16.gmra.mrb[0].mxu0 %v260
    %v950 = vpop.f32.mrb[0].mxu0
    %v951 = vadd.f32 %v902, %v950
    %v952 = vpop.f32.mrb[0].mxu0
    %v953 = vpop.f32.mrb[0].mxu0
    %v954 = vadd.f32 %v905, %v953
    %v955 = vpop.f32.mrb[0].mxu0
    %956 = vmatprep.mubr.bf16.mxu0 0
    %957 = vmatmul.mubr.bf16.gmra.mrb[0].mxu0 %v269
    %v958 = vpop.f32.mrb[0].mxu0
    %v959 = vadd.f32 %v910, %v958
    %v960 = vpop.f32.mrb[0].mxu0
    %v961 = vpop.f32.mrb[0].mxu0
    %v962 = vadd.f32 %v913, %v961
    %v963 = vpop.f32.mrb[0].mxu0
    %964 = vdwg.mxu0
    %v965 = vmax.f32 %v951, 0.0
    %v966 = vmax.f32 %v954, 0.0
    %v967 = vmax.f32 %v959, 0.0
    %v968 = vmax.f32 %v962, 0.0
    %v969 = vpack.c.bf16 %v966, %v965
    %v970 = vpack.c.bf16 %v968, %v967
    %v971 = vld [vmem:[%s2] sm:$0xf]
    %v972 = vld [vmem:[%s2 + $0x4] sm:$0xf]
    %v973 = vld [vmem:[%s2 + $0x8] sm:$0xf]
    %v974 = vld [vmem:[%s2 + $0xc] sm:$0xf]
    %v975 = vld [vmem:[%s2 + $0x10] sm:$0xf]
    %v976 = vld [vmem:[%s2 + $0x14] sm:$0xf]
    %v977 = vld [vmem:[%s2 + $0x18] sm:$0xf]
    %v978 = vld [vmem:[%s2 + $0x1c] sm:$0xf]
    %v979 = vld [vmem:[%s2 + $0x20] sm:$0xf]
    %v980 = vld [vmem:[%s2 + $0x24] sm:$0xf]
    %v981 = vld [vmem:[%s2 + $0x28] sm:$0xf]
    %v982 = vld [vmem:[%s2 + $0x2c] sm:$0xf]
    %v983 = vld [vmem:[%s2 + $0x30] sm:$0xf]
    %v984 = vld [vmem:[%s2 + $0x34] sm:$0xf]
    %v985 = vld [vmem:[%s2 + $0x38] sm:$0xf]
    %v986 = vld [vmem:[%s2 + $0x3c] sm:$0xf]
    %v987 = vld [vmem:[%s3] sm:$0xf]
    %v988 = vld [vmem:[%s3 + $0x4] sm:$0xf]
    %v989 = vld [vmem:[%s3 + $0x8] sm:$0xf]
    %v990 = vld [vmem:[%s3 + $0xc] sm:$0xf]
    %v991 = vunpack.c.l.bf16 %v987
    %v992 = vunpack.c.l.bf16 %v988
    %v993 = vunpack.c.l.bf16 %v989
    %v994 = vunpack.c.l.bf16 %v990
    %v1011 = vunpack.c.l.b16 %v971
    %v1012 = vunpack.c.l.b16 %v972
    %v1013 = vunpack.c.l.b16 %v973
    %v1014 = vunpack.c.l.b16 %v974
    %v1015 = vunpack.c.l.b16 %v975
    %v1016 = vunpack.c.l.b16 %v976
    %v1017 = vunpack.c.l.b16 %v977
    %v1018 = vunpack.c.l.b16 %v978
    %v1019 = vunpack.c.l.b16 %v979
    %v1020 = vunpack.c.l.b16 %v980
    %v1021 = vunpack.c.l.b16 %v981
    %v1022 = vunpack.c.l.b16 %v982
    %v1023 = vunpack.c.l.b16 %v983
    %v1024 = vunpack.c.l.b16 %v984
    %v1025 = vunpack.c.l.b16 %v985
    %v1026 = vunpack.c.l.b16 %v986
    %v1027 = vpack.c.b16 %v1012, %v1011
    %v1028 = vpack.c.b16 %v1014, %v1013
    %v1029 = vpack.c.b16 %v1016, %v1015
    %v1030 = vpack.c.b16 %v1018, %v1017
    %v1031 = vpack.c.b16 %v1020, %v1019
    %v1032 = vpack.c.b16 %v1022, %v1021
    %v1033 = vpack.c.b16 %v1024, %v1023
    %v1034 = vpack.c.b16 %v1026, %v1025
    %1043 = vmatprep.subr.bf16.mxu0 0
    %1044 = vmatpush1.bf16.msra.mxu0 %v1027
    %1045 = vmatprep.subr.bf16.mxu0 0
    %1046 = vmatpush1.bf16.msra.mxu0 %v1028
    %1047 = vmatprep.subr.bf16.mxu0 0
    %1048 = vmatpush1.bf16.msra.mxu0 %v1029
    %1049 = vmatprep.subr.bf16.mxu0 0
    %1050 = vmatpush1.bf16.msra.mxu0 %v1030
    %1051 = vmatprep.subr.bf16.mxu0 0
    %1052 = vmatpush1.bf16.msra.mxu0 %v1031
    %1053 = vmatprep.subr.bf16.mxu0 0
    %1054 = vmatpush1.bf16.msra.mxu0 %v1032
    %1055 = vmatprep.subr.bf16.mxu0 0
    %1056 = vmatpush1.bf16.msra.mxu0 %v1033
    %1057 = vmatprep.subr.bf16.mxu0 0
    %1058 = vmatpush1.bf16.msra.mxu0 %v1034
    %1059 = vmatprep.subr.bf16.mxu0 0
    %1060 = vmatpush1.bf16.msra.mxu0 0
    %1061 = vmatprep.subr.bf16.mxu0 0
    %1062 = vmatpush1.bf16.msra.mxu0 0
    %1063 = vmatprep.subr.bf16.mxu0 0
    %1064 = vmatpush1.bf16.msra.mxu0 0
    %1065 = vmatprep.subr.bf16.mxu0 0
    %1066 = vmatpush1.bf16.msra.mxu0 0
    %1067 = vmatprep.subr.bf16.mxu0 0
    %1068 = vmatpush1.bf16.msra.mxu0 0
    %1069 = vmatprep.subr.bf16.mxu0 0
    %1070 = vmatpush1.bf16.msra.mxu0 0
    %1071 = vmatprep.subr.bf16.mxu0 0
    %1072 = vmatpush1.bf16.msra.mxu0 0
    %1073 = vmatprep.subr.bf16.mxu0 0
    %1074 = vmatpush1.bf16.msra.mxu0 0
    %1075 = vmatprep.mubr.bf16.mxu0 0
    %1076 = vmatmul.mubr.bf16.gmra.mrb[0].mxu0 %v969
    %v1077 = vpop.f32.mrb[0].mxu0
    %v1078 = vadd.f32 %v991, %v1077
    %v1079 = vpop.f32.mrb[0].mxu0
    %v1080 = vpop.f32.mrb[0].mxu0
    %v1081 = vadd.f32 %v992, %v1080
    %v1082 = vpop.f32.mrb[0].mxu0
    %1083 = vmatprep.mubr.bf16.mxu0 0
    %1084 = vmatmul.mubr.bf16.gmra.mrb[0].mxu0 %v970
    %v1085 = vpop.f32.mrb[0].mxu0
    %v1086 = vadd.f32 %v993, %v1085
    %v1087 = vpop.f32.mrb[0].mxu0
    %v1088 = vpop.f32.mrb[0].mxu0
    %v1089 = vadd.f32 %v994, %v1088
    %v1090 = vpop.f32.mrb[0].mxu0
    %1091 = vdwg.mxu0
    %v1092 = vpack.c.bf16 %v1081, %v1078
    %v1093 = vpack.c.bf16 %v1089, %v1086
    %v1096 = vunpack.c.l.b16 %v1092
    %v1097 = vunpack.c.h.b16 %v1092
    %v1098 = vunpack.c.l.b16 %v1093
    %v1099 = vunpack.c.h.b16 %v1093
    %v1100 = vpack.c.b16 %v1096, %v1096
    %v1101 = vpack.c.b16 %v1097, %v1097
    %v1102 = vpack.c.b16 %v1098, %v1098
    %v1103 = vpack.c.b16 %v1099, %v1099
    %1108 = vst [vmem:[%s4] sm:$0xf] %v1100
    %1109 = vst [vmem:[%s4 + $0x4] sm:$0xf] %v1101
    %1110 = vst [vmem:[%s4 + $0x8] sm:$0xf] %v1102
    %1111 = vst [vmem:[%s4 + $0xc] sm:$0xf] %v1103
    // Predicated region
    $region22: #{_lambda_.21} parent=1 // pred_check
      _
    $region23: #{_lambda_.21} parent=1 // pred_check_branch
      %1113 = sbr.rel (0) target = $region25
    $region24: #{_lambda_.21} parent=1 // pred_region
      _
    $region25: #{_lambda_.21} parent=1 // pred_fallthru
      _
    // Predicated region
    $region26: #{_lambda_.21} parent=1 // pred_check
      _
    $region27: #{_lambda_.21} parent=1 // pred_check_branch
      %1115 = sbr.rel (0) target = $region29
    $region28: #{_lambda_.21} parent=1 // pred_region
      _
    $region29: #{_lambda_.21} parent=1 // pred_fallthru
      _
    %1116 = vsyncpa [#allocation3], 1

// kernel: _lambda_.27
$region0: #{_lambda_.27}
  #allocation0 [shape = 'u32[]', space=smem, size = 0x4, offset = 0x4, fixed_abs, tag = 'smem constant byte address 0x4 - core index']
  #allocation1 [shape = 'u32[144,128]{1,0:T(1,128)}', space=vmem, size = 0x12000, scoped, tag = 'internal scratch']
  %s0 = inlined_call_operand.vmem [shape: bf16[32,128], index: 0, kind: input, shape index: {}]
  %s1 = inlined_call_operand.vmem [shape: bf16[128,128], index: 1, kind: input, shape index: {}]
  %s2 = inlined_call_operand.vmem [shape: f32[1,128], index: 2, kind: input, shape index: {}]
  %s3 = inlined_call_operand.vmem [shape: bf16[32,128], index: 3, kind: output, shape index: {}]
  %s4 = sld [smem:[#allocation0]]
  $region22: #{_lambda_.27} parent=0
    _
  %s6 = ssub.s32 1, %s4
  %s7 = scalar_select 0, %s6, %s4
  // Predicated region
  $region2: #{_lambda_.27} parent=0 // pred_check
    _
  $region3: #{_lambda_.27} parent=0 // pred_check_branch
    %9 = sbr.rel (0) target = $region5
  $region4: #{_lambda_.27} parent=0 // pred_region
    _
  $region5: #{_lambda_.27} parent=0 // pred_fallthru
    _
  // Predicated region
  $region6: #{_lambda_.27} parent=0 // pred_check
    _
  $region7: #{_lambda_.27} parent=0 // pred_check_branch
    %11 = sbr.rel (0) target = $region9
  $region8: #{_lambda_.27} parent=0 // pred_region
    _
  $region9: #{_lambda_.27} parent=0 // pred_fallthru
    _
  // Predicated region
  $region10: #{_lambda_.27} parent=0 // pred_check
    _
  $region11: #{_lambda_.27} parent=0 // pred_check_branch
    %13 = sbr.rel (0) target = $region13
  $region12: #{_lambda_.27} parent=0 // pred_region
    _
  $region13: #{_lambda_.27} parent=0 // pred_fallthru
    _
  %v15 = vld [vmem:[%s0] sm:$0xf]
  %v16 = vld [vmem:[%s0 + $0x4] sm:$0xf]
  %v17 = vld [vmem:[%s0 + $0x8] sm:$0xf]
  %v18 = vld [vmem:[%s0 + $0xc] sm:$0xf]
  %v19 = vunpack.c.l.bf16 %v15
  %v20 = vunpack.c.l.bf16 %v16
  %v21 = vunpack.c.l.bf16 %v17
  %v22 = vunpack.c.l.bf16 %v18
  %vm23 = vcmp.gt.f32.partialorder %v19, 0.0
  %vm24 = vcmp.gt.f32.partialorder %v20, 0.0
  %vm25 = vcmp.gt.f32.partialorder %v21, 0.0
  %vm26 = vcmp.gt.f32.partialorder %v22, 0.0
  %v27 = vmul.f32 %v19, 0.01
  %v28 = vmul.f32 %v20, 0.01
  %v29 = vmul.f32 %v21, 0.01
  %v30 = vmul.f32 %v22, 0.01
  %v31 = vsel %vm23, %v19, %v27
  %v32 = vsel %vm24, %v20, %v28
  %v33 = vsel %vm25, %v21, %v29
  %v34 = vsel %vm26, %v22, %v30
  %v35 = vpack.c.bf16 %v32, %v31
  %v36 = vpack.c.bf16 %v34, %v33
  %v37 = vld [vmem:[%s1] sm:$0xf]
  %v38 = vld [vmem:[%s1 + $0x4] sm:$0xf]
  %v39 = vld [vmem:[%s1 + $0x8] sm:$0xf]
  %v40 = vld [vmem:[%s1 + $0xc] sm:$0xf]
  %v41 = vld [vmem:[%s1 + $0x10] sm:$0xf]
  %v42 = vld [vmem:[%s1 + $0x14] sm:$0xf]
  %v43 = vld [vmem:[%s1 + $0x18] sm:$0xf]
  %v44 = vld [vmem:[%s1 + $0x1c] sm:$0xf]
  %v45 = vld [vmem:[%s1 + $0x20] sm:$0xf]
  %v46 = vld [vmem:[%s1 + $0x24] sm:$0xf]
  %v47 = vld [vmem:[%s1 + $0x28] sm:$0xf]
  %v48 = vld [vmem:[%s1 + $0x2c] sm:$0xf]
  %v49 = vld [vmem:[%s1 + $0x30] sm:$0xf]
  %v50 = vld [vmem:[%s1 + $0x34] sm:$0xf]
  %v51 = vld [vmem:[%s1 + $0x38] sm:$0xf]
  %v52 = vld [vmem:[%s1 + $0x3c] sm:$0xf]
  %v53 = vld [vmem:[%s2] sm:$0x1]
  %v55 = vlaneseq
  %v56 = vshrl.u32 %v55, 7
  %v57 = vsub.s32 0, %v56
  %v58 = vrot.slane %v53, %v57
  %v76 = vunpack.c.l.b16 %v37
  %v77 = vunpack.c.l.b16 %v38
  %v78 = vunpack.c.l.b16 %v39
  %v79 = vunpack.c.l.b16 %v40
  %v80 = vunpack.c.l.b16 %v41
  %v81 = vunpack.c.l.b16 %v42
  %v82 = vunpack.c.l.b16 %v43
  %v83 = vunpack.c.l.b16 %v44
  %v84 = vunpack.c.l.b16 %v45
  %v85 = vunpack.c.l.b16 %v46
  %v86 = vunpack.c.l.b16 %v47
  %v87 = vunpack.c.l.b16 %v48
  %v88 = vunpack.c.l.b16 %v49
  %v89 = vunpack.c.l.b16 %v50
  %v90 = vunpack.c.l.b16 %v51
  %v91 = vunpack.c.l.b16 %v52
  %v92 = vpack.c.b16 %v77, %v76
  %v93 = vpack.c.b16 %v79, %v78
  %v94 = vpack.c.b16 %v81, %v80
  %v95 = vpack.c.b16 %v83, %v82
  %v96 = vpack.c.b16 %v85, %v84
  %v97 = vpack.c.b16 %v87, %v86
  %v98 = vpack.c.b16 %v89, %v88
  %v99 = vpack.c.b16 %v91, %v90
  %108 = vmatprep.subr.bf16.mxu0 0
  %109 = vmatpush1.bf16.msra.mxu0 %v92
  %110 = vmatprep.subr.bf16.mxu0 0
  %111 = vmatpush1.bf16.msra.mxu0 %v93
  %112 = vmatprep.subr.bf16.mxu0 0
  %113 = vmatpush1.bf16.msra.mxu0 %v94
  %114 = vmatprep.subr.bf16.mxu0 0
  %115 = vmatpush1.bf16.msra.mxu0 %v95
  %116 = vmatprep.subr.bf16.mxu0 0
  %117 = vmatpush1.bf16.msra.mxu0 %v96
  %118 = vmatprep.subr.bf16.mxu0 0
  %119 = vmatpush1.bf16.msra.mxu0 %v97
  %120 = vmatprep.subr.bf16.mxu0 0
  %121 = vmatpush1.bf16.msra.mxu0 %v98
  %122 = vmatprep.subr.bf16.mxu0 0
  %123 = vmatpush1.bf16.msra.mxu0 %v99
  %124 = vmatprep.subr.bf16.mxu0 0
  %125 = vmatpush1.bf16.msra.mxu0 0
  %126 = vmatprep.subr.bf16.mxu0 0
  %127 = vmatpush1.bf16.msra.mxu0 0
  %128 = vmatprep.subr.bf16.mxu0 0
  %129 = vmatpush1.bf16.msra.mxu0 0
  %130 = vmatprep.subr.bf16.mxu0 0
  %131 = vmatpush1.bf16.msra.mxu0 0
  %132 = vmatprep.subr.bf16.mxu0 0
  %133 = vmatpush1.bf16.msra.mxu0 0
  %134 = vmatprep.subr.bf16.mxu0 0
  %135 = vmatpush1.bf16.msra.mxu0 0
  %136 = vmatprep.subr.bf16.mxu0 0
  %137 = vmatpush1.bf16.msra.mxu0 0
  %138 = vmatprep.subr.bf16.mxu0 0
  %139 = vmatpush1.bf16.msra.mxu0 0
  %140 = vmatprep.mubr.bf16.mxu0 0
  %141 = vmatmul.mubr.bf16.gmra.mrb[0].mxu0 %v35
  %v142 = vpop.f32.mrb[0].mxu0
  %v143 = vadd.f32 %v58, %v142
  %v144 = vpop.f32.mrb[0].mxu0
  %v145 = vpop.f32.mrb[0].mxu0
  %v146 = vadd.f32 %v58, %v145
  %v147 = vpop.f32.mrb[0].mxu0
  %148 = vmatprep.mubr.bf16.mxu0 0
  %149 = vmatmul.mubr.bf16.gmra.mrb[0].mxu0 %v36
  %v150 = vpop.f32.mrb[0].mxu0
  %v151 = vadd.f32 %v58, %v150
  %v152 = vpop.f32.mrb[0].mxu0
  %v153 = vpop.f32.mrb[0].mxu0
  %v154 = vadd.f32 %v58, %v153
  %v155 = vpop.f32.mrb[0].mxu0
  %156 = vdwg.mxu0
  %vm157 = vcmp.gt.f32.partialorder %v143, 0.0
  %vm158 = vcmp.gt.f32.partialorder %v146, 0.0
  %vm159 = vcmp.gt.f32.partialorder %v151, 0.0
  %vm160 = vcmp.gt.f32.partialorder %v154, 0.0
  %v161 = vmul.f32 %v143, 0.01
  %v162 = vmul.f32 %v146, 0.01
  %v163 = vmul.f32 %v151, 0.01
  %v164 = vmul.f32 %v154, 0.01
  %v165 = vsel %vm157, %v143, %v161
  %v166 = vsel %vm158, %v146, %v162
  %v167 = vsel %vm159, %v151, %v163
  %v168 = vsel %vm160, %v154, %v164
  %v169 = vpack.c.bf16 %v166, %v165
  %v170 = vpack.c.bf16 %v168, %v167
  %v173 = vunpack.c.l.b16 %v169
  %v174 = vunpack.c.h.b16 %v169
  %v175 = vunpack.c.l.b16 %v170
  %v176 = vunpack.c.h.b16 %v170
  %v177 = vpack.c.b16 %v173, %v173
  %v178 = vpack.c.b16 %v174, %v174
  %v179 = vpack.c.b16 %v175, %v175
  %v180 = vpack.c.b16 %v176, %v176
  %185 = vst [vmem:[%s3] sm:$0xf] %v177
  %186 = vst [vmem:[%s3 + $0x4] sm:$0xf] %v178
  %187 = vst [vmem:[%s3 + $0x8] sm:$0xf] %v179
  %188 = vst [vmem:[%s3 + $0xc] sm:$0xf] %v180
  // Predicated region
  $region14: #{_lambda_.27} parent=0 // pred_check
    _
  $region15: #{_lambda_.27} parent=0 // pred_check_branch
    %190 = sbr.rel (0) target = $region17
  $region16: #{_lambda_.27} parent=0 // pred_region
    _
  $region17: #{_lambda_.27} parent=0 // pred_fallthru
    _
  // Predicated region
  $region18: #{_lambda_.27} parent=0 // pred_check
    _
  $region19: #{_lambda_.27} parent=0 // pred_check_branch
    %192 = sbr.rel (0) target = $region21
  $region20: #{_lambda_.27} parent=0 // pred_region
    _
  $region21: #{_lambda_.27} parent=0 // pred_fallthru
    _

// kernel: _lambda_.20
$region0: #{_lambda_.20}
  #allocation0 [shape = 'u32[]', space=smem, size = 0x4, offset = 0x4, fixed_abs, tag = 'smem constant byte address 0x4 - core index']
  #allocation1 [shape = 'u32[144,128]{1,0:T(1,128)}', space=vmem, size = 0x12000, scoped, tag = 'internal scratch']
  %s0 = inlined_call_operand.vmem [shape: bf16[32,2048], index: 0, kind: input, shape index: {}]
  %s1 = inlined_call_operand.vmem [shape: bf16[2048,128], index: 1, kind: input, shape index: {}]
  %s2 = inlined_call_operand.vmem [shape: f32[1,128], index: 2, kind: input, shape index: {}]
  %s3 = inlined_call_operand.vmem [shape: bf16[32,128], index: 3, kind: output, shape index: {}]
  %s4 = sld [smem:[#allocation0]]
  $region22: #{_lambda_.20} parent=0
    _
  %s6 = ssub.s32 1, %s4
  %s7 = scalar_select 0, %s6, %s4
  // Predicated region
  $region2: #{_lambda_.20} parent=0 // pred_check
    _
  $region3: #{_lambda_.20} parent=0 // pred_check_branch
    %9 = sbr.rel (0) target = $region5
  $region4: #{_lambda_.20} parent=0 // pred_region
    _
  $region5: #{_lambda_.20} parent=0 // pred_fallthru
    _
  // Predicated region
  $region6: #{_lambda_.20} parent=0 // pred_check
    _
  $region7: #{_lambda_.20} parent=0 // pred_check_branch
    %11 = sbr.rel (0) target = $region9
  $region8: #{_lambda_.20} parent=0 // pred_region
    _
  $region9: #{_lambda_.20} parent=0 // pred_fallthru
    _
  // Predicated region
  $region10: #{_lambda_.20} parent=0 // pred_check
    _
  $region11: #{_lambda_.20} parent=0 // pred_check_branch
    %13 = sbr.rel (0) target = $region13
  $region12: #{_lambda_.20} parent=0 // pred_region
    _
  $region13: #{_lambda_.20} parent=0 // pred_fallthru
    _
  %v15 = vld [vmem:[%s0] sm:$0xff]
  %v16 = vld [vmem:[%s0 + $0x8] sm:$0xff]
  %v17 = vld [vmem:[%s0 + $0x10] sm:$0xff]
  %v18 = vld [vmem:[%s0 + $0x18] sm:$0xff]
  %v19 = vld [vmem:[%s0 + $0x20] sm:$0xff]
  %v20 = vld [vmem:[%s0 + $0x28] sm:$0xff]
  %v21 = vld [vmem:[%s0 + $0x30] sm:$0xff]
  %v22 = vld [vmem:[%s0 + $0x38] sm:$0xff]
  %v23 = vld [vmem:[%s0 + $0x40] sm:$0xff]
  %v24 = vld [vmem:[%s0 + $0x48] sm:$0xff]
  %v25 = vld [vmem:[%s0 + $0x50] sm:$0xff]
  %v26 = vld [vmem:[%s0 + $0x58] sm:$0xff]
  %v27 = vld [vmem:[%s0 + $0x60] sm:$0xff]
  %v28 = vld [vmem:[%s0 + $0x68] sm:$0xff]
  %v29 = vld [vmem:[%s0 + $0x70] sm:$0xff]
  %v30 = vld [vmem:[%s0 + $0x78] sm:$0xff]
  %v31 = vld [vmem:[%s0 + $0x80] sm:$0xff]
  %v32 = vld [vmem:[%s0 + $0x88] sm:$0xff]
  %v33 = vld [vmem:[%s0 + $0x90] sm:$0xff]
  %v34 = vld [vmem:[%s0 + $0x98] sm:$0xff]
  %v35 = vld [vmem:[%s0 + $0xa0] sm:$0xff]
  %v36 = vld [vmem:[%s0 + $0xa8] sm:$0xff]
  %v37 = vld [vmem:[%s0 + $0xb0] sm:$0xff]
  %v38 = vld [vmem:[%s0 + $0xb8] sm:$0xff]
  %v39 = vld [vmem:[%s0 + $0xc0] sm:$0xff]
  %v40 = vld [vmem:[%s0 + $0xc8] sm:$0xff]
  %v41 = vld [vmem:[%s0 + $0xd0] sm:$0xff]
  %v42 = vld [vmem:[%s0 + $0xd8] sm:$0xff]
  %v43 = vld [vmem:[%s0 + $0xe0] sm:$0xff]
  %v44 = vld [vmem:[%s0 + $0xe8] sm:$0xff]
  %v45 = vld [vmem:[%s0 + $0xf0] sm:$0xff]
  %v46 = vld [vmem:[%s0 + $0xf8] sm:$0xff]
  %v47 = vld [vmem:[%s1] sm:$0xf]
  %v48 = vld [vmem:[%s1 + $0x4] sm:$0xf]
  %v49 = vld [vmem:[%s1 + $0x8] sm:$0xf]
  %v50 = vld [vmem:[%s1 + $0xc] sm:$0xf]
  %v51 = vld [vmem:[%s1 + $0x10] sm:$0xf]
  %v52 = vld [vmem:[%s1 + $0x14] sm:$0xf]
  %v53 = vld [vmem:[%s1 + $0x18] sm:$0xf]
  %v54 = vld [vmem:[%s1 + $0x1c] sm:$0xf]
  %v55 = vld [vmem:[%s1 + $0x20] sm:$0xf]
  %v56 = vld [vmem:[%s1 + $0x24] sm:$0xf]
  %v57 = vld [vmem:[%s1 + $0x28] sm:$0xf]
  %v58 = vld [vmem:[%s1 + $0x2c] sm:$0xf]
  %v59 = vld [vmem:[%s1 + $0x30] sm:$0xf]
  %v60 = vld [vmem:[%s1 + $0x34] sm:$0xf]
  %v61 = vld [vmem:[%s1 + $0x38] sm:$0xf]
  %v62 = vld [vmem:[%s1 + $0x3c] sm:$0xf]
  %v63 = vld [vmem:[%s1 + $0x40] sm:$0xf]
  %v64 = vld [vmem:[%s1 + $0x44] sm:$0xf]
  %v65 = vld [vmem:[%s1 + $0x48] sm:$0xf]
  %v66 = vld [vmem:[%s1 + $0x4c] sm:$0xf]
  %v67 = vld [vmem:[%s1 + $0x50] sm:$0xf]
  %v68 = vld [vmem:[%s1 + $0x54] sm:$0xf]
  %v69 = vld [vmem:[%s1 + $0x58] sm:$0xf]
  %v70 = vld [vmem:[%s1 + $0x5c] sm:$0xf]
  %v71 = vld [vmem:[%s1 + $0x60] sm:$0xf]
  %v72 = vld [vmem:[%s1 + $0x64] sm:$0xf]
  %v73 = vld [vmem:[%s1 + $0x68] sm:$0xf]
  %v74 = vld [vmem:[%s1 + $0x6c] sm:$0xf]
  %v75 = vld [vmem:[%s1 + $0x70] sm:$0xf]
  %v76 = vld [vmem:[%s1 + $0x74] sm:$0xf]
  %v77 = vld [vmem:[%s1 + $0x78] sm:$0xf]
  %v78 = vld [vmem:[%s1 + $0x7c] sm:$0xf]
  %v79 = vld [vmem:[%s1 + $0x80] sm:$0xf]
  %v80 = vld [vmem:[%s1 + $0x84] sm:$0xf]
  %v81 = vld [vmem:[%s1 + $0x88] sm:$0xf]
  %v82 = vld [vmem:[%s1 + $0x8c] sm:$0xf]
  %v83 = vld [vmem:[%s1 + $0x90] sm:$0xf]
  %v84 = vld [vmem:[%s1 + $0x94] sm:$0xf]
  %v85 = vld [vmem:[%s1 + $0x98] sm:$0xf]
  %v86 = vld [vmem:[%s1 + $0x9c] sm:$0xf]
  %v87 = vld [vmem:[%s1 + $0xa0] sm:$0xf]
  %v88 = vld [vmem:[%s1 + $0xa4] sm:$0xf]
  %v89 = vld [vmem:[%s1 + $0xa8] sm:$0xf]
  %v90 = vld [vmem:[%s1 + $0xac] sm:$0xf]
  %v91 = vld [vmem:[%s1 + $0xb0] sm:$0xf]
  %v92 = vld [vmem:[%s1 + $0xb4] sm:$0xf]
  %v93 = vld [vmem:[%s1 + $0xb8] sm:$0xf]
  %v94 = vld [vmem:[%s1 + $0xbc] sm:$0xf]
  %v95 = vld [vmem:[%s1 + $0xc0] sm:$0xf]
  %v96 = vld [vmem:[%s1 + $0xc4] sm:$0xf]
  %v97 = vld [vmem:[%s1 + $0xc8] sm:$0xf]
  %v98 = vld [vmem:[%s1 + $0xcc] sm:$0xf]
  %v99 = vld [vmem:[%s1 + $0xd0] sm:$0xf]
  %v100 = vld [vmem:[%s1 + $0xd4] sm:$0xf]
  %v101 = vld [vmem:[%s1 + $0xd8] sm:$0xf]
  %v102 = vld [vmem:[%s1 + $0xdc] sm:$0xf]
  %v103 = vld [vmem:[%s1 + $0xe0] sm:$0xf]
  %v104 = vld [vmem:[%s1 + $0xe4] sm:$0xf]
  %v105 = vld [vmem:[%s1 + $0xe8] sm:$0xf]
  %v106 = vld [vmem:[%s1 + $0xec] sm:$0xf]
  %v107 = vld [vmem:[%s1 + $0xf0] sm:$0xf]
  %v108 = vld [vmem:[%s1 + $0xf4] sm:$0xf]
  %v109 = vld [vmem:[%s1 + $0xf8] sm:$0xf]
  %v110 = vld [vmem:[%s1 + $0xfc] sm:$0xf]
  %v111 = vld [vmem:[%s1 + $0x100] sm:$0xf]
  %v112 = vld [vmem:[%s1 + $0x104] sm:$0xf]
  %v113 = vld [vmem:[%s1 + $0x108] sm:$0xf]
  %v114 = vld [vmem:[%s1 + $0x10c] sm:$0xf]
  %v115 = vld [vmem:[%s1 + $0x110] sm:$0xf]
  %v116 = vld [vmem:[%s1 + $0x114] sm:$0xf]
  %v117 = vld [vmem:[%s1 + $0x118] sm:$0xf]
  %v118 = vld [vmem:[%s1 + $0x11c] sm:$0xf]
  %v119 = vld [vmem:[%s1 + $0x120] sm:$0xf]
  %v120 = vld [vmem:[%s1 + $0x124] sm:$0xf]
  %v121 = vld [vmem:[%s1 + $0x128] sm:$0xf]
  %v122 = vld [vmem:[%s1 + $0x12c] sm:$0xf]
  %v123 = vld [vmem:[%s1 + $0x130] sm:$0xf]
  %v124 = vld [vmem:[%s1 + $0x134] sm:$0xf]
  %v125 = vld [vmem:[%s1 + $0x138] sm:$0xf]
  %v126 = vld [vmem:[%s1 + $0x13c] sm:$0xf]
  %v127 = vld [vmem:[%s1 + $0x140] sm:$0xf]
  %v128 = vld [vmem:[%s1 + $0x144] sm:$0xf]
  %v129 = vld [vmem:[%s1 + $0x148] sm:$0xf]
  %v130 = vld [vmem:[%s1 + $0x14c] sm:$0xf]
  %v131 = vld [vmem:[%s1 + $0x150] sm:$0xf]
  %v132 = vld [vmem:[%s1 + $0x154] sm:$0xf]
  %v133 = vld [vmem:[%s1 + $0x158] sm:$0xf]
  %v134 = vld [vmem:[%s1 + $0x15c] sm:$0xf]
  %v135 = vld [vmem:[%s1 + $0x160] sm:$0xf]
  %v136 = vld [vmem:[%s1 + $0x164] sm:$0xf]
  %v137 = vld [vmem:[%s1 + $0x168] sm:$0xf]
  %v138 = vld [vmem:[%s1 + $0x16c] sm:$0xf]
  %v139 = vld [vmem:[%s1 + $0x170] sm:$0xf]
  %v140 = vld [vmem:[%s1 + $0x174] sm:$0xf]
  %v141 = vld [vmem:[%s1 + $0x178] sm:$0xf]
  %v142 = vld [vmem:[%s1 + $0x17c] sm:$0xf]
  %v143 = vld [vmem:[%s1 + $0x180] sm:$0xf]
  %v144 = vld [vmem:[%s1 + $0x184] sm:$0xf]
  %v145 = vld [vmem:[%s1 + $0x188] sm:$0xf]
  %v146 = vld [vmem:[%s1 + $0x18c] sm:$0xf]
  %v147 = vld [vmem:[%s1 + $0x190] sm:$0xf]
  %v148 = vld [vmem:[%s1 + $0x194] sm:$0xf]
  %v149 = vld [vmem:[%s1 + $0x198] sm:$0xf]
  %v150 = vld [vmem:[%s1 + $0x19c] sm:$0xf]
  %v151 = vld [vmem:[%s1 + $0x1a0] sm:$0xf]
  %v152 = vld [vmem:[%s1 + $0x1a4] sm:$0xf]
  %v153 = vld [vmem:[%s1 + $0x1a8] sm:$0xf]
  %v154 = vld [vmem:[%s1 + $0x1ac] sm:$0xf]
  %v155 = vld [vmem:[%s1 + $0x1b0] sm:$0xf]
  %v156 = vld [vmem:[%s1 + $0x1b4] sm:$0xf]
  %v157 = vld [vmem:[%s1 + $0x1b8] sm:$0xf]
  %v158 = vld [vmem:[%s1 + $0x1bc] sm:$0xf]
  %v159 = vld [vmem:[%s1 + $0x1c0] sm:$0xf]
  %v160 = vld [vmem:[%s1 + $0x1c4] sm:$0xf]
  %v161 = vld [vmem:[%s1 + $0x1c8] sm:$0xf]
  %v162 = vld [vmem:[%s1 + $0x1cc] sm:$0xf]
  %v163 = vld [vmem:[%s1 + $0x1d0] sm:$0xf]
  %v164 = vld [vmem:[%s1 + $0x1d4] sm:$0xf]
  %v165 = vld [vmem:[%s1 + $0x1d8] sm:$0xf]
  %v166 = vld [vmem:[%s1 + $0x1dc] sm:$0xf]
  %v167 = vld [vmem:[%s1 + $0x1e0] sm:$0xf]
  %v168 = vld [vmem:[%s1 + $0x1e4] sm:$0xf]
  %v169 = vld [vmem:[%s1 + $0x1e8] sm:$0xf]
  %v170 = vld [vmem:[%s1 + $0x1ec] sm:$0xf]
  %v171 = vld [vmem:[%s1 + $0x1f0] sm:$0xf]
  %v172 = vld [vmem:[%s1 + $0x1f4] sm:$0xf]
  %v173 = vld [vmem:[%s1 + $0x1f8] sm:$0xf]
  %v174 = vld [vmem:[%s1 + $0x1fc] sm:$0xf]
  %v175 = vld [vmem:[%s1 + $0x200] sm:$0xf]
  %v176 = vld [vmem:[%s1 + $0x204] sm:$0xf]
  %v177 = vld [vmem:[%s1 + $0x208] sm:$0xf]
  %v178 = vld [vmem:[%s1 + $0x20c] sm:$0xf]
  %v179 = vld [vmem:[%s1 + $0x210] sm:$0xf]
  %v180 = vld [vmem:[%s1 + $0x214] sm:$0xf]
  %v181 = vld [vmem:[%s1 + $0x218] sm:$0xf]
  %v182 = vld [vmem:[%s1 + $0x21c] sm:$0xf]
  %v183 = vld [vmem:[%s1 + $0x220] sm:$0xf]
  %v184 = vld [vmem:[%s1 + $0x224] sm:$0xf]
  %v185 = vld [vmem:[%s1 + $0x228] sm:$0xf]
  %v186 = vld [vmem:[%s1 + $0x22c] sm:$0xf]
  %v187 = vld [vmem:[%s1 + $0x230] sm:$0xf]
  %v188 = vld [vmem:[%s1 + $0x234] sm:$0xf]
  %v189 = vld [vmem:[%s1 + $0x238] sm:$0xf]
  %v190 = vld [vmem:[%s1 + $0x23c] sm:$0xf]
  %v191 = vld [vmem:[%s1 + $0x240] sm:$0xf]
  %v192 = vld [vmem:[%s1 + $0x244] sm:$0xf]
  %v193 = vld [vmem:[%s1 + $0x248] sm:$0xf]
  %v194 = vld [vmem:[%s1 + $0x24c] sm:$0xf]
  %v195 = vld [vmem:[%s1 + $0x250] sm:$0xf]
  %v196 = vld [vmem:[%s1 + $0x254] sm:$0xf]
  %v197 = vld [vmem:[%s1 + $0x258] sm:$0xf]
  %v198 = vld [vmem:[%s1 + $0x25c] sm:$0xf]
  %v199 = vld [vmem:[%s1 + $0x260] sm:$0xf]
  %v200 = vld [vmem:[%s1 + $0x264] sm:$0xf]
  %v201 = vld [vmem:[%s1 + $0x268] sm:$0xf]
  %v202 = vld [vmem:[%s1 + $0x26c] sm:$0xf]
  %v203 = vld [vmem:[%s1 + $0x270] sm:$0xf]
  %v204 = vld [vmem:[%s1 + $0x274] sm:$0xf]
  %v205 = vld [vmem:[%s1 + $0x278] sm:$0xf]
  %v206 = vld [vmem:[%s1 + $0x27c] sm:$0xf]
  %v207 = vld [vmem:[%s1 + $0x280] sm:$0xf]
  %v208 = vld [vmem:[%s1 + $0x284] sm:$0xf]
  %v209 = vld [vmem:[%s1 + $0x288] sm:$0xf]
  %v210 = vld [vmem:[%s1 + $0x28c] sm:$0xf]
  %v211 = vld [vmem:[%s1 + $0x290] sm:$0xf]
  %v212 = vld [vmem:[%s1 + $0x294] sm:$0xf]
  %v213 = vld [vmem:[%s1 + $0x298] sm:$0xf]
  %v214 = vld [vmem:[%s1 + $0x29c] sm:$0xf]
  %v215 = vld [vmem:[%s1 + $0x2a0] sm:$0xf]
  %v216 = vld [vmem:[%s1 + $0x2a4] sm:$0xf]
  %v217 = vld [vmem:[%s1 + $0x2a8] sm:$0xf]
  %v218 = vld [vmem:[%s1 + $0x2ac] sm:$0xf]
  %v219 = vld [vmem:[%s1 + $0x2b0] sm:$0xf]
  %v220 = vld [vmem:[%s1 + $0x2b4] sm:$0xf]
  %v221 = vld [vmem:[%s1 + $0x2b8] sm:$0xf]
  %v222 = vld [vmem:[%s1 + $0x2bc] sm:$0xf]
  %v223 = vld [vmem:[%s1 + $0x2c0] sm:$0xf]
  %v224 = vld [vmem:[%s1 + $0x2c4] sm:$0xf]
  %v225 = vld [vmem:[%s1 + $0x2c8] sm:$0xf]
  %v226 = vld [vmem:[%s1 + $0x2cc] sm:$0xf]
  %v227 = vld [vmem:[%s1 + $0x2d0] sm:$0xf]
  %v228 = vld [vmem:[%s1 + $0x2d4] sm:$0xf]
  %v229 = vld [vmem:[%s1 + $0x2d8] sm:$0xf]
  %v230 = vld [vmem:[%s1 + $0x2dc] sm:$0xf]
  %v231 = vld [vmem:[%s1 + $0x2e0] sm:$0xf]
  %v232 = vld [vmem:[%s1 + $0x2e4] sm:$0xf]
  %v233 = vld [vmem:[%s1 + $0x2e8] sm:$0xf]
  %v234 = vld [vmem:[%s1 + $0x2ec] sm:$0xf]
  %v235 = vld [vmem:[%s1 + $0x2f0] sm:$0xf]
  %v236 = vld [vmem:[%s1 + $0x2f4] sm:$0xf]
  %v237 = vld [vmem:[%s1 + $0x2f8] sm:$0xf]
  %v238 = vld [vmem:[%s1 + $0x2fc] sm:$0xf]
  %v239 = vld [vmem:[%s1 + $0x300] sm:$0xf]
  %v240 = vld [vmem:[%s1 + $0x304] sm:$0xf]
  %v241 = vld [vmem:[%s1 + $0x308] sm:$0xf]
  %v242 = vld [vmem:[%s1 + $0x30c] sm:$0xf]
  %v243 = vld [vmem:[%s1 + $0x310] sm:$0xf]
  %v244 = vld [vmem:[%s1 + $0x314] sm:$0xf]
  %v245 = vld [vmem:[%s1 + $0x318] sm:$0xf]
  %v246 = vld [vmem:[%s1 + $0x31c] sm:$0xf]
  %v247 = vld [vmem:[%s1 + $0x320] sm:$0xf]
  %v248 = vld [vmem:[%s1 + $0x324] sm:$0xf]
  %v249 = vld [vmem:[%s1 + $0x328] sm:$0xf]
  %v250 = vld [vmem:[%s1 + $0x32c] sm:$0xf]
  %v251 = vld [vmem:[%s1 + $0x330] sm:$0xf]
  %v252 = vld [vmem:[%s1 + $0x334] sm:$0xf]
  %v253 = vld [vmem:[%s1 + $0x338] sm:$0xf]
  %v254 = vld [vmem:[%s1 + $0x33c] sm:$0xf]
  %v255 = vld [vmem:[%s1 + $0x340] sm:$0xf]
  %v256 = vld [vmem:[%s1 + $0x344] sm:$0xf]
  %v257 = vld [vmem:[%s1 + $0x348] sm:$0xf]
  %v258 = vld [vmem:[%s1 + $0x34c] sm:$0xf]
  %v259 = vld [vmem:[%s1 + $0x350] sm:$0xf]
  %v260 = vld [vmem:[%s1 + $0x354] sm:$0xf]
  %v261 = vld [vmem:[%s1 + $0x358] sm:$0xf]
  %v262 = vld [vmem:[%s1 + $0x35c] sm:$0xf]
  %v263 = vld [vmem:[%s1 + $0x360] sm:$0xf]
  %v264 = vld [vmem:[%s1 + $0x364] sm:$0xf]
  %v265 = vld [vmem:[%s1 + $0x368] sm:$0xf]
  %v266 = vld [vmem:[%s1 + $0x36c] sm:$0xf]
  %v267 = vld [vmem:[%s1 + $0x370] sm:$0xf]
  %v268 = vld [vmem:[%s1 + $0x374] sm:$0xf]
  %v269 = vld [vmem:[%s1 + $0x378] sm:$0xf]
  %v270 = vld [vmem:[%s1 + $0x37c] sm:$0xf]
  %v271 = vld [vmem:[%s1 + $0x380] sm:$0xf]
  %v272 = vld [vmem:[%s1 + $0x384] sm:$0xf]
  %v273 = vld [vmem:[%s1 + $0x388] sm:$0xf]
  %v274 = vld [vmem:[%s1 + $0x38c] sm:$0xf]
  %v275 = vld [vmem:[%s1 + $0x390] sm:$0xf]
  %v276 = vld [vmem:[%s1 + $0x394] sm:$0xf]
  %v277 = vld [vmem:[%s1 + $0x398] sm:$0xf]
  %v278 = vld [vmem:[%s1 + $0x39c] sm:$0xf]
  %v279 = vld [vmem:[%s1 + $0x3a0] sm:$0xf]
  %v280 = vld [vmem:[%s1 + $0x3a4] sm:$0xf]
  %v281 = vld [vmem:[%s1 + $0x3a8] sm:$0xf]
  %v282 = vld [vmem:[%s1 + $0x3ac] sm:$0xf]
  %v283 = vld [vmem:[%s1 + $0x3b0] sm:$0xf]
  %v284 = vld [vmem:[%s1 + $0x3b4] sm:$0xf]
  %v285 = vld [vmem:[%s1 + $0x3b8] sm:$0xf]
  %v286 = vld [vmem:[%s1 + $0x3bc] sm:$0xf]
  %v287 = vld [vmem:[%s1 + $0x3c0] sm:$0xf]
  %v288 = vld [vmem:[%s1 + $0x3c4] sm:$0xf]
  %v289 = vld [vmem:[%s1 + $0x3c8] sm:$0xf]
  %v290 = vld [vmem:[%s1 + $0x3cc] sm:$0xf]
  %v291 = vld [vmem:[%s1 + $0x3d0] sm:$0xf]
  %v292 = vld [vmem:[%s1 + $0x3d4] sm:$0xf]
  %v293 = vld [vmem:[%s1 + $0x3d8] sm:$0xf]
  %v294 = vld [vmem:[%s1 + $0x3dc] sm:$0xf]
  %v295 = vld [vmem:[%s1 + $0x3e0] sm:$0xf]
  %v296 = vld [vmem:[%s1 + $0x3e4] sm:$0xf]
  %v297 = vld [vmem:[%s1 + $0x3e8] sm:$0xf]
  %v298 = vld [vmem:[%s1 + $0x3ec] sm:$0xf]
  %v299 = vld [vmem:[%s1 + $0x3f0] sm:$0xf]
  %v300 = vld [vmem:[%s1 + $0x3f4] sm:$0xf]
  %v301 = vld [vmem:[%s1 + $0x3f8] sm:$0xf]
  %v302 = vld [vmem:[%s1 + $0x3fc] sm:$0xf]
  %v303 = vld [vmem:[%s2] sm:$0x1]
  %v305 = vlaneseq
  %v306 = vshrl.u32 %v305, 7
  %v307 = vsub.s32 0, %v306
  %v308 = vrot.slane %v303, %v307
  %v342 = vunpack.c.l.b16 %v15
  %v343 = vunpack.c.h.b16 %v15
  %v344 = vunpack.c.l.b16 %v16
  %v345 = vunpack.c.h.b16 %v16
  %v346 = vunpack.c.l.b16 %v17
  %v347 = vunpack.c.h.b16 %v17
  %v348 = vunpack.c.l.b16 %v18
  %v349 = vunpack.c.h.b16 %v18
  %v350 = vunpack.c.l.b16 %v19
  %v351 = vunpack.c.h.b16 %v19
  %v352 = vunpack.c.l.b16 %v20
  %v353 = vunpack.c.h.b16 %v20
  %v354 = vunpack.c.l.b16 %v21
  %v355 = vunpack.c.h.b16 %v21
  %v356 = vunpack.c.l.b16 %v22
  %v357 = vunpack.c.h.b16 %v22
  %v358 = vunpack.c.l.b16 %v23
  %v359 = vunpack.c.h.b16 %v23
  %v360 = vunpack.c.l.b16 %v24
  %v361 = vunpack.c.h.b16 %v24
  %v362 = vunpack.c.l.b16 %v25
  %v363 = vunpack.c.h.b16 %v25
  %v364 = vunpack.c.l.b16 %v26
  %v365 = vunpack.c.h.b16 %v26
  %v366 = vunpack.c.l.b16 %v27
  %v367 = vunpack.c.h.b16 %v27
  %v368 = vunpack.c.l.b16 %v28
  %v369 = vunpack.c.h.b16 %v28
  %v370 = vunpack.c.l.b16 %v29
  %v371 = vunpack.c.h.b16 %v29
  %v372 = vunpack.c.l.b16 %v30
  %v373 = vunpack.c.h.b16 %v30
  %v374 = vunpack.c.l.b16 %v31
  %v375 = vunpack.c.h.b16 %v31
  %v376 = vunpack.c.l.b16 %v32
  %v377 = vunpack.c.h.b16 %v32
  %v378 = vunpack.c.l.b16 %v33
  %v379 = vunpack.c.h.b16 %v33
  %v380 = vunpack.c.l.b16 %v34
  %v381 = vunpack.c.h.b16 %v34
  %v382 = vunpack.c.l.b16 %v35
  %v383 = vunpack.c.h.b16 %v35
  %v384 = vunpack.c.l.b16 %v36
  %v385 = vunpack.c.h.b16 %v36
  %v386 = vunpack.c.l.b16 %v37
  %v387 = vunpack.c.h.b16 %v37
  %v388 = vunpack.c.l.b16 %v38
  %v389 = vunpack.c.h.b16 %v38
  %v390 = vunpack.c.l.b16 %v39
  %v391 = vunpack.c.h.b16 %v39
  %v392 = vunpack.c.l.b16 %v40
  %v393 = vunpack.c.h.b16 %v40
  %v394 = vunpack.c.l.b16 %v41
  %v395 = vunpack.c.h.b16 %v41
  %v396 = vunpack.c.l.b16 %v42
  %v397 = vunpack.c.h.b16 %v42
  %v398 = vunpack.c.l.b16 %v43
  %v399 = vunpack.c.h.b16 %v43
  %v400 = vunpack.c.l.b16 %v44
  %v401 = vunpack.c.h.b16 %v44
  %v402 = vunpack.c.l.b16 %v45
  %v403 = vunpack.c.h.b16 %v45
  %v404 = vunpack.c.l.b16 %v46
  %v405 = vunpack.c.h.b16 %v46
  %v406 = vpack.c.b16 %v358, %v342
  %v407 = vpack.c.b16 %v359, %v343
  %v408 = vpack.c.b16 %v360, %v344
  %v409 = vpack.c.b16 %v361, %v345
  %v410 = vpack.c.b16 %v362, %v346
  %v411 = vpack.c.b16 %v363, %v347
  %v412 = vpack.c.b16 %v364, %v348
  %v413 = vpack.c.b16 %v365, %v349
  %v414 = vpack.c.b16 %v366, %v350
  %v415 = vpack.c.b16 %v367, %v351
  %v416 = vpack.c.b16 %v368, %v352
  %v417 = vpack.c.b16 %v369, %v353
  %v418 = vpack.c.b16 %v370, %v354
  %v419 = vpack.c.b16 %v371, %v355
  %v420 = vpack.c.b16 %v372, %v356
  %v421 = vpack.c.b16 %v373, %v357
  %v422 = vpack.c.b16 %v390, %v374
  %v423 = vpack.c.b16 %v391, %v375
  %v424 = vpack.c.b16 %v392, %v376
  %v425 = vpack.c.b16 %v393, %v377
  %v426 = vpack.c.b16 %v394, %v378
  %v427 = vpack.c.b16 %v395, %v379
  %v428 = vpack.c.b16 %v396, %v380
  %v429 = vpack.c.b16 %v397, %v381
  %v430 = vpack.c.b16 %v398, %v382
  %v431 = vpack.c.b16 %v399, %v383
  %v432 = vpack.c.b16 %v400, %v384
  %v433 = vpack.c.b16 %v401, %v385
  %v434 = vpack.c.b16 %v402, %v386
  %v435 = vpack.c.b16 %v403, %v387
  %v436 = vpack.c.b16 %v404, %v388
  %v437 = vpack.c.b16 %v405, %v389
  %v726 = vunpack.c.l.b16 %v47
  %v727 = vunpack.c.l.b16 %v48
  %v728 = vunpack.c.l.b16 %v49
  %v729 = vunpack.c.l.b16 %v50
  %v730 = vunpack.c.l.b16 %v51
  %v731 = vunpack.c.l.b16 %v52
  %v732 = vunpack.c.l.b16 %v53
  %v733 = vunpack.c.l.b16 %v54
  %v734 = vunpack.c.l.b16 %v55
  %v735 = vunpack.c.l.b16 %v56
  %v736 = vunpack.c.l.b16 %v57
  %v737 = vunpack.c.l.b16 %v58
  %v738 = vunpack.c.l.b16 %v59
  %v739 = vunpack.c.l.b16 %v60
  %v740 = vunpack.c.l.b16 %v61
  %v741 = vunpack.c.l.b16 %v62
  %v742 = vunpack.c.l.b16 %v63
  %v743 = vunpack.c.l.b16 %v64
  %v744 = vunpack.c.l.b16 %v65
  %v745 = vunpack.c.l.b16 %v66
  %v746 = vunpack.c.l.b16 %v67
  %v747 = vunpack.c.l.b16 %v68
  %v748 = vunpack.c.l.b16 %v69
  %v749 = vunpack.c.l.b16 %v70
  %v750 = vunpack.c.l.b16 %v71
  %v751 = vunpack.c.l.b16 %v72
  %v752 = vunpack.c.l.b16 %v73
  %v753 = vunpack.c.l.b16 %v74
  %v754 = vunpack.c.l.b16 %v75
  %v755 = vunpack.c.l.b16 %v76
  %v756 = vunpack.c.l.b16 %v77
  %v757 = vunpack.c.l.b16 %v78
  %v758 = vunpack.c.l.b16 %v79
  %v759 = vunpack.c.l.b16 %v80
  %v760 = vunpack.c.l.b16 %v81
  %v761 = vunpack.c.l.b16 %v82
  %v762 = vunpack.c.l.b16 %v83
  %v763 = vunpack.c.l.b16 %v84
  %v764 = vunpack.c.l.b16 %v85
  %v765 = vunpack.c.l.b16 %v86
  %v766 = vunpack.c.l.b16 %v87
  %v767 = vunpack.c.l.b16 %v88
  %v768 = vunpack.c.l.b16 %v89
  %v769 = vunpack.c.l.b16 %v90
  %v770 = vunpack.c.l.b16 %v91
  %v771 = vunpack.c.l.b16 %v92
  %v772 = vunpack.c.l.b16 %v93
  %v773 = vunpack.c.l.b16 %v94
  %v774 = vunpack.c.l.b16 %v95
  %v775 = vunpack.c.l.b16 %v96
  %v776 = vunpack.c.l.b16 %v97
  %v777 = vunpack.c.l.b16 %v98
  %v778 = vunpack.c.l.b16 %v99
  %v779 = vunpack.c.l.b16 %v100
  %v780 = vunpack.c.l.b16 %v101
  %v781 = vunpack.c.l.b16 %v102
  %v782 = vunpack.c.l.b16 %v103
  %v783 = vunpack.c.l.b16 %v104
  %v784 = vunpack.c.l.b16 %v105
  %v785 = vunpack.c.l.b16 %v106
  %v786 = vunpack.c.l.b16 %v107
  %v787 = vunpack.c.l.b16 %v108
  %v788 = vunpack.c.l.b16 %v109
  %v789 = vunpack.c.l.b16 %v110
  %v790 = vunpack.c.l.b16 %v111
  %v791 = vunpack.c.l.b16 %v112
  %v792 = vunpack.c.l.b16 %v113
  %v793 = vunpack.c.l.b16 %v114
  %v794 = vunpack.c.l.b16 %v115
  %v795 = vunpack.c.l.b16 %v116
  %v796 = vunpack.c.l.b16 %v117
  %v797 = vunpack.c.l.b16 %v118
  %v798 = vunpack.c.l.b16 %v119
  %v799 = vunpack.c.l.b16 %v120
  %v800 = vunpack.c.l.b16 %v121
  %v801 = vunpack.c.l.b16 %v122
  %v802 = vunpack.c.l.b16 %v123
  %v803 = vunpack.c.l.b16 %v124
  %v804 = vunpack.c.l.b16 %v125
  %v805 = vunpack.c.l.b16 %v126
  %v806 = vunpack.c.l.b16 %v127
  %v807 = vunpack.c.l.b16 %v128
  %v808 = vunpack.c.l.b16 %v129
  %v809 = vunpack.c.l.b16 %v130
  %v810 = vunpack.c.l.b16 %v131
  %v811 = vunpack.c.l.b16 %v132
  %v812 = vunpack.c.l.b16 %v133
  %v813 = vunpack.c.l.b16 %v134
  %v814 = vunpack.c.l.b16 %v135
  %v815 = vunpack.c.l.b16 %v136
  %v816 = vunpack.c.l.b16 %v137
  %v817 = vunpack.c.l.b16 %v138
  %v818 = vunpack.c.l.b16 %v139
  %v819 = vunpack.c.l.b16 %v140
  %v820 = vunpack.c.l.b16 %v141
  %v821 = vunpack.c.l.b16 %v142
  %v822 = vunpack.c.l.b16 %v143
  %v823 = vunpack.c.l.b16 %v144
  %v824 = vunpack.c.l.b16 %v145
  %v825 = vunpack.c.l.b16 %v146
  %v826 = vunpack.c.l.b16 %v147
  %v827 = vunpack.c.l.b16 %v148
  %v828 = vunpack.c.l.b16 %v149
  %v829 = vunpack.c.l.b16 %v150
  %v830 = vunpack.c.l.b16 %v151
  %v831 = vunpack.c.l.b16 %v152
  %v832 = vunpack.c.l.b16 %v153
  %v833 = vunpack.c.l.b16 %v154
  %v834 = vunpack.c.l.b16 %v155
  %v835 = vunpack.c.l.b16 %v156
  %v836 = vunpack.c.l.b16 %v157
  %v837 = vunpack.c.l.b16 %v158
  %v838 = vunpack.c.l.b16 %v159
  %v839 = vunpack.c.l.b16 %v160
  %v840 = vunpack.c.l.b16 %v161
  %v841 = vunpack.c.l.b16 %v162
  %v842 = vunpack.c.l.b16 %v163
  %v843 = vunpack.c.l.b16 %v164
  %v844 = vunpack.c.l.b16 %v165
  %v845 = vunpack.c.l.b16 %v166
  %v846 = vunpack.c.l.b16 %v167
  %v847 = vunpack.c.l.b16 %v168
  %v848 = vunpack.c.l.b16 %v169
  %v849 = vunpack.c.l.b16 %v170
  %v850 = vunpack.c.l.b16 %v171
  %v851 = vunpack.c.l.b16 %v172
  %v852 = vunpack.c.l.b16 %v173
  %v853 = vunpack.c.l.b16 %v174
  %v854 = vunpack.c.l.b16 %v175
  %v855 = vunpack.c.l.b16 %v176
  %v856 = vunpack.c.l.b16 %v177
  %v857 = vunpack.c.l.b16 %v178
  %v858 = vunpack.c.l.b16 %v179
  %v859 = vunpack.c.l.b16 %v180
  %v860 = vunpack.c.l.b16 %v181
  %v861 = vunpack.c.l.b16 %v182
  %v862 = vunpack.c.l.b16 %v183
  %v863 = vunpack.c.l.b16 %v184
  %v864 = vunpack.c.l.b16 %v185
  %v865 = vunpack.c.l.b16 %v186
  %v866 = vunpack.c.l.b16 %v187
  %v867 = vunpack.c.l.b16 %v188
  %v868 = vunpack.c.l.b16 %v189
  %v869 = vunpack.c.l.b16 %v190
  %v870 = vunpack.c.l.b16 %v191
  %v871 = vunpack.c.l.b16 %v192
  %v872 = vunpack.c.l.b16 %v193
  %v873 = vunpack.c.l.b16 %v194
  %v874 = vunpack.c.l.b16 %v195
  %v875 = vunpack.c.l.b16 %v196
  %v876 = vunpack.c.l.b16 %v197
  %v877 = vunpack.c.l.b16 %v198
  %v878 = vunpack.c.l.b16 %v199
  %v879 = vunpack.c.l.b16 %v200
  %v880 = vunpack.c.l.b16 %v201
  %v881 = vunpack.c.l.b16 %v202
  %v882 = vunpack.c.l.b16 %v203
  %v883 = vunpack.c.l.b16 %v204
  %v884 = vunpack.c.l.b16 %v205
  %v885 = vunpack.c.l.b16 %v206
  %v886 = vunpack.c.l.b16 %v207
  %v887 = vunpack.c.l.b16 %v208
  %v888 = vunpack.c.l.b16 %v209
  %v889 = vunpack.c.l.b16 %v210
  %v890 = vunpack.c.l.b16 %v211
  %v891 = vunpack.c.l.b16 %v212
  %v892 = vunpack.c.l.b16 %v213
  %v893 = vunpack.c.l.b16 %v214
  %v894 = vunpack.c.l.b16 %v215
  %v895 = vunpack.c.l.b16 %v216
  %v896 = vunpack.c.l.b16 %v217
  %v897 = vunpack.c.l.b16 %v218
  %v898 = vunpack.c.l.b16 %v219
  %v899 = vunpack.c.l.b16 %v220
  %v900 = vunpack.c.l.b16 %v221
  %v901 = vunpack.c.l.b16 %v222
  %v902 = vunpack.c.l.b16 %v223
  %v903 = vunpack.c.l.b16 %v224
  %v904 = vunpack.c.l.b16 %v225
  %v905 = vunpack.c.l.b16 %v226
  %v906 = vunpack.c.l.b16 %v227
  %v907 = vunpack.c.l.b16 %v228
  %v908 = vunpack.c.l.b16 %v229
  %v909 = vunpack.c.l.b16 %v230
  %v910 = vunpack.c.l.b16 %v231
  %v911 = vunpack.c.l.b16 %v232
  %v912 = vunpack.c.l.b16 %v233
  %v913 = vunpack.c.l.b16 %v234
  %v914 = vunpack.c.l.b16 %v235
  %v915 = vunpack.c.l.b16 %v236
  %v916 = vunpack.c.l.b16 %v237
  %v917 = vunpack.c.l.b16 %v238
  %v918 = vunpack.c.l.b16 %v239
  %v919 = vunpack.c.l.b16 %v240
  %v920 = vunpack.c.l.b16 %v241
  %v921 = vunpack.c.l.b16 %v242
  %v922 = vunpack.c.l.b16 %v243
  %v923 = vunpack.c.l.b16 %v244
  %v924 = vunpack.c.l.b16 %v245
  %v925 = vunpack.c.l.b16 %v246
  %v926 = vunpack.c.l.b16 %v247
  %v927 = vunpack.c.l.b16 %v248
  %v928 = vunpack.c.l.b16 %v249
  %v929 = vunpack.c.l.b16 %v250
  %v930 = vunpack.c.l.b16 %v251
  %v931 = vunpack.c.l.b16 %v252
  %v932 = vunpack.c.l.b16 %v253
  %v933 = vunpack.c.l.b16 %v254
  %v934 = vunpack.c.l.b16 %v255
  %v935 = vunpack.c.l.b16 %v256
  %v936 = vunpack.c.l.b16 %v257
  %v937 = vunpack.c.l.b16 %v258
  %v938 = vunpack.c.l.b16 %v259
  %v939 = vunpack.c.l.b16 %v260
  %v940 = vunpack.c.l.b16 %v261
  %v941 = vunpack.c.l.b16 %v262
  %v942 = vunpack.c.l.b16 %v263
  %v943 = vunpack.c.l.b16 %v264
  %v944 = vunpack.c.l.b16 %v265
  %v945 = vunpack.c.l.b16 %v266
  %v946 = vunpack.c.l.b16 %v267
  %v947 = vunpack.c.l.b16 %v268
  %v948 = vunpack.c.l.b16 %v269
  %v949 = vunpack.c.l.b16 %v270
  %v950 = vunpack.c.l.b16 %v271
  %v951 = vunpack.c.l.b16 %v272
  %v952 = vunpack.c.l.b16 %v273
  %v953 = vunpack.c.l.b16 %v274
  %v954 = vunpack.c.l.b16 %v275
  %v955 = vunpack.c.l.b16 %v276
  %v956 = vunpack.c.l.b16 %v277
  %v957 = vunpack.c.l.b16 %v278
  %v958 = vunpack.c.l.b16 %v279
  %v959 = vunpack.c.l.b16 %v280
  %v960 = vunpack.c.l.b16 %v281
  %v961 = vunpack.c.l.b16 %v282
  %v962 = vunpack.c.l.b16 %v283
  %v963 = vunpack.c.l.b16 %v284
  %v964 = vunpack.c.l.b16 %v285
  %v965 = vunpack.c.l.b16 %v286
  %v966 = vunpack.c.l.b16 %v287
  %v967 = vunpack.c.l.b16 %v288
  %v968 = vunpack.c.l.b16 %v289
  %v969 = vunpack.c.l.b16 %v290
  %v970 = vunpack.c.l.b16 %v291
  %v971 = vunpack.c.l.b16 %v292
  %v972 = vunpack.c.l.b16 %v293
  %v973 = vunpack.c.l.b16 %v294
  %v974 = vunpack.c.l.b16 %v295
  %v975 = vunpack.c.l.b16 %v296
  %v976 = vunpack.c.l.b16 %v297
  %v977 = vunpack.c.l.b16 %v298
  %v978 = vunpack.c.l.b16 %v299
  %v979 = vunpack.c.l.b16 %v300
  %v980 = vunpack.c.l.b16 %v301
  %v981 = vunpack.c.l.b16 %v302
  %v982 = vpack.c.b16 %v727, %v726
  %v983 = vpack.c.b16 %v729, %v728
  %v984 = vpack.c.b16 %v731, %v730
  %v985 = vpack.c.b16 %v733, %v732
  %v986 = vpack.c.b16 %v735, %v734
  %v987 = vpack.c.b16 %v737, %v736
  %v988 = vpack.c.b16 %v739, %v738
  %v989 = vpack.c.b16 %v741, %v740
  %v990 = vpack.c.b16 %v743, %v742
  %v991 = vpack.c.b16 %v745, %v744
  %v992 = vpack.c.b16 %v747, %v746
  %v993 = vpack.c.b16 %v749, %v748
  %v994 = vpack.c.b16 %v751, %v750
  %v995 = vpack.c.b16 %v753, %v752
  %v996 = vpack.c.b16 %v755, %v754
  %v997 = vpack.c.b16 %v757, %v756
  %v998 = vpack.c.b16 %v759, %v758
  %v999 = vpack.c.b16 %v761, %v760
  %v1000 = vpack.c.b16 %v763, %v762
  %v1001 = vpack.c.b16 %v765, %v764
  %v1002 = vpack.c.b16 %v767, %v766
  %v1003 = vpack.c.b16 %v769, %v768
  %v1004 = vpack.c.b16 %v771, %v770
  %v1005 = vpack.c.b16 %v773, %v772
  %v1006 = vpack.c.b16 %v775, %v774
  %v1007 = vpack.c.b16 %v777, %v776
  %v1008 = vpack.c.b16 %v779, %v778
  %v1009 = vpack.c.b16 %v781, %v780
  %v1010 = vpack.c.b16 %v783, %v782
  %v1011 = vpack.c.b16 %v785, %v784
  %v1012 = vpack.c.b16 %v787, %v786
  %v1013 = vpack.c.b16 %v789, %v788
  %v1014 = vpack.c.b16 %v791, %v790
  %v1015 = vpack.c.b16 %v793, %v792
  %v1016 = vpack.c.b16 %v795, %v794
  %v1017 = vpack.c.b16 %v797, %v796
  %v1018 = vpack.c.b16 %v799, %v798
  %v1019 = vpack.c.b16 %v801, %v800
  %v1020 = vpack.c.b16 %v803, %v802
  %v1021 = vpack.c.b16 %v805, %v804
  %v1022 = vpack.c.b16 %v807, %v806
  %v1023 = vpack.c.b16 %v809, %v808
  %v1024 = vpack.c.b16 %v811, %v810
  %v1025 = vpack.c.b16 %v813, %v812
  %v1026 = vpack.c.b16 %v815, %v814
  %v1027 = vpack.c.b16 %v817, %v816
  %v1028 = vpack.c.b16 %v819, %v818
  %v1029 = vpack.c.b16 %v821, %v820
  %v1030 = vpack.c.b16 %v823, %v822
  %v1031 = vpack.c.b16 %v825, %v824
  %v1032 = vpack.c.b16 %v827, %v826
  %v1033 = vpack.c.b16 %v829, %v828
  %v1034 = vpack.c.b16 %v831, %v830
  %v1035 = vpack.c.b16 %v833, %v832
  %v1036 = vpack.c.b16 %v835, %v834
  %v1037 = vpack.c.b16 %v837, %v836
  %v1038 = vpack.c.b16 %v839, %v838
  %v1039 = vpack.c.b16 %v841, %v840
  %v1040 = vpack.c.b16 %v843, %v842
  %v1041 = vpack.c.b16 %v845, %v844
  %v1042 = vpack.c.b16 %v847, %v846
  %v1043 = vpack.c.b16 %v849, %v848
  %v1044 = vpack.c.b16 %v851, %v850
  %v1045 = vpack.c.b16 %v853, %v852
  %v1046 = vpack.c.b16 %v855, %v854
  %v1047 = vpack.c.b16 %v857, %v856
  %v1048 = vpack.c.b16 %v859, %v858
  %v1049 = vpack.c.b16 %v861, %v860
  %v1050 = vpack.c.b16 %v863, %v862
  %v1051 = vpack.c.b16 %v865, %v864
  %v1052 = vpack.c.b16 %v867, %v866
  %v1053 = vpack.c.b16 %v869, %v868
  %v1054 = vpack.c.b16 %v871, %v870
  %v1055 = vpack.c.b16 %v873, %v872
  %v1056 = vpack.c.b16 %v875, %v874
  %v1057 = vpack.c.b16 %v877, %v876
  %v1058 = vpack.c.b16 %v879, %v878
  %v1059 = vpack.c.b16 %v881, %v880
  %v1060 = vpack.c.b16 %v883, %v882
  %v1061 = vpack.c.b16 %v885, %v884
  %v1062 = vpack.c.b16 %v887, %v886
  %v1063 = vpack.c.b16 %v889, %v888
  %v1064 = vpack.c.b16 %v891, %v890
  %v1065 = vpack.c.b16 %v893, %v892
  %v1066 = vpack.c.b16 %v895, %v894
  %v1067 = vpack.c.b16 %v897, %v896
  %v1068 = vpack.c.b16 %v899, %v898
  %v1069 = vpack.c.b16 %v901, %v900
  %v1070 = vpack.c.b16 %v903, %v902
  %v1071 = vpack.c.b16 %v905, %v904
  %v1072 = vpack.c.b16 %v907, %v906
  %v1073 = vpack.c.b16 %v909, %v908
  %v1074 = vpack.c.b16 %v911, %v910
  %v1075 = vpack.c.b16 %v913, %v912
  %v1076 = vpack.c.b16 %v915, %v914
  %v1077 = vpack.c.b16 %v917, %v916
  %v1078 = vpack.c.b16 %v919, %v918
  %v1079 = vpack.c.b16 %v921, %v920
  %v1080 = vpack.c.b16 %v923, %v922
  %v1081 = vpack.c.b16 %v925, %v924
  %v1082 = vpack.c.b16 %v927, %v926
  %v1083 = vpack.c.b16 %v929, %v928
  %v1084 = vpack.c.b16 %v931, %v930
  %v1085 = vpack.c.b16 %v933, %v932
  %v1086 = vpack.c.b16 %v935, %v934
  %v1087 = vpack.c.b16 %v937, %v936
  %v1088 = vpack.c.b16 %v939, %v938
  %v1089 = vpack.c.b16 %v941, %v940
  %v1090 = vpack.c.b16 %v943, %v942
  %v1091 = vpack.c.b16 %v945, %v944
  %v1092 = vpack.c.b16 %v947, %v946
  %v1093 = vpack.c.b16 %v949, %v948
  %v1094 = vpack.c.b16 %v951, %v950
  %v1095 = vpack.c.b16 %v953, %v952
  %v1096 = vpack.c.b16 %v955, %v954
  %v1097 = vpack.c.b16 %v957, %v956
  %v1098 = vpack.c.b16 %v959, %v958
  %v1099 = vpack.c.b16 %v961, %v960
  %v1100 = vpack.c.b16 %v963, %v962
  %v1101 = vpack.c.b16 %v965, %v964
  %v1102 = vpack.c.b16 %v967, %v966
  %v1103 = vpack.c.b16 %v969, %v968
  %v1104 = vpack.c.b16 %v971, %v970
  %v1105 = vpack.c.b16 %v973, %v972
  %v1106 = vpack.c.b16 %v975, %v974
  %v1107 = vpack.c.b16 %v977, %v976
  %v1108 = vpack.c.b16 %v979, %v978
  %v1109 = vpack.c.b16 %v981, %v980
  %1238 = vmatprep.subr.bf16.mxu0 0
  %1239 = vmatpush1.bf16.msra.mxu0 %v982
  %1240 = vmatprep.subr.bf16.mxu0 0
  %1241 = vmatpush1.bf16.msra.mxu0 %v983
  %1242 = vmatprep.subr.bf16.mxu0 0
  %1243 = vmatpush1.bf16.msra.mxu0 %v984
  %1244 = vmatprep.subr.bf16.mxu0 0
  %1245 = vmatpush1.bf16.msra.mxu0 %v985
  %1246 = vmatprep.subr.bf16.mxu0 0
  %1247 = vmatpush1.bf16.msra.mxu0 %v986
  %1248 = vmatprep.subr.bf16.mxu0 0
  %1249 = vmatpush1.bf16.msra.mxu0 %v987
  %1250 = vmatprep.subr.bf16.mxu0 0
  %1251 = vmatpush1.bf16.msra.mxu0 %v988
  %1252 = vmatprep.subr.bf16.mxu0 0
  %1253 = vmatpush1.bf16.msra.mxu0 %v989
  %1254 = vmatprep.subr.bf16.mxu0 0
  %1255 = vmatpush1.bf16.msra.mxu0 %v990
  %1256 = vmatprep.subr.bf16.mxu0 0
  %1257 = vmatpush1.bf16.msra.mxu0 %v991
  %1258 = vmatprep.subr.bf16.mxu0 0
  %1259 = vmatpush1.bf16.msra.mxu0 %v992
  %1260 = vmatprep.subr.bf16.mxu0 0
  %1261 = vmatpush1.bf16.msra.mxu0 %v993
  %1262 = vmatprep.subr.bf16.mxu0 0
  %1263 = vmatpush1.bf16.msra.mxu0 %v994
  %1264 = vmatprep.subr.bf16.mxu0 0
  %1265 = vmatpush1.bf16.msra.mxu0 %v995
  %1266 = vmatprep.subr.bf16.mxu0 0
  %1267 = vmatpush1.bf16.msra.mxu0 %v996
  %1268 = vmatprep.subr.bf16.mxu0 0
  %1269 = vmatpush1.bf16.msra.mxu0 %v997
  %1270 = vmatprep.mubr.bf16.mxu0 %v407
  %1271 = vmatmul.mubr.bf16.gmra.mrb[0].mxu0 %v406
  %v1272 = vpop.f32.mrb[0].mxu0
  %v1273 = vadd.f32 %v308, %v1272
  %v1274 = vpop.f32.mrb[0].mxu0
  %v1275 = vpop.f32.mrb[0].mxu0
  %v1276 = vadd.f32 %v308, %v1275
  %v1277 = vpop.f32.mrb[0].mxu0
  %1278 = vmatprep.mubr.bf16.mxu0 %v423
  %1279 = vmatmul.mubr.bf16.gmra.mrb[0].mxu0 %v422
  %v1280 = vpop.f32.mrb[0].mxu0
  %v1281 = vadd.f32 %v308, %v1280
  %v1282 = vpop.f32.mrb[0].mxu0
  %v1283 = vpop.f32.mrb[0].mxu0
  %v1284 = vadd.f32 %v308, %v1283
  %v1285 = vpop.f32.mrb[0].mxu0
  %1286 = vdwg.mxu0
  %1287 = vmatprep.subr.bf16.mxu0 0
  %1288 = vmatpush1.bf16.msra.mxu0 %v998
  %1289 = vmatprep.subr.bf16.mxu0 0
  %1290 = vmatpush1.bf16.msra.mxu0 %v999
  %1291 = vmatprep.subr.bf16.mxu0 0
  %1292 = vmatpush1.bf16.msra.mxu0 %v1000
  %1293 = vmatprep.subr.bf16.mxu0 0
  %1294 = vmatpush1.bf16.msra.mxu0 %v1001
  %1295 = vmatprep.subr.bf16.mxu0 0
  %1296 = vmatpush1.bf16.msra.mxu0 %v1002
  %1297 = vmatprep.subr.bf16.mxu0 0
  %1298 = vmatpush1.bf16.msra.mxu0 %v1003
  %1299 = vmatprep.subr.bf16.mxu0 0
  %1300 = vmatpush1.bf16.msra.mxu0 %v1004
  %1301 = vmatprep.subr.bf16.mxu0 0
  %1302 = vmatpush1.bf16.msra.mxu0 %v1005
  %1303 = vmatprep.subr.bf16.mxu0 0
  %1304 = vmatpush1.bf16.msra.mxu0 %v1006
  %1305 = vmatprep.subr.bf16.mxu0 0
  %1306 = vmatpush1.bf16.msra.mxu0 %v1007
  %1307 = vmatprep.subr.bf16.mxu0 0
  %1308 = vmatpush1.bf16.msra.mxu0 %v1008
  %1309 = vmatprep.subr.bf16.mxu0 0
  %1310 = vmatpush1.bf16.msra.mxu0 %v1009
  %1311 = vmatprep.subr.bf16.mxu0 0
  %1312 = vmatpush1.bf16.msra.mxu0 %v1010
  %1313 = vmatprep.subr.bf16.mxu0 0
  %1314 = vmatpush1.bf16.msra.mxu0 %v1011
  %1315 = vmatprep.subr.bf16.mxu0 0
  %1316 = vmatpush1.bf16.msra.mxu0 %v1012
  %1317 = vmatprep.subr.bf16.mxu0 0
  %1318 = vmatpush1.bf16.msra.mxu0 %v1013
  %1319 = vmatprep.mubr.bf16.mxu0 %v409
  %1320 = vmatmul.mubr.bf16.gmra.mrb[0].mxu0 %v408
  %v1321 = vpop.f32.mrb[0].mxu0
  %v1322 = vadd.f32 %v1273, %v1321
  %v1323 = vpop.f32.mrb[0].mxu0
  %v1324 = vpop.f32.mrb[0].mxu0
  %v1325 = vadd.f32 %v1276, %v1324
  %v1326 = vpop.f32.mrb[0].mxu0
  %1327 = vmatprep.mubr.bf16.mxu0 %v425
  %1328 = vmatmul.mubr.bf16.gmra.mrb[0].mxu0 %v424
  %v1329 = vpop.f32.mrb[0].mxu0
  %v1330 = vadd.f32 %v1281, %v1329
  %v1331 = vpop.f32.mrb[0].mxu0
  %v1332 = vpop.f32.mrb[0].mxu0
  %v1333 = vadd.f32 %v1284, %v1332
  %v1334 = vpop.f32.mrb[0].mxu0
  %1335 = vdwg.mxu0
  %1336 = vmatprep.subr.bf16.mxu0 0
  %1337 = vmatpush1.bf16.msra.mxu0 %v1014
  %1338 = vmatprep.subr.bf16.mxu0 0
  %1339 = vmatpush1.bf16.msra.mxu0 %v1015
  %1340 = vmatprep.subr.bf16.mxu0 0
  %1341 = vmatpush1.bf16.msra.mxu0 %v1016
  %1342 = vmatprep.subr.bf16.mxu0 0
  %1343 = vmatpush1.bf16.msra.mxu0 %v1017
  %1344 = vmatprep.subr.bf16.mxu0 0
  %1345 = vmatpush1.bf16.msra.mxu0 %v1018
  %1346 = vmatprep.subr.bf16.mxu0 0
  %1347 = vmatpush1.bf16.msra.mxu0 %v1019
  %1348 = vmatprep.subr.bf16.mxu0 0
  %1349 = vmatpush1.bf16.msra.mxu0 %v1020
  %1350 = vmatprep.subr.bf16.mxu0 0
  %1351 = vmatpush1.bf16.msra.mxu0 %v1021
  %1352 = vmatprep.subr.bf16.mxu0 0
  %1353 = vmatpush1.bf16.msra.mxu0 %v1022
  %1354 = vmatprep.subr.bf16.mxu0 0
  %1355 = vmatpush1.bf16.msra.mxu0 %v1023
  %1356 = vmatprep.subr.bf16.mxu0 0
  %1357 = vmatpush1.bf16.msra.mxu0 %v1024
  %1358 = vmatprep.subr.bf16.mxu0 0
  %1359 = vmatpush1.bf16.msra.mxu0 %v1025
  %1360 = vmatprep.subr.bf16.mxu0 0
  %1361 = vmatpush1.bf16.msra.mxu0 %v1026
  %1362 = vmatprep.subr.bf16.mxu0 0
  %1363 = vmatpush1.bf16.msra.mxu0 %v1027
  %1364 = vmatprep.subr.bf16.mxu0 0
  %1365 = vmatpush1.bf16.msra.mxu0 %v1028
  %1366 = vmatprep.subr.bf16.mxu0 0
  %1367 = vmatpush1.bf16.msra.mxu0 %v1029
  %1368 = vmatprep.mubr.bf16.mxu0 %v411
  %1369 = vmatmul.mubr.bf16.gmra.mrb[0].mxu0 %v410
  %v1370 = vpop.f32.mrb[0].mxu0
  %v1371 = vadd.f32 %v1322, %v1370
  %v1372 = vpop.f32.mrb[0].mxu0
  %v1373 = vpop.f32.mrb[0].mxu0
  %v1374 = vadd.f32 %v1325, %v1373
  %v1375 = vpop.f32.mrb[0].mxu0
  %1376 = vmatprep.mubr.bf16.mxu0 %v427
  %1377 = vmatmul.mubr.bf16.gmra.mrb[0].mxu0 %v426
  %v1378 = vpop.f32.mrb[0].mxu0
  %v1379 = vadd.f32 %v1330, %v1378
  %v1380 = vpop.f32.mrb[0].mxu0
  %v1381 = vpop.f32.mrb[0].mxu0
  %v1382 = vadd.f32 %v1333, %v1381
  %v1383 = vpop.f32.mrb[0].mxu0
  %1384 = vdwg.mxu0
  %1385 = vmatprep.subr.bf16.mxu0 0
  %1386 = vmatpush1.bf16.msra.mxu0 %v1030
  %1387 = vmatprep.subr.bf16.mxu0 0
  %1388 = vmatpush1.bf16.msra.mxu0 %v1031
  %1389 = vmatprep.subr.bf16.mxu0 0
  %1390 = vmatpush1.bf16.msra.mxu0 %v1032
  %1391 = vmatprep.subr.bf16.mxu0 0
  %1392 = vmatpush1.bf16.msra.mxu0 %v1033
  %1393 = vmatprep.subr.bf16.mxu0 0
  %1394 = vmatpush1.bf16.msra.mxu0 %v1034
  %1395 = vmatprep.subr.bf16.mxu0 0
  %1396 = vmatpush1.bf16.msra.mxu0 %v1035
  %1397 = vmatprep.subr.bf16.mxu0 0
  %1398 = vmatpush1.bf16.msra.mxu0 %v1036
  %1399 = vmatprep.subr.bf16.mxu0 0
  %1400 = vmatpush1.bf16.msra.mxu0 %v1037
  %1401 = vmatprep.subr.bf16.mxu0 0
  %1402 = vmatpush1.bf16.msra.mxu0 %v1038
  %1403 = vmatprep.subr.bf16.mxu0 0
  %1404 = vmatpush1.bf16.msra.mxu0 %v1039
  %1405 = vmatprep.subr.bf16.mxu0 0
  %1406 = vmatpush1.bf16.msra.mxu0 %v1040
  %1407 = vmatprep.subr.bf16.mxu0 0
  %1408 = vmatpush1.bf16.msra.mxu0 %v1041
  %1409 = vmatprep.subr.bf16.mxu0 0
  %1410 = vmatpush1.bf16.msra.mxu0 %v1042
  %1411 = vmatprep.subr.bf16.mxu0 0
  %1412 = vmatpush1.bf16.msra.mxu0 %v1043
  %1413 = vmatprep.subr.bf16.mxu0 0
  %1414 = vmatpush1.bf16.msra.mxu0 %v1044
  %1415 = vmatprep.subr.bf16.mxu0 0
  %1416 = vmatpush1.bf16.msra.mxu0 %v1045
  %1417 = vmatprep.mubr.bf16.mxu0 %v413
  %1418 = vmatmul.mubr.bf16.gmra.mrb[0].mxu0 %v412
  %v1419 = vpop.f32.mrb[0].mxu0
  %v1420 = vadd.f32 %v1371, %v1419
  %v1421 = vpop.f32.mrb[0].mxu0
  %v1422 = vpop.f32.mrb[0].mxu0
  %v1423 = vadd.f32 %v1374, %v1422
  %v1424 = vpop.f32.mrb[0].mxu0
  %1425 = vmatprep.mubr.bf16.mxu0 %v429
  %1426 = vmatmul.mubr.bf16.gmra.mrb[0].mxu0 %v428
  %v1427 = vpop.f32.mrb[0].mxu0
  %v1428 = vadd.f32 %v1379, %v1427
  %v1429 = vpop.f32.mrb[0].mxu0
  %v1430 = vpop.f32.mrb[0].mxu0
  %v1431 = vadd.f32 %v1382, %v1430
  %v1432 = vpop.f32.mrb[0].mxu0
  %1433 = vdwg.mxu0
  %1434 = vmatprep.subr.bf16.mxu0 0
  %1435 = vmatpush1.bf16.msra.mxu0 %v1046
  %1436 = vmatprep.subr.bf16.mxu0 0
  %1437 = vmatpush1.bf16.msra.mxu0 %v1047
  %1438 = vmatprep.subr.bf16.mxu0 0
  %1439 = vmatpush1.bf16.msra.mxu0 %v1048
  %1440 = vmatprep.subr.bf16.mxu0 0
  %1441 = vmatpush1.bf16.msra.mxu0 %v1049
  %1442 = vmatprep.subr.bf16.mxu0 0
  %1443 = vmatpush1.bf16.msra.mxu0 %v1050
  %1444 = vmatprep.subr.bf16.mxu0 0
  %1445 = vmatpush1.bf16.msra.mxu0 %v1051
  %1446 = vmatprep.subr.bf16.mxu0 0
  %1447 = vmatpush1.bf16.msra.mxu0 %v1052
  %1448 = vmatprep.subr.bf16.mxu0 0
  %1449 = vmatpush1.bf16.msra.mxu0 %v1053
  %1450 = vmatprep.subr.bf16.mxu0 0
  %1451 = vmatpush1.bf16.msra.mxu0 %v1054
  %1452 = vmatprep.subr.bf16.mxu0 0
  %1453 = vmatpush1.bf16.msra.mxu0 %v1055
  %1454 = vmatprep.subr.bf16.mxu0 0
  %1455 = vmatpush1.bf16.msra.mxu0 %v1056
  %1456 = vmatprep.subr.bf16.mxu0 0
  %1457 = vmatpush1.bf16.msra.mxu0 %v1057
  %1458 = vmatprep.subr.bf16.mxu0 0
  %1459 = vmatpush1.bf16.msra.mxu0 %v1058
  %1460 = vmatprep.subr.bf16.mxu0 0
  %1461 = vmatpush1.bf16.msra.mxu0 %v1059
  %1462 = vmatprep.subr.bf16.mxu0 0
  %1463 = vmatpush1.bf16.msra.mxu0 %v1060
  %1464 = vmatprep.subr.bf16.mxu0 0
  %1465 = vmatpush1.bf16.msra.mxu0 %v1061
  %1466 = vmatprep.mubr.bf16.mxu0 %v415
  %1467 = vmatmul.mubr.bf16.gmra.mrb[0].mxu0 %v414
  %v1468 = vpop.f32.mrb[0].mxu0
  %v1469 = vadd.f32 %v1420, %v1468
  %v1470 = vpop.f32.mrb[0].mxu0
  %v1471 = vpop.f32.mrb[0].mxu0
  %v1472 = vadd.f32 %v1423, %v1471
  %v1473 = vpop.f32.mrb[0].mxu0
  %1474 = vmatprep.mubr.bf16.mxu0 %v431
  %1475 = vmatmul.mubr.bf16.gmra.mrb[0].mxu0 %v430
  %v1476 = vpop.f32.mrb[0].mxu0
  %v1477 = vadd.f32 %v1428, %v1476
  %v1478 = vpop.f32.mrb[0].mxu0
  %v1479 = vpop.f32.mrb[0].mxu0
  %v1480 = vadd.f32 %v1431, %v1479
  %v1481 = vpop.f32.mrb[0].mxu0
  %1482 = vdwg.mxu0
  %1483 = vmatprep.subr.bf16.mxu0 0
  %1484 = vmatpush1.bf16.msra.mxu0 %v1062
  %1485 = vmatprep.subr.bf16.mxu0 0
  %1486 = vmatpush1.bf16.msra.mxu0 %v1063
  %1487 = vmatprep.subr.bf16.mxu0 0
  %1488 = vmatpush1.bf16.msra.mxu0 %v1064
  %1489 = vmatprep.subr.bf16.mxu0 0
  %1490 = vmatpush1.bf16.msra.mxu0 %v1065
  %1491 = vmatprep.subr.bf16.mxu0 0
  %1492 = vmatpush1.bf16.msra.mxu0 %v1066
  %1493 = vmatprep.subr.bf16.mxu0 0
  %1494 = vmatpush1.bf16.msra.mxu0 %v1067
  %1495 = vmatprep.subr.bf16.mxu0 0
  %1496 = vmatpush1.bf16.msra.mxu0 %v1068
  %1497 = vmatprep.subr.bf16.mxu0 0
  %1498 = vmatpush1.bf16.msra.mxu0 %v1069
  %1499 = vmatprep.subr.bf16.mxu0 0
  %1500 = vmatpush1.bf16.msra.mxu0 %v1070
  %1501 = vmatprep.subr.bf16.mxu0 0
  %1502 = vmatpush1.bf16.msra.mxu0 %v1071
  %1503 = vmatprep.subr.bf16.mxu0 0
  %1504 = vmatpush1.bf16.msra.mxu0 %v1072
  %1505 = vmatprep.subr.bf16.mxu0 0
  %1506 = vmatpush1.bf16.msra.mxu0 %v1073
  %1507 = vmatprep.subr.bf16.mxu0 0
  %1508 = vmatpush1.bf16.msra.mxu0 %v1074
  %1509 = vmatprep.subr.bf16.mxu0 0
  %1510 = vmatpush1.bf16.msra.mxu0 %v1075
  %1511 = vmatprep.subr.bf16.mxu0 0
  %1512 = vmatpush1.bf16.msra.mxu0 %v1076
  %1513 = vmatprep.subr.bf16.mxu0 0
  %1514 = vmatpush1.bf16.msra.mxu0 %v1077
  %1515 = vmatprep.mubr.bf16.mxu0 %v417
  %1516 = vmatmul.mubr.bf16.gmra.mrb[0].mxu0 %v416
  %v1517 = vpop.f32.mrb[0].mxu0
  %v1518 = vadd.f32 %v1469, %v1517
  %v1519 = vpop.f32.mrb[0].mxu0
  %v1520 = vpop.f32.mrb[0].mxu0
  %v1521 = vadd.f32 %v1472, %v1520
  %v1522 = vpop.f32.mrb[0].mxu0
  %1523 = vmatprep.mubr.bf16.mxu0 %v433
  %1524 = vmatmul.mubr.bf16.gmra.mrb[0].mxu0 %v432
  %v1525 = vpop.f32.mrb[0].mxu0
  %v1526 = vadd.f32 %v1477, %v1525
  %v1527 = vpop.f32.mrb[0].mxu0
  %v1528 = vpop.f32.mrb[0].mxu0
  %v1529 = vadd.f32 %v1480, %v1528
  %v1530 = vpop.f32.mrb[0].mxu0
  %1531 = vdwg.mxu0
  %1532 = vmatprep.subr.bf16.mxu0 0
  %1533 = vmatpush1.bf16.msra.mxu0 %v1078
  %1534 = vmatprep.subr.bf16.mxu0 0
  %1535 = vmatpush1.bf16.msra.mxu0 %v1079
  %1536 = vmatprep.subr.bf16.mxu0 0
  %1537 = vmatpush1.bf16.msra.mxu0 %v1080
  %1538 = vmatprep.subr.bf16.mxu0 0
  %1539 = vmatpush1.bf16.msra.mxu0 %v1081
  %1540 = vmatprep.subr.bf16.mxu0 0
  %1541 = vmatpush1.bf16.msra.mxu0 %v1082
  %1542 = vmatprep.subr.bf16.mxu0 0
  %1543 = vmatpush1.bf16.msra.mxu0 %v1083
  %1544 = vmatprep.subr.bf16.mxu0 0
  %1545 = vmatpush1.bf16.msra.mxu0 %v1084
  %1546 = vmatprep.subr.bf16.mxu0 0
  %1547 = vmatpush1.bf16.msra.mxu0 %v1085
  %1548 = vmatprep.subr.bf16.mxu0 0
  %1549 = vmatpush1.bf16.msra.mxu0 %v1086
  %1550 = vmatprep.subr.bf16.mxu0 0
  %1551 = vmatpush1.bf16.msra.mxu0 %v1087
  %1552 = vmatprep.subr.bf16.mxu0 0
  %1553 = vmatpush1.bf16.msra.mxu0 %v1088
  %1554 = vmatprep.subr.bf16.mxu0 0
  %1555 = vmatpush1.bf16.msra.mxu0 %v1089
  %1556 = vmatprep.subr.bf16.mxu0 0
  %1557 = vmatpush1.bf16.msra.mxu0 %v1090
  %1558 = vmatprep.subr.bf16.mxu0 0
  %1559 = vmatpush1.bf16.msra.mxu0 %v1091
  %1560 = vmatprep.subr.bf16.mxu0 0
  %1561 = vmatpush1.bf16.msra.mxu0 %v1092
  %1562 = vmatprep.subr.bf16.mxu0 0
  %1563 = vmatpush1.bf16.msra.mxu0 %v1093
  %1564 = vmatprep.mubr.bf16.mxu0 %v419
  %1565 = vmatmul.mubr.bf16.gmra.mrb[0].mxu0 %v418
  %v1566 = vpop.f32.mrb[0].mxu0
  %v1567 = vadd.f32 %v1518, %v1566
  %v1568 = vpop.f32.mrb[0].mxu0
  %v1569 = vpop.f32.mrb[0].mxu0
  %v1570 = vadd.f32 %v1521, %v1569
  %v1571 = vpop.f32.mrb[0].mxu0
  %1572 = vmatprep.mubr.bf16.mxu0 %v435
  %1573 = vmatmul.mubr.bf16.gmra.mrb[0].mxu0 %v434
  %v1574 = vpop.f32.mrb[0].mxu0
  %v1575 = vadd.f32 %v1526, %v1574
  %v1576 = vpop.f32.mrb[0].mxu0
  %v1577 = vpop.f32.mrb[0].mxu0
  %v1578 = vadd.f32 %v1529, %v1577
  %v1579 = vpop.f32.mrb[0].mxu0
  %1580 = vdwg.mxu0
  %1581 = vmatprep.subr.bf16.mxu0 0
  %1582 = vmatpush1.bf16.msra.mxu0 %v1094
  %1583 = vmatprep.subr.bf16.mxu0 0
  %1584 = vmatpush1.bf16.msra.mxu0 %v1095
  %1585 = vmatprep.subr.bf16.mxu0 0
  %1586 = vmatpush1.bf16.msra.mxu0 %v1096
  %1587 = vmatprep.subr.bf16.mxu0 0
  %1588 = vmatpush1.bf16.msra.mxu0 %v1097
  %1589 = vmatprep.subr.bf16.mxu0 0
  %1590 = vmatpush1.bf16.msra.mxu0 %v1098
  %1591 = vmatprep.subr.bf16.mxu0 0
  %1592 = vmatpush1.bf16.msra.mxu0 %v1099
  %1593 = vmatprep.subr.bf16.mxu0 0
  %1594 = vmatpush1.bf16.msra.mxu0 %v1100
  %1595 = vmatprep.subr.bf16.mxu0 0
  %1596 = vmatpush1.bf16.msra.mxu0 %v1101
  %1597 = vmatprep.subr.bf16.mxu0 0
  %1598 = vmatpush1.bf16.msra.mxu0 %v1102
  %1599 = vmatprep.subr.bf16.mxu0 0
  %1600 = vmatpush1.bf16.msra.mxu0 %v1103
  %1601 = vmatprep.subr.bf16.mxu0 0
  %1602 = vmatpush1.bf16.msra.mxu0 %v1104
  %1603 = vmatprep.subr.bf16.mxu0 0
  %1604 = vmatpush1.bf16.msra.mxu0 %v1105
  %1605 = vmatprep.subr.bf16.mxu0 0
  %1606 = vmatpush1.bf16.msra.mxu0 %v1106
  %1607 = vmatprep.subr.bf16.mxu0 0
  %1608 = vmatpush1.bf16.msra.mxu0 %v1107
  %1609 = vmatprep.subr.bf16.mxu0 0
  %1610 = vmatpush1.bf16.msra.mxu0 %v1108
  %1611 = vmatprep.subr.bf16.mxu0 0
  %1612 = vmatpush1.bf16.msra.mxu0 %v1109
  %1613 = vmatprep.mubr.bf16.mxu0 %v421
  %1614 = vmatmul.mubr.bf16.gmra.mrb[0].mxu0 %v420
  %v1615 = vpop.f32.mrb[0].mxu0
  %v1616 = vadd.f32 %v1567, %v1615
  %v1617 = vpop.f32.mrb[0].mxu0
  %v1618 = vpop.f32.mrb[0].mxu0
  %v1619 = vadd.f32 %v1570, %v1618
  %v1620 = vpop.f32.mrb[0].mxu0
  %1621 = vmatprep.mubr.bf16.mxu0 %v437
  %1622 = vmatmul.mubr.bf16.gmra.mrb[0].mxu0 %v436
  %v1623 = vpop.f32.mrb[0].mxu0
  %v1624 = vadd.f32 %v1575, %v1623
  %v1625 = vpop.f32.mrb[0].mxu0
  %v1626 = vpop.f32.mrb[0].mxu0
  %v1627 = vadd.f32 %v1578, %v1626
  %v1628 = vpop.f32.mrb[0].mxu0
  %1629 = vdwg.mxu0
  %vm1630 = vcmp.gt.f32.partialorder %v1616, 0.0
  %vm1631 = vcmp.gt.f32.partialorder %v1619, 0.0
  %vm1632 = vcmp.gt.f32.partialorder %v1624, 0.0
  %vm1633 = vcmp.gt.f32.partialorder %v1627, 0.0
  %v1634 = vmul.f32 %v1616, 0.01
  %v1635 = vmul.f32 %v1619, 0.01
  %v1636 = vmul.f32 %v1624, 0.01
  %v1637 = vmul.f32 %v1627, 0.01
  %v1638 = vsel %vm1630, %v1616, %v1634
  %v1639 = vsel %vm1631, %v1619, %v1635
  %v1640 = vsel %vm1632, %v1624, %v1636
  %v1641 = vsel %vm1633, %v1627, %v1637
  %v1642 = vpack.c.bf16 %v1639, %v1638
  %v1643 = vpack.c.bf16 %v1641, %v1640
  %v1646 = vunpack.c.l.b16 %v1642
  %v1647 = vunpack.c.h.b16 %v1642
  %v1648 = vunpack.c.l.b16 %v1643
  %v1649 = vunpack.c.h.b16 %v1643
  %v1650 = vpack.c.b16 %v1646, %v1646
  %v1651 = vpack.c.b16 %v1647, %v1647
  %v1652 = vpack.c.b16 %v1648, %v1648
  %v1653 = vpack.c.b16 %v1649, %v1649
  %1658 = vst [vmem:[%s3] sm:$0xf] %v1650
  %1659 = vst [vmem:[%s3 + $0x4] sm:$0xf] %v1651
  %1660 = vst [vmem:[%s3 + $0x8] sm:$0xf] %v1652
  %1661 = vst [vmem:[%s3 + $0xc] sm:$0xf] %v1653
  // Predicated region
  $region14: #{_lambda_.20} parent=0 // pred_check
    _
  $region15: #{_lambda_.20} parent=0 // pred_check_branch
    %1663 = sbr.rel (0) target = $region17
  $region16: #{_lambda_.20} parent=0 // pred_region
    _
  $region17: #{_lambda_.20} parent=0 // pred_fallthru
    _
  // Predicated region
  $region18: #{_lambda_.20} parent=0 // pred_check
    _
  $region19: #{_lambda_.20} parent=0 // pred_check_branch
    %1665 = sbr.rel (0) target = $region21
  $region20: #{_lambda_.20} parent=0 // pred_region
    _
  $region21: #{_lambda_.20} parent=0 // pred_fallthru
    _

// kernel: _lambda_.28
$region0: #{_lambda_.28}
  #allocation0 [shape = 'u32[]', space=smem, size = 0x4, offset = 0x4, fixed_abs, tag = 'smem constant byte address 0x4 - core index']
  #allocation1 [shape = 'u32[144,128]{1,0:T(1,128)}', space=vmem, size = 0x12000, scoped, tag = 'internal scratch']
  %s0 = inlined_call_operand.vmem [shape: bf16[32,128], index: 0, kind: input, shape index: {}]
  %s1 = inlined_call_operand.vmem [shape: f32[128,128], index: 1, kind: input, shape index: {}]
  %s2 = inlined_call_operand.vmem [shape: f32[128,128], index: 2, kind: input, shape index: {}]
  %s3 = inlined_call_operand.vmem [shape: f32[1,128], index: 3, kind: input, shape index: {}]
  %s4 = inlined_call_operand.vmem [shape: s32[32,1], index: 4, kind: output, shape index: {0}]
  %s5 = inlined_call_operand.vmem [shape: bf16[32,128], index: 5, kind: output, shape index: {1}]
  %s6 = inlined_call_operand.vmem [shape: f32[1,8,128], index: 6, kind: output, shape index: {2}]
  %7 = xla_tuple %s4, %s5, %s6
  %s8 = sld [smem:[#allocation0]]
  $region42: #{_lambda_.28} parent=0
    _
  %s10 = ssub.s32 1, %s8
  %s11 = scalar_select 0, %s10, %s8
  // Predicated region
  $region2: #{_lambda_.28} parent=0 // pred_check
    _
  $region3: #{_lambda_.28} parent=0 // pred_check_branch
    %13 = sbr.rel (0) target = $region5
  $region4: #{_lambda_.28} parent=0 // pred_region
    _
  $region5: #{_lambda_.28} parent=0 // pred_fallthru
    _
  // Predicated region
  $region6: #{_lambda_.28} parent=0 // pred_check
    _
  $region7: #{_lambda_.28} parent=0 // pred_check_branch
    %15 = sbr.rel (0) target = $region9
  $region8: #{_lambda_.28} parent=0 // pred_region
    _
  $region9: #{_lambda_.28} parent=0 // pred_fallthru
    _
  // Predicated region
  $region10: #{_lambda_.28} parent=0 // pred_check
    _
  $region11: #{_lambda_.28} parent=0 // pred_check_branch
    %17 = sbr.rel (0) target = $region13
  $region12: #{_lambda_.28} parent=0 // pred_region
    _
  $region13: #{_lambda_.28} parent=0 // pred_fallthru
    _
  // Predicated region
  $region14: #{_lambda_.28} parent=0 // pred_check
    _
  $region15: #{_lambda_.28} parent=0 // pred_check_branch
    %19 = sbr.rel (0) target = $region17
  $region16: #{_lambda_.28} parent=0 // pred_region
    _
  $region17: #{_lambda_.28} parent=0 // pred_fallthru
    _
  %v20 = vld [vmem:[%s0] sm:$0xf]
  %v21 = vld [vmem:[%s0 + $0x4] sm:$0xf]
  %v22 = vld [vmem:[%s0 + $0x8] sm:$0xf]
  %v23 = vld [vmem:[%s0 + $0xc] sm:$0xf]
  %v24 = vunpack.c.l.bf16 %v20
  %v25 = vunpack.c.l.bf16 %v21
  %v26 = vunpack.c.l.bf16 %v22
  %v27 = vunpack.c.l.bf16 %v23
  %v28 = vmul.f32 %v24, %v24
  %v29 = vmul.f32 %v25, %v25
  %v30 = vmul.f32 %v26, %v26
  %v31 = vmul.f32 %v27, %v27
  %32 = vadd.xlane.f32.xlu0 %v28
  %v33 = vpop.xlane.xlu0 %32
  %34 = vadd.xlane.f32.xlu0 %v29
  %v35 = vpop.xlane.xlu0 %34
  %36 = vadd.xlane.f32.xlu0 %v30
  %v37 = vpop.xlane.xlu0 %36
  %38 = vadd.xlane.f32.xlu0 %v31
  %v39 = vpop.xlane.xlu0 %38
  %v40 = vld [vmem:[%s1] sm:$0xff]
  %v41 = vld [vmem:[%s1 + $0x8] sm:$0xff]
  %v42 = vld [vmem:[%s1 + $0x10] sm:$0xff]
  %v43 = vld [vmem:[%s1 + $0x18] sm:$0xff]
  %v44 = vld [vmem:[%s1 + $0x20] sm:$0xff]
  %v45 = vld [vmem:[%s1 + $0x28] sm:$0xff]
  %v46 = vld [vmem:[%s1 + $0x30] sm:$0xff]
  %v47 = vld [vmem:[%s1 + $0x38] sm:$0xff]
  %v48 = vld [vmem:[%s1 + $0x40] sm:$0xff]
  %v49 = vld [vmem:[%s1 + $0x48] sm:$0xff]
  %v50 = vld [vmem:[%s1 + $0x50] sm:$0xff]
  %v51 = vld [vmem:[%s1 + $0x58] sm:$0xff]
  %v52 = vld [vmem:[%s1 + $0x60] sm:$0xff]
  %v53 = vld [vmem:[%s1 + $0x68] sm:$0xff]
  %v54 = vld [vmem:[%s1 + $0x70] sm:$0xff]
  %v55 = vld [vmem:[%s1 + $0x78] sm:$0xff]
  %56 = vmatprep.subr.mxu0 0.0
  %57 = vmatpush1.msra.mxu0 %v40
  %58 = vmatprep.subr.mxu0 0.0
  %59 = vmatpush1.msra.mxu0 %v41
  %60 = vmatprep.subr.mxu0 0.0
  %61 = vmatpush1.msra.mxu0 %v42
  %62 = vmatprep.subr.mxu0 0.0
  %63 = vmatpush1.msra.mxu0 %v43
  %64 = vmatprep.subr.mxu0 0.0
  %65 = vmatpush1.msra.mxu0 %v44
  %66 = vmatprep.subr.mxu0 0.0
  %67 = vmatpush1.msra.mxu0 %v45
  %68 = vmatprep.subr.mxu0 0.0
  %69 = vmatpush1.msra.mxu0 %v46
  %70 = vmatprep.subr.mxu0 0.0
  %71 = vmatpush1.msra.mxu0 %v47
  %72 = vmatprep.subr.mxu0 0.0
  %73 = vmatpush1.msra.mxu0 %v48
  %74 = vmatprep.subr.mxu0 0.0
  %75 = vmatpush1.msra.mxu0 %v49
  %76 = vmatprep.subr.mxu0 0.0
  %77 = vmatpush1.msra.mxu0 %v50
  %78 = vmatprep.subr.mxu0 0.0
  %79 = vmatpush1.msra.mxu0 %v51
  %80 = vmatprep.subr.mxu0 0.0
  %81 = vmatpush1.msra.mxu0 %v52
  %82 = vmatprep.subr.mxu0 0.0
  %83 = vmatpush1.msra.mxu0 %v53
  %84 = vmatprep.subr.mxu0 0.0
  %85 = vmatpush1.msra.mxu0 %v54
  %86 = vmatprep.subr.mxu0 0.0
  %87 = vmatpush1.msra.mxu0 %v55
  %88 = vmatprep.subr.mxu0 0.0
  %89 = vmatpush1.msra.mxu0 0.0
  %90 = vmatprep.subr.mxu0 0.0
  %91 = vmatpush1.msra.mxu0 0.0
  %92 = vmatprep.subr.mxu0 0.0
  %93 = vmatpush1.msra.mxu0 0.0
  %94 = vmatprep.subr.mxu0 0.0
  %95 = vmatpush1.msra.mxu0 0.0
  %96 = vmatprep.subr.mxu0 0.0
  %97 = vmatpush1.msra.mxu0 0.0
  %98 = vmatprep.subr.mxu0 0.0
  %99 = vmatpush1.msra.mxu0 0.0
  %100 = vmatprep.subr.mxu0 0.0
  %101 = vmatpush1.msra.mxu0 0.0
  %102 = vmatprep.subr.mxu0 0.0
  %103 = vmatpush1.msra.mxu0 0.0
  %104 = vmatprep.subr.mxu0 0.0
  %105 = vmatpush1.msra.mxu0 0.0
  %106 = vmatprep.subr.mxu0 0.0
  %107 = vmatpush1.msra.mxu0 0.0
  %108 = vmatprep.subr.mxu0 0.0
  %109 = vmatpush1.msra.mxu0 0.0
  %110 = vmatprep.subr.mxu0 0.0
  %111 = vmatpush1.msra.mxu0 0.0
  %112 = vmatprep.subr.mxu0 0.0
  %113 = vmatpush1.msra.mxu0 0.0
  %114 = vmatprep.subr.mxu0 0.0
  %115 = vmatpush1.msra.mxu0 0.0
  %116 = vmatprep.subr.mxu0 0.0
  %117 = vmatpush1.msra.mxu0 0.0
  %118 = vmatprep.subr.mxu0 0.0
  %119 = vmatpush1.msra.mxu0 0.0
  %120 = vmatprep.mubr.f32.mxu0 0.0
  %121 = vmatmul.mubr.f32.gmra.mrb[0].mxu0 %v24
  %v122 = vpop.f32.mrb[0].mxu0
  %v123 = vadd.f32 0.0, %v122
  %v124 = vpop.f32.mrb[0].mxu0
  %125 = vmatprep.mubr.f32.mxu0 0.0
  %126 = vmatmul.mubr.f32.gmra.mrb[0].mxu0 %v25
  %v127 = vpop.f32.mrb[0].mxu0
  %v128 = vadd.f32 0.0, %v127
  %v129 = vpop.f32.mrb[0].mxu0
  %130 = vmatprep.mubr.f32.mxu0 0.0
  %131 = vmatmul.mubr.f32.gmra.mrb[0].mxu0 %v26
  %v132 = vpop.f32.mrb[0].mxu0
  %v133 = vadd.f32 0.0, %v132
  %v134 = vpop.f32.mrb[0].mxu0
  %135 = vmatprep.mubr.f32.mxu0 0.0
  %136 = vmatmul.mubr.f32.gmra.mrb[0].mxu0 %v27
  %v137 = vpop.f32.mrb[0].mxu0
  %v138 = vadd.f32 0.0, %v137
  %v139 = vpop.f32.mrb[0].mxu0
  %140 = vdwg.mxu0
  %v141 = vmul.f32 %v123, 2.0
  %v142 = vmul.f32 %v128, 2.0
  %v143 = vmul.f32 %v133, 2.0
  %v144 = vmul.f32 %v138, 2.0
  %v145 = vsub.f32 %v33, %v141
  %v146 = vsub.f32 %v35, %v142
  %v147 = vsub.f32 %v37, %v143
  %v148 = vsub.f32 %v39, %v144
  %v149 = vld [vmem:[%s3] sm:$0x1]
  %v151 = vlaneseq
  %v152 = vshrl.u32 %v151, 7
  %v153 = vsub.s32 0, %v152
  %v154 = vrot.slane %v149, %v153
  %v156 = vadd.f32 %v145, %v154
  %v157 = vadd.f32 %v146, %v154
  %v158 = vadd.f32 %v147, %v154
  %v159 = vadd.f32 %v148, %v154
  %v160 = vlaneseq
  %v161 = vand.u32 %v160, 127
  %162 = vmin.xlane.f32.xlu0 %v156
  %v163 = vpop.xlane.xlu0 %162
  %164 = vmin.xlane.f32.xlu0 %v157
  %v165 = vpop.xlane.xlu0 %164
  %166 = vmin.xlane.f32.xlu0 %v158
  %v167 = vpop.xlane.xlu0 %166
  %168 = vmin.xlane.f32.xlu0 %v159
  %v169 = vpop.xlane.xlu0 %168
  %vm170 = vcmp.eq.f32.partialorder %v156, %v163
  %vm171 = vcmp.eq.f32.partialorder %v157, %v165
  %vm172 = vcmp.eq.f32.partialorder %v158, %v167
  %vm173 = vcmp.eq.f32.partialorder %v159, %v169
  %v174 = vsel %vm170, %v161, 128
  %v175 = vsel %vm171, %v161, 128
  %v176 = vsel %vm172, %v161, 128
  %v177 = vsel %vm173, %v161, 128
  %v178 = vand.u32 %v174, 65535
  %v179 = vshra.s32 %v174, 16
  %v180 = vcvt.s32.f32 %v178
  %v181 = vcvt.s32.f32 %v179
  %182 = vmin.xlane.f32.xlu0 %v181
  %v183 = vpop.xlane.xlu0 %182
  %vm184 = vcmp.eq.f32.partialorder %v181, %v183
  %v185 = vsel %vm184, %v180, inf
  %186 = vmin.xlane.f32.xlu0 %v185
  %v187 = vpop.xlane.xlu0 %186
  %v188 = vcvt.f32.s32 %v187
  %v189 = vcvt.f32.s32 %v183
  %v190 = vshll.u32 %v189, 16
  %v191 = vadd.s32 %v190, %v188
  %v192 = vand.u32 %v175, 65535
  %v193 = vshra.s32 %v175, 16
  %v194 = vcvt.s32.f32 %v192
  %v195 = vcvt.s32.f32 %v193
  %196 = vmin.xlane.f32.xlu0 %v195
  %v197 = vpop.xlane.xlu0 %196
  %vm198 = vcmp.eq.f32.partialorder %v195, %v197
  %v199 = vsel %vm198, %v194, inf
  %200 = vmin.xlane.f32.xlu0 %v199
  %v201 = vpop.xlane.xlu0 %200
  %v202 = vcvt.f32.s32 %v201
  %v203 = vcvt.f32.s32 %v197
  %v204 = vshll.u32 %v203, 16
  %v205 = vadd.s32 %v204, %v202
  %v206 = vand.u32 %v176, 65535
  %v207 = vshra.s32 %v176, 16
  %v208 = vcvt.s32.f32 %v206
  %v209 = vcvt.s32.f32 %v207
  %210 = vmin.xlane.f32.xlu0 %v209
  %v211 = vpop.xlane.xlu0 %210
  %vm212 = vcmp.eq.f32.partialorder %v209, %v211
  %v213 = vsel %vm212, %v208, inf
  %214 = vmin.xlane.f32.xlu0 %v213
  %v215 = vpop.xlane.xlu0 %214
  %v216 = vcvt.f32.s32 %v215
  %v217 = vcvt.f32.s32 %v211
  %v218 = vshll.u32 %v217, 16
  %v219 = vadd.s32 %v218, %v216
  %v220 = vand.u32 %v177, 65535
  %v221 = vshra.s32 %v177, 16
  %v222 = vcvt.s32.f32 %v220
  %v223 = vcvt.s32.f32 %v221
  %224 = vmin.xlane.f32.xlu0 %v223
  %v225 = vpop.xlane.xlu0 %224
  %vm226 = vcmp.eq.f32.partialorder %v223, %v225
  %v227 = vsel %vm226, %v222, inf
  %228 = vmin.xlane.f32.xlu0 %v227
  %v229 = vpop.xlane.xlu0 %228
  %v230 = vcvt.f32.s32 %v229
  %v231 = vcvt.f32.s32 %v225
  %v232 = vshll.u32 %v231, 16
  %v233 = vadd.s32 %v232, %v230
  %vm234 = vcmp.eq.s32.totalorder %v161, %v191
  %vm235 = vcmp.eq.s32.totalorder %v161, %v205
  %vm236 = vcmp.eq.s32.totalorder %v161, %v219
  %vm237 = vcmp.eq.s32.totalorder %v161, %v233
  %v238 = vsel %vm234, 1, 0
  %v239 = vsel %vm235, 1, 0
  %v240 = vsel %vm236, 1, 0
  %v241 = vsel %vm237, 1, 0
  %v242 = vcvt.s32.f32 %v238
  %v243 = vcvt.s32.f32 %v239
  %v244 = vcvt.s32.f32 %v240
  %v245 = vcvt.s32.f32 %v241
  %v246 = vld [vmem:[%s2] sm:$0xff]
  %v247 = vld [vmem:[%s2 + $0x8] sm:$0xff]
  %v248 = vld [vmem:[%s2 + $0x10] sm:$0xff]
  %v249 = vld [vmem:[%s2 + $0x18] sm:$0xff]
  %v250 = vld [vmem:[%s2 + $0x20] sm:$0xff]
  %v251 = vld [vmem:[%s2 + $0x28] sm:$0xff]
  %v252 = vld [vmem:[%s2 + $0x30] sm:$0xff]
  %v253 = vld [vmem:[%s2 + $0x38] sm:$0xff]
  %v254 = vld [vmem:[%s2 + $0x40] sm:$0xff]
  %v255 = vld [vmem:[%s2 + $0x48] sm:$0xff]
  %v256 = vld [vmem:[%s2 + $0x50] sm:$0xff]
  %v257 = vld [vmem:[%s2 + $0x58] sm:$0xff]
  %v258 = vld [vmem:[%s2 + $0x60] sm:$0xff]
  %v259 = vld [vmem:[%s2 + $0x68] sm:$0xff]
  %v260 = vld [vmem:[%s2 + $0x70] sm:$0xff]
  %v261 = vld [vmem:[%s2 + $0x78] sm:$0xff]
  %262 = vmatprep.subr.mxu0 0.0
  %263 = vmatpush1.msra.mxu0 %v246
  %264 = vmatprep.subr.mxu0 0.0
  %265 = vmatpush1.msra.mxu0 %v247
  %266 = vmatprep.subr.mxu0 0.0
  %267 = vmatpush1.msra.mxu0 %v248
  %268 = vmatprep.subr.mxu0 0.0
  %269 = vmatpush1.msra.mxu0 %v249
  %270 = vmatprep.subr.mxu0 0.0
  %271 = vmatpush1.msra.mxu0 %v250
  %272 = vmatprep.subr.mxu0 0.0
  %273 = vmatpush1.msra.mxu0 %v251
  %274 = vmatprep.subr.mxu0 0.0
  %275 = vmatpush1.msra.mxu0 %v252
  %276 = vmatprep.subr.mxu0 0.0
  %277 = vmatpush1.msra.mxu0 %v253
  %278 = vmatprep.subr.mxu0 0.0
  %279 = vmatpush1.msra.mxu0 %v254
  %280 = vmatprep.subr.mxu0 0.0
  %281 = vmatpush1.msra.mxu0 %v255
  %282 = vmatprep.subr.mxu0 0.0
  %283 = vmatpush1.msra.mxu0 %v256
  %284 = vmatprep.subr.mxu0 0.0
  %285 = vmatpush1.msra.mxu0 %v257
  %286 = vmatprep.subr.mxu0 0.0
  %287 = vmatpush1.msra.mxu0 %v258
  %288 = vmatprep.subr.mxu0 0.0
  %289 = vmatpush1.msra.mxu0 %v259
  %290 = vmatprep.subr.mxu0 0.0
  %291 = vmatpush1.msra.mxu0 %v260
  %292 = vmatprep.subr.mxu0 0.0
  %293 = vmatpush1.msra.mxu0 %v261
  %294 = vmatprep.subr.mxu0 0.0
  %295 = vmatpush1.msra.mxu0 0.0
  %296 = vmatprep.subr.mxu0 0.0
  %297 = vmatpush1.msra.mxu0 0.0
  %298 = vmatprep.subr.mxu0 0.0
  %299 = vmatpush1.msra.mxu0 0.0
  %300 = vmatprep.subr.mxu0 0.0
  %301 = vmatpush1.msra.mxu0 0.0
  %302 = vmatprep.subr.mxu0 0.0
  %303 = vmatpush1.msra.mxu0 0.0
  %304 = vmatprep.subr.mxu0 0.0
  %305 = vmatpush1.msra.mxu0 0.0
  %306 = vmatprep.subr.mxu0 0.0
  %307 = vmatpush1.msra.mxu0 0.0
  %308 = vmatprep.subr.mxu0 0.0
  %309 = vmatpush1.msra.mxu0 0.0
  %310 = vmatprep.subr.mxu0 0.0
  %311 = vmatpush1.msra.mxu0 0.0
  %312 = vmatprep.subr.mxu0 0.0
  %313 = vmatpush1.msra.mxu0 0.0
  %314 = vmatprep.subr.mxu0 0.0
  %315 = vmatpush1.msra.mxu0 0.0
  %316 = vmatprep.subr.mxu0 0.0
  %317 = vmatpush1.msra.mxu0 0.0
  %318 = vmatprep.subr.mxu0 0.0
  %319 = vmatpush1.msra.mxu0 0.0
  %320 = vmatprep.subr.mxu0 0.0
  %321 = vmatpush1.msra.mxu0 0.0
  %322 = vmatprep.subr.mxu0 0.0
  %323 = vmatpush1.msra.mxu0 0.0
  %324 = vmatprep.subr.mxu0 0.0
  %325 = vmatpush1.msra.mxu0 0.0
  %326 = vmatprep.mubr.f32.mxu0 0.0
  %327 = vmatmul.mubr.f32.gmra.mrb[0].mxu0 %v242
  %v328 = vpop.f32.mrb[0].mxu0
  %v329 = vadd.f32 0.0, %v328
  %v330 = vpop.f32.mrb[0].mxu0
  %331 = vmatprep.mubr.f32.mxu0 0.0
  %332 = vmatmul.mubr.f32.gmra.mrb[0].mxu0 %v243
  %v333 = vpop.f32.mrb[0].mxu0
  %v334 = vadd.f32 0.0, %v333
  %v335 = vpop.f32.mrb[0].mxu0
  %336 = vmatprep.mubr.f32.mxu0 0.0
  %337 = vmatmul.mubr.f32.gmra.mrb[0].mxu0 %v244
  %v338 = vpop.f32.mrb[0].mxu0
  %v339 = vadd.f32 0.0, %v338
  %v340 = vpop.f32.mrb[0].mxu0
  %341 = vmatprep.mubr.f32.mxu0 0.0
  %342 = vmatmul.mubr.f32.gmra.mrb[0].mxu0 %v245
  %v343 = vpop.f32.mrb[0].mxu0
  %v344 = vadd.f32 0.0, %v343
  %v345 = vpop.f32.mrb[0].mxu0
  %346 = vdwg.mxu0
  %vm347 = vcmask 7168
  %348 = vst.msk [vmem:[%s4] sm:$0xff] %vm347, %v191
  %349 = vst.msk [vmem:[%s4 + $0x8] sm:$0xff] %vm347, %v205
  %350 = vst.msk [vmem:[%s4 + $0x10] sm:$0xff] %vm347, %v219
  %351 = vst.msk [vmem:[%s4 + $0x18] sm:$0xff] %vm347, %v233
  %v352 = vpack.c.bf16 %v334, %v329
  %v353 = vpack.c.bf16 %v344, %v339
  %v356 = vunpack.c.l.b16 %v352
  %v357 = vunpack.c.h.b16 %v352
  %v358 = vunpack.c.l.b16 %v353
  %v359 = vunpack.c.h.b16 %v353
  %v360 = vpack.c.b16 %v356, %v356
  %v361 = vpack.c.b16 %v357, %v357
  %v362 = vpack.c.b16 %v358, %v358
  %v363 = vpack.c.b16 %v359, %v359
  %368 = vst [vmem:[%s5] sm:$0xf] %v360
  %369 = vst [vmem:[%s5 + $0x4] sm:$0xf] %v361
  %370 = vst [vmem:[%s5 + $0x8] sm:$0xf] %v362
  %371 = vst [vmem:[%s5 + $0xc] sm:$0xf] %v363
  %v372 = vlaneseq
  %v373 = vshrl.u32 %v372, 7
  %v374 = vadd.s32 %v373, 8
  %v375 = vadd.s32 %v373, 16
  %v376 = vadd.s32 %v373, 24
  %s377 = smul.u32 0, 32
  %v378 = vstv %s377
  %v379 = vadd.s32 %v373, %v378
  %v380 = vadd.s32 %v374, %v378
  %v381 = vadd.s32 %v375, %v378
  %v382 = vadd.s32 %v376, %v378
  %vm383 = vcmp.lt.s32.totalorder %v379, 32
  %vm384 = vcmp.lt.s32.totalorder %v380, 32
  %vm385 = vcmp.lt.s32.totalorder %v381, 32
  %vm386 = vcmp.lt.s32.totalorder %v382, 32
  %v387 = vsub.f32 %v329, %v24
  %v388 = vsub.f32 %v334, %v25
  %v389 = vsub.f32 %v339, %v26
  %v390 = vsub.f32 %v344, %v27
  %v391 = vsel %vm383, 1, 0
  %v392 = vsel %vm384, 1, 0
  %v393 = vsel %vm385, 1, 0
  %v394 = vsel %vm386, 1, 0
  %vm395 = vcmp.eq.s32.totalorder %v391, 1
  %vm396 = vcmp.eq.s32.totalorder %v392, 1
  %vm397 = vcmp.eq.s32.totalorder %v393, 1
  %vm398 = vcmp.eq.s32.totalorder %v394, 1
  %v399 = vsel %vm395, %v387, 0.0
  %v400 = vsel %vm396, %v388, 0.0
  %v401 = vsel %vm397, %v389, 0.0
  %v402 = vsel %vm398, %v390, 0.0
  %v403 = vmul.f32 %v399, %v399
  %v404 = vmul.f32 %v400, %v400
  %v405 = vmul.f32 %v401, %v401
  %v406 = vmul.f32 %v402, %v402
  %v407 = vadd.f32 %v403, %v404
  %v408 = vadd.f32 %v407, %v405
  %v409 = vadd.f32 %v408, %v406
  %410 = vadd.xlane.f32.xlu0 %v409
  %v411 = vpop.xlane.xlu0 %410
  %v412 = vrot.slane %v411, 4
  %v413 = vadd.f32 %v411, %v412
  %v414 = vrot.slane %v413, 2
  %v415 = vadd.f32 %v413, %v414
  %v416 = vrot.slane %v415, 1
  %v417 = vadd.f32 %v415, %v416
  %s418 = vtos %v417
  %v419 = vstv %s418
  %420 = vst [vmem:[%s6] sm:$0xff] %v419
  // Predicated region
  $region18: #{_lambda_.28} parent=0 // pred_check
    _
  $region19: #{_lambda_.28} parent=0 // pred_check_branch
    %422 = sbr.rel (0) target = $region21
  $region20: #{_lambda_.28} parent=0 // pred_region
    _
  $region21: #{_lambda_.28} parent=0 // pred_fallthru
    _
  // Predicated region
  $region22: #{_lambda_.28} parent=0 // pred_check
    _
  $region23: #{_lambda_.28} parent=0 // pred_check_branch
    %424 = sbr.rel (0) target = $region25
  $region24: #{_lambda_.28} parent=0 // pred_region
    _
  $region25: #{_lambda_.28} parent=0 // pred_fallthru
    _
  // Predicated region
  $region26: #{_lambda_.28} parent=0 // pred_check
    _
  $region27: #{_lambda_.28} parent=0 // pred_check_branch
    %426 = sbr.rel (0) target = $region29
  $region28: #{_lambda_.28} parent=0 // pred_region
    _
  $region29: #{_lambda_.28} parent=0 // pred_fallthru
    _
  // Predicated region
  $region30: #{_lambda_.28} parent=0 // pred_check
    _
  $region31: #{_lambda_.28} parent=0 // pred_check_branch
    %428 = sbr.rel (0) target = $region33
  $region32: #{_lambda_.28} parent=0 // pred_region
    _
  $region33: #{_lambda_.28} parent=0 // pred_fallthru
    _
  // Predicated region
  $region34: #{_lambda_.28} parent=0 // pred_check
    _
  $region35: #{_lambda_.28} parent=0 // pred_check_branch
    %430 = sbr.rel (0) target = $region37
  $region36: #{_lambda_.28} parent=0 // pred_region
    _
  $region37: #{_lambda_.28} parent=0 // pred_fallthru
    _
  // Predicated region
  $region38: #{_lambda_.28} parent=0 // pred_check
    _
  $region39: #{_lambda_.28} parent=0 // pred_check_branch
    %432 = sbr.rel (0) target = $region41
  $region40: #{_lambda_.28} parent=0 // pred_region
    _
  $region41: #{_lambda_.28} parent=0 // pred_fallthru
    _

// kernel: _lambda_.29
$region0: #{_lambda_.29}
  #allocation0 [shape = 'u32[]', space=smem, size = 0x4, offset = 0x4, fixed_abs, tag = 'smem constant byte address 0x4 - core index']
  #allocation1 [shape = 'u32[144,128]{1,0:T(1,128)}', space=vmem, size = 0x12000, scoped, tag = 'internal scratch']
  %s0 = inlined_call_operand.vmem [shape: bf16[32,1152], index: 0, kind: input, shape index: {}]
  %s1 = inlined_call_operand.vmem [shape: bf16[1152,128], index: 1, kind: input, shape index: {}]
  %s2 = inlined_call_operand.vmem [shape: f32[1,128], index: 2, kind: input, shape index: {}]
  %s3 = inlined_call_operand.vmem [shape: bf16[32,128], index: 3, kind: output, shape index: {}]
  %s4 = sld [smem:[#allocation0]]
  $region22: #{_lambda_.29} parent=0
    _
  %s6 = ssub.s32 1, %s4
  %s7 = scalar_select 0, %s6, %s4
  // Predicated region
  $region2: #{_lambda_.29} parent=0 // pred_check
    _
  $region3: #{_lambda_.29} parent=0 // pred_check_branch
    %9 = sbr.rel (0) target = $region5
  $region4: #{_lambda_.29} parent=0 // pred_region
    _
  $region5: #{_lambda_.29} parent=0 // pred_fallthru
    _
  // Predicated region
  $region6: #{_lambda_.29} parent=0 // pred_check
    _
  $region7: #{_lambda_.29} parent=0 // pred_check_branch
    %11 = sbr.rel (0) target = $region9
  $region8: #{_lambda_.29} parent=0 // pred_region
    _
  $region9: #{_lambda_.29} parent=0 // pred_fallthru
    _
  // Predicated region
  $region10: #{_lambda_.29} parent=0 // pred_check
    _
  $region11: #{_lambda_.29} parent=0 // pred_check_branch
    %13 = sbr.rel (0) target = $region13
  $region12: #{_lambda_.29} parent=0 // pred_region
    _
  $region13: #{_lambda_.29} parent=0 // pred_fallthru
    _
  %v15 = vld [vmem:[%s0] sm:$0xff]
  %v16 = vld [vmem:[%s0 + $0x8] sm:$0xff]
  %v17 = vld [vmem:[%s0 + $0x10] sm:$0xff]
  %v18 = vld [vmem:[%s0 + $0x18] sm:$0xff]
  %v19 = vld [vmem:[%s0 + $0x20] sm:$0xf]
  %v20 = vld [vmem:[%s0 + $0x24] sm:$0xff]
  %v21 = vld [vmem:[%s0 + $0x2c] sm:$0xff]
  %v22 = vld [vmem:[%s0 + $0x34] sm:$0xff]
  %v23 = vld [vmem:[%s0 + $0x3c] sm:$0xff]
  %v24 = vld [vmem:[%s0 + $0x44] sm:$0xf]
  %v25 = vld [vmem:[%s0 + $0x48] sm:$0xff]
  %v26 = vld [vmem:[%s0 + $0x50] sm:$0xff]
  %v27 = vld [vmem:[%s0 + $0x58] sm:$0xff]
  %v28 = vld [vmem:[%s0 + $0x60] sm:$0xff]
  %v29 = vld [vmem:[%s0 + $0x68] sm:$0xf]
  %v30 = vld [vmem:[%s0 + $0x6c] sm:$0xff]
  %v31 = vld [vmem:[%s0 + $0x74] sm:$0xff]
  %v32 = vld [vmem:[%s0 + $0x7c] sm:$0xff]
  %v33 = vld [vmem:[%s0 + $0x84] sm:$0xff]
  %v34 = vld [vmem:[%s0 + $0x8c] sm:$0xf]
  %v35 = vld [vmem:[%s1] sm:$0xf]
  %v36 = vld [vmem:[%s1 + $0x4] sm:$0xf]
  %v37 = vld [vmem:[%s1 + $0x8] sm:$0xf]
  %v38 = vld [vmem:[%s1 + $0xc] sm:$0xf]
  %v39 = vld [vmem:[%s1 + $0x10] sm:$0xf]
  %v40 = vld [vmem:[%s1 + $0x14] sm:$0xf]
  %v41 = vld [vmem:[%s1 + $0x18] sm:$0xf]
  %v42 = vld [vmem:[%s1 + $0x1c] sm:$0xf]
  %v43 = vld [vmem:[%s1 + $0x20] sm:$0xf]
  %v44 = vld [vmem:[%s1 + $0x24] sm:$0xf]
  %v45 = vld [vmem:[%s1 + $0x28] sm:$0xf]
  %v46 = vld [vmem:[%s1 + $0x2c] sm:$0xf]
  %v47 = vld [vmem:[%s1 + $0x30] sm:$0xf]
  %v48 = vld [vmem:[%s1 + $0x34] sm:$0xf]
  %v49 = vld [vmem:[%s1 + $0x38] sm:$0xf]
  %v50 = vld [vmem:[%s1 + $0x3c] sm:$0xf]
  %v51 = vld [vmem:[%s1 + $0x40] sm:$0xf]
  %v52 = vld [vmem:[%s1 + $0x44] sm:$0xf]
  %v53 = vld [vmem:[%s1 + $0x48] sm:$0xf]
  %v54 = vld [vmem:[%s1 + $0x4c] sm:$0xf]
  %v55 = vld [vmem:[%s1 + $0x50] sm:$0xf]
  %v56 = vld [vmem:[%s1 + $0x54] sm:$0xf]
  %v57 = vld [vmem:[%s1 + $0x58] sm:$0xf]
  %v58 = vld [vmem:[%s1 + $0x5c] sm:$0xf]
  %v59 = vld [vmem:[%s1 + $0x60] sm:$0xf]
  %v60 = vld [vmem:[%s1 + $0x64] sm:$0xf]
  %v61 = vld [vmem:[%s1 + $0x68] sm:$0xf]
  %v62 = vld [vmem:[%s1 + $0x6c] sm:$0xf]
  %v63 = vld [vmem:[%s1 + $0x70] sm:$0xf]
  %v64 = vld [vmem:[%s1 + $0x74] sm:$0xf]
  %v65 = vld [vmem:[%s1 + $0x78] sm:$0xf]
  %v66 = vld [vmem:[%s1 + $0x7c] sm:$0xf]
  %v67 = vld [vmem:[%s1 + $0x80] sm:$0xf]
  %v68 = vld [vmem:[%s1 + $0x84] sm:$0xf]
  %v69 = vld [vmem:[%s1 + $0x88] sm:$0xf]
  %v70 = vld [vmem:[%s1 + $0x8c] sm:$0xf]
  %v71 = vld [vmem:[%s1 + $0x90] sm:$0xf]
  %v72 = vld [vmem:[%s1 + $0x94] sm:$0xf]
  %v73 = vld [vmem:[%s1 + $0x98] sm:$0xf]
  %v74 = vld [vmem:[%s1 + $0x9c] sm:$0xf]
  %v75 = vld [vmem:[%s1 + $0xa0] sm:$0xf]
  %v76 = vld [vmem:[%s1 + $0xa4] sm:$0xf]
  %v77 = vld [vmem:[%s1 + $0xa8] sm:$0xf]
  %v78 = vld [vmem:[%s1 + $0xac] sm:$0xf]
  %v79 = vld [vmem:[%s1 + $0xb0] sm:$0xf]
  %v80 = vld [vmem:[%s1 + $0xb4] sm:$0xf]
  %v81 = vld [vmem:[%s1 + $0xb8] sm:$0xf]
  %v82 = vld [vmem:[%s1 + $0xbc] sm:$0xf]
  %v83 = vld [vmem:[%s1 + $0xc0] sm:$0xf]
  %v84 = vld [vmem:[%s1 + $0xc4] sm:$0xf]
  %v85 = vld [vmem:[%s1 + $0xc8] sm:$0xf]
  %v86 = vld [vmem:[%s1 + $0xcc] sm:$0xf]
  %v87 = vld [vmem:[%s1 + $0xd0] sm:$0xf]
  %v88 = vld [vmem:[%s1 + $0xd4] sm:$0xf]
  %v89 = vld [vmem:[%s1 + $0xd8] sm:$0xf]
  %v90 = vld [vmem:[%s1 + $0xdc] sm:$0xf]
  %v91 = vld [vmem:[%s1 + $0xe0] sm:$0xf]
  %v92 = vld [vmem:[%s1 + $0xe4] sm:$0xf]
  %v93 = vld [vmem:[%s1 + $0xe8] sm:$0xf]
  %v94 = vld [vmem:[%s1 + $0xec] sm:$0xf]
  %v95 = vld [vmem:[%s1 + $0xf0] sm:$0xf]
  %v96 = vld [vmem:[%s1 + $0xf4] sm:$0xf]
  %v97 = vld [vmem:[%s1 + $0xf8] sm:$0xf]
  %v98 = vld [vmem:[%s1 + $0xfc] sm:$0xf]
  %v99 = vld [vmem:[%s1 + $0x100] sm:$0xf]
  %v100 = vld [vmem:[%s1 + $0x104] sm:$0xf]
  %v101 = vld [vmem:[%s1 + $0x108] sm:$0xf]
  %v102 = vld [vmem:[%s1 + $0x10c] sm:$0xf]
  %v103 = vld [vmem:[%s1 + $0x110] sm:$0xf]
  %v104 = vld [vmem:[%s1 + $0x114] sm:$0xf]
  %v105 = vld [vmem:[%s1 + $0x118] sm:$0xf]
  %v106 = vld [vmem:[%s1 + $0x11c] sm:$0xf]
  %v107 = vld [vmem:[%s1 + $0x120] sm:$0xf]
  %v108 = vld [vmem:[%s1 + $0x124] sm:$0xf]
  %v109 = vld [vmem:[%s1 + $0x128] sm:$0xf]
  %v110 = vld [vmem:[%s1 + $0x12c] sm:$0xf]
  %v111 = vld [vmem:[%s1 + $0x130] sm:$0xf]
  %v112 = vld [vmem:[%s1 + $0x134] sm:$0xf]
  %v113 = vld [vmem:[%s1 + $0x138] sm:$0xf]
  %v114 = vld [vmem:[%s1 + $0x13c] sm:$0xf]
  %v115 = vld [vmem:[%s1 + $0x140] sm:$0xf]
  %v116 = vld [vmem:[%s1 + $0x144] sm:$0xf]
  %v117 = vld [vmem:[%s1 + $0x148] sm:$0xf]
  %v118 = vld [vmem:[%s1 + $0x14c] sm:$0xf]
  %v119 = vld [vmem:[%s1 + $0x150] sm:$0xf]
  %v120 = vld [vmem:[%s1 + $0x154] sm:$0xf]
  %v121 = vld [vmem:[%s1 + $0x158] sm:$0xf]
  %v122 = vld [vmem:[%s1 + $0x15c] sm:$0xf]
  %v123 = vld [vmem:[%s1 + $0x160] sm:$0xf]
  %v124 = vld [vmem:[%s1 + $0x164] sm:$0xf]
  %v125 = vld [vmem:[%s1 + $0x168] sm:$0xf]
  %v126 = vld [vmem:[%s1 + $0x16c] sm:$0xf]
  %v127 = vld [vmem:[%s1 + $0x170] sm:$0xf]
  %v128 = vld [vmem:[%s1 + $0x174] sm:$0xf]
  %v129 = vld [vmem:[%s1 + $0x178] sm:$0xf]
  %v130 = vld [vmem:[%s1 + $0x17c] sm:$0xf]
  %v131 = vld [vmem:[%s1 + $0x180] sm:$0xf]
  %v132 = vld [vmem:[%s1 + $0x184] sm:$0xf]
  %v133 = vld [vmem:[%s1 + $0x188] sm:$0xf]
  %v134 = vld [vmem:[%s1 + $0x18c] sm:$0xf]
  %v135 = vld [vmem:[%s1 + $0x190] sm:$0xf]
  %v136 = vld [vmem:[%s1 + $0x194] sm:$0xf]
  %v137 = vld [vmem:[%s1 + $0x198] sm:$0xf]
  %v138 = vld [vmem:[%s1 + $0x19c] sm:$0xf]
  %v139 = vld [vmem:[%s1 + $0x1a0] sm:$0xf]
  %v140 = vld [vmem:[%s1 + $0x1a4] sm:$0xf]
  %v141 = vld [vmem:[%s1 + $0x1a8] sm:$0xf]
  %v142 = vld [vmem:[%s1 + $0x1ac] sm:$0xf]
  %v143 = vld [vmem:[%s1 + $0x1b0] sm:$0xf]
  %v144 = vld [vmem:[%s1 + $0x1b4] sm:$0xf]
  %v145 = vld [vmem:[%s1 + $0x1b8] sm:$0xf]
  %v146 = vld [vmem:[%s1 + $0x1bc] sm:$0xf]
  %v147 = vld [vmem:[%s1 + $0x1c0] sm:$0xf]
  %v148 = vld [vmem:[%s1 + $0x1c4] sm:$0xf]
  %v149 = vld [vmem:[%s1 + $0x1c8] sm:$0xf]
  %v150 = vld [vmem:[%s1 + $0x1cc] sm:$0xf]
  %v151 = vld [vmem:[%s1 + $0x1d0] sm:$0xf]
  %v152 = vld [vmem:[%s1 + $0x1d4] sm:$0xf]
  %v153 = vld [vmem:[%s1 + $0x1d8] sm:$0xf]
  %v154 = vld [vmem:[%s1 + $0x1dc] sm:$0xf]
  %v155 = vld [vmem:[%s1 + $0x1e0] sm:$0xf]
  %v156 = vld [vmem:[%s1 + $0x1e4] sm:$0xf]
  %v157 = vld [vmem:[%s1 + $0x1e8] sm:$0xf]
  %v158 = vld [vmem:[%s1 + $0x1ec] sm:$0xf]
  %v159 = vld [vmem:[%s1 + $0x1f0] sm:$0xf]
  %v160 = vld [vmem:[%s1 + $0x1f4] sm:$0xf]
  %v161 = vld [vmem:[%s1 + $0x1f8] sm:$0xf]
  %v162 = vld [vmem:[%s1 + $0x1fc] sm:$0xf]
  %v163 = vld [vmem:[%s1 + $0x200] sm:$0xf]
  %v164 = vld [vmem:[%s1 + $0x204] sm:$0xf]
  %v165 = vld [vmem:[%s1 + $0x208] sm:$0xf]
  %v166 = vld [vmem:[%s1 + $0x20c] sm:$0xf]
  %v167 = vld [vmem:[%s1 + $0x210] sm:$0xf]
  %v168 = vld [vmem:[%s1 + $0x214] sm:$0xf]
  %v169 = vld [vmem:[%s1 + $0x218] sm:$0xf]
  %v170 = vld [vmem:[%s1 + $0x21c] sm:$0xf]
  %v171 = vld [vmem:[%s1 + $0x220] sm:$0xf]
  %v172 = vld [vmem:[%s1 + $0x224] sm:$0xf]
  %v173 = vld [vmem:[%s1 + $0x228] sm:$0xf]
  %v174 = vld [vmem:[%s1 + $0x22c] sm:$0xf]
  %v175 = vld [vmem:[%s1 + $0x230] sm:$0xf]
  %v176 = vld [vmem:[%s1 + $0x234] sm:$0xf]
  %v177 = vld [vmem:[%s1 + $0x238] sm:$0xf]
  %v178 = vld [vmem:[%s1 + $0x23c] sm:$0xf]
  %v179 = vld [vmem:[%s2] sm:$0x1]
  %v181 = vlaneseq
  %v182 = vshrl.u32 %v181, 7
  %v183 = vsub.s32 0, %v182
  %v184 = vrot.slane %v179, %v183
  %v206 = vunpack.c.l.b16 %v15
  %v207 = vunpack.c.h.b16 %v15
  %v208 = vunpack.c.l.b16 %v16
  %v209 = vunpack.c.h.b16 %v16
  %v210 = vunpack.c.l.b16 %v17
  %v211 = vunpack.c.h.b16 %v17
  %v212 = vunpack.c.l.b16 %v18
  %v213 = vunpack.c.h.b16 %v18
  %v214 = vunpack.c.l.b16 %v19
  %v215 = vunpack.c.l.b16 %v20
  %v216 = vunpack.c.h.b16 %v20
  %v217 = vunpack.c.l.b16 %v21
  %v218 = vunpack.c.h.b16 %v21
  %v219 = vunpack.c.l.b16 %v22
  %v220 = vunpack.c.h.b16 %v22
  %v221 = vunpack.c.l.b16 %v23
  %v222 = vunpack.c.h.b16 %v23
  %v223 = vunpack.c.l.b16 %v24
  %v224 = vunpack.c.l.b16 %v25
  %v225 = vunpack.c.h.b16 %v25
  %v226 = vunpack.c.l.b16 %v26
  %v227 = vunpack.c.h.b16 %v26
  %v228 = vunpack.c.l.b16 %v27
  %v229 = vunpack.c.h.b16 %v27
  %v230 = vunpack.c.l.b16 %v28
  %v231 = vunpack.c.h.b16 %v28
  %v232 = vunpack.c.l.b16 %v29
  %v233 = vunpack.c.l.b16 %v30
  %v234 = vunpack.c.h.b16 %v30
  %v235 = vunpack.c.l.b16 %v31
  %v236 = vunpack.c.h.b16 %v31
  %v237 = vunpack.c.l.b16 %v32
  %v238 = vunpack.c.h.b16 %v32
  %v239 = vunpack.c.l.b16 %v33
  %v240 = vunpack.c.h.b16 %v33
  %v241 = vunpack.c.l.b16 %v34
  %v242 = vpack.c.b16 %v215, %v206
  %v243 = vpack.c.b16 %v216, %v207
  %v244 = vpack.c.b16 %v217, %v208
  %v245 = vpack.c.b16 %v218, %v209
  %v246 = vpack.c.b16 %v219, %v210
  %v247 = vpack.c.b16 %v220, %v211
  %v248 = vpack.c.b16 %v221, %v212
  %v249 = vpack.c.b16 %v222, %v213
  %v250 = vpack.c.b16 %v223, %v214
  %v251 = vpack.c.b16 %v233, %v224
  %v252 = vpack.c.b16 %v234, %v225
  %v253 = vpack.c.b16 %v235, %v226
  %v254 = vpack.c.b16 %v236, %v227
  %v255 = vpack.c.b16 %v237, %v228
  %v256 = vpack.c.b16 %v238, %v229
  %v257 = vpack.c.b16 %v239, %v230
  %v258 = vpack.c.b16 %v240, %v231
  %v259 = vpack.c.b16 %v241, %v232
  %v422 = vunpack.c.l.b16 %v35
  %v423 = vunpack.c.l.b16 %v36
  %v424 = vunpack.c.l.b16 %v37
  %v425 = vunpack.c.l.b16 %v38
  %v426 = vunpack.c.l.b16 %v39
  %v427 = vunpack.c.l.b16 %v40
  %v428 = vunpack.c.l.b16 %v41
  %v429 = vunpack.c.l.b16 %v42
  %v430 = vunpack.c.l.b16 %v43
  %v431 = vunpack.c.l.b16 %v44
  %v432 = vunpack.c.l.b16 %v45
  %v433 = vunpack.c.l.b16 %v46
  %v434 = vunpack.c.l.b16 %v47
  %v435 = vunpack.c.l.b16 %v48
  %v436 = vunpack.c.l.b16 %v49
  %v437 = vunpack.c.l.b16 %v50
  %v438 = vunpack.c.l.b16 %v51
  %v439 = vunpack.c.l.b16 %v52
  %v440 = vunpack.c.l.b16 %v53
  %v441 = vunpack.c.l.b16 %v54
  %v442 = vunpack.c.l.b16 %v55
  %v443 = vunpack.c.l.b16 %v56
  %v444 = vunpack.c.l.b16 %v57
  %v445 = vunpack.c.l.b16 %v58
  %v446 = vunpack.c.l.b16 %v59
  %v447 = vunpack.c.l.b16 %v60
  %v448 = vunpack.c.l.b16 %v61
  %v449 = vunpack.c.l.b16 %v62
  %v450 = vunpack.c.l.b16 %v63
  %v451 = vunpack.c.l.b16 %v64
  %v452 = vunpack.c.l.b16 %v65
  %v453 = vunpack.c.l.b16 %v66
  %v454 = vunpack.c.l.b16 %v67
  %v455 = vunpack.c.l.b16 %v68
  %v456 = vunpack.c.l.b16 %v69
  %v457 = vunpack.c.l.b16 %v70
  %v458 = vunpack.c.l.b16 %v71
  %v459 = vunpack.c.l.b16 %v72
  %v460 = vunpack.c.l.b16 %v73
  %v461 = vunpack.c.l.b16 %v74
  %v462 = vunpack.c.l.b16 %v75
  %v463 = vunpack.c.l.b16 %v76
  %v464 = vunpack.c.l.b16 %v77
  %v465 = vunpack.c.l.b16 %v78
  %v466 = vunpack.c.l.b16 %v79
  %v467 = vunpack.c.l.b16 %v80
  %v468 = vunpack.c.l.b16 %v81
  %v469 = vunpack.c.l.b16 %v82
  %v470 = vunpack.c.l.b16 %v83
  %v471 = vunpack.c.l.b16 %v84
  %v472 = vunpack.c.l.b16 %v85
  %v473 = vunpack.c.l.b16 %v86
  %v474 = vunpack.c.l.b16 %v87
  %v475 = vunpack.c.l.b16 %v88
  %v476 = vunpack.c.l.b16 %v89
  %v477 = vunpack.c.l.b16 %v90
  %v478 = vunpack.c.l.b16 %v91
  %v479 = vunpack.c.l.b16 %v92
  %v480 = vunpack.c.l.b16 %v93
  %v481 = vunpack.c.l.b16 %v94
  %v482 = vunpack.c.l.b16 %v95
  %v483 = vunpack.c.l.b16 %v96
  %v484 = vunpack.c.l.b16 %v97
  %v485 = vunpack.c.l.b16 %v98
  %v486 = vunpack.c.l.b16 %v99
  %v487 = vunpack.c.l.b16 %v100
  %v488 = vunpack.c.l.b16 %v101
  %v489 = vunpack.c.l.b16 %v102
  %v490 = vunpack.c.l.b16 %v103
  %v491 = vunpack.c.l.b16 %v104
  %v492 = vunpack.c.l.b16 %v105
  %v493 = vunpack.c.l.b16 %v106
  %v494 = vunpack.c.l.b16 %v107
  %v495 = vunpack.c.l.b16 %v108
  %v496 = vunpack.c.l.b16 %v109
  %v497 = vunpack.c.l.b16 %v110
  %v498 = vunpack.c.l.b16 %v111
  %v499 = vunpack.c.l.b16 %v112
  %v500 = vunpack.c.l.b16 %v113
  %v501 = vunpack.c.l.b16 %v114
  %v502 = vunpack.c.l.b16 %v115
  %v503 = vunpack.c.l.b16 %v116
  %v504 = vunpack.c.l.b16 %v117
  %v505 = vunpack.c.l.b16 %v118
  %v506 = vunpack.c.l.b16 %v119
  %v507 = vunpack.c.l.b16 %v120
  %v508 = vunpack.c.l.b16 %v121
  %v509 = vunpack.c.l.b16 %v122
  %v510 = vunpack.c.l.b16 %v123
  %v511 = vunpack.c.l.b16 %v124
  %v512 = vunpack.c.l.b16 %v125
  %v513 = vunpack.c.l.b16 %v126
  %v514 = vunpack.c.l.b16 %v127
  %v515 = vunpack.c.l.b16 %v128
  %v516 = vunpack.c.l.b16 %v129
  %v517 = vunpack.c.l.b16 %v130
  %v518 = vunpack.c.l.b16 %v131
  %v519 = vunpack.c.l.b16 %v132
  %v520 = vunpack.c.l.b16 %v133
  %v521 = vunpack.c.l.b16 %v134
  %v522 = vunpack.c.l.b16 %v135
  %v523 = vunpack.c.l.b16 %v136
  %v524 = vunpack.c.l.b16 %v137
  %v525 = vunpack.c.l.b16 %v138
  %v526 = vunpack.c.l.b16 %v139
  %v527 = vunpack.c.l.b16 %v140
  %v528 = vunpack.c.l.b16 %v141
  %v529 = vunpack.c.l.b16 %v142
  %v530 = vunpack.c.l.b16 %v143
  %v531 = vunpack.c.l.b16 %v144
  %v532 = vunpack.c.l.b16 %v145
  %v533 = vunpack.c.l.b16 %v146
  %v534 = vunpack.c.l.b16 %v147
  %v535 = vunpack.c.l.b16 %v148
  %v536 = vunpack.c.l.b16 %v149
  %v537 = vunpack.c.l.b16 %v150
  %v538 = vunpack.c.l.b16 %v151
  %v539 = vunpack.c.l.b16 %v152
  %v540 = vunpack.c.l.b16 %v153
  %v541 = vunpack.c.l.b16 %v154
  %v542 = vunpack.c.l.b16 %v155
  %v543 = vunpack.c.l.b16 %v156
  %v544 = vunpack.c.l.b16 %v157
  %v545 = vunpack.c.l.b16 %v158
  %v546 = vunpack.c.l.b16 %v159
  %v547 = vunpack.c.l.b16 %v160
  %v548 = vunpack.c.l.b16 %v161
  %v549 = vunpack.c.l.b16 %v162
  %v550 = vunpack.c.l.b16 %v163
  %v551 = vunpack.c.l.b16 %v164
  %v552 = vunpack.c.l.b16 %v165
  %v553 = vunpack.c.l.b16 %v166
  %v554 = vunpack.c.l.b16 %v167
  %v555 = vunpack.c.l.b16 %v168
  %v556 = vunpack.c.l.b16 %v169
  %v557 = vunpack.c.l.b16 %v170
  %v558 = vunpack.c.l.b16 %v171
  %v559 = vunpack.c.l.b16 %v172
  %v560 = vunpack.c.l.b16 %v173
  %v561 = vunpack.c.l.b16 %v174
  %v562 = vunpack.c.l.b16 %v175
  %v563 = vunpack.c.l.b16 %v176
  %v564 = vunpack.c.l.b16 %v177
  %v565 = vunpack.c.l.b16 %v178
  %v566 = vpack.c.b16 %v423, %v422
  %v567 = vpack.c.b16 %v425, %v424
  %v568 = vpack.c.b16 %v427, %v426
  %v569 = vpack.c.b16 %v429, %v428
  %v570 = vpack.c.b16 %v431, %v430
  %v571 = vpack.c.b16 %v433, %v432
  %v572 = vpack.c.b16 %v435, %v434
  %v573 = vpack.c.b16 %v437, %v436
  %v574 = vpack.c.b16 %v439, %v438
  %v575 = vpack.c.b16 %v441, %v440
  %v576 = vpack.c.b16 %v443, %v442
  %v577 = vpack.c.b16 %v445, %v444
  %v578 = vpack.c.b16 %v447, %v446
  %v579 = vpack.c.b16 %v449, %v448
  %v580 = vpack.c.b16 %v451, %v450
  %v581 = vpack.c.b16 %v453, %v452
  %v582 = vpack.c.b16 %v455, %v454
  %v583 = vpack.c.b16 %v457, %v456
  %v584 = vpack.c.b16 %v459, %v458
  %v585 = vpack.c.b16 %v461, %v460
  %v586 = vpack.c.b16 %v463, %v462
  %v587 = vpack.c.b16 %v465, %v464
  %v588 = vpack.c.b16 %v467, %v466
  %v589 = vpack.c.b16 %v469, %v468
  %v590 = vpack.c.b16 %v471, %v470
  %v591 = vpack.c.b16 %v473, %v472
  %v592 = vpack.c.b16 %v475, %v474
  %v593 = vpack.c.b16 %v477, %v476
  %v594 = vpack.c.b16 %v479, %v478
  %v595 = vpack.c.b16 %v481, %v480
  %v596 = vpack.c.b16 %v483, %v482
  %v597 = vpack.c.b16 %v485, %v484
  %v598 = vpack.c.b16 %v487, %v486
  %v599 = vpack.c.b16 %v489, %v488
  %v600 = vpack.c.b16 %v491, %v490
  %v601 = vpack.c.b16 %v493, %v492
  %v602 = vpack.c.b16 %v495, %v494
  %v603 = vpack.c.b16 %v497, %v496
  %v604 = vpack.c.b16 %v499, %v498
  %v605 = vpack.c.b16 %v501, %v500
  %v606 = vpack.c.b16 %v503, %v502
  %v607 = vpack.c.b16 %v505, %v504
  %v608 = vpack.c.b16 %v507, %v506
  %v609 = vpack.c.b16 %v509, %v508
  %v610 = vpack.c.b16 %v511, %v510
  %v611 = vpack.c.b16 %v513, %v512
  %v612 = vpack.c.b16 %v515, %v514
  %v613 = vpack.c.b16 %v517, %v516
  %v614 = vpack.c.b16 %v519, %v518
  %v615 = vpack.c.b16 %v521, %v520
  %v616 = vpack.c.b16 %v523, %v522
  %v617 = vpack.c.b16 %v525, %v524
  %v618 = vpack.c.b16 %v527, %v526
  %v619 = vpack.c.b16 %v529, %v528
  %v620 = vpack.c.b16 %v531, %v530
  %v621 = vpack.c.b16 %v533, %v532
  %v622 = vpack.c.b16 %v535, %v534
  %v623 = vpack.c.b16 %v537, %v536
  %v624 = vpack.c.b16 %v539, %v538
  %v625 = vpack.c.b16 %v541, %v540
  %v626 = vpack.c.b16 %v543, %v542
  %v627 = vpack.c.b16 %v545, %v544
  %v628 = vpack.c.b16 %v547, %v546
  %v629 = vpack.c.b16 %v549, %v548
  %v630 = vpack.c.b16 %v551, %v550
  %v631 = vpack.c.b16 %v553, %v552
  %v632 = vpack.c.b16 %v555, %v554
  %v633 = vpack.c.b16 %v557, %v556
  %v634 = vpack.c.b16 %v559, %v558
  %v635 = vpack.c.b16 %v561, %v560
  %v636 = vpack.c.b16 %v563, %v562
  %v637 = vpack.c.b16 %v565, %v564
  %710 = vmatprep.subr.bf16.mxu0 0
  %711 = vmatpush1.bf16.msra.mxu0 %v566
  %712 = vmatprep.subr.bf16.mxu0 0
  %713 = vmatpush1.bf16.msra.mxu0 %v567
  %714 = vmatprep.subr.bf16.mxu0 0
  %715 = vmatpush1.bf16.msra.mxu0 %v568
  %716 = vmatprep.subr.bf16.mxu0 0
  %717 = vmatpush1.bf16.msra.mxu0 %v569
  %718 = vmatprep.subr.bf16.mxu0 0
  %719 = vmatpush1.bf16.msra.mxu0 %v570
  %720 = vmatprep.subr.bf16.mxu0 0
  %721 = vmatpush1.bf16.msra.mxu0 %v571
  %722 = vmatprep.subr.bf16.mxu0 0
  %723 = vmatpush1.bf16.msra.mxu0 %v572
  %724 = vmatprep.subr.bf16.mxu0 0
  %725 = vmatpush1.bf16.msra.mxu0 %v573
  %726 = vmatprep.subr.bf16.mxu0 0
  %727 = vmatpush1.bf16.msra.mxu0 %v574
  %728 = vmatprep.subr.bf16.mxu0 0
  %729 = vmatpush1.bf16.msra.mxu0 %v575
  %730 = vmatprep.subr.bf16.mxu0 0
  %731 = vmatpush1.bf16.msra.mxu0 %v576
  %732 = vmatprep.subr.bf16.mxu0 0
  %733 = vmatpush1.bf16.msra.mxu0 %v577
  %734 = vmatprep.subr.bf16.mxu0 0
  %735 = vmatpush1.bf16.msra.mxu0 %v578
  %736 = vmatprep.subr.bf16.mxu0 0
  %737 = vmatpush1.bf16.msra.mxu0 %v579
  %738 = vmatprep.subr.bf16.mxu0 0
  %739 = vmatpush1.bf16.msra.mxu0 %v580
  %740 = vmatprep.subr.bf16.mxu0 0
  %741 = vmatpush1.bf16.msra.mxu0 %v581
  %742 = vmatprep.mubr.bf16.mxu0 %v243
  %743 = vmatmul.mubr.bf16.gmra.mrb[0].mxu0 %v242
  %v744 = vpop.f32.mrb[0].mxu0
  %v745 = vadd.f32 %v184, %v744
  %v746 = vpop.f32.mrb[0].mxu0
  %v747 = vpop.f32.mrb[0].mxu0
  %v748 = vadd.f32 %v184, %v747
  %v749 = vpop.f32.mrb[0].mxu0
  %750 = vmatprep.mubr.bf16.mxu0 %v252
  %751 = vmatmul.mubr.bf16.gmra.mrb[0].mxu0 %v251
  %v752 = vpop.f32.mrb[0].mxu0
  %v753 = vadd.f32 %v184, %v752
  %v754 = vpop.f32.mrb[0].mxu0
  %v755 = vpop.f32.mrb[0].mxu0
  %v756 = vadd.f32 %v184, %v755
  %v757 = vpop.f32.mrb[0].mxu0
  %758 = vdwg.mxu0
  %759 = vmatprep.subr.bf16.mxu0 0
  %760 = vmatpush1.bf16.msra.mxu0 %v582
  %761 = vmatprep.subr.bf16.mxu0 0
  %762 = vmatpush1.bf16.msra.mxu0 %v583
  %763 = vmatprep.subr.bf16.mxu0 0
  %764 = vmatpush1.bf16.msra.mxu0 %v584
  %765 = vmatprep.subr.bf16.mxu0 0
  %766 = vmatpush1.bf16.msra.mxu0 %v585
  %767 = vmatprep.subr.bf16.mxu0 0
  %768 = vmatpush1.bf16.msra.mxu0 %v586
  %769 = vmatprep.subr.bf16.mxu0 0
  %770 = vmatpush1.bf16.msra.mxu0 %v587
  %771 = vmatprep.subr.bf16.mxu0 0
  %772 = vmatpush1.bf16.msra.mxu0 %v588
  %773 = vmatprep.subr.bf16.mxu0 0
  %774 = vmatpush1.bf16.msra.mxu0 %v589
  %775 = vmatprep.subr.bf16.mxu0 0
  %776 = vmatpush1.bf16.msra.mxu0 %v590
  %777 = vmatprep.subr.bf16.mxu0 0
  %778 = vmatpush1.bf16.msra.mxu0 %v591
  %779 = vmatprep.subr.bf16.mxu0 0
  %780 = vmatpush1.bf16.msra.mxu0 %v592
  %781 = vmatprep.subr.bf16.mxu0 0
  %782 = vmatpush1.bf16.msra.mxu0 %v593
  %783 = vmatprep.subr.bf16.mxu0 0
  %784 = vmatpush1.bf16.msra.mxu0 %v594
  %785 = vmatprep.subr.bf16.mxu0 0
  %786 = vmatpush1.bf16.msra.mxu0 %v595
  %787 = vmatprep.subr.bf16.mxu0 0
  %788 = vmatpush1.bf16.msra.mxu0 %v596
  %789 = vmatprep.subr.bf16.mxu0 0
  %790 = vmatpush1.bf16.msra.mxu0 %v597
  %791 = vmatprep.mubr.bf16.mxu0 %v245
  %792 = vmatmul.mubr.bf16.gmra.mrb[0].mxu0 %v244
  %v793 = vpop.f32.mrb[0].mxu0
  %v794 = vadd.f32 %v745, %v793
  %v795 = vpop.f32.mrb[0].mxu0
  %v796 = vpop.f32.mrb[0].mxu0
  %v797 = vadd.f32 %v748, %v796
  %v798 = vpop.f32.mrb[0].mxu0
  %799 = vmatprep.mubr.bf16.mxu0 %v254
  %800 = vmatmul.mubr.bf16.gmra.mrb[0].mxu0 %v253
  %v801 = vpop.f32.mrb[0].mxu0
  %v802 = vadd.f32 %v753, %v801
  %v803 = vpop.f32.mrb[0].mxu0
  %v804 = vpop.f32.mrb[0].mxu0
  %v805 = vadd.f32 %v756, %v804
  %v806 = vpop.f32.mrb[0].mxu0
  %807 = vdwg.mxu0
  %808 = vmatprep.subr.bf16.mxu0 0
  %809 = vmatpush1.bf16.msra.mxu0 %v598
  %810 = vmatprep.subr.bf16.mxu0 0
  %811 = vmatpush1.bf16.msra.mxu0 %v599
  %812 = vmatprep.subr.bf16.mxu0 0
  %813 = vmatpush1.bf16.msra.mxu0 %v600
  %814 = vmatprep.subr.bf16.mxu0 0
  %815 = vmatpush1.bf16.msra.mxu0 %v601
  %816 = vmatprep.subr.bf16.mxu0 0
  %817 = vmatpush1.bf16.msra.mxu0 %v602
  %818 = vmatprep.subr.bf16.mxu0 0
  %819 = vmatpush1.bf16.msra.mxu0 %v603
  %820 = vmatprep.subr.bf16.mxu0 0
  %821 = vmatpush1.bf16.msra.mxu0 %v604
  %822 = vmatprep.subr.bf16.mxu0 0
  %823 = vmatpush1.bf16.msra.mxu0 %v605
  %824 = vmatprep.subr.bf16.mxu0 0
  %825 = vmatpush1.bf16.msra.mxu0 %v606
  %826 = vmatprep.subr.bf16.mxu0 0
  %827 = vmatpush1.bf16.msra.mxu0 %v607
  %828 = vmatprep.subr.bf16.mxu0 0
  %829 = vmatpush1.bf16.msra.mxu0 %v608
  %830 = vmatprep.subr.bf16.mxu0 0
  %831 = vmatpush1.bf16.msra.mxu0 %v609
  %832 = vmatprep.subr.bf16.mxu0 0
  %833 = vmatpush1.bf16.msra.mxu0 %v610
  %834 = vmatprep.subr.bf16.mxu0 0
  %835 = vmatpush1.bf16.msra.mxu0 %v611
  %836 = vmatprep.subr.bf16.mxu0 0
  %837 = vmatpush1.bf16.msra.mxu0 %v612
  %838 = vmatprep.subr.bf16.mxu0 0
  %839 = vmatpush1.bf16.msra.mxu0 %v613
  %840 = vmatprep.mubr.bf16.mxu0 %v247
  %841 = vmatmul.mubr.bf16.gmra.mrb[0].mxu0 %v246
  %v842 = vpop.f32.mrb[0].mxu0
  %v843 = vadd.f32 %v794, %v842
  %v844 = vpop.f32.mrb[0].mxu0
  %v845 = vpop.f32.mrb[0].mxu0
  %v846 = vadd.f32 %v797, %v845
  %v847 = vpop.f32.mrb[0].mxu0
  %848 = vmatprep.mubr.bf16.mxu0 %v256
  %849 = vmatmul.mubr.bf16.gmra.mrb[0].mxu0 %v255
  %v850 = vpop.f32.mrb[0].mxu0
  %v851 = vadd.f32 %v802, %v850
  %v852 = vpop.f32.mrb[0].mxu0
  %v853 = vpop.f32.mrb[0].mxu0
  %v854 = vadd.f32 %v805, %v853
  %v855 = vpop.f32.mrb[0].mxu0
  %856 = vdwg.mxu0
  %857 = vmatprep.subr.bf16.mxu0 0
  %858 = vmatpush1.bf16.msra.mxu0 %v614
  %859 = vmatprep.subr.bf16.mxu0 0
  %860 = vmatpush1.bf16.msra.mxu0 %v615
  %861 = vmatprep.subr.bf16.mxu0 0
  %862 = vmatpush1.bf16.msra.mxu0 %v616
  %863 = vmatprep.subr.bf16.mxu0 0
  %864 = vmatpush1.bf16.msra.mxu0 %v617
  %865 = vmatprep.subr.bf16.mxu0 0
  %866 = vmatpush1.bf16.msra.mxu0 %v618
  %867 = vmatprep.subr.bf16.mxu0 0
  %868 = vmatpush1.bf16.msra.mxu0 %v619
  %869 = vmatprep.subr.bf16.mxu0 0
  %870 = vmatpush1.bf16.msra.mxu0 %v620
  %871 = vmatprep.subr.bf16.mxu0 0
  %872 = vmatpush1.bf16.msra.mxu0 %v621
  %873 = vmatprep.subr.bf16.mxu0 0
  %874 = vmatpush1.bf16.msra.mxu0 %v622
  %875 = vmatprep.subr.bf16.mxu0 0
  %876 = vmatpush1.bf16.msra.mxu0 %v623
  %877 = vmatprep.subr.bf16.mxu0 0
  %878 = vmatpush1.bf16.msra.mxu0 %v624
  %879 = vmatprep.subr.bf16.mxu0 0
  %880 = vmatpush1.bf16.msra.mxu0 %v625
  %881 = vmatprep.subr.bf16.mxu0 0
  %882 = vmatpush1.bf16.msra.mxu0 %v626
  %883 = vmatprep.subr.bf16.mxu0 0
  %884 = vmatpush1.bf16.msra.mxu0 %v627
  %885 = vmatprep.subr.bf16.mxu0 0
  %886 = vmatpush1.bf16.msra.mxu0 %v628
  %887 = vmatprep.subr.bf16.mxu0 0
  %888 = vmatpush1.bf16.msra.mxu0 %v629
  %889 = vmatprep.mubr.bf16.mxu0 %v249
  %890 = vmatmul.mubr.bf16.gmra.mrb[0].mxu0 %v248
  %v891 = vpop.f32.mrb[0].mxu0
  %v892 = vadd.f32 %v843, %v891
  %v893 = vpop.f32.mrb[0].mxu0
  %v894 = vpop.f32.mrb[0].mxu0
  %v895 = vadd.f32 %v846, %v894
  %v896 = vpop.f32.mrb[0].mxu0
  %897 = vmatprep.mubr.bf16.mxu0 %v258
  %898 = vmatmul.mubr.bf16.gmra.mrb[0].mxu0 %v257
  %v899 = vpop.f32.mrb[0].mxu0
  %v900 = vadd.f32 %v851, %v899
  %v901 = vpop.f32.mrb[0].mxu0
  %v902 = vpop.f32.mrb[0].mxu0
  %v903 = vadd.f32 %v854, %v902
  %v904 = vpop.f32.mrb[0].mxu0
  %905 = vdwg.mxu0
  %906 = vmatprep.subr.bf16.mxu0 0
  %907 = vmatpush1.bf16.msra.mxu0 %v630
  %908 = vmatprep.subr.bf16.mxu0 0
  %909 = vmatpush1.bf16.msra.mxu0 %v631
  %910 = vmatprep.subr.bf16.mxu0 0
  %911 = vmatpush1.bf16.msra.mxu0 %v632
  %912 = vmatprep.subr.bf16.mxu0 0
  %913 = vmatpush1.bf16.msra.mxu0 %v633
  %914 = vmatprep.subr.bf16.mxu0 0
  %915 = vmatpush1.bf16.msra.mxu0 %v634
  %916 = vmatprep.subr.bf16.mxu0 0
  %917 = vmatpush1.bf16.msra.mxu0 %v635
  %918 = vmatprep.subr.bf16.mxu0 0
  %919 = vmatpush1.bf16.msra.mxu0 %v636
  %920 = vmatprep.subr.bf16.mxu0 0
  %921 = vmatpush1.bf16.msra.mxu0 %v637
  %922 = vmatprep.subr.bf16.mxu0 0
  %923 = vmatpush1.bf16.msra.mxu0 0
  %924 = vmatprep.subr.bf16.mxu0 0
  %925 = vmatpush1.bf16.msra.mxu0 0
  %926 = vmatprep.subr.bf16.mxu0 0
  %927 = vmatpush1.bf16.msra.mxu0 0
  %928 = vmatprep.subr.bf16.mxu0 0
  %929 = vmatpush1.bf16.msra.mxu0 0
  %930 = vmatprep.subr.bf16.mxu0 0
  %931 = vmatpush1.bf16.msra.mxu0 0
  %932 = vmatprep.subr.bf16.mxu0 0
  %933 = vmatpush1.bf16.msra.mxu0 0
  %934 = vmatprep.subr.bf16.mxu0 0
  %935 = vmatpush1.bf16.msra.mxu0 0
  %936 = vmatprep.subr.bf16.mxu0 0
  %937 = vmatpush1.bf16.msra.mxu0 0
  %938 = vmatprep.mubr.bf16.mxu0 0
  %939 = vmatmul.mubr.bf16.gmra.mrb[0].mxu0 %v250
  %v940 = vpop.f32.mrb[0].mxu0
  %v941 = vadd.f32 %v892, %v940
  %v942 = vpop.f32.mrb[0].mxu0
  %v943 = vpop.f32.mrb[0].mxu0
  %v944 = vadd.f32 %v895, %v943
  %v945 = vpop.f32.mrb[0].mxu0
  %946 = vmatprep.mubr.bf16.mxu0 0
  %947 = vmatmul.mubr.bf16.gmra.mrb[0].mxu0 %v259
  %v948 = vpop.f32.mrb[0].mxu0
  %v949 = vadd.f32 %v900, %v948
  %v950 = vpop.f32.mrb[0].mxu0
  %v951 = vpop.f32.mrb[0].mxu0
  %v952 = vadd.f32 %v903, %v951
  %v953 = vpop.f32.mrb[0].mxu0
  %954 = vdwg.mxu0
  %vm955 = vcmp.gt.f32.partialorder %v941, 0.0
  %vm956 = vcmp.gt.f32.partialorder %v944, 0.0
  %vm957 = vcmp.gt.f32.partialorder %v949, 0.0
  %vm958 = vcmp.gt.f32.partialorder %v952, 0.0
  %v959 = vmul.f32 %v941, 0.01
  %v960 = vmul.f32 %v944, 0.01
  %v961 = vmul.f32 %v949, 0.01
  %v962 = vmul.f32 %v952, 0.01
  %v963 = vsel %vm955, %v941, %v959
  %v964 = vsel %vm956, %v944, %v960
  %v965 = vsel %vm957, %v949, %v961
  %v966 = vsel %vm958, %v952, %v962
  %v967 = vpack.c.bf16 %v964, %v963
  %v968 = vpack.c.bf16 %v966, %v965
  %v971 = vunpack.c.l.b16 %v967
  %v972 = vunpack.c.h.b16 %v967
  %v973 = vunpack.c.l.b16 %v968
  %v974 = vunpack.c.h.b16 %v968
  %v975 = vpack.c.b16 %v971, %v971
  %v976 = vpack.c.b16 %v972, %v972
  %v977 = vpack.c.b16 %v973, %v973
  %v978 = vpack.c.b16 %v974, %v974
  %983 = vst [vmem:[%s3] sm:$0xf] %v975
  %984 = vst [vmem:[%s3 + $0x4] sm:$0xf] %v976
  %985 = vst [vmem:[%s3 + $0x8] sm:$0xf] %v977
  %986 = vst [vmem:[%s3 + $0xc] sm:$0xf] %v978
  // Predicated region
  $region14: #{_lambda_.29} parent=0 // pred_check
    _
  $region15: #{_lambda_.29} parent=0 // pred_check_branch
    %988 = sbr.rel (0) target = $region17
  $region16: #{_lambda_.29} parent=0 // pred_region
    _
  $region17: #{_lambda_.29} parent=0 // pred_fallthru
    _
  // Predicated region
  $region18: #{_lambda_.29} parent=0 // pred_check
    _
  $region19: #{_lambda_.29} parent=0 // pred_check_branch
    %990 = sbr.rel (0) target = $region21
  $region20: #{_lambda_.29} parent=0 // pred_region
    _
  $region21: #{_lambda_.29} parent=0 // pred_fallthru
    _

// kernel: _lambda_.30
$region0: #{_lambda_.30}
  #allocation0 [shape = 'u32[]', space=smem, size = 0x4, offset = 0x4, fixed_abs, tag = 'smem constant byte address 0x4 - core index']
  #allocation1 [shape = 'u32[144,128]{1,0:T(1,128)}', space=vmem, size = 0x12000, scoped, tag = 'internal scratch']
  %s0 = inlined_call_operand.vmem [shape: bf16[32,1152], index: 0, kind: input, shape index: {}]
  %s1 = inlined_call_operand.vmem [shape: bf16[1152,128], index: 1, kind: input, shape index: {}]
  %s2 = inlined_call_operand.vmem [shape: bf16[128,128], index: 2, kind: input, shape index: {}]
  %s3 = inlined_call_operand.vmem [shape: bf16[32,128], index: 3, kind: input, shape index: {}]
  %s4 = inlined_call_operand.vmem [shape: bf16[32,128], index: 4, kind: output, shape index: {}]
  %s5 = sld [smem:[#allocation0]]
  $region26: #{_lambda_.30} parent=0
    _
  %s7 = ssub.s32 1, %s5
  %s8 = scalar_select 0, %s7, %s5
  // Predicated region
  $region2: #{_lambda_.30} parent=0 // pred_check
    _
  $region3: #{_lambda_.30} parent=0 // pred_check_branch
    %10 = sbr.rel (0) target = $region5
  $region4: #{_lambda_.30} parent=0 // pred_region
    _
  $region5: #{_lambda_.30} parent=0 // pred_fallthru
    _
  // Predicated region
  $region6: #{_lambda_.30} parent=0 // pred_check
    _
  $region7: #{_lambda_.30} parent=0 // pred_check_branch
    %12 = sbr.rel (0) target = $region9
  $region8: #{_lambda_.30} parent=0 // pred_region
    _
  $region9: #{_lambda_.30} parent=0 // pred_fallthru
    _
  // Predicated region
  $region10: #{_lambda_.30} parent=0 // pred_check
    _
  $region11: #{_lambda_.30} parent=0 // pred_check_branch
    %14 = sbr.rel (0) target = $region13
  $region12: #{_lambda_.30} parent=0 // pred_region
    _
  $region13: #{_lambda_.30} parent=0 // pred_fallthru
    _
  // Predicated region
  $region14: #{_lambda_.30} parent=0 // pred_check
    _
  $region15: #{_lambda_.30} parent=0 // pred_check_branch
    %16 = sbr.rel (0) target = $region17
  $region16: #{_lambda_.30} parent=0 // pred_region
    _
  $region17: #{_lambda_.30} parent=0 // pred_fallthru
    _
  %v18 = vld [vmem:[%s0] sm:$0xff]
  %v19 = vld [vmem:[%s0 + $0x8] sm:$0xff]
  %v20 = vld [vmem:[%s0 + $0x10] sm:$0xff]
  %v21 = vld [vmem:[%s0 + $0x18] sm:$0xff]
  %v22 = vld [vmem:[%s0 + $0x20] sm:$0xf]
  %v23 = vld [vmem:[%s0 + $0x24] sm:$0xff]
  %v24 = vld [vmem:[%s0 + $0x2c] sm:$0xff]
  %v25 = vld [vmem:[%s0 + $0x34] sm:$0xff]
  %v26 = vld [vmem:[%s0 + $0x3c] sm:$0xff]
  %v27 = vld [vmem:[%s0 + $0x44] sm:$0xf]
  %v28 = vld [vmem:[%s0 + $0x48] sm:$0xff]
  %v29 = vld [vmem:[%s0 + $0x50] sm:$0xff]
  %v30 = vld [vmem:[%s0 + $0x58] sm:$0xff]
  %v31 = vld [vmem:[%s0 + $0x60] sm:$0xff]
  %v32 = vld [vmem:[%s0 + $0x68] sm:$0xf]
  %v33 = vld [vmem:[%s0 + $0x6c] sm:$0xff]
  %v34 = vld [vmem:[%s0 + $0x74] sm:$0xff]
  %v35 = vld [vmem:[%s0 + $0x7c] sm:$0xff]
  %v36 = vld [vmem:[%s0 + $0x84] sm:$0xff]
  %v37 = vld [vmem:[%s0 + $0x8c] sm:$0xf]
  %v38 = vld [vmem:[%s1] sm:$0xf]
  %v39 = vld [vmem:[%s1 + $0x4] sm:$0xf]
  %v40 = vld [vmem:[%s1 + $0x8] sm:$0xf]
  %v41 = vld [vmem:[%s1 + $0xc] sm:$0xf]
  %v42 = vld [vmem:[%s1 + $0x10] sm:$0xf]
  %v43 = vld [vmem:[%s1 + $0x14] sm:$0xf]
  %v44 = vld [vmem:[%s1 + $0x18] sm:$0xf]
  %v45 = vld [vmem:[%s1 + $0x1c] sm:$0xf]
  %v46 = vld [vmem:[%s1 + $0x20] sm:$0xf]
  %v47 = vld [vmem:[%s1 + $0x24] sm:$0xf]
  %v48 = vld [vmem:[%s1 + $0x28] sm:$0xf]
  %v49 = vld [vmem:[%s1 + $0x2c] sm:$0xf]
  %v50 = vld [vmem:[%s1 + $0x30] sm:$0xf]
  %v51 = vld [vmem:[%s1 + $0x34] sm:$0xf]
  %v52 = vld [vmem:[%s1 + $0x38] sm:$0xf]
  %v53 = vld [vmem:[%s1 + $0x3c] sm:$0xf]
  %v54 = vld [vmem:[%s1 + $0x40] sm:$0xf]
  %v55 = vld [vmem:[%s1 + $0x44] sm:$0xf]
  %v56 = vld [vmem:[%s1 + $0x48] sm:$0xf]
  %v57 = vld [vmem:[%s1 + $0x4c] sm:$0xf]
  %v58 = vld [vmem:[%s1 + $0x50] sm:$0xf]
  %v59 = vld [vmem:[%s1 + $0x54] sm:$0xf]
  %v60 = vld [vmem:[%s1 + $0x58] sm:$0xf]
  %v61 = vld [vmem:[%s1 + $0x5c] sm:$0xf]
  %v62 = vld [vmem:[%s1 + $0x60] sm:$0xf]
  %v63 = vld [vmem:[%s1 + $0x64] sm:$0xf]
  %v64 = vld [vmem:[%s1 + $0x68] sm:$0xf]
  %v65 = vld [vmem:[%s1 + $0x6c] sm:$0xf]
  %v66 = vld [vmem:[%s1 + $0x70] sm:$0xf]
  %v67 = vld [vmem:[%s1 + $0x74] sm:$0xf]
  %v68 = vld [vmem:[%s1 + $0x78] sm:$0xf]
  %v69 = vld [vmem:[%s1 + $0x7c] sm:$0xf]
  %v70 = vld [vmem:[%s1 + $0x80] sm:$0xf]
  %v71 = vld [vmem:[%s1 + $0x84] sm:$0xf]
  %v72 = vld [vmem:[%s1 + $0x88] sm:$0xf]
  %v73 = vld [vmem:[%s1 + $0x8c] sm:$0xf]
  %v74 = vld [vmem:[%s1 + $0x90] sm:$0xf]
  %v75 = vld [vmem:[%s1 + $0x94] sm:$0xf]
  %v76 = vld [vmem:[%s1 + $0x98] sm:$0xf]
  %v77 = vld [vmem:[%s1 + $0x9c] sm:$0xf]
  %v78 = vld [vmem:[%s1 + $0xa0] sm:$0xf]
  %v79 = vld [vmem:[%s1 + $0xa4] sm:$0xf]
  %v80 = vld [vmem:[%s1 + $0xa8] sm:$0xf]
  %v81 = vld [vmem:[%s1 + $0xac] sm:$0xf]
  %v82 = vld [vmem:[%s1 + $0xb0] sm:$0xf]
  %v83 = vld [vmem:[%s1 + $0xb4] sm:$0xf]
  %v84 = vld [vmem:[%s1 + $0xb8] sm:$0xf]
  %v85 = vld [vmem:[%s1 + $0xbc] sm:$0xf]
  %v86 = vld [vmem:[%s1 + $0xc0] sm:$0xf]
  %v87 = vld [vmem:[%s1 + $0xc4] sm:$0xf]
  %v88 = vld [vmem:[%s1 + $0xc8] sm:$0xf]
  %v89 = vld [vmem:[%s1 + $0xcc] sm:$0xf]
  %v90 = vld [vmem:[%s1 + $0xd0] sm:$0xf]
  %v91 = vld [vmem:[%s1 + $0xd4] sm:$0xf]
  %v92 = vld [vmem:[%s1 + $0xd8] sm:$0xf]
  %v93 = vld [vmem:[%s1 + $0xdc] sm:$0xf]
  %v94 = vld [vmem:[%s1 + $0xe0] sm:$0xf]
  %v95 = vld [vmem:[%s1 + $0xe4] sm:$0xf]
  %v96 = vld [vmem:[%s1 + $0xe8] sm:$0xf]
  %v97 = vld [vmem:[%s1 + $0xec] sm:$0xf]
  %v98 = vld [vmem:[%s1 + $0xf0] sm:$0xf]
  %v99 = vld [vmem:[%s1 + $0xf4] sm:$0xf]
  %v100 = vld [vmem:[%s1 + $0xf8] sm:$0xf]
  %v101 = vld [vmem:[%s1 + $0xfc] sm:$0xf]
  %v102 = vld [vmem:[%s1 + $0x100] sm:$0xf]
  %v103 = vld [vmem:[%s1 + $0x104] sm:$0xf]
  %v104 = vld [vmem:[%s1 + $0x108] sm:$0xf]
  %v105 = vld [vmem:[%s1 + $0x10c] sm:$0xf]
  %v106 = vld [vmem:[%s1 + $0x110] sm:$0xf]
  %v107 = vld [vmem:[%s1 + $0x114] sm:$0xf]
  %v108 = vld [vmem:[%s1 + $0x118] sm:$0xf]
  %v109 = vld [vmem:[%s1 + $0x11c] sm:$0xf]
  %v110 = vld [vmem:[%s1 + $0x120] sm:$0xf]
  %v111 = vld [vmem:[%s1 + $0x124] sm:$0xf]
  %v112 = vld [vmem:[%s1 + $0x128] sm:$0xf]
  %v113 = vld [vmem:[%s1 + $0x12c] sm:$0xf]
  %v114 = vld [vmem:[%s1 + $0x130] sm:$0xf]
  %v115 = vld [vmem:[%s1 + $0x134] sm:$0xf]
  %v116 = vld [vmem:[%s1 + $0x138] sm:$0xf]
  %v117 = vld [vmem:[%s1 + $0x13c] sm:$0xf]
  %v118 = vld [vmem:[%s1 + $0x140] sm:$0xf]
  %v119 = vld [vmem:[%s1 + $0x144] sm:$0xf]
  %v120 = vld [vmem:[%s1 + $0x148] sm:$0xf]
  %v121 = vld [vmem:[%s1 + $0x14c] sm:$0xf]
  %v122 = vld [vmem:[%s1 + $0x150] sm:$0xf]
  %v123 = vld [vmem:[%s1 + $0x154] sm:$0xf]
  %v124 = vld [vmem:[%s1 + $0x158] sm:$0xf]
  %v125 = vld [vmem:[%s1 + $0x15c] sm:$0xf]
  %v126 = vld [vmem:[%s1 + $0x160] sm:$0xf]
  %v127 = vld [vmem:[%s1 + $0x164] sm:$0xf]
  %v128 = vld [vmem:[%s1 + $0x168] sm:$0xf]
  %v129 = vld [vmem:[%s1 + $0x16c] sm:$0xf]
  %v130 = vld [vmem:[%s1 + $0x170] sm:$0xf]
  %v131 = vld [vmem:[%s1 + $0x174] sm:$0xf]
  %v132 = vld [vmem:[%s1 + $0x178] sm:$0xf]
  %v133 = vld [vmem:[%s1 + $0x17c] sm:$0xf]
  %v134 = vld [vmem:[%s1 + $0x180] sm:$0xf]
  %v135 = vld [vmem:[%s1 + $0x184] sm:$0xf]
  %v136 = vld [vmem:[%s1 + $0x188] sm:$0xf]
  %v137 = vld [vmem:[%s1 + $0x18c] sm:$0xf]
  %v138 = vld [vmem:[%s1 + $0x190] sm:$0xf]
  %v139 = vld [vmem:[%s1 + $0x194] sm:$0xf]
  %v140 = vld [vmem:[%s1 + $0x198] sm:$0xf]
  %v141 = vld [vmem:[%s1 + $0x19c] sm:$0xf]
  %v142 = vld [vmem:[%s1 + $0x1a0] sm:$0xf]
  %v143 = vld [vmem:[%s1 + $0x1a4] sm:$0xf]
  %v144 = vld [vmem:[%s1 + $0x1a8] sm:$0xf]
  %v145 = vld [vmem:[%s1 + $0x1ac] sm:$0xf]
  %v146 = vld [vmem:[%s1 + $0x1b0] sm:$0xf]
  %v147 = vld [vmem:[%s1 + $0x1b4] sm:$0xf]
  %v148 = vld [vmem:[%s1 + $0x1b8] sm:$0xf]
  %v149 = vld [vmem:[%s1 + $0x1bc] sm:$0xf]
  %v150 = vld [vmem:[%s1 + $0x1c0] sm:$0xf]
  %v151 = vld [vmem:[%s1 + $0x1c4] sm:$0xf]
  %v152 = vld [vmem:[%s1 + $0x1c8] sm:$0xf]
  %v153 = vld [vmem:[%s1 + $0x1cc] sm:$0xf]
  %v154 = vld [vmem:[%s1 + $0x1d0] sm:$0xf]
  %v155 = vld [vmem:[%s1 + $0x1d4] sm:$0xf]
  %v156 = vld [vmem:[%s1 + $0x1d8] sm:$0xf]
  %v157 = vld [vmem:[%s1 + $0x1dc] sm:$0xf]
  %v158 = vld [vmem:[%s1 + $0x1e0] sm:$0xf]
  %v159 = vld [vmem:[%s1 + $0x1e4] sm:$0xf]
  %v160 = vld [vmem:[%s1 + $0x1e8] sm:$0xf]
  %v161 = vld [vmem:[%s1 + $0x1ec] sm:$0xf]
  %v162 = vld [vmem:[%s1 + $0x1f0] sm:$0xf]
  %v163 = vld [vmem:[%s1 + $0x1f4] sm:$0xf]
  %v164 = vld [vmem:[%s1 + $0x1f8] sm:$0xf]
  %v165 = vld [vmem:[%s1 + $0x1fc] sm:$0xf]
  %v166 = vld [vmem:[%s1 + $0x200] sm:$0xf]
  %v167 = vld [vmem:[%s1 + $0x204] sm:$0xf]
  %v168 = vld [vmem:[%s1 + $0x208] sm:$0xf]
  %v169 = vld [vmem:[%s1 + $0x20c] sm:$0xf]
  %v170 = vld [vmem:[%s1 + $0x210] sm:$0xf]
  %v171 = vld [vmem:[%s1 + $0x214] sm:$0xf]
  %v172 = vld [vmem:[%s1 + $0x218] sm:$0xf]
  %v173 = vld [vmem:[%s1 + $0x21c] sm:$0xf]
  %v174 = vld [vmem:[%s1 + $0x220] sm:$0xf]
  %v175 = vld [vmem:[%s1 + $0x224] sm:$0xf]
  %v176 = vld [vmem:[%s1 + $0x228] sm:$0xf]
  %v177 = vld [vmem:[%s1 + $0x22c] sm:$0xf]
  %v178 = vld [vmem:[%s1 + $0x230] sm:$0xf]
  %v179 = vld [vmem:[%s1 + $0x234] sm:$0xf]
  %v180 = vld [vmem:[%s1 + $0x238] sm:$0xf]
  %v181 = vld [vmem:[%s1 + $0x23c] sm:$0xf]
  %v202 = vunpack.c.l.b16 %v18
  %v203 = vunpack.c.h.b16 %v18
  %v204 = vunpack.c.l.b16 %v19
  %v205 = vunpack.c.h.b16 %v19
  %v206 = vunpack.c.l.b16 %v20
  %v207 = vunpack.c.h.b16 %v20
  %v208 = vunpack.c.l.b16 %v21
  %v209 = vunpack.c.h.b16 %v21
  %v210 = vunpack.c.l.b16 %v22
  %v211 = vunpack.c.l.b16 %v23
  %v212 = vunpack.c.h.b16 %v23
  %v213 = vunpack.c.l.b16 %v24
  %v214 = vunpack.c.h.b16 %v24
  %v215 = vunpack.c.l.b16 %v25
  %v216 = vunpack.c.h.b16 %v25
  %v217 = vunpack.c.l.b16 %v26
  %v218 = vunpack.c.h.b16 %v26
  %v219 = vunpack.c.l.b16 %v27
  %v220 = vunpack.c.l.b16 %v28
  %v221 = vunpack.c.h.b16 %v28
  %v222 = vunpack.c.l.b16 %v29
  %v223 = vunpack.c.h.b16 %v29
  %v224 = vunpack.c.l.b16 %v30
  %v225 = vunpack.c.h.b16 %v30
  %v226 = vunpack.c.l.b16 %v31
  %v227 = vunpack.c.h.b16 %v31
  %v228 = vunpack.c.l.b16 %v32
  %v229 = vunpack.c.l.b16 %v33
  %v230 = vunpack.c.h.b16 %v33
  %v231 = vunpack.c.l.b16 %v34
  %v232 = vunpack.c.h.b16 %v34
  %v233 = vunpack.c.l.b16 %v35
  %v234 = vunpack.c.h.b16 %v35
  %v235 = vunpack.c.l.b16 %v36
  %v236 = vunpack.c.h.b16 %v36
  %v237 = vunpack.c.l.b16 %v37
  %v238 = vpack.c.b16 %v211, %v202
  %v239 = vpack.c.b16 %v212, %v203
  %v240 = vpack.c.b16 %v213, %v204
  %v241 = vpack.c.b16 %v214, %v205
  %v242 = vpack.c.b16 %v215, %v206
  %v243 = vpack.c.b16 %v216, %v207
  %v244 = vpack.c.b16 %v217, %v208
  %v245 = vpack.c.b16 %v218, %v209
  %v246 = vpack.c.b16 %v219, %v210
  %v247 = vpack.c.b16 %v229, %v220
  %v248 = vpack.c.b16 %v230, %v221
  %v249 = vpack.c.b16 %v231, %v222
  %v250 = vpack.c.b16 %v232, %v223
  %v251 = vpack.c.b16 %v233, %v224
  %v252 = vpack.c.b16 %v234, %v225
  %v253 = vpack.c.b16 %v235, %v226
  %v254 = vpack.c.b16 %v236, %v227
  %v255 = vpack.c.b16 %v237, %v228
  %v418 = vunpack.c.l.b16 %v38
  %v419 = vunpack.c.l.b16 %v39
  %v420 = vunpack.c.l.b16 %v40
  %v421 = vunpack.c.l.b16 %v41
  %v422 = vunpack.c.l.b16 %v42
  %v423 = vunpack.c.l.b16 %v43
  %v424 = vunpack.c.l.b16 %v44
  %v425 = vunpack.c.l.b16 %v45
  %v426 = vunpack.c.l.b16 %v46
  %v427 = vunpack.c.l.b16 %v47
  %v428 = vunpack.c.l.b16 %v48
  %v429 = vunpack.c.l.b16 %v49
  %v430 = vunpack.c.l.b16 %v50
  %v431 = vunpack.c.l.b16 %v51
  %v432 = vunpack.c.l.b16 %v52
  %v433 = vunpack.c.l.b16 %v53
  %v434 = vunpack.c.l.b16 %v54
  %v435 = vunpack.c.l.b16 %v55
  %v436 = vunpack.c.l.b16 %v56
  %v437 = vunpack.c.l.b16 %v57
  %v438 = vunpack.c.l.b16 %v58
  %v439 = vunpack.c.l.b16 %v59
  %v440 = vunpack.c.l.b16 %v60
  %v441 = vunpack.c.l.b16 %v61
  %v442 = vunpack.c.l.b16 %v62
  %v443 = vunpack.c.l.b16 %v63
  %v444 = vunpack.c.l.b16 %v64
  %v445 = vunpack.c.l.b16 %v65
  %v446 = vunpack.c.l.b16 %v66
  %v447 = vunpack.c.l.b16 %v67
  %v448 = vunpack.c.l.b16 %v68
  %v449 = vunpack.c.l.b16 %v69
  %v450 = vunpack.c.l.b16 %v70
  %v451 = vunpack.c.l.b16 %v71
  %v452 = vunpack.c.l.b16 %v72
  %v453 = vunpack.c.l.b16 %v73
  %v454 = vunpack.c.l.b16 %v74
  %v455 = vunpack.c.l.b16 %v75
  %v456 = vunpack.c.l.b16 %v76
  %v457 = vunpack.c.l.b16 %v77
  %v458 = vunpack.c.l.b16 %v78
  %v459 = vunpack.c.l.b16 %v79
  %v460 = vunpack.c.l.b16 %v80
  %v461 = vunpack.c.l.b16 %v81
  %v462 = vunpack.c.l.b16 %v82
  %v463 = vunpack.c.l.b16 %v83
  %v464 = vunpack.c.l.b16 %v84
  %v465 = vunpack.c.l.b16 %v85
  %v466 = vunpack.c.l.b16 %v86
  %v467 = vunpack.c.l.b16 %v87
  %v468 = vunpack.c.l.b16 %v88
  %v469 = vunpack.c.l.b16 %v89
  %v470 = vunpack.c.l.b16 %v90
  %v471 = vunpack.c.l.b16 %v91
  %v472 = vunpack.c.l.b16 %v92
  %v473 = vunpack.c.l.b16 %v93
  %v474 = vunpack.c.l.b16 %v94
  %v475 = vunpack.c.l.b16 %v95
  %v476 = vunpack.c.l.b16 %v96
  %v477 = vunpack.c.l.b16 %v97
  %v478 = vunpack.c.l.b16 %v98
  %v479 = vunpack.c.l.b16 %v99
  %v480 = vunpack.c.l.b16 %v100
  %v481 = vunpack.c.l.b16 %v101
  %v482 = vunpack.c.l.b16 %v102
  %v483 = vunpack.c.l.b16 %v103
  %v484 = vunpack.c.l.b16 %v104
  %v485 = vunpack.c.l.b16 %v105
  %v486 = vunpack.c.l.b16 %v106
  %v487 = vunpack.c.l.b16 %v107
  %v488 = vunpack.c.l.b16 %v108
  %v489 = vunpack.c.l.b16 %v109
  %v490 = vunpack.c.l.b16 %v110
  %v491 = vunpack.c.l.b16 %v111
  %v492 = vunpack.c.l.b16 %v112
  %v493 = vunpack.c.l.b16 %v113
  %v494 = vunpack.c.l.b16 %v114
  %v495 = vunpack.c.l.b16 %v115
  %v496 = vunpack.c.l.b16 %v116
  %v497 = vunpack.c.l.b16 %v117
  %v498 = vunpack.c.l.b16 %v118
  %v499 = vunpack.c.l.b16 %v119
  %v500 = vunpack.c.l.b16 %v120
  %v501 = vunpack.c.l.b16 %v121
  %v502 = vunpack.c.l.b16 %v122
  %v503 = vunpack.c.l.b16 %v123
  %v504 = vunpack.c.l.b16 %v124
  %v505 = vunpack.c.l.b16 %v125
  %v506 = vunpack.c.l.b16 %v126
  %v507 = vunpack.c.l.b16 %v127
  %v508 = vunpack.c.l.b16 %v128
  %v509 = vunpack.c.l.b16 %v129
  %v510 = vunpack.c.l.b16 %v130
  %v511 = vunpack.c.l.b16 %v131
  %v512 = vunpack.c.l.b16 %v132
  %v513 = vunpack.c.l.b16 %v133
  %v514 = vunpack.c.l.b16 %v134
  %v515 = vunpack.c.l.b16 %v135
  %v516 = vunpack.c.l.b16 %v136
  %v517 = vunpack.c.l.b16 %v137
  %v518 = vunpack.c.l.b16 %v138
  %v519 = vunpack.c.l.b16 %v139
  %v520 = vunpack.c.l.b16 %v140
  %v521 = vunpack.c.l.b16 %v141
  %v522 = vunpack.c.l.b16 %v142
  %v523 = vunpack.c.l.b16 %v143
  %v524 = vunpack.c.l.b16 %v144
  %v525 = vunpack.c.l.b16 %v145
  %v526 = vunpack.c.l.b16 %v146
  %v527 = vunpack.c.l.b16 %v147
  %v528 = vunpack.c.l.b16 %v148
  %v529 = vunpack.c.l.b16 %v149
  %v530 = vunpack.c.l.b16 %v150
  %v531 = vunpack.c.l.b16 %v151
  %v532 = vunpack.c.l.b16 %v152
  %v533 = vunpack.c.l.b16 %v153
  %v534 = vunpack.c.l.b16 %v154
  %v535 = vunpack.c.l.b16 %v155
  %v536 = vunpack.c.l.b16 %v156
  %v537 = vunpack.c.l.b16 %v157
  %v538 = vunpack.c.l.b16 %v158
  %v539 = vunpack.c.l.b16 %v159
  %v540 = vunpack.c.l.b16 %v160
  %v541 = vunpack.c.l.b16 %v161
  %v542 = vunpack.c.l.b16 %v162
  %v543 = vunpack.c.l.b16 %v163
  %v544 = vunpack.c.l.b16 %v164
  %v545 = vunpack.c.l.b16 %v165
  %v546 = vunpack.c.l.b16 %v166
  %v547 = vunpack.c.l.b16 %v167
  %v548 = vunpack.c.l.b16 %v168
  %v549 = vunpack.c.l.b16 %v169
  %v550 = vunpack.c.l.b16 %v170
  %v551 = vunpack.c.l.b16 %v171
  %v552 = vunpack.c.l.b16 %v172
  %v553 = vunpack.c.l.b16 %v173
  %v554 = vunpack.c.l.b16 %v174
  %v555 = vunpack.c.l.b16 %v175
  %v556 = vunpack.c.l.b16 %v176
  %v557 = vunpack.c.l.b16 %v177
  %v558 = vunpack.c.l.b16 %v178
  %v559 = vunpack.c.l.b16 %v179
  %v560 = vunpack.c.l.b16 %v180
  %v561 = vunpack.c.l.b16 %v181
  %v562 = vpack.c.b16 %v419, %v418
  %v563 = vpack.c.b16 %v421, %v420
  %v564 = vpack.c.b16 %v423, %v422
  %v565 = vpack.c.b16 %v425, %v424
  %v566 = vpack.c.b16 %v427, %v426
  %v567 = vpack.c.b16 %v429, %v428
  %v568 = vpack.c.b16 %v431, %v430
  %v569 = vpack.c.b16 %v433, %v432
  %v570 = vpack.c.b16 %v435, %v434
  %v571 = vpack.c.b16 %v437, %v436
  %v572 = vpack.c.b16 %v439, %v438
  %v573 = vpack.c.b16 %v441, %v440
  %v574 = vpack.c.b16 %v443, %v442
  %v575 = vpack.c.b16 %v445, %v444
  %v576 = vpack.c.b16 %v447, %v446
  %v577 = vpack.c.b16 %v449, %v448
  %v578 = vpack.c.b16 %v451, %v450
  %v579 = vpack.c.b16 %v453, %v452
  %v580 = vpack.c.b16 %v455, %v454
  %v581 = vpack.c.b16 %v457, %v456
  %v582 = vpack.c.b16 %v459, %v458
  %v583 = vpack.c.b16 %v461, %v460
  %v584 = vpack.c.b16 %v463, %v462
  %v585 = vpack.c.b16 %v465, %v464
  %v586 = vpack.c.b16 %v467, %v466
  %v587 = vpack.c.b16 %v469, %v468
  %v588 = vpack.c.b16 %v471, %v470
  %v589 = vpack.c.b16 %v473, %v472
  %v590 = vpack.c.b16 %v475, %v474
  %v591 = vpack.c.b16 %v477, %v476
  %v592 = vpack.c.b16 %v479, %v478
  %v593 = vpack.c.b16 %v481, %v480
  %v594 = vpack.c.b16 %v483, %v482
  %v595 = vpack.c.b16 %v485, %v484
  %v596 = vpack.c.b16 %v487, %v486
  %v597 = vpack.c.b16 %v489, %v488
  %v598 = vpack.c.b16 %v491, %v490
  %v599 = vpack.c.b16 %v493, %v492
  %v600 = vpack.c.b16 %v495, %v494
  %v601 = vpack.c.b16 %v497, %v496
  %v602 = vpack.c.b16 %v499, %v498
  %v603 = vpack.c.b16 %v501, %v500
  %v604 = vpack.c.b16 %v503, %v502
  %v605 = vpack.c.b16 %v505, %v504
  %v606 = vpack.c.b16 %v507, %v506
  %v607 = vpack.c.b16 %v509, %v508
  %v608 = vpack.c.b16 %v511, %v510
  %v609 = vpack.c.b16 %v513, %v512
  %v610 = vpack.c.b16 %v515, %v514
  %v611 = vpack.c.b16 %v517, %v516
  %v612 = vpack.c.b16 %v519, %v518
  %v613 = vpack.c.b16 %v521, %v520
  %v614 = vpack.c.b16 %v523, %v522
  %v615 = vpack.c.b16 %v525, %v524
  %v616 = vpack.c.b16 %v527, %v526
  %v617 = vpack.c.b16 %v529, %v528
  %v618 = vpack.c.b16 %v531, %v530
  %v619 = vpack.c.b16 %v533, %v532
  %v620 = vpack.c.b16 %v535, %v534
  %v621 = vpack.c.b16 %v537, %v536
  %v622 = vpack.c.b16 %v539, %v538
  %v623 = vpack.c.b16 %v541, %v540
  %v624 = vpack.c.b16 %v543, %v542
  %v625 = vpack.c.b16 %v545, %v544
  %v626 = vpack.c.b16 %v547, %v546
  %v627 = vpack.c.b16 %v549, %v548
  %v628 = vpack.c.b16 %v551, %v550
  %v629 = vpack.c.b16 %v553, %v552
  %v630 = vpack.c.b16 %v555, %v554
  %v631 = vpack.c.b16 %v557, %v556
  %v632 = vpack.c.b16 %v559, %v558
  %v633 = vpack.c.b16 %v561, %v560
  %706 = vmatprep.subr.bf16.mxu0 0
  %707 = vmatpush1.bf16.msra.mxu0 %v562
  %708 = vmatprep.subr.bf16.mxu0 0
  %709 = vmatpush1.bf16.msra.mxu0 %v563
  %710 = vmatprep.subr.bf16.mxu0 0
  %711 = vmatpush1.bf16.msra.mxu0 %v564
  %712 = vmatprep.subr.bf16.mxu0 0
  %713 = vmatpush1.bf16.msra.mxu0 %v565
  %714 = vmatprep.subr.bf16.mxu0 0
  %715 = vmatpush1.bf16.msra.mxu0 %v566
  %716 = vmatprep.subr.bf16.mxu0 0
  %717 = vmatpush1.bf16.msra.mxu0 %v567
  %718 = vmatprep.subr.bf16.mxu0 0
  %719 = vmatpush1.bf16.msra.mxu0 %v568
  %720 = vmatprep.subr.bf16.mxu0 0
  %721 = vmatpush1.bf16.msra.mxu0 %v569
  %722 = vmatprep.subr.bf16.mxu0 0
  %723 = vmatpush1.bf16.msra.mxu0 %v570
  %724 = vmatprep.subr.bf16.mxu0 0
  %725 = vmatpush1.bf16.msra.mxu0 %v571
  %726 = vmatprep.subr.bf16.mxu0 0
  %727 = vmatpush1.bf16.msra.mxu0 %v572
  %728 = vmatprep.subr.bf16.mxu0 0
  %729 = vmatpush1.bf16.msra.mxu0 %v573
  %730 = vmatprep.subr.bf16.mxu0 0
  %731 = vmatpush1.bf16.msra.mxu0 %v574
  %732 = vmatprep.subr.bf16.mxu0 0
  %733 = vmatpush1.bf16.msra.mxu0 %v575
  %734 = vmatprep.subr.bf16.mxu0 0
  %735 = vmatpush1.bf16.msra.mxu0 %v576
  %736 = vmatprep.subr.bf16.mxu0 0
  %737 = vmatpush1.bf16.msra.mxu0 %v577
  %738 = vmatprep.mubr.bf16.mxu0 %v239
  %739 = vmatmul.mubr.bf16.gmra.mrb[0].mxu0 %v238
  %v740 = vpop.f32.mrb[0].mxu0
  %v741 = vadd.f32 0.0, %v740
  %v742 = vpop.f32.mrb[0].mxu0
  %v743 = vpop.f32.mrb[0].mxu0
  %v744 = vadd.f32 0.0, %v743
  %v745 = vpop.f32.mrb[0].mxu0
  %746 = vmatprep.mubr.bf16.mxu0 %v248
  %747 = vmatmul.mubr.bf16.gmra.mrb[0].mxu0 %v247
  %v748 = vpop.f32.mrb[0].mxu0
  %v749 = vadd.f32 0.0, %v748
  %v750 = vpop.f32.mrb[0].mxu0
  %v751 = vpop.f32.mrb[0].mxu0
  %v752 = vadd.f32 0.0, %v751
  %v753 = vpop.f32.mrb[0].mxu0
  %754 = vdwg.mxu0
  %755 = vmatprep.subr.bf16.mxu0 0
  %756 = vmatpush1.bf16.msra.mxu0 %v578
  %757 = vmatprep.subr.bf16.mxu0 0
  %758 = vmatpush1.bf16.msra.mxu0 %v579
  %759 = vmatprep.subr.bf16.mxu0 0
  %760 = vmatpush1.bf16.msra.mxu0 %v580
  %761 = vmatprep.subr.bf16.mxu0 0
  %762 = vmatpush1.bf16.msra.mxu0 %v581
  %763 = vmatprep.subr.bf16.mxu0 0
  %764 = vmatpush1.bf16.msra.mxu0 %v582
  %765 = vmatprep.subr.bf16.mxu0 0
  %766 = vmatpush1.bf16.msra.mxu0 %v583
  %767 = vmatprep.subr.bf16.mxu0 0
  %768 = vmatpush1.bf16.msra.mxu0 %v584
  %769 = vmatprep.subr.bf16.mxu0 0
  %770 = vmatpush1.bf16.msra.mxu0 %v585
  %771 = vmatprep.subr.bf16.mxu0 0
  %772 = vmatpush1.bf16.msra.mxu0 %v586
  %773 = vmatprep.subr.bf16.mxu0 0
  %774 = vmatpush1.bf16.msra.mxu0 %v587
  %775 = vmatprep.subr.bf16.mxu0 0
  %776 = vmatpush1.bf16.msra.mxu0 %v588
  %777 = vmatprep.subr.bf16.mxu0 0
  %778 = vmatpush1.bf16.msra.mxu0 %v589
  %779 = vmatprep.subr.bf16.mxu0 0
  %780 = vmatpush1.bf16.msra.mxu0 %v590
  %781 = vmatprep.subr.bf16.mxu0 0
  %782 = vmatpush1.bf16.msra.mxu0 %v591
  %783 = vmatprep.subr.bf16.mxu0 0
  %784 = vmatpush1.bf16.msra.mxu0 %v592
  %785 = vmatprep.subr.bf16.mxu0 0
  %786 = vmatpush1.bf16.msra.mxu0 %v593
  %787 = vmatprep.mubr.bf16.mxu0 %v241
  %788 = vmatmul.mubr.bf16.gmra.mrb[0].mxu0 %v240
  %v789 = vpop.f32.mrb[0].mxu0
  %v790 = vadd.f32 %v741, %v789
  %v791 = vpop.f32.mrb[0].mxu0
  %v792 = vpop.f32.mrb[0].mxu0
  %v793 = vadd.f32 %v744, %v792
  %v794 = vpop.f32.mrb[0].mxu0
  %795 = vmatprep.mubr.bf16.mxu0 %v250
  %796 = vmatmul.mubr.bf16.gmra.mrb[0].mxu0 %v249
  %v797 = vpop.f32.mrb[0].mxu0
  %v798 = vadd.f32 %v749, %v797
  %v799 = vpop.f32.mrb[0].mxu0
  %v800 = vpop.f32.mrb[0].mxu0
  %v801 = vadd.f32 %v752, %v800
  %v802 = vpop.f32.mrb[0].mxu0
  %803 = vdwg.mxu0
  %804 = vmatprep.subr.bf16.mxu0 0
  %805 = vmatpush1.bf16.msra.mxu0 %v594
  %806 = vmatprep.subr.bf16.mxu0 0
  %807 = vmatpush1.bf16.msra.mxu0 %v595
  %808 = vmatprep.subr.bf16.mxu0 0
  %809 = vmatpush1.bf16.msra.mxu0 %v596
  %810 = vmatprep.subr.bf16.mxu0 0
  %811 = vmatpush1.bf16.msra.mxu0 %v597
  %812 = vmatprep.subr.bf16.mxu0 0
  %813 = vmatpush1.bf16.msra.mxu0 %v598
  %814 = vmatprep.subr.bf16.mxu0 0
  %815 = vmatpush1.bf16.msra.mxu0 %v599
  %816 = vmatprep.subr.bf16.mxu0 0
  %817 = vmatpush1.bf16.msra.mxu0 %v600
  %818 = vmatprep.subr.bf16.mxu0 0
  %819 = vmatpush1.bf16.msra.mxu0 %v601
  %820 = vmatprep.subr.bf16.mxu0 0
  %821 = vmatpush1.bf16.msra.mxu0 %v602
  %822 = vmatprep.subr.bf16.mxu0 0
  %823 = vmatpush1.bf16.msra.mxu0 %v603
  %824 = vmatprep.subr.bf16.mxu0 0
  %825 = vmatpush1.bf16.msra.mxu0 %v604
  %826 = vmatprep.subr.bf16.mxu0 0
  %827 = vmatpush1.bf16.msra.mxu0 %v605
  %828 = vmatprep.subr.bf16.mxu0 0
  %829 = vmatpush1.bf16.msra.mxu0 %v606
  %830 = vmatprep.subr.bf16.mxu0 0
  %831 = vmatpush1.bf16.msra.mxu0 %v607
  %832 = vmatprep.subr.bf16.mxu0 0
  %833 = vmatpush1.bf16.msra.mxu0 %v608
  %834 = vmatprep.subr.bf16.mxu0 0
  %835 = vmatpush1.bf16.msra.mxu0 %v609
  %836 = vmatprep.mubr.bf16.mxu0 %v243
  %837 = vmatmul.mubr.bf16.gmra.mrb[0].mxu0 %v242
  %v838 = vpop.f32.mrb[0].mxu0
  %v839 = vadd.f32 %v790, %v838
  %v840 = vpop.f32.mrb[0].mxu0
  %v841 = vpop.f32.mrb[0].mxu0
  %v842 = vadd.f32 %v793, %v841
  %v843 = vpop.f32.mrb[0].mxu0
  %844 = vmatprep.mubr.bf16.mxu0 %v252
  %845 = vmatmul.mubr.bf16.gmra.mrb[0].mxu0 %v251
  %v846 = vpop.f32.mrb[0].mxu0
  %v847 = vadd.f32 %v798, %v846
  %v848 = vpop.f32.mrb[0].mxu0
  %v849 = vpop.f32.mrb[0].mxu0
  %v850 = vadd.f32 %v801, %v849
  %v851 = vpop.f32.mrb[0].mxu0
  %852 = vdwg.mxu0
  %853 = vmatprep.subr.bf16.mxu0 0
  %854 = vmatpush1.bf16.msra.mxu0 %v610
  %855 = vmatprep.subr.bf16.mxu0 0
  %856 = vmatpush1.bf16.msra.mxu0 %v611
  %857 = vmatprep.subr.bf16.mxu0 0
  %858 = vmatpush1.bf16.msra.mxu0 %v612
  %859 = vmatprep.subr.bf16.mxu0 0
  %860 = vmatpush1.bf16.msra.mxu0 %v613
  %861 = vmatprep.subr.bf16.mxu0 0
  %862 = vmatpush1.bf16.msra.mxu0 %v614
  %863 = vmatprep.subr.bf16.mxu0 0
  %864 = vmatpush1.bf16.msra.mxu0 %v615
  %865 = vmatprep.subr.bf16.mxu0 0
  %866 = vmatpush1.bf16.msra.mxu0 %v616
  %867 = vmatprep.subr.bf16.mxu0 0
  %868 = vmatpush1.bf16.msra.mxu0 %v617
  %869 = vmatprep.subr.bf16.mxu0 0
  %870 = vmatpush1.bf16.msra.mxu0 %v618
  %871 = vmatprep.subr.bf16.mxu0 0
  %872 = vmatpush1.bf16.msra.mxu0 %v619
  %873 = vmatprep.subr.bf16.mxu0 0
  %874 = vmatpush1.bf16.msra.mxu0 %v620
  %875 = vmatprep.subr.bf16.mxu0 0
  %876 = vmatpush1.bf16.msra.mxu0 %v621
  %877 = vmatprep.subr.bf16.mxu0 0
  %878 = vmatpush1.bf16.msra.mxu0 %v622
  %879 = vmatprep.subr.bf16.mxu0 0
  %880 = vmatpush1.bf16.msra.mxu0 %v623
  %881 = vmatprep.subr.bf16.mxu0 0
  %882 = vmatpush1.bf16.msra.mxu0 %v624
  %883 = vmatprep.subr.bf16.mxu0 0
  %884 = vmatpush1.bf16.msra.mxu0 %v625
  %885 = vmatprep.mubr.bf16.mxu0 %v245
  %886 = vmatmul.mubr.bf16.gmra.mrb[0].mxu0 %v244
  %v887 = vpop.f32.mrb[0].mxu0
  %v888 = vadd.f32 %v839, %v887
  %v889 = vpop.f32.mrb[0].mxu0
  %v890 = vpop.f32.mrb[0].mxu0
  %v891 = vadd.f32 %v842, %v890
  %v892 = vpop.f32.mrb[0].mxu0
  %893 = vmatprep.mubr.bf16.mxu0 %v254
  %894 = vmatmul.mubr.bf16.gmra.mrb[0].mxu0 %v253
  %v895 = vpop.f32.mrb[0].mxu0
  %v896 = vadd.f32 %v847, %v895
  %v897 = vpop.f32.mrb[0].mxu0
  %v898 = vpop.f32.mrb[0].mxu0
  %v899 = vadd.f32 %v850, %v898
  %v900 = vpop.f32.mrb[0].mxu0
  %901 = vdwg.mxu0
  %902 = vmatprep.subr.bf16.mxu0 0
  %903 = vmatpush1.bf16.msra.mxu0 %v626
  %904 = vmatprep.subr.bf16.mxu0 0
  %905 = vmatpush1.bf16.msra.mxu0 %v627
  %906 = vmatprep.subr.bf16.mxu0 0
  %907 = vmatpush1.bf16.msra.mxu0 %v628
  %908 = vmatprep.subr.bf16.mxu0 0
  %909 = vmatpush1.bf16.msra.mxu0 %v629
  %910 = vmatprep.subr.bf16.mxu0 0
  %911 = vmatpush1.bf16.msra.mxu0 %v630
  %912 = vmatprep.subr.bf16.mxu0 0
  %913 = vmatpush1.bf16.msra.mxu0 %v631
  %914 = vmatprep.subr.bf16.mxu0 0
  %915 = vmatpush1.bf16.msra.mxu0 %v632
  %916 = vmatprep.subr.bf16.mxu0 0
  %917 = vmatpush1.bf16.msra.mxu0 %v633
  %918 = vmatprep.subr.bf16.mxu0 0
  %919 = vmatpush1.bf16.msra.mxu0 0
  %920 = vmatprep.subr.bf16.mxu0 0
  %921 = vmatpush1.bf16.msra.mxu0 0
  %922 = vmatprep.subr.bf16.mxu0 0
  %923 = vmatpush1.bf16.msra.mxu0 0
  %924 = vmatprep.subr.bf16.mxu0 0
  %925 = vmatpush1.bf16.msra.mxu0 0
  %926 = vmatprep.subr.bf16.mxu0 0
  %927 = vmatpush1.bf16.msra.mxu0 0
  %928 = vmatprep.subr.bf16.mxu0 0
  %929 = vmatpush1.bf16.msra.mxu0 0
  %930 = vmatprep.subr.bf16.mxu0 0
  %931 = vmatpush1.bf16.msra.mxu0 0
  %932 = vmatprep.subr.bf16.mxu0 0
  %933 = vmatpush1.bf16.msra.mxu0 0
  %934 = vmatprep.mubr.bf16.mxu0 0
  %935 = vmatmul.mubr.bf16.gmra.mrb[0].mxu0 %v246
  %v936 = vpop.f32.mrb[0].mxu0
  %v937 = vadd.f32 %v888, %v936
  %v938 = vpop.f32.mrb[0].mxu0
  %v939 = vpop.f32.mrb[0].mxu0
  %v940 = vadd.f32 %v891, %v939
  %v941 = vpop.f32.mrb[0].mxu0
  %942 = vmatprep.mubr.bf16.mxu0 0
  %943 = vmatmul.mubr.bf16.gmra.mrb[0].mxu0 %v255
  %v944 = vpop.f32.mrb[0].mxu0
  %v945 = vadd.f32 %v896, %v944
  %v946 = vpop.f32.mrb[0].mxu0
  %v947 = vpop.f32.mrb[0].mxu0
  %v948 = vadd.f32 %v899, %v947
  %v949 = vpop.f32.mrb[0].mxu0
  %950 = vdwg.mxu0
  %v951 = vmax.f32 %v937, 0.0
  %v952 = vmax.f32 %v940, 0.0
  %v953 = vmax.f32 %v945, 0.0
  %v954 = vmax.f32 %v948, 0.0
  %v955 = vpack.c.bf16 %v952, %v951
  %v956 = vpack.c.bf16 %v954, %v953
  %v957 = vld [vmem:[%s2] sm:$0xf]
  %v958 = vld [vmem:[%s2 + $0x4] sm:$0xf]
  %v959 = vld [vmem:[%s2 + $0x8] sm:$0xf]
  %v960 = vld [vmem:[%s2 + $0xc] sm:$0xf]
  %v961 = vld [vmem:[%s2 + $0x10] sm:$0xf]
  %v962 = vld [vmem:[%s2 + $0x14] sm:$0xf]
  %v963 = vld [vmem:[%s2 + $0x18] sm:$0xf]
  %v964 = vld [vmem:[%s2 + $0x1c] sm:$0xf]
  %v965 = vld [vmem:[%s2 + $0x20] sm:$0xf]
  %v966 = vld [vmem:[%s2 + $0x24] sm:$0xf]
  %v967 = vld [vmem:[%s2 + $0x28] sm:$0xf]
  %v968 = vld [vmem:[%s2 + $0x2c] sm:$0xf]
  %v969 = vld [vmem:[%s2 + $0x30] sm:$0xf]
  %v970 = vld [vmem:[%s2 + $0x34] sm:$0xf]
  %v971 = vld [vmem:[%s2 + $0x38] sm:$0xf]
  %v972 = vld [vmem:[%s2 + $0x3c] sm:$0xf]
  %v973 = vld [vmem:[%s3] sm:$0xf]
  %v974 = vld [vmem:[%s3 + $0x4] sm:$0xf]
  %v975 = vld [vmem:[%s3 + $0x8] sm:$0xf]
  %v976 = vld [vmem:[%s3 + $0xc] sm:$0xf]
  %v977 = vunpack.c.l.bf16 %v973
  %v978 = vunpack.c.l.bf16 %v974
  %v979 = vunpack.c.l.bf16 %v975
  %v980 = vunpack.c.l.bf16 %v976
  %v997 = vunpack.c.l.b16 %v957
  %v998 = vunpack.c.l.b16 %v958
  %v999 = vunpack.c.l.b16 %v959
  %v1000 = vunpack.c.l.b16 %v960
  %v1001 = vunpack.c.l.b16 %v961
  %v1002 = vunpack.c.l.b16 %v962
  %v1003 = vunpack.c.l.b16 %v963
  %v1004 = vunpack.c.l.b16 %v964
  %v1005 = vunpack.c.l.b16 %v965
  %v1006 = vunpack.c.l.b16 %v966
  %v1007 = vunpack.c.l.b16 %v967
  %v1008 = vunpack.c.l.b16 %v968
  %v1009 = vunpack.c.l.b16 %v969
  %v1010 = vunpack.c.l.b16 %v970
  %v1011 = vunpack.c.l.b16 %v971
  %v1012 = vunpack.c.l.b16 %v972
  %v1013 = vpack.c.b16 %v998, %v997
  %v1014 = vpack.c.b16 %v1000, %v999
  %v1015 = vpack.c.b16 %v1002, %v1001
  %v1016 = vpack.c.b16 %v1004, %v1003
  %v1017 = vpack.c.b16 %v1006, %v1005
  %v1018 = vpack.c.b16 %v1008, %v1007
  %v1019 = vpack.c.b16 %v1010, %v1009
  %v1020 = vpack.c.b16 %v1012, %v1011
  %1029 = vmatprep.subr.bf16.mxu0 0
  %1030 = vmatpush1.bf16.msra.mxu0 %v1013
  %1031 = vmatprep.subr.bf16.mxu0 0
  %1032 = vmatpush1.bf16.msra.mxu0 %v1014
  %1033 = vmatprep.subr.bf16.mxu0 0
  %1034 = vmatpush1.bf16.msra.mxu0 %v1015
  %1035 = vmatprep.subr.bf16.mxu0 0
  %1036 = vmatpush1.bf16.msra.mxu0 %v1016
  %1037 = vmatprep.subr.bf16.mxu0 0
  %1038 = vmatpush1.bf16.msra.mxu0 %v1017
  %1039 = vmatprep.subr.bf16.mxu0 0
  %1040 = vmatpush1.bf16.msra.mxu0 %v1018
  %1041 = vmatprep.subr.bf16.mxu0 0
  %1042 = vmatpush1.bf16.msra.mxu0 %v1019
  %1043 = vmatprep.subr.bf16.mxu0 0
  %1044 = vmatpush1.bf16.msra.mxu0 %v1020
  %1045 = vmatprep.subr.bf16.mxu0 0
  %1046 = vmatpush1.bf16.msra.mxu0 0
  %1047 = vmatprep.subr.bf16.mxu0 0
  %1048 = vmatpush1.bf16.msra.mxu0 0
  %1049 = vmatprep.subr.bf16.mxu0 0
  %1050 = vmatpush1.bf16.msra.mxu0 0
  %1051 = vmatprep.subr.bf16.mxu0 0
  %1052 = vmatpush1.bf16.msra.mxu0 0
  %1053 = vmatprep.subr.bf16.mxu0 0
  %1054 = vmatpush1.bf16.msra.mxu0 0
  %1055 = vmatprep.subr.bf16.mxu0 0
  %1056 = vmatpush1.bf16.msra.mxu0 0
  %1057 = vmatprep.subr.bf16.mxu0 0
  %1058 = vmatpush1.bf16.msra.mxu0 0
  %1059 = vmatprep.subr.bf16.mxu0 0
  %1060 = vmatpush1.bf16.msra.mxu0 0
  %1061 = vmatprep.mubr.bf16.mxu0 0
  %1062 = vmatmul.mubr.bf16.gmra.mrb[0].mxu0 %v955
  %v1063 = vpop.f32.mrb[0].mxu0
  %v1064 = vadd.f32 %v977, %v1063
  %v1065 = vpop.f32.mrb[0].mxu0
  %v1066 = vpop.f32.mrb[0].mxu0
  %v1067 = vadd.f32 %v978, %v1066
  %v1068 = vpop.f32.mrb[0].mxu0
  %1069 = vmatprep.mubr.bf16.mxu0 0
  %1070 = vmatmul.mubr.bf16.gmra.mrb[0].mxu0 %v956
  %v1071 = vpop.f32.mrb[0].mxu0
  %v1072 = vadd.f32 %v979, %v1071
  %v1073 = vpop.f32.mrb[0].mxu0
  %v1074 = vpop.f32.mrb[0].mxu0
  %v1075 = vadd.f32 %v980, %v1074
  %v1076 = vpop.f32.mrb[0].mxu0
  %1077 = vdwg.mxu0
  %v1078 = vpack.c.bf16 %v1067, %v1064
  %v1079 = vpack.c.bf16 %v1075, %v1072
  %v1082 = vunpack.c.l.b16 %v1078
  %v1083 = vunpack.c.h.b16 %v1078
  %v1084 = vunpack.c.l.b16 %v1079
  %v1085 = vunpack.c.h.b16 %v1079
  %v1086 = vpack.c.b16 %v1082, %v1082
  %v1087 = vpack.c.b16 %v1083, %v1083
  %v1088 = vpack.c.b16 %v1084, %v1084
  %v1089 = vpack.c.b16 %v1085, %v1085
  %1094 = vst [vmem:[%s4] sm:$0xf] %v1086
  %1095 = vst [vmem:[%s4 + $0x4] sm:$0xf] %v1087
  %1096 = vst [vmem:[%s4 + $0x8] sm:$0xf] %v1088
  %1097 = vst [vmem:[%s4 + $0xc] sm:$0xf] %v1089
  // Predicated region
  $region18: #{_lambda_.30} parent=0 // pred_check
    _
  $region19: #{_lambda_.30} parent=0 // pred_check_branch
    %1099 = sbr.rel (0) target = $region21
  $region20: #{_lambda_.30} parent=0 // pred_region
    _
  $region21: #{_lambda_.30} parent=0 // pred_fallthru
    _
  // Predicated region
  $region22: #{_lambda_.30} parent=0 // pred_check
    _
  $region23: #{_lambda_.30} parent=0 // pred_check_branch
    %1101 = sbr.rel (0) target = $region25
  $region24: #{_lambda_.30} parent=0 // pred_region
    _
  $region25: #{_lambda_.30} parent=0 // pred_fallthru
    _

// kernel: _lambda_.36
$region0: #{_lambda_.36}
  #allocation0 [shape = 'u32[]', space=smem, size = 0x4, offset = 0x4, fixed_abs, tag = 'smem constant byte address 0x4 - core index']
  #allocation1 [shape = 'u32[144,128]{1,0:T(1,128)}', space=vmem, size = 0x12000, scoped, tag = 'internal scratch']
  %s0 = inlined_call_operand.vmem [shape: bf16[4,32,512], index: 0, kind: input, shape index: {}]
  %s1 = inlined_call_operand.vmem [shape: bf16[4,512,128], index: 1, kind: input, shape index: {}]
  %s2 = inlined_call_operand.vmem [shape: f32[1,128], index: 2, kind: input, shape index: {}]
  %s3 = inlined_call_operand.vmem [shape: bf16[4,32,128], index: 3, kind: output, shape index: {}]
  %s4 = sld [smem:[#allocation0]]
  $region45: #{_lambda_.36} parent=0
    _
  %s6 = ssub.s32 1, %s4
  %s7 = scalar_select 0, %s6, %s4
  loop: start=0, step=1, limit=6
  $region2: #{_lambda_.36} parent=0 // loop_pre_header
    _
  $region3: #{_lambda_.36} parent=0 // loop_header
    %s9 = sphi 0, %s13
    %p10 = scmp.ge.s32.totalorder %s9, 6
    %s16 = sphi 0, %s28
    %s17 = sphi 0, %s24
    %s18 = sphi 0, %s16
    %s19 = sphi 0, %s17
    %s20 = sphi 0, %s18
    %s21 = sphi 0, %s19
    %s33 = sphi 0, %s35
    %s36 = sphi 0, %s33
    %s37 = sphi 0, %s36
    %s53 = sphi 0, %s37
    %s59 = sphi 0, %s61
    %s62 = sphi 0, %s59
    %s63 = sphi 0, %s62
    %s79 = sphi 0, %s63
    %s83 = sphi 0, %s83
    %s85 = sphi 0, %s83
    %s86 = sphi 0, %s85
    %s100 = sphi 0, %s86
    %s108 = sphi 0, %s110
    %s111 = sphi 0, %s108
    %s112 = sphi 0, %s111
    %s128 = sphi 0, %s112
  $region4: #{_lambda_.36} parent=0 // loop_header_branch
    %12 = sbr.rel (%p10) target = $region8
  $region5: #{_lambda_.36} parent=0 // loop_body
    %s14 = ssub.s32 %s9, 1
    %s15 = ssub.s32 %s9, 2
    %s22 = sadd.s32 1, %s17
    %p23 = scmp.ge.s32.totalorder %s22, 1
    %s24 = scalar_select %p23, 0, %s22
    %s25 = sadd.s32 1, %s16
    %s26 = scalar_select %p23, %s25, %s16
    %p27 = scmp.ge.s32.totalorder %s26, 4
    %s28 = scalar_select %p27, 0, %s26
    %s29 = ssub.s32 %s16, %s28
    %s30 = ssub.s32 %s17, %s24
    %s31 = sor.u32 %s29, %s30
    %p32 = scmp.eq.s32.totalorder %s31, 0
    %s34 = sadd.s32 %s33, 1
    %s35 = scalar_select %p32, %s33, %s34
    %p38 = pneg %p32
    %p39 = scmp.eq.s32.totalorder %s9, 3
    %p40 = por %p38, %p39
    %p41 = scmp.ne.s32.totalorder %s33, %s36
    %p42 = scmp.eq.s32.totalorder %s9, 0
    %p43 = por %p41, %p42
    %p44 = scmp.ne.s32.totalorder %s33, %s36
    %p45 = scmp.eq.s32.totalorder %s14, 3
    %p46 = por %p44, %p45
    %p47 = scmp.ne.s32.totalorder %s36, %s37
    %p48 = scmp.eq.s32.totalorder %s14, 0
    %p49 = por %p47, %p48
    %p50 = scmp.ne.s32.totalorder %s36, %s37
    %p51 = scmp.eq.s32.totalorder %s15, 3
    %p52 = por %p50, %p51
    %p54 = scmp.ne.s32.totalorder %s37, %s53
    %p55 = scmp.eq.s32.totalorder %s15, 0
    %p56 = por %p54, %p55
    %s57 = ssub.s32 %s16, %s28
    %p58 = scmp.eq.s32.totalorder %s57, 0
    %s60 = sadd.s32 %s59, 1
    %s61 = scalar_select %p58, %s59, %s60
    %p64 = pneg %p58
    %p65 = scmp.eq.s32.totalorder %s9, 3
    %p66 = por %p64, %p65
    %p67 = scmp.ne.s32.totalorder %s59, %s62
    %p68 = scmp.eq.s32.totalorder %s9, 0
    %p69 = por %p67, %p68
    %p70 = scmp.ne.s32.totalorder %s59, %s62
    %p71 = scmp.eq.s32.totalorder %s14, 3
    %p72 = por %p70, %p71
    %p73 = scmp.ne.s32.totalorder %s62, %s63
    %p74 = scmp.eq.s32.totalorder %s14, 0
    %p75 = por %p73, %p74
    %p76 = scmp.ne.s32.totalorder %s62, %s63
    %p77 = scmp.eq.s32.totalorder %s15, 3
    %p78 = por %p76, %p77
    %p80 = scmp.ne.s32.totalorder %s63, %s79
    %p81 = scmp.eq.s32.totalorder %s15, 0
    %p82 = por %p80, %p81
    %s84 = sadd.s32 %s83, 1
    %p87 = scmp.eq.s32.totalorder %s9, 3
    %p88 = scmp.ne.s32.totalorder %s83, %s85
    %p89 = scmp.eq.s32.totalorder %s9, 0
    %p90 = por %p88, %p89
    %p91 = scmp.ne.s32.totalorder %s83, %s85
    %p92 = scmp.eq.s32.totalorder %s14, 3
    %p93 = por %p91, %p92
    %p94 = scmp.ne.s32.totalorder %s85, %s86
    %p95 = scmp.eq.s32.totalorder %s14, 0
    %p96 = por %p94, %p95
    %p97 = scmp.ne.s32.totalorder %s85, %s86
    %p98 = scmp.eq.s32.totalorder %s15, 3
    %p99 = por %p97, %p98
    %p101 = scmp.ne.s32.totalorder %s86, %s100
    %p102 = scmp.eq.s32.totalorder %s15, 0
    %p103 = por %p101, %p102
    %s104 = ssub.s32 %s16, %s28
    %s105 = ssub.s32 %s17, %s24
    %s106 = sor.u32 %s104, %s105
    %p107 = scmp.eq.s32.totalorder %s106, 0
    %s109 = sadd.s32 %s108, 1
    %s110 = scalar_select %p107, %s108, %s109
    %p113 = pneg %p107
    %p114 = scmp.eq.s32.totalorder %s9, 3
    %p115 = por %p113, %p114
    %p116 = scmp.ne.s32.totalorder %s108, %s111
    %p117 = scmp.eq.s32.totalorder %s9, 0
    %p118 = por %p116, %p117
    %p119 = scmp.ne.s32.totalorder %s108, %s111
    %p120 = scmp.eq.s32.totalorder %s14, 3
    %p121 = por %p119, %p120
    %p122 = scmp.ne.s32.totalorder %s111, %s112
    %p123 = scmp.eq.s32.totalorder %s14, 0
    %p124 = por %p122, %p123
    %p125 = scmp.ne.s32.totalorder %s111, %s112
    %p126 = scmp.eq.s32.totalorder %s15, 3
    %p127 = por %p125, %p126
    %p129 = scmp.ne.s32.totalorder %s112, %s128
    %p130 = scmp.eq.s32.totalorder %s15, 0
    %p131 = por %p129, %p130
    %p132 = scmp.le.s32.totalorder 1, %s9
    %p133 = scmp.lt.s32.totalorder %s9, 5
    %p134 = pnand %p132, %p133
    %p135 = pneg %p134
    // Predicated region
    $region9: #{_lambda_.36} parent=5 // pred_check
      _
    $region10: #{_lambda_.36} parent=5 // pred_check_branch
      %137 = sbr.rel (%p134) target = $region12
    $region11: #{_lambda_.36} parent=5 // pred_region
      %s138 = ssub.s32 %s9, 1
      // Predicated region
      $region13: #{_lambda_.36} parent=11 // pred_check
        %p139 = pneg %p96
      $region14: #{_lambda_.36} parent=11 // pred_check_branch
        %141 = sbr.rel (%p139) target = $region16
      $region15: #{_lambda_.36} parent=11 // pred_region
        _
      $region16: #{_lambda_.36} parent=11 // pred_fallthru
        _
    $region12: #{_lambda_.36} parent=5 // pred_fallthru
      _
    %p142 = scmp.lt.s32.totalorder %s9, 4
    // Predicated region
    $region17: #{_lambda_.36} parent=5 // pred_check
      %p143 = pneg %p142
    $region18: #{_lambda_.36} parent=5 // pred_check_branch
      %145 = sbr.rel (%p143) target = $region20
    $region19: #{_lambda_.36} parent=5 // pred_region
      // Predicated region
      $region21: #{_lambda_.36} parent=19 // pred_check
        %p146 = pneg %p43
      $region22: #{_lambda_.36} parent=19 // pred_check_branch
        %148 = sbr.rel (%p146) target = $region24
      $region23: #{_lambda_.36} parent=19 // pred_region
        %s149 = smul.u32 4, %s17
        %p150 = scmp.lt.s32.totalorder %s16, 3
        %s151 = scalar_select %p150, %s16, 3
        %p152 = scmp.lt.s32.totalorder %s149, 3
        %s153 = scalar_select %p152, %s149, 3
        %s154 = smul.addr %s153, 4
        %s155 = smul.addr %s151, 16
        %s156 = sadd.s32 %s154, %s155
        %s157 = smul.addr %s156, 4
        %s158 = scalar_lea.vmem %s0, %s157
        %s159 = smul.u32 4, %s17
      $region24: #{_lambda_.36} parent=19 // pred_fallthru
        _
      // Predicated region
      $region25: #{_lambda_.36} parent=19 // pred_check
        %p160 = pneg %p69
      $region26: #{_lambda_.36} parent=19 // pred_check_branch
        %162 = sbr.rel (%p160) target = $region28
      $region27: #{_lambda_.36} parent=19 // pred_region
        %p163 = scmp.lt.s32.totalorder %s16, 3
        %s164 = scalar_select %p163, %s16, 3
        %s165 = smul.addr %s164, 64
        %s166 = smul.addr %s165, 4
        %s167 = scalar_lea.vmem %s1, %s166
      $region28: #{_lambda_.36} parent=19 // pred_fallthru
        _
    $region20: #{_lambda_.36} parent=5 // pred_fallthru
      _
    %p168 = scmp.le.s32.totalorder 1, %s9
    %p169 = scmp.lt.s32.totalorder %s9, 5
    %p170 = pnand %p168, %p169
    %p171 = pneg %p170
    // Predicated region
    $region29: #{_lambda_.36} parent=5 // pred_check
      _
    $region30: #{_lambda_.36} parent=5 // pred_check_branch
      %173 = sbr.rel (%p170) target = $region32
    $region31: #{_lambda_.36} parent=5 // pred_region
      %s174 = ssub.s32 %s9, 1
      %s175 = smul.u32 4, %s19
      %p176 = scmp.lt.s32.totalorder %s18, 3
      %s177 = scalar_select %p176, %s18, 3
      %p178 = scmp.lt.s32.totalorder %s175, 3
      %s179 = scalar_select %p178, %s175, 3
      %s180 = smul.addr %s179, 4
      %s181 = smul.addr %s177, 16
      %s182 = sadd.s32 %s180, %s181
      %s183 = smul.addr %s182, 4
      %s184 = scalar_lea.vmem %s0, %s183
      %p185 = pneg %p49
      %p186 = pneg %p46
      %p187 = scmp.lt.s32.totalorder %s18, 3
      %s188 = scalar_select %p187, %s18, 3
      %s189 = smul.addr %s188, 64
      %s190 = smul.addr %s189, 4
      %s191 = scalar_lea.vmem %s1, %s190
      %p192 = pneg %p75
      %p193 = pneg %p72
      %p194 = pneg %p96
      %p195 = pneg %p93
      %p196 = pneg %p124
      %p197 = pneg %p121
      %s198 = smul.u32 4, %s19
      %p199 = scmp.lt.s32.totalorder %s18, 3
      %s200 = scalar_select %p199, %s18, 3
      %p201 = scmp.lt.s32.totalorder %s198, 3
      %s202 = scalar_select %p201, %s198, 3
      %s203 = smul.addr %s200, 4
      %s204 = sadd.s32 %s202, %s203
      %s205 = smul.addr %s204, 4
      %s206 = scalar_lea.vmem %s3, %s205
      %s207 = smul.u32 4, %s19
      %p208 = scmp.lt.s32.totalorder %s18, 3
      %s209 = scalar_select %p208, %s18, 3
      %p210 = scmp.lt.s32.totalorder %s207, 3
      %s211 = scalar_select %p210, %s207, 3
      %s212 = smul.addr %s211, 4
      %s213 = smul.addr %s209, 16
      %s214 = sadd.s32 %s212, %s213
      %s215 = smul.addr %s214, 4
      %s216 = scalar_lea.vmem %s0, %s215
      %s217 = smul.u32 4, %s19
      %p218 = scmp.lt.s32.totalorder %s18, 3
      %s219 = scalar_select %p218, %s18, 3
      %s220 = smul.addr %s219, 64
      %s221 = smul.addr %s220, 4
      %s222 = scalar_lea.vmem %s1, %s221
      %s223 = smul.u32 4, %s19
      %p224 = scmp.lt.s32.totalorder %s18, 3
      %s225 = scalar_select %p224, %s18, 3
      %p226 = scmp.lt.s32.totalorder %s223, 3
      %s227 = scalar_select %p226, %s223, 3
      %s228 = smul.addr %s225, 4
      %s229 = sadd.s32 %s227, %s228
      %s230 = smul.addr %s229, 4
      %s231 = scalar_lea.vmem %s3, %s230
      %s232 = smul.u32 4, %s19
      %v234 = vld [vmem:[%s216] sm:$0xff]
      %v235 = vld [vmem:[%s216 + $0x8] sm:$0xff]
      %v236 = vld [vmem:[%s216 + $0x10] sm:$0xff]
      %v237 = vld [vmem:[%s216 + $0x18] sm:$0xff]
      %v238 = vld [vmem:[%s216 + $0x20] sm:$0xff]
      %v239 = vld [vmem:[%s216 + $0x28] sm:$0xff]
      %v240 = vld [vmem:[%s216 + $0x30] sm:$0xff]
      %v241 = vld [vmem:[%s216 + $0x38] sm:$0xff]
      %v242 = vunpack.c.l.bf16 %v234
      %v243 = vunpack.c.h.bf16 %v234
      %v244 = vunpack.c.l.bf16 %v235
      %v245 = vunpack.c.h.bf16 %v235
      %v246 = vunpack.c.l.bf16 %v236
      %v247 = vunpack.c.h.bf16 %v236
      %v248 = vunpack.c.l.bf16 %v237
      %v249 = vunpack.c.h.bf16 %v237
      %v250 = vunpack.c.l.bf16 %v238
      %v251 = vunpack.c.h.bf16 %v238
      %v252 = vunpack.c.l.bf16 %v239
      %v253 = vunpack.c.h.bf16 %v239
      %v254 = vunpack.c.l.bf16 %v240
      %v255 = vunpack.c.h.bf16 %v240
      %v256 = vunpack.c.l.bf16 %v241
      %v257 = vunpack.c.h.bf16 %v241
      %vm258 = vcmp.gt.f32.partialorder %v242, 0.0
      %vm259 = vcmp.gt.f32.partialorder %v243, 0.0
      %vm260 = vcmp.gt.f32.partialorder %v244, 0.0
      %vm261 = vcmp.gt.f32.partialorder %v245, 0.0
      %vm262 = vcmp.gt.f32.partialorder %v246, 0.0
      %vm263 = vcmp.gt.f32.partialorder %v247, 0.0
      %vm264 = vcmp.gt.f32.partialorder %v248, 0.0
      %vm265 = vcmp.gt.f32.partialorder %v249, 0.0
      %vm266 = vcmp.gt.f32.partialorder %v250, 0.0
      %vm267 = vcmp.gt.f32.partialorder %v251, 0.0
      %vm268 = vcmp.gt.f32.partialorder %v252, 0.0
      %vm269 = vcmp.gt.f32.partialorder %v253, 0.0
      %vm270 = vcmp.gt.f32.partialorder %v254, 0.0
      %vm271 = vcmp.gt.f32.partialorder %v255, 0.0
      %vm272 = vcmp.gt.f32.partialorder %v256, 0.0
      %vm273 = vcmp.gt.f32.partialorder %v257, 0.0
      %v274 = vmul.f32 %v242, 0.01
      %v275 = vmul.f32 %v243, 0.01
      %v276 = vmul.f32 %v244, 0.01
      %v277 = vmul.f32 %v245, 0.01
      %v278 = vmul.f32 %v246, 0.01
      %v279 = vmul.f32 %v247, 0.01
      %v280 = vmul.f32 %v248, 0.01
      %v281 = vmul.f32 %v249, 0.01
      %v282 = vmul.f32 %v250, 0.01
      %v283 = vmul.f32 %v251, 0.01
      %v284 = vmul.f32 %v252, 0.01
      %v285 = vmul.f32 %v253, 0.01
      %v286 = vmul.f32 %v254, 0.01
      %v287 = vmul.f32 %v255, 0.01
      %v288 = vmul.f32 %v256, 0.01
      %v289 = vmul.f32 %v257, 0.01
      %v290 = vsel %vm258, %v242, %v274
      %v291 = vsel %vm259, %v243, %v275
      %v292 = vsel %vm260, %v244, %v276
      %v293 = vsel %vm261, %v245, %v277
      %v294 = vsel %vm262, %v246, %v278
      %v295 = vsel %vm263, %v247, %v279
      %v296 = vsel %vm264, %v248, %v280
      %v297 = vsel %vm265, %v249, %v281
      %v298 = vsel %vm266, %v250, %v282
      %v299 = vsel %vm267, %v251, %v283
      %v300 = vsel %vm268, %v252, %v284
      %v301 = vsel %vm269, %v253, %v285
      %v302 = vsel %vm270, %v254, %v286
      %v303 = vsel %vm271, %v255, %v287
      %v304 = vsel %vm272, %v256, %v288
      %v305 = vsel %vm273, %v257, %v289
      %v306 = vpack.c.bf16 %v294, %v290
      %v307 = vpack.c.bf16 %v295, %v291
      %v308 = vpack.c.bf16 %v296, %v292
      %v309 = vpack.c.bf16 %v297, %v293
      %v310 = vpack.c.bf16 %v302, %v298
      %v311 = vpack.c.bf16 %v303, %v299
      %v312 = vpack.c.bf16 %v304, %v300
      %v313 = vpack.c.bf16 %v305, %v301
      %v314 = vld [vmem:[%s222] sm:$0xf]
      %v315 = vld [vmem:[%s222 + $0x4] sm:$0xf]
      %v316 = vld [vmem:[%s222 + $0x8] sm:$0xf]
      %v317 = vld [vmem:[%s222 + $0xc] sm:$0xf]
      %v318 = vld [vmem:[%s222 + $0x10] sm:$0xf]
      %v319 = vld [vmem:[%s222 + $0x14] sm:$0xf]
      %v320 = vld [vmem:[%s222 + $0x18] sm:$0xf]
      %v321 = vld [vmem:[%s222 + $0x1c] sm:$0xf]
      %v322 = vld [vmem:[%s222 + $0x20] sm:$0xf]
      %v323 = vld [vmem:[%s222 + $0x24] sm:$0xf]
      %v324 = vld [vmem:[%s222 + $0x28] sm:$0xf]
      %v325 = vld [vmem:[%s222 + $0x2c] sm:$0xf]
      %v326 = vld [vmem:[%s222 + $0x30] sm:$0xf]
      %v327 = vld [vmem:[%s222 + $0x34] sm:$0xf]
      %v328 = vld [vmem:[%s222 + $0x38] sm:$0xf]
      %v329 = vld [vmem:[%s222 + $0x3c] sm:$0xf]
      %v330 = vld [vmem:[%s222 + $0x40] sm:$0xf]
      %v331 = vld [vmem:[%s222 + $0x44] sm:$0xf]
      %v332 = vld [vmem:[%s222 + $0x48] sm:$0xf]
      %v333 = vld [vmem:[%s222 + $0x4c] sm:$0xf]
      %v334 = vld [vmem:[%s222 + $0x50] sm:$0xf]
      %v335 = vld [vmem:[%s222 + $0x54] sm:$0xf]
      %v336 = vld [vmem:[%s222 + $0x58] sm:$0xf]
      %v337 = vld [vmem:[%s222 + $0x5c] sm:$0xf]
      %v338 = vld [vmem:[%s222 + $0x60] sm:$0xf]
      %v339 = vld [vmem:[%s222 + $0x64] sm:$0xf]
      %v340 = vld [vmem:[%s222 + $0x68] sm:$0xf]
      %v341 = vld [vmem:[%s222 + $0x6c] sm:$0xf]
      %v342 = vld [vmem:[%s222 + $0x70] sm:$0xf]
      %v343 = vld [vmem:[%s222 + $0x74] sm:$0xf]
      %v344 = vld [vmem:[%s222 + $0x78] sm:$0xf]
      %v345 = vld [vmem:[%s222 + $0x7c] sm:$0xf]
      %v346 = vld [vmem:[%s222 + $0x80] sm:$0xf]
      %v347 = vld [vmem:[%s222 + $0x84] sm:$0xf]
      %v348 = vld [vmem:[%s222 + $0x88] sm:$0xf]
      %v349 = vld [vmem:[%s222 + $0x8c] sm:$0xf]
      %v350 = vld [vmem:[%s222 + $0x90] sm:$0xf]
      %v351 = vld [vmem:[%s222 + $0x94] sm:$0xf]
      %v352 = vld [vmem:[%s222 + $0x98] sm:$0xf]
      %v353 = vld [vmem:[%s222 + $0x9c] sm:$0xf]
      %v354 = vld [vmem:[%s222 + $0xa0] sm:$0xf]
      %v355 = vld [vmem:[%s222 + $0xa4] sm:$0xf]
      %v356 = vld [vmem:[%s222 + $0xa8] sm:$0xf]
      %v357 = vld [vmem:[%s222 + $0xac] sm:$0xf]
      %v358 = vld [vmem:[%s222 + $0xb0] sm:$0xf]
      %v359 = vld [vmem:[%s222 + $0xb4] sm:$0xf]
      %v360 = vld [vmem:[%s222 + $0xb8] sm:$0xf]
      %v361 = vld [vmem:[%s222 + $0xbc] sm:$0xf]
      %v362 = vld [vmem:[%s222 + $0xc0] sm:$0xf]
      %v363 = vld [vmem:[%s222 + $0xc4] sm:$0xf]
      %v364 = vld [vmem:[%s222 + $0xc8] sm:$0xf]
      %v365 = vld [vmem:[%s222 + $0xcc] sm:$0xf]
      %v366 = vld [vmem:[%s222 + $0xd0] sm:$0xf]
      %v367 = vld [vmem:[%s222 + $0xd4] sm:$0xf]
      %v368 = vld [vmem:[%s222 + $0xd8] sm:$0xf]
      %v369 = vld [vmem:[%s222 + $0xdc] sm:$0xf]
      %v370 = vld [vmem:[%s222 + $0xe0] sm:$0xf]
      %v371 = vld [vmem:[%s222 + $0xe4] sm:$0xf]
      %v372 = vld [vmem:[%s222 + $0xe8] sm:$0xf]
      %v373 = vld [vmem:[%s222 + $0xec] sm:$0xf]
      %v374 = vld [vmem:[%s222 + $0xf0] sm:$0xf]
      %v375 = vld [vmem:[%s222 + $0xf4] sm:$0xf]
      %v376 = vld [vmem:[%s222 + $0xf8] sm:$0xf]
      %v377 = vld [vmem:[%s222 + $0xfc] sm:$0xf]
      %v378 = vld [vmem:[%s2] sm:$0x1]
      %v380 = vlaneseq
      %v381 = vshrl.u32 %v380, 7
      %v382 = vsub.s32 0, %v381
      %v383 = vrot.slane %v378, %v382
      %v449 = vunpack.c.l.b16 %v314
      %v450 = vunpack.c.l.b16 %v315
      %v451 = vunpack.c.l.b16 %v316
      %v452 = vunpack.c.l.b16 %v317
      %v453 = vunpack.c.l.b16 %v318
      %v454 = vunpack.c.l.b16 %v319
      %v455 = vunpack.c.l.b16 %v320
      %v456 = vunpack.c.l.b16 %v321
      %v457 = vunpack.c.l.b16 %v322
      %v458 = vunpack.c.l.b16 %v323
      %v459 = vunpack.c.l.b16 %v324
      %v460 = vunpack.c.l.b16 %v325
      %v461 = vunpack.c.l.b16 %v326
      %v462 = vunpack.c.l.b16 %v327
      %v463 = vunpack.c.l.b16 %v328
      %v464 = vunpack.c.l.b16 %v329
      %v465 = vunpack.c.l.b16 %v330
      %v466 = vunpack.c.l.b16 %v331
      %v467 = vunpack.c.l.b16 %v332
      %v468 = vunpack.c.l.b16 %v333
      %v469 = vunpack.c.l.b16 %v334
      %v470 = vunpack.c.l.b16 %v335
      %v471 = vunpack.c.l.b16 %v336
      %v472 = vunpack.c.l.b16 %v337
      %v473 = vunpack.c.l.b16 %v338
      %v474 = vunpack.c.l.b16 %v339
      %v475 = vunpack.c.l.b16 %v340
      %v476 = vunpack.c.l.b16 %v341
      %v477 = vunpack.c.l.b16 %v342
      %v478 = vunpack.c.l.b16 %v343
      %v479 = vunpack.c.l.b16 %v344
      %v480 = vunpack.c.l.b16 %v345
      %v481 = vunpack.c.l.b16 %v346
      %v482 = vunpack.c.l.b16 %v347
      %v483 = vunpack.c.l.b16 %v348
      %v484 = vunpack.c.l.b16 %v349
      %v485 = vunpack.c.l.b16 %v350
      %v486 = vunpack.c.l.b16 %v351
      %v487 = vunpack.c.l.b16 %v352
      %v488 = vunpack.c.l.b16 %v353
      %v489 = vunpack.c.l.b16 %v354
      %v490 = vunpack.c.l.b16 %v355
      %v491 = vunpack.c.l.b16 %v356
      %v492 = vunpack.c.l.b16 %v357
      %v493 = vunpack.c.l.b16 %v358
      %v494 = vunpack.c.l.b16 %v359
      %v495 = vunpack.c.l.b16 %v360
      %v496 = vunpack.c.l.b16 %v361
      %v497 = vunpack.c.l.b16 %v362
      %v498 = vunpack.c.l.b16 %v363
      %v499 = vunpack.c.l.b16 %v364
      %v500 = vunpack.c.l.b16 %v365
      %v501 = vunpack.c.l.b16 %v366
      %v502 = vunpack.c.l.b16 %v367
      %v503 = vunpack.c.l.b16 %v368
      %v504 = vunpack.c.l.b16 %v369
      %v505 = vunpack.c.l.b16 %v370
      %v506 = vunpack.c.l.b16 %v371
      %v507 = vunpack.c.l.b16 %v372
      %v508 = vunpack.c.l.b16 %v373
      %v509 = vunpack.c.l.b16 %v374
      %v510 = vunpack.c.l.b16 %v375
      %v511 = vunpack.c.l.b16 %v376
      %v512 = vunpack.c.l.b16 %v377
      %v513 = vpack.c.b16 %v450, %v449
      %v514 = vpack.c.b16 %v452, %v451
      %v515 = vpack.c.b16 %v454, %v453
      %v516 = vpack.c.b16 %v456, %v455
      %v517 = vpack.c.b16 %v458, %v457
      %v518 = vpack.c.b16 %v460, %v459
      %v519 = vpack.c.b16 %v462, %v461
      %v520 = vpack.c.b16 %v464, %v463
      %v521 = vpack.c.b16 %v466, %v465
      %v522 = vpack.c.b16 %v468, %v467
      %v523 = vpack.c.b16 %v470, %v469
      %v524 = vpack.c.b16 %v472, %v471
      %v525 = vpack.c.b16 %v474, %v473
      %v526 = vpack.c.b16 %v476, %v475
      %v527 = vpack.c.b16 %v478, %v477
      %v528 = vpack.c.b16 %v480, %v479
      %v529 = vpack.c.b16 %v482, %v481
      %v530 = vpack.c.b16 %v484, %v483
      %v531 = vpack.c.b16 %v486, %v485
      %v532 = vpack.c.b16 %v488, %v487
      %v533 = vpack.c.b16 %v490, %v489
      %v534 = vpack.c.b16 %v492, %v491
      %v535 = vpack.c.b16 %v494, %v493
      %v536 = vpack.c.b16 %v496, %v495
      %v537 = vpack.c.b16 %v498, %v497
      %v538 = vpack.c.b16 %v500, %v499
      %v539 = vpack.c.b16 %v502, %v501
      %v540 = vpack.c.b16 %v504, %v503
      %v541 = vpack.c.b16 %v506, %v505
      %v542 = vpack.c.b16 %v508, %v507
      %v543 = vpack.c.b16 %v510, %v509
      %v544 = vpack.c.b16 %v512, %v511
      %577 = vmatprep.subr.bf16.mxu0 0
      %578 = vmatpush1.bf16.msra.mxu0 %v513
      %579 = vmatprep.subr.bf16.mxu0 0
      %580 = vmatpush1.bf16.msra.mxu0 %v514
      %581 = vmatprep.subr.bf16.mxu0 0
      %582 = vmatpush1.bf16.msra.mxu0 %v515
      %583 = vmatprep.subr.bf16.mxu0 0
      %584 = vmatpush1.bf16.msra.mxu0 %v516
      %585 = vmatprep.subr.bf16.mxu0 0
      %586 = vmatpush1.bf16.msra.mxu0 %v517
      %587 = vmatprep.subr.bf16.mxu0 0
      %588 = vmatpush1.bf16.msra.mxu0 %v518
      %589 = vmatprep.subr.bf16.mxu0 0
      %590 = vmatpush1.bf16.msra.mxu0 %v519
      %591 = vmatprep.subr.bf16.mxu0 0
      %592 = vmatpush1.bf16.msra.mxu0 %v520
      %593 = vmatprep.subr.bf16.mxu0 0
      %594 = vmatpush1.bf16.msra.mxu0 %v521
      %595 = vmatprep.subr.bf16.mxu0 0
      %596 = vmatpush1.bf16.msra.mxu0 %v522
      %597 = vmatprep.subr.bf16.mxu0 0
      %598 = vmatpush1.bf16.msra.mxu0 %v523
      %599 = vmatprep.subr.bf16.mxu0 0
      %600 = vmatpush1.bf16.msra.mxu0 %v524
      %601 = vmatprep.subr.bf16.mxu0 0
      %602 = vmatpush1.bf16.msra.mxu0 %v525
      %603 = vmatprep.subr.bf16.mxu0 0
      %604 = vmatpush1.bf16.msra.mxu0 %v526
      %605 = vmatprep.subr.bf16.mxu0 0
      %606 = vmatpush1.bf16.msra.mxu0 %v527
      %607 = vmatprep.subr.bf16.mxu0 0
      %608 = vmatpush1.bf16.msra.mxu0 %v528
      %609 = vmatprep.mubr.bf16.mxu0 %v307
      %610 = vmatmul.mubr.bf16.gmra.mrb[0].mxu0 %v306
      %v611 = vpop.f32.mrb[0].mxu0
      %v612 = vadd.f32 %v383, %v611
      %v613 = vpop.f32.mrb[0].mxu0
      %v614 = vpop.f32.mrb[0].mxu0
      %v615 = vadd.f32 %v383, %v614
      %v616 = vpop.f32.mrb[0].mxu0
      %617 = vmatprep.mubr.bf16.mxu0 %v311
      %618 = vmatmul.mubr.bf16.gmra.mrb[0].mxu0 %v310
      %v619 = vpop.f32.mrb[0].mxu0
      %v620 = vadd.f32 %v383, %v619
      %v621 = vpop.f32.mrb[0].mxu0
      %v622 = vpop.f32.mrb[0].mxu0
      %v623 = vadd.f32 %v383, %v622
      %v624 = vpop.f32.mrb[0].mxu0
      %625 = vdwg.mxu0
      %626 = vmatprep.subr.bf16.mxu0 0
      %627 = vmatpush1.bf16.msra.mxu0 %v529
      %628 = vmatprep.subr.bf16.mxu0 0
      %629 = vmatpush1.bf16.msra.mxu0 %v530
      %630 = vmatprep.subr.bf16.mxu0 0
      %631 = vmatpush1.bf16.msra.mxu0 %v531
      %632 = vmatprep.subr.bf16.mxu0 0
      %633 = vmatpush1.bf16.msra.mxu0 %v532
      %634 = vmatprep.subr.bf16.mxu0 0
      %635 = vmatpush1.bf16.msra.mxu0 %v533
      %636 = vmatprep.subr.bf16.mxu0 0
      %637 = vmatpush1.bf16.msra.mxu0 %v534
      %638 = vmatprep.subr.bf16.mxu0 0
      %639 = vmatpush1.bf16.msra.mxu0 %v535
      %640 = vmatprep.subr.bf16.mxu0 0
      %641 = vmatpush1.bf16.msra.mxu0 %v536
      %642 = vmatprep.subr.bf16.mxu0 0
      %643 = vmatpush1.bf16.msra.mxu0 %v537
      %644 = vmatprep.subr.bf16.mxu0 0
      %645 = vmatpush1.bf16.msra.mxu0 %v538
      %646 = vmatprep.subr.bf16.mxu0 0
      %647 = vmatpush1.bf16.msra.mxu0 %v539
      %648 = vmatprep.subr.bf16.mxu0 0
      %649 = vmatpush1.bf16.msra.mxu0 %v540
      %650 = vmatprep.subr.bf16.mxu0 0
      %651 = vmatpush1.bf16.msra.mxu0 %v541
      %652 = vmatprep.subr.bf16.mxu0 0
      %653 = vmatpush1.bf16.msra.mxu0 %v542
      %654 = vmatprep.subr.bf16.mxu0 0
      %655 = vmatpush1.bf16.msra.mxu0 %v543
      %656 = vmatprep.subr.bf16.mxu0 0
      %657 = vmatpush1.bf16.msra.mxu0 %v544
      %658 = vmatprep.mubr.bf16.mxu0 %v309
      %659 = vmatmul.mubr.bf16.gmra.mrb[0].mxu0 %v308
      %v660 = vpop.f32.mrb[0].mxu0
      %v661 = vadd.f32 %v612, %v660
      %v662 = vpop.f32.mrb[0].mxu0
      %v663 = vpop.f32.mrb[0].mxu0
      %v664 = vadd.f32 %v615, %v663
      %v665 = vpop.f32.mrb[0].mxu0
      %666 = vmatprep.mubr.bf16.mxu0 %v313
      %667 = vmatmul.mubr.bf16.gmra.mrb[0].mxu0 %v312
      %v668 = vpop.f32.mrb[0].mxu0
      %v669 = vadd.f32 %v620, %v668
      %v670 = vpop.f32.mrb[0].mxu0
      %v671 = vpop.f32.mrb[0].mxu0
      %v672 = vadd.f32 %v623, %v671
      %v673 = vpop.f32.mrb[0].mxu0
      %674 = vdwg.mxu0
      %vm675 = vcmp.gt.f32.partialorder %v661, 0.0
      %vm676 = vcmp.gt.f32.partialorder %v664, 0.0
      %vm677 = vcmp.gt.f32.partialorder %v669, 0.0
      %vm678 = vcmp.gt.f32.partialorder %v672, 0.0
      %v679 = vmul.f32 %v661, 0.01
      %v680 = vmul.f32 %v664, 0.01
      %v681 = vmul.f32 %v669, 0.01
      %v682 = vmul.f32 %v672, 0.01
      %v683 = vsel %vm675, %v661, %v679
      %v684 = vsel %vm676, %v664, %v680
      %v685 = vsel %vm677, %v669, %v681
      %v686 = vsel %vm678, %v672, %v682
      %v687 = vpack.c.bf16 %v684, %v683
      %v688 = vpack.c.bf16 %v686, %v685
      %v691 = vunpack.c.l.b16 %v687
      %v692 = vunpack.c.h.b16 %v687
      %v693 = vunpack.c.l.b16 %v688
      %v694 = vunpack.c.h.b16 %v688
      %v695 = vpack.c.b16 %v691, %v691
      %v696 = vpack.c.b16 %v692, %v692
      %v697 = vpack.c.b16 %v693, %v693
      %v698 = vpack.c.b16 %v694, %v694
      %703 = vst [vmem:[%s231] sm:$0xf] %v695
      %704 = vst [vmem:[%s231 + $0x4] sm:$0xf] %v696
      %705 = vst [vmem:[%s231 + $0x8] sm:$0xf] %v697
      %706 = vst [vmem:[%s231 + $0xc] sm:$0xf] %v698
      %s707 = smul.u32 4, %s19
      %p708 = scmp.lt.s32.totalorder %s18, 3
      %s709 = scalar_select %p708, %s18, 3
      %p710 = scmp.lt.s32.totalorder %s707, 3
      %s711 = scalar_select %p710, %s707, 3
      %s712 = smul.addr %s709, 4
      %s713 = sadd.s32 %s711, %s712
      %s714 = smul.addr %s713, 4
      %s715 = scalar_lea.vmem %s3, %s714
      // Predicated region
      $region33: #{_lambda_.36} parent=31 // pred_check
        %p716 = pneg %p121
      $region34: #{_lambda_.36} parent=31 // pred_check_branch
        %718 = sbr.rel (%p716) target = $region36
      $region35: #{_lambda_.36} parent=31 // pred_region
        %s719 = smul.u32 4, %s19
      $region36: #{_lambda_.36} parent=31 // pred_fallthru
        _
    $region32: #{_lambda_.36} parent=5 // pred_fallthru
      _
    %p720 = scmp.le.s32.totalorder 2, %s9
    // Predicated region
    $region37: #{_lambda_.36} parent=5 // pred_check
      %p721 = pneg %p720
    $region38: #{_lambda_.36} parent=5 // pred_check_branch
      %723 = sbr.rel (%p721) target = $region40
    $region39: #{_lambda_.36} parent=5 // pred_region
      %s724 = ssub.s32 %s9, 2
      // Predicated region
      $region41: #{_lambda_.36} parent=39 // pred_check
        %p725 = pneg %p127
      $region42: #{_lambda_.36} parent=39 // pred_check_branch
        %727 = sbr.rel (%p725) target = $region44
      $region43: #{_lambda_.36} parent=39 // pred_region
        %s728 = smul.u32 4, %s21
        %p729 = scmp.lt.s32.totalorder %s20, 3
        %s730 = scalar_select %p729, %s20, 3
        %p731 = scmp.lt.s32.totalorder %s728, 3
        %s732 = scalar_select %p731, %s728, 3
        %s733 = smul.addr %s730, 4
        %s734 = sadd.s32 %s732, %s733
        %s735 = smul.addr %s734, 4
        %s736 = scalar_lea.vmem %s3, %s735
      $region44: #{_lambda_.36} parent=39 // pred_fallthru
        _
    $region40: #{_lambda_.36} parent=5 // pred_fallthru
      _
  $region6: #{_lambda_.36} parent=0 // loop_footer
    %s13 = sadd.s32 1, %s9
  $region7: #{_lambda_.36} parent=0 // loop_footer_branch
    %8 = sbr.rel target = $region3
  $region8: #{_lambda_.36} parent=0 // loop_exit
    _

// kernel: _lambda_.37
$region0: #{_lambda_.37}
  #allocation0 [shape = 'u32[]', space=smem, size = 0x4, offset = 0x4, fixed_abs, tag = 'smem constant byte address 0x4 - core index']
  #allocation1 [shape = 'u32[144,128]{1,0:T(1,128)}', space=vmem, size = 0x12000, scoped, tag = 'internal scratch']
  %s0 = inlined_call_operand.vmem [shape: bf16[4,128,512], index: 0, kind: input, shape index: {}]
  %s1 = inlined_call_operand.vmem [shape: bf16[4,512,128], index: 1, kind: input, shape index: {}]
  %s2 = inlined_call_operand.vmem [shape: f32[1,128], index: 2, kind: input, shape index: {}]
  %s3 = inlined_call_operand.vmem [shape: bf16[4,128,128], index: 3, kind: output, shape index: {}]
  %s4 = sld [smem:[#allocation0]]
  $region45: #{_lambda_.37} parent=0
    _
  %s6 = ssub.s32 1, %s4
  %s7 = scalar_select 0, %s6, %s4
  loop: start=0, step=1, limit=6
  $region2: #{_lambda_.37} parent=0 // loop_pre_header
    _
  $region3: #{_lambda_.37} parent=0 // loop_header
    %s9 = sphi 0, %s13
    %p10 = scmp.ge.s32.totalorder %s9, 6
    %s16 = sphi 0, %s28
    %s17 = sphi 0, %s24
    %s18 = sphi 0, %s16
    %s19 = sphi 0, %s17
    %s20 = sphi 0, %s18
    %s21 = sphi 0, %s19
    %s33 = sphi 0, %s35
    %s36 = sphi 0, %s33
    %s37 = sphi 0, %s36
    %s53 = sphi 0, %s37
    %s59 = sphi 0, %s61
    %s62 = sphi 0, %s59
    %s63 = sphi 0, %s62
    %s79 = sphi 0, %s63
    %s83 = sphi 0, %s83
    %s85 = sphi 0, %s83
    %s86 = sphi 0, %s85
    %s100 = sphi 0, %s86
    %s108 = sphi 0, %s110
    %s111 = sphi 0, %s108
    %s112 = sphi 0, %s111
    %s128 = sphi 0, %s112
  $region4: #{_lambda_.37} parent=0 // loop_header_branch
    %12 = sbr.rel (%p10) target = $region8
  $region5: #{_lambda_.37} parent=0 // loop_body
    %s14 = ssub.s32 %s9, 1
    %s15 = ssub.s32 %s9, 2
    %s22 = sadd.s32 1, %s17
    %p23 = scmp.ge.s32.totalorder %s22, 1
    %s24 = scalar_select %p23, 0, %s22
    %s25 = sadd.s32 1, %s16
    %s26 = scalar_select %p23, %s25, %s16
    %p27 = scmp.ge.s32.totalorder %s26, 4
    %s28 = scalar_select %p27, 0, %s26
    %s29 = ssub.s32 %s16, %s28
    %s30 = ssub.s32 %s17, %s24
    %s31 = sor.u32 %s29, %s30
    %p32 = scmp.eq.s32.totalorder %s31, 0
    %s34 = sadd.s32 %s33, 1
    %s35 = scalar_select %p32, %s33, %s34
    %p38 = pneg %p32
    %p39 = scmp.eq.s32.totalorder %s9, 3
    %p40 = por %p38, %p39
    %p41 = scmp.ne.s32.totalorder %s33, %s36
    %p42 = scmp.eq.s32.totalorder %s9, 0
    %p43 = por %p41, %p42
    %p44 = scmp.ne.s32.totalorder %s33, %s36
    %p45 = scmp.eq.s32.totalorder %s14, 3
    %p46 = por %p44, %p45
    %p47 = scmp.ne.s32.totalorder %s36, %s37
    %p48 = scmp.eq.s32.totalorder %s14, 0
    %p49 = por %p47, %p48
    %p50 = scmp.ne.s32.totalorder %s36, %s37
    %p51 = scmp.eq.s32.totalorder %s15, 3
    %p52 = por %p50, %p51
    %p54 = scmp.ne.s32.totalorder %s37, %s53
    %p55 = scmp.eq.s32.totalorder %s15, 0
    %p56 = por %p54, %p55
    %s57 = ssub.s32 %s16, %s28
    %p58 = scmp.eq.s32.totalorder %s57, 0
    %s60 = sadd.s32 %s59, 1
    %s61 = scalar_select %p58, %s59, %s60
    %p64 = pneg %p58
    %p65 = scmp.eq.s32.totalorder %s9, 3
    %p66 = por %p64, %p65
    %p67 = scmp.ne.s32.totalorder %s59, %s62
    %p68 = scmp.eq.s32.totalorder %s9, 0
    %p69 = por %p67, %p68
    %p70 = scmp.ne.s32.totalorder %s59, %s62
    %p71 = scmp.eq.s32.totalorder %s14, 3
    %p72 = por %p70, %p71
    %p73 = scmp.ne.s32.totalorder %s62, %s63
    %p74 = scmp.eq.s32.totalorder %s14, 0
    %p75 = por %p73, %p74
    %p76 = scmp.ne.s32.totalorder %s62, %s63
    %p77 = scmp.eq.s32.totalorder %s15, 3
    %p78 = por %p76, %p77
    %p80 = scmp.ne.s32.totalorder %s63, %s79
    %p81 = scmp.eq.s32.totalorder %s15, 0
    %p82 = por %p80, %p81
    %s84 = sadd.s32 %s83, 1
    %p87 = scmp.eq.s32.totalorder %s9, 3
    %p88 = scmp.ne.s32.totalorder %s83, %s85
    %p89 = scmp.eq.s32.totalorder %s9, 0
    %p90 = por %p88, %p89
    %p91 = scmp.ne.s32.totalorder %s83, %s85
    %p92 = scmp.eq.s32.totalorder %s14, 3
    %p93 = por %p91, %p92
    %p94 = scmp.ne.s32.totalorder %s85, %s86
    %p95 = scmp.eq.s32.totalorder %s14, 0
    %p96 = por %p94, %p95
    %p97 = scmp.ne.s32.totalorder %s85, %s86
    %p98 = scmp.eq.s32.totalorder %s15, 3
    %p99 = por %p97, %p98
    %p101 = scmp.ne.s32.totalorder %s86, %s100
    %p102 = scmp.eq.s32.totalorder %s15, 0
    %p103 = por %p101, %p102
    %s104 = ssub.s32 %s16, %s28
    %s105 = ssub.s32 %s17, %s24
    %s106 = sor.u32 %s104, %s105
    %p107 = scmp.eq.s32.totalorder %s106, 0
    %s109 = sadd.s32 %s108, 1
    %s110 = scalar_select %p107, %s108, %s109
    %p113 = pneg %p107
    %p114 = scmp.eq.s32.totalorder %s9, 3
    %p115 = por %p113, %p114
    %p116 = scmp.ne.s32.totalorder %s108, %s111
    %p117 = scmp.eq.s32.totalorder %s9, 0
    %p118 = por %p116, %p117
    %p119 = scmp.ne.s32.totalorder %s108, %s111
    %p120 = scmp.eq.s32.totalorder %s14, 3
    %p121 = por %p119, %p120
    %p122 = scmp.ne.s32.totalorder %s111, %s112
    %p123 = scmp.eq.s32.totalorder %s14, 0
    %p124 = por %p122, %p123
    %p125 = scmp.ne.s32.totalorder %s111, %s112
    %p126 = scmp.eq.s32.totalorder %s15, 3
    %p127 = por %p125, %p126
    %p129 = scmp.ne.s32.totalorder %s112, %s128
    %p130 = scmp.eq.s32.totalorder %s15, 0
    %p131 = por %p129, %p130
    %p132 = scmp.le.s32.totalorder 1, %s9
    %p133 = scmp.lt.s32.totalorder %s9, 5
    %p134 = pnand %p132, %p133
    %p135 = pneg %p134
    // Predicated region
    $region9: #{_lambda_.37} parent=5 // pred_check
      _
    $region10: #{_lambda_.37} parent=5 // pred_check_branch
      %137 = sbr.rel (%p134) target = $region12
    $region11: #{_lambda_.37} parent=5 // pred_region
      %s138 = ssub.s32 %s9, 1
      // Predicated region
      $region13: #{_lambda_.37} parent=11 // pred_check
        %p139 = pneg %p96
      $region14: #{_lambda_.37} parent=11 // pred_check_branch
        %141 = sbr.rel (%p139) target = $region16
      $region15: #{_lambda_.37} parent=11 // pred_region
        _
      $region16: #{_lambda_.37} parent=11 // pred_fallthru
        _
    $region12: #{_lambda_.37} parent=5 // pred_fallthru
      _
    %p142 = scmp.lt.s32.totalorder %s9, 4
    // Predicated region
    $region17: #{_lambda_.37} parent=5 // pred_check
      %p143 = pneg %p142
    $region18: #{_lambda_.37} parent=5 // pred_check_branch
      %145 = sbr.rel (%p143) target = $region20
    $region19: #{_lambda_.37} parent=5 // pred_region
      // Predicated region
      $region21: #{_lambda_.37} parent=19 // pred_check
        %p146 = pneg %p43
      $region22: #{_lambda_.37} parent=19 // pred_check_branch
        %148 = sbr.rel (%p146) target = $region24
      $region23: #{_lambda_.37} parent=19 // pred_region
        %s149 = smul.u32 16, %s17
        %p150 = scmp.lt.s32.totalorder %s16, 3
        %s151 = scalar_select %p150, %s16, 3
        %p152 = scmp.lt.s32.totalorder %s149, 15
        %s153 = scalar_select %p152, %s149, 15
        %s154 = smul.addr %s153, 4
        %s155 = smul.addr %s151, 64
        %s156 = sadd.s32 %s154, %s155
        %s157 = smul.addr %s156, 4
        %s158 = scalar_lea.vmem %s0, %s157
        %s159 = smul.u32 16, %s17
      $region24: #{_lambda_.37} parent=19 // pred_fallthru
        _
      // Predicated region
      $region25: #{_lambda_.37} parent=19 // pred_check
        %p160 = pneg %p69
      $region26: #{_lambda_.37} parent=19 // pred_check_branch
        %162 = sbr.rel (%p160) target = $region28
      $region27: #{_lambda_.37} parent=19 // pred_region
        %p163 = scmp.lt.s32.totalorder %s16, 3
        %s164 = scalar_select %p163, %s16, 3
        %s165 = smul.addr %s164, 64
        %s166 = smul.addr %s165, 4
        %s167 = scalar_lea.vmem %s1, %s166
      $region28: #{_lambda_.37} parent=19 // pred_fallthru
        _
    $region20: #{_lambda_.37} parent=5 // pred_fallthru
      _
    %p168 = scmp.le.s32.totalorder 1, %s9
    %p169 = scmp.lt.s32.totalorder %s9, 5
    %p170 = pnand %p168, %p169
    %p171 = pneg %p170
    // Predicated region
    $region29: #{_lambda_.37} parent=5 // pred_check
      _
    $region30: #{_lambda_.37} parent=5 // pred_check_branch
      %173 = sbr.rel (%p170) target = $region32
    $region31: #{_lambda_.37} parent=5 // pred_region
      %s174 = ssub.s32 %s9, 1
      %s175 = smul.u32 16, %s19
      %p176 = scmp.lt.s32.totalorder %s18, 3
      %s177 = scalar_select %p176, %s18, 3
      %p178 = scmp.lt.s32.totalorder %s175, 15
      %s179 = scalar_select %p178, %s175, 15
      %s180 = smul.addr %s179, 4
      %s181 = smul.addr %s177, 64
      %s182 = sadd.s32 %s180, %s181
      %s183 = smul.addr %s182, 4
      %s184 = scalar_lea.vmem %s0, %s183
      %p185 = pneg %p49
      %p186 = pneg %p46
      %p187 = scmp.lt.s32.totalorder %s18, 3
      %s188 = scalar_select %p187, %s18, 3
      %s189 = smul.addr %s188, 64
      %s190 = smul.addr %s189, 4
      %s191 = scalar_lea.vmem %s1, %s190
      %p192 = pneg %p75
      %p193 = pneg %p72
      %p194 = pneg %p96
      %p195 = pneg %p93
      %p196 = pneg %p124
      %p197 = pneg %p121
      %s198 = smul.u32 16, %s19
      %p199 = scmp.lt.s32.totalorder %s18, 3
      %s200 = scalar_select %p199, %s18, 3
      %p201 = scmp.lt.s32.totalorder %s198, 15
      %s202 = scalar_select %p201, %s198, 15
      %s203 = smul.addr %s200, 16
      %s204 = sadd.s32 %s202, %s203
      %s205 = smul.addr %s204, 4
      %s206 = scalar_lea.vmem %s3, %s205
      %s207 = smul.u32 16, %s19
      %p208 = scmp.lt.s32.totalorder %s18, 3
      %s209 = scalar_select %p208, %s18, 3
      %p210 = scmp.lt.s32.totalorder %s207, 15
      %s211 = scalar_select %p210, %s207, 15
      %s212 = smul.addr %s211, 4
      %s213 = smul.addr %s209, 64
      %s214 = sadd.s32 %s212, %s213
      %s215 = smul.addr %s214, 4
      %s216 = scalar_lea.vmem %s0, %s215
      %s217 = smul.u32 16, %s19
      %p218 = scmp.lt.s32.totalorder %s18, 3
      %s219 = scalar_select %p218, %s18, 3
      %s220 = smul.addr %s219, 64
      %s221 = smul.addr %s220, 4
      %s222 = scalar_lea.vmem %s1, %s221
      %s223 = smul.u32 16, %s19
      %p224 = scmp.lt.s32.totalorder %s18, 3
      %s225 = scalar_select %p224, %s18, 3
      %p226 = scmp.lt.s32.totalorder %s223, 15
      %s227 = scalar_select %p226, %s223, 15
      %s228 = smul.addr %s225, 16
      %s229 = sadd.s32 %s227, %s228
      %s230 = smul.addr %s229, 4
      %s231 = scalar_lea.vmem %s3, %s230
      %s232 = smul.u32 16, %s19
      %v234 = vld [vmem:[%s216] sm:$0xff]
      %v235 = vld [vmem:[%s216 + $0x8] sm:$0xff]
      %v236 = vld [vmem:[%s216 + $0x10] sm:$0xff]
      %v237 = vld [vmem:[%s216 + $0x18] sm:$0xff]
      %v238 = vld [vmem:[%s216 + $0x20] sm:$0xff]
      %v239 = vld [vmem:[%s216 + $0x28] sm:$0xff]
      %v240 = vld [vmem:[%s216 + $0x30] sm:$0xff]
      %v241 = vld [vmem:[%s216 + $0x38] sm:$0xff]
      %v242 = vld [vmem:[%s216 + $0x40] sm:$0xff]
      %v243 = vld [vmem:[%s216 + $0x48] sm:$0xff]
      %v244 = vld [vmem:[%s216 + $0x50] sm:$0xff]
      %v245 = vld [vmem:[%s216 + $0x58] sm:$0xff]
      %v246 = vld [vmem:[%s216 + $0x60] sm:$0xff]
      %v247 = vld [vmem:[%s216 + $0x68] sm:$0xff]
      %v248 = vld [vmem:[%s216 + $0x70] sm:$0xff]
      %v249 = vld [vmem:[%s216 + $0x78] sm:$0xff]
      %v250 = vld [vmem:[%s216 + $0x80] sm:$0xff]
      %v251 = vld [vmem:[%s216 + $0x88] sm:$0xff]
      %v252 = vld [vmem:[%s216 + $0x90] sm:$0xff]
      %v253 = vld [vmem:[%s216 + $0x98] sm:$0xff]
      %v254 = vld [vmem:[%s216 + $0xa0] sm:$0xff]
      %v255 = vld [vmem:[%s216 + $0xa8] sm:$0xff]
      %v256 = vld [vmem:[%s216 + $0xb0] sm:$0xff]
      %v257 = vld [vmem:[%s216 + $0xb8] sm:$0xff]
      %v258 = vld [vmem:[%s216 + $0xc0] sm:$0xff]
      %v259 = vld [vmem:[%s216 + $0xc8] sm:$0xff]
      %v260 = vld [vmem:[%s216 + $0xd0] sm:$0xff]
      %v261 = vld [vmem:[%s216 + $0xd8] sm:$0xff]
      %v262 = vld [vmem:[%s216 + $0xe0] sm:$0xff]
      %v263 = vld [vmem:[%s216 + $0xe8] sm:$0xff]
      %v264 = vld [vmem:[%s216 + $0xf0] sm:$0xff]
      %v265 = vld [vmem:[%s216 + $0xf8] sm:$0xff]
      %v266 = vld [vmem:[%s222] sm:$0xf]
      %v267 = vld [vmem:[%s222 + $0x4] sm:$0xf]
      %v268 = vld [vmem:[%s222 + $0x8] sm:$0xf]
      %v269 = vld [vmem:[%s222 + $0xc] sm:$0xf]
      %v270 = vld [vmem:[%s222 + $0x10] sm:$0xf]
      %v271 = vld [vmem:[%s222 + $0x14] sm:$0xf]
      %v272 = vld [vmem:[%s222 + $0x18] sm:$0xf]
      %v273 = vld [vmem:[%s222 + $0x1c] sm:$0xf]
      %v274 = vld [vmem:[%s222 + $0x20] sm:$0xf]
      %v275 = vld [vmem:[%s222 + $0x24] sm:$0xf]
      %v276 = vld [vmem:[%s222 + $0x28] sm:$0xf]
      %v277 = vld [vmem:[%s222 + $0x2c] sm:$0xf]
      %v278 = vld [vmem:[%s222 + $0x30] sm:$0xf]
      %v279 = vld [vmem:[%s222 + $0x34] sm:$0xf]
      %v280 = vld [vmem:[%s222 + $0x38] sm:$0xf]
      %v281 = vld [vmem:[%s222 + $0x3c] sm:$0xf]
      %v282 = vld [vmem:[%s222 + $0x40] sm:$0xf]
      %v283 = vld [vmem:[%s222 + $0x44] sm:$0xf]
      %v284 = vld [vmem:[%s222 + $0x48] sm:$0xf]
      %v285 = vld [vmem:[%s222 + $0x4c] sm:$0xf]
      %v286 = vld [vmem:[%s222 + $0x50] sm:$0xf]
      %v287 = vld [vmem:[%s222 + $0x54] sm:$0xf]
      %v288 = vld [vmem:[%s222 + $0x58] sm:$0xf]
      %v289 = vld [vmem:[%s222 + $0x5c] sm:$0xf]
      %v290 = vld [vmem:[%s222 + $0x60] sm:$0xf]
      %v291 = vld [vmem:[%s222 + $0x64] sm:$0xf]
      %v292 = vld [vmem:[%s222 + $0x68] sm:$0xf]
      %v293 = vld [vmem:[%s222 + $0x6c] sm:$0xf]
      %v294 = vld [vmem:[%s222 + $0x70] sm:$0xf]
      %v295 = vld [vmem:[%s222 + $0x74] sm:$0xf]
      %v296 = vld [vmem:[%s222 + $0x78] sm:$0xf]
      %v297 = vld [vmem:[%s222 + $0x7c] sm:$0xf]
      %v298 = vld [vmem:[%s222 + $0x80] sm:$0xf]
      %v299 = vld [vmem:[%s222 + $0x84] sm:$0xf]
      %v300 = vld [vmem:[%s222 + $0x88] sm:$0xf]
      %v301 = vld [vmem:[%s222 + $0x8c] sm:$0xf]
      %v302 = vld [vmem:[%s222 + $0x90] sm:$0xf]
      %v303 = vld [vmem:[%s222 + $0x94] sm:$0xf]
      %v304 = vld [vmem:[%s222 + $0x98] sm:$0xf]
      %v305 = vld [vmem:[%s222 + $0x9c] sm:$0xf]
      %v306 = vld [vmem:[%s222 + $0xa0] sm:$0xf]
      %v307 = vld [vmem:[%s222 + $0xa4] sm:$0xf]
      %v308 = vld [vmem:[%s222 + $0xa8] sm:$0xf]
      %v309 = vld [vmem:[%s222 + $0xac] sm:$0xf]
      %v310 = vld [vmem:[%s222 + $0xb0] sm:$0xf]
      %v311 = vld [vmem:[%s222 + $0xb4] sm:$0xf]
      %v312 = vld [vmem:[%s222 + $0xb8] sm:$0xf]
      %v313 = vld [vmem:[%s222 + $0xbc] sm:$0xf]
      %v314 = vld [vmem:[%s222 + $0xc0] sm:$0xf]
      %v315 = vld [vmem:[%s222 + $0xc4] sm:$0xf]
      %v316 = vld [vmem:[%s222 + $0xc8] sm:$0xf]
      %v317 = vld [vmem:[%s222 + $0xcc] sm:$0xf]
      %v318 = vld [vmem:[%s222 + $0xd0] sm:$0xf]
      %v319 = vld [vmem:[%s222 + $0xd4] sm:$0xf]
      %v320 = vld [vmem:[%s222 + $0xd8] sm:$0xf]
      %v321 = vld [vmem:[%s222 + $0xdc] sm:$0xf]
      %v322 = vld [vmem:[%s222 + $0xe0] sm:$0xf]
      %v323 = vld [vmem:[%s222 + $0xe4] sm:$0xf]
      %v324 = vld [vmem:[%s222 + $0xe8] sm:$0xf]
      %v325 = vld [vmem:[%s222 + $0xec] sm:$0xf]
      %v326 = vld [vmem:[%s222 + $0xf0] sm:$0xf]
      %v327 = vld [vmem:[%s222 + $0xf4] sm:$0xf]
      %v328 = vld [vmem:[%s222 + $0xf8] sm:$0xf]
      %v329 = vld [vmem:[%s222 + $0xfc] sm:$0xf]
      %v330 = vld [vmem:[%s2] sm:$0x1]
      %v332 = vlaneseq
      %v333 = vshrl.u32 %v332, 7
      %v334 = vsub.s32 0, %v333
      %v335 = vrot.slane %v330, %v334
      %v369 = vunpack.c.l.b16 %v234
      %v370 = vunpack.c.h.b16 %v234
      %v371 = vunpack.c.l.b16 %v235
      %v372 = vunpack.c.h.b16 %v235
      %v373 = vunpack.c.l.b16 %v236
      %v374 = vunpack.c.h.b16 %v236
      %v375 = vunpack.c.l.b16 %v237
      %v376 = vunpack.c.h.b16 %v237
      %v377 = vunpack.c.l.b16 %v238
      %v378 = vunpack.c.h.b16 %v238
      %v379 = vunpack.c.l.b16 %v239
      %v380 = vunpack.c.h.b16 %v239
      %v381 = vunpack.c.l.b16 %v240
      %v382 = vunpack.c.h.b16 %v240
      %v383 = vunpack.c.l.b16 %v241
      %v384 = vunpack.c.h.b16 %v241
      %v385 = vunpack.c.l.b16 %v242
      %v386 = vunpack.c.h.b16 %v242
      %v387 = vunpack.c.l.b16 %v243
      %v388 = vunpack.c.h.b16 %v243
      %v389 = vunpack.c.l.b16 %v244
      %v390 = vunpack.c.h.b16 %v244
      %v391 = vunpack.c.l.b16 %v245
      %v392 = vunpack.c.h.b16 %v245
      %v393 = vunpack.c.l.b16 %v246
      %v394 = vunpack.c.h.b16 %v246
      %v395 = vunpack.c.l.b16 %v247
      %v396 = vunpack.c.h.b16 %v247
      %v397 = vunpack.c.l.b16 %v248
      %v398 = vunpack.c.h.b16 %v248
      %v399 = vunpack.c.l.b16 %v249
      %v400 = vunpack.c.h.b16 %v249
      %v401 = vunpack.c.l.b16 %v250
      %v402 = vunpack.c.h.b16 %v250
      %v403 = vunpack.c.l.b16 %v251
      %v404 = vunpack.c.h.b16 %v251
      %v405 = vunpack.c.l.b16 %v252
      %v406 = vunpack.c.h.b16 %v252
      %v407 = vunpack.c.l.b16 %v253
      %v408 = vunpack.c.h.b16 %v253
      %v409 = vunpack.c.l.b16 %v254
      %v410 = vunpack.c.h.b16 %v254
      %v411 = vunpack.c.l.b16 %v255
      %v412 = vunpack.c.h.b16 %v255
      %v413 = vunpack.c.l.b16 %v256
      %v414 = vunpack.c.h.b16 %v256
      %v415 = vunpack.c.l.b16 %v257
      %v416 = vunpack.c.h.b16 %v257
      %v417 = vunpack.c.l.b16 %v258
      %v418 = vunpack.c.h.b16 %v258
      %v419 = vunpack.c.l.b16 %v259
      %v420 = vunpack.c.h.b16 %v259
      %v421 = vunpack.c.l.b16 %v260
      %v422 = vunpack.c.h.b16 %v260
      %v423 = vunpack.c.l.b16 %v261
      %v424 = vunpack.c.h.b16 %v261
      %v425 = vunpack.c.l.b16 %v262
      %v426 = vunpack.c.h.b16 %v262
      %v427 = vunpack.c.l.b16 %v263
      %v428 = vunpack.c.h.b16 %v263
      %v429 = vunpack.c.l.b16 %v264
      %v430 = vunpack.c.h.b16 %v264
      %v431 = vunpack.c.l.b16 %v265
      %v432 = vunpack.c.h.b16 %v265
      %v433 = vpack.c.b16 %v373, %v369
      %v434 = vpack.c.b16 %v374, %v370
      %v435 = vpack.c.b16 %v375, %v371
      %v436 = vpack.c.b16 %v376, %v372
      %v437 = vpack.c.b16 %v381, %v377
      %v438 = vpack.c.b16 %v382, %v378
      %v439 = vpack.c.b16 %v383, %v379
      %v440 = vpack.c.b16 %v384, %v380
      %v441 = vpack.c.b16 %v389, %v385
      %v442 = vpack.c.b16 %v390, %v386
      %v443 = vpack.c.b16 %v391, %v387
      %v444 = vpack.c.b16 %v392, %v388
      %v445 = vpack.c.b16 %v397, %v393
      %v446 = vpack.c.b16 %v398, %v394
      %v447 = vpack.c.b16 %v399, %v395
      %v448 = vpack.c.b16 %v400, %v396
      %v449 = vpack.c.b16 %v405, %v401
      %v450 = vpack.c.b16 %v406, %v402
      %v451 = vpack.c.b16 %v407, %v403
      %v452 = vpack.c.b16 %v408, %v404
      %v453 = vpack.c.b16 %v413, %v409
      %v454 = vpack.c.b16 %v414, %v410
      %v455 = vpack.c.b16 %v415, %v411
      %v456 = vpack.c.b16 %v416, %v412
      %v457 = vpack.c.b16 %v421, %v417
      %v458 = vpack.c.b16 %v422, %v418
      %v459 = vpack.c.b16 %v423, %v419
      %v460 = vpack.c.b16 %v424, %v420
      %v461 = vpack.c.b16 %v429, %v425
      %v462 = vpack.c.b16 %v430, %v426
      %v463 = vpack.c.b16 %v431, %v427
      %v464 = vpack.c.b16 %v432, %v428
      %v561 = vunpack.c.l.b16 %v266
      %v562 = vunpack.c.l.b16 %v267
      %v563 = vunpack.c.l.b16 %v268
      %v564 = vunpack.c.l.b16 %v269
      %v565 = vunpack.c.l.b16 %v270
      %v566 = vunpack.c.l.b16 %v271
      %v567 = vunpack.c.l.b16 %v272
      %v568 = vunpack.c.l.b16 %v273
      %v569 = vunpack.c.l.b16 %v274
      %v570 = vunpack.c.l.b16 %v275
      %v571 = vunpack.c.l.b16 %v276
      %v572 = vunpack.c.l.b16 %v277
      %v573 = vunpack.c.l.b16 %v278
      %v574 = vunpack.c.l.b16 %v279
      %v575 = vunpack.c.l.b16 %v280
      %v576 = vunpack.c.l.b16 %v281
      %v577 = vunpack.c.l.b16 %v282
      %v578 = vunpack.c.l.b16 %v283
      %v579 = vunpack.c.l.b16 %v284
      %v580 = vunpack.c.l.b16 %v285
      %v581 = vunpack.c.l.b16 %v286
      %v582 = vunpack.c.l.b16 %v287
      %v583 = vunpack.c.l.b16 %v288
      %v584 = vunpack.c.l.b16 %v289
      %v585 = vunpack.c.l.b16 %v290
      %v586 = vunpack.c.l.b16 %v291
      %v587 = vunpack.c.l.b16 %v292
      %v588 = vunpack.c.l.b16 %v293
      %v589 = vunpack.c.l.b16 %v294
      %v590 = vunpack.c.l.b16 %v295
      %v591 = vunpack.c.l.b16 %v296
      %v592 = vunpack.c.l.b16 %v297
      %v593 = vunpack.c.l.b16 %v298
      %v594 = vunpack.c.l.b16 %v299
      %v595 = vunpack.c.l.b16 %v300
      %v596 = vunpack.c.l.b16 %v301
      %v597 = vunpack.c.l.b16 %v302
      %v598 = vunpack.c.l.b16 %v303
      %v599 = vunpack.c.l.b16 %v304
      %v600 = vunpack.c.l.b16 %v305
      %v601 = vunpack.c.l.b16 %v306
      %v602 = vunpack.c.l.b16 %v307
      %v603 = vunpack.c.l.b16 %v308
      %v604 = vunpack.c.l.b16 %v309
      %v605 = vunpack.c.l.b16 %v310
      %v606 = vunpack.c.l.b16 %v311
      %v607 = vunpack.c.l.b16 %v312
      %v608 = vunpack.c.l.b16 %v313
      %v609 = vunpack.c.l.b16 %v314
      %v610 = vunpack.c.l.b16 %v315
      %v611 = vunpack.c.l.b16 %v316
      %v612 = vunpack.c.l.b16 %v317
      %v613 = vunpack.c.l.b16 %v318
      %v614 = vunpack.c.l.b16 %v319
      %v615 = vunpack.c.l.b16 %v320
      %v616 = vunpack.c.l.b16 %v321
      %v617 = vunpack.c.l.b16 %v322
      %v618 = vunpack.c.l.b16 %v323
      %v619 = vunpack.c.l.b16 %v324
      %v620 = vunpack.c.l.b16 %v325
      %v621 = vunpack.c.l.b16 %v326
      %v622 = vunpack.c.l.b16 %v327
      %v623 = vunpack.c.l.b16 %v328
      %v624 = vunpack.c.l.b16 %v329
      %v625 = vpack.c.b16 %v562, %v561
      %v626 = vpack.c.b16 %v564, %v563
      %v627 = vpack.c.b16 %v566, %v565
      %v628 = vpack.c.b16 %v568, %v567
      %v629 = vpack.c.b16 %v570, %v569
      %v630 = vpack.c.b16 %v572, %v571
      %v631 = vpack.c.b16 %v574, %v573
      %v632 = vpack.c.b16 %v576, %v575
      %v633 = vpack.c.b16 %v578, %v577
      %v634 = vpack.c.b16 %v580, %v579
      %v635 = vpack.c.b16 %v582, %v581
      %v636 = vpack.c.b16 %v584, %v583
      %v637 = vpack.c.b16 %v586, %v585
      %v638 = vpack.c.b16 %v588, %v587
      %v639 = vpack.c.b16 %v590, %v589
      %v640 = vpack.c.b16 %v592, %v591
      %v641 = vpack.c.b16 %v594, %v593
      %v642 = vpack.c.b16 %v596, %v595
      %v643 = vpack.c.b16 %v598, %v597
      %v644 = vpack.c.b16 %v600, %v599
      %v645 = vpack.c.b16 %v602, %v601
      %v646 = vpack.c.b16 %v604, %v603
      %v647 = vpack.c.b16 %v606, %v605
      %v648 = vpack.c.b16 %v608, %v607
      %v649 = vpack.c.b16 %v610, %v609
      %v650 = vpack.c.b16 %v612, %v611
      %v651 = vpack.c.b16 %v614, %v613
      %v652 = vpack.c.b16 %v616, %v615
      %v653 = vpack.c.b16 %v618, %v617
      %v654 = vpack.c.b16 %v620, %v619
      %v655 = vpack.c.b16 %v622, %v621
      %v656 = vpack.c.b16 %v624, %v623
      %689 = vmatprep.subr.bf16.mxu0 0
      %690 = vmatpush1.bf16.msra.mxu0 %v625
      %691 = vmatprep.subr.bf16.mxu0 0
      %692 = vmatpush1.bf16.msra.mxu0 %v626
      %693 = vmatprep.subr.bf16.mxu0 0
      %694 = vmatpush1.bf16.msra.mxu0 %v627
      %695 = vmatprep.subr.bf16.mxu0 0
      %696 = vmatpush1.bf16.msra.mxu0 %v628
      %697 = vmatprep.subr.bf16.mxu0 0
      %698 = vmatpush1.bf16.msra.mxu0 %v629
      %699 = vmatprep.subr.bf16.mxu0 0
      %700 = vmatpush1.bf16.msra.mxu0 %v630
      %701 = vmatprep.subr.bf16.mxu0 0
      %702 = vmatpush1.bf16.msra.mxu0 %v631
      %703 = vmatprep.subr.bf16.mxu0 0
      %704 = vmatpush1.bf16.msra.mxu0 %v632
      %705 = vmatprep.subr.bf16.mxu0 0
      %706 = vmatpush1.bf16.msra.mxu0 %v633
      %707 = vmatprep.subr.bf16.mxu0 0
      %708 = vmatpush1.bf16.msra.mxu0 %v634
      %709 = vmatprep.subr.bf16.mxu0 0
      %710 = vmatpush1.bf16.msra.mxu0 %v635
      %711 = vmatprep.subr.bf16.mxu0 0
      %712 = vmatpush1.bf16.msra.mxu0 %v636
      %713 = vmatprep.subr.bf16.mxu0 0
      %714 = vmatpush1.bf16.msra.mxu0 %v637
      %715 = vmatprep.subr.bf16.mxu0 0
      %716 = vmatpush1.bf16.msra.mxu0 %v638
      %717 = vmatprep.subr.bf16.mxu0 0
      %718 = vmatpush1.bf16.msra.mxu0 %v639
      %719 = vmatprep.subr.bf16.mxu0 0
      %720 = vmatpush1.bf16.msra.mxu0 %v640
      %721 = vmatprep.mubr.bf16.mxu0 %v434
      %722 = vmatmul.mubr.bf16.gmra.mrb[0].mxu0 %v433
      %v723 = vpop.f32.mrb[0].mxu0
      %v724 = vadd.f32 %v335, %v723
      %v725 = vpop.f32.mrb[0].mxu0
      %v726 = vpop.f32.mrb[0].mxu0
      %v727 = vadd.f32 %v335, %v726
      %v728 = vpop.f32.mrb[0].mxu0
      %729 = vmatprep.mubr.bf16.mxu0 %v438
      %730 = vmatmul.mubr.bf16.gmra.mrb[0].mxu0 %v437
      %v731 = vpop.f32.mrb[0].mxu0
      %v732 = vadd.f32 %v335, %v731
      %v733 = vpop.f32.mrb[0].mxu0
      %v734 = vpop.f32.mrb[0].mxu0
      %v735 = vadd.f32 %v335, %v734
      %v736 = vpop.f32.mrb[0].mxu0
      %737 = vmatprep.mubr.bf16.mxu0 %v442
      %738 = vmatmul.mubr.bf16.gmra.mrb[0].mxu0 %v441
      %v739 = vpop.f32.mrb[0].mxu0
      %v740 = vadd.f32 %v335, %v739
      %v741 = vpop.f32.mrb[0].mxu0
      %v742 = vpop.f32.mrb[0].mxu0
      %v743 = vadd.f32 %v335, %v742
      %v744 = vpop.f32.mrb[0].mxu0
      %745 = vmatprep.mubr.bf16.mxu0 %v446
      %746 = vmatmul.mubr.bf16.gmra.mrb[0].mxu0 %v445
      %v747 = vpop.f32.mrb[0].mxu0
      %v748 = vadd.f32 %v335, %v747
      %v749 = vpop.f32.mrb[0].mxu0
      %v750 = vpop.f32.mrb[0].mxu0
      %v751 = vadd.f32 %v335, %v750
      %v752 = vpop.f32.mrb[0].mxu0
      %753 = vmatprep.mubr.bf16.mxu0 %v450
      %754 = vmatmul.mubr.bf16.gmra.mrb[0].mxu0 %v449
      %v755 = vpop.f32.mrb[0].mxu0
      %v756 = vadd.f32 %v335, %v755
      %v757 = vpop.f32.mrb[0].mxu0
      %v758 = vpop.f32.mrb[0].mxu0
      %v759 = vadd.f32 %v335, %v758
      %v760 = vpop.f32.mrb[0].mxu0
      %761 = vmatprep.mubr.bf16.mxu0 %v454
      %762 = vmatmul.mubr.bf16.gmra.mrb[0].mxu0 %v453
      %v763 = vpop.f32.mrb[0].mxu0
      %v764 = vadd.f32 %v335, %v763
      %v765 = vpop.f32.mrb[0].mxu0
      %v766 = vpop.f32.mrb[0].mxu0
      %v767 = vadd.f32 %v335, %v766
      %v768 = vpop.f32.mrb[0].mxu0
      %769 = vmatprep.mubr.bf16.mxu0 %v458
      %770 = vmatmul.mubr.bf16.gmra.mrb[0].mxu0 %v457
      %v771 = vpop.f32.mrb[0].mxu0
      %v772 = vadd.f32 %v335, %v771
      %v773 = vpop.f32.mrb[0].mxu0
      %v774 = vpop.f32.mrb[0].mxu0
      %v775 = vadd.f32 %v335, %v774
      %v776 = vpop.f32.mrb[0].mxu0
      %777 = vmatprep.mubr.bf16.mxu0 %v462
      %778 = vmatmul.mubr.bf16.gmra.mrb[0].mxu0 %v461
      %v779 = vpop.f32.mrb[0].mxu0
      %v780 = vadd.f32 %v335, %v779
      %v781 = vpop.f32.mrb[0].mxu0
      %v782 = vpop.f32.mrb[0].mxu0
      %v783 = vadd.f32 %v335, %v782
      %v784 = vpop.f32.mrb[0].mxu0
      %785 = vdwg.mxu0
      %786 = vmatprep.subr.bf16.mxu0 0
      %787 = vmatpush1.bf16.msra.mxu0 %v641
      %788 = vmatprep.subr.bf16.mxu0 0
      %789 = vmatpush1.bf16.msra.mxu0 %v642
      %790 = vmatprep.subr.bf16.mxu0 0
      %791 = vmatpush1.bf16.msra.mxu0 %v643
      %792 = vmatprep.subr.bf16.mxu0 0
      %793 = vmatpush1.bf16.msra.mxu0 %v644
      %794 = vmatprep.subr.bf16.mxu0 0
      %795 = vmatpush1.bf16.msra.mxu0 %v645
      %796 = vmatprep.subr.bf16.mxu0 0
      %797 = vmatpush1.bf16.msra.mxu0 %v646
      %798 = vmatprep.subr.bf16.mxu0 0
      %799 = vmatpush1.bf16.msra.mxu0 %v647
      %800 = vmatprep.subr.bf16.mxu0 0
      %801 = vmatpush1.bf16.msra.mxu0 %v648
      %802 = vmatprep.subr.bf16.mxu0 0
      %803 = vmatpush1.bf16.msra.mxu0 %v649
      %804 = vmatprep.subr.bf16.mxu0 0
      %805 = vmatpush1.bf16.msra.mxu0 %v650
      %806 = vmatprep.subr.bf16.mxu0 0
      %807 = vmatpush1.bf16.msra.mxu0 %v651
      %808 = vmatprep.subr.bf16.mxu0 0
      %809 = vmatpush1.bf16.msra.mxu0 %v652
      %810 = vmatprep.subr.bf16.mxu0 0
      %811 = vmatpush1.bf16.msra.mxu0 %v653
      %812 = vmatprep.subr.bf16.mxu0 0
      %813 = vmatpush1.bf16.msra.mxu0 %v654
      %814 = vmatprep.subr.bf16.mxu0 0
      %815 = vmatpush1.bf16.msra.mxu0 %v655
      %816 = vmatprep.subr.bf16.mxu0 0
      %817 = vmatpush1.bf16.msra.mxu0 %v656
      %818 = vmatprep.mubr.bf16.mxu0 %v436
      %819 = vmatmul.mubr.bf16.gmra.mrb[0].mxu0 %v435
      %v820 = vpop.f32.mrb[0].mxu0
      %v821 = vadd.f32 %v724, %v820
      %v822 = vpop.f32.mrb[0].mxu0
      %v823 = vpop.f32.mrb[0].mxu0
      %v824 = vadd.f32 %v727, %v823
      %v825 = vpop.f32.mrb[0].mxu0
      %826 = vmatprep.mubr.bf16.mxu0 %v440
      %827 = vmatmul.mubr.bf16.gmra.mrb[0].mxu0 %v439
      %v828 = vpop.f32.mrb[0].mxu0
      %v829 = vadd.f32 %v732, %v828
      %v830 = vpop.f32.mrb[0].mxu0
      %v831 = vpop.f32.mrb[0].mxu0
      %v832 = vadd.f32 %v735, %v831
      %v833 = vpop.f32.mrb[0].mxu0
      %834 = vmatprep.mubr.bf16.mxu0 %v444
      %835 = vmatmul.mubr.bf16.gmra.mrb[0].mxu0 %v443
      %v836 = vpop.f32.mrb[0].mxu0
      %v837 = vadd.f32 %v740, %v836
      %v838 = vpop.f32.mrb[0].mxu0
      %v839 = vpop.f32.mrb[0].mxu0
      %v840 = vadd.f32 %v743, %v839
      %v841 = vpop.f32.mrb[0].mxu0
      %842 = vmatprep.mubr.bf16.mxu0 %v448
      %843 = vmatmul.mubr.bf16.gmra.mrb[0].mxu0 %v447
      %v844 = vpop.f32.mrb[0].mxu0
      %v845 = vadd.f32 %v748, %v844
      %v846 = vpop.f32.mrb[0].mxu0
      %v847 = vpop.f32.mrb[0].mxu0
      %v848 = vadd.f32 %v751, %v847
      %v849 = vpop.f32.mrb[0].mxu0
      %850 = vmatprep.mubr.bf16.mxu0 %v452
      %851 = vmatmul.mubr.bf16.gmra.mrb[0].mxu0 %v451
      %v852 = vpop.f32.mrb[0].mxu0
      %v853 = vadd.f32 %v756, %v852
      %v854 = vpop.f32.mrb[0].mxu0
      %v855 = vpop.f32.mrb[0].mxu0
      %v856 = vadd.f32 %v759, %v855
      %v857 = vpop.f32.mrb[0].mxu0
      %858 = vmatprep.mubr.bf16.mxu0 %v456
      %859 = vmatmul.mubr.bf16.gmra.mrb[0].mxu0 %v455
      %v860 = vpop.f32.mrb[0].mxu0
      %v861 = vadd.f32 %v764, %v860
      %v862 = vpop.f32.mrb[0].mxu0
      %v863 = vpop.f32.mrb[0].mxu0
      %v864 = vadd.f32 %v767, %v863
      %v865 = vpop.f32.mrb[0].mxu0
      %866 = vmatprep.mubr.bf16.mxu0 %v460
      %867 = vmatmul.mubr.bf16.gmra.mrb[0].mxu0 %v459
      %v868 = vpop.f32.mrb[0].mxu0
      %v869 = vadd.f32 %v772, %v868
      %v870 = vpop.f32.mrb[0].mxu0
      %v871 = vpop.f32.mrb[0].mxu0
      %v872 = vadd.f32 %v775, %v871
      %v873 = vpop.f32.mrb[0].mxu0
      %874 = vmatprep.mubr.bf16.mxu0 %v464
      %875 = vmatmul.mubr.bf16.gmra.mrb[0].mxu0 %v463
      %v876 = vpop.f32.mrb[0].mxu0
      %v877 = vadd.f32 %v780, %v876
      %v878 = vpop.f32.mrb[0].mxu0
      %v879 = vpop.f32.mrb[0].mxu0
      %v880 = vadd.f32 %v783, %v879
      %v881 = vpop.f32.mrb[0].mxu0
      %882 = vdwg.mxu0
      %v883 = vsub.f32 0.0, %v821
      %v884 = vsub.f32 0.0, %v824
      %v885 = vsub.f32 0.0, %v829
      %v886 = vsub.f32 0.0, %v832
      %v887 = vsub.f32 0.0, %v837
      %v888 = vsub.f32 0.0, %v840
      %v889 = vsub.f32 0.0, %v845
      %v890 = vsub.f32 0.0, %v848
      %v891 = vsub.f32 0.0, %v853
      %v892 = vsub.f32 0.0, %v856
      %v893 = vsub.f32 0.0, %v861
      %v894 = vsub.f32 0.0, %v864
      %v895 = vsub.f32 0.0, %v869
      %v896 = vsub.f32 0.0, %v872
      %v897 = vsub.f32 0.0, %v877
      %v898 = vsub.f32 0.0, %v880
      %v899 = vmul.f32 %v883, 1.442695
      %v900 = vpow.pop %v899
      %v901 = vmul.f32 %v884, 1.442695
      %v902 = vpow.pop %v901
      %v903 = vmul.f32 %v885, 1.442695
      %v904 = vpow.pop %v903
      %v905 = vmul.f32 %v886, 1.442695
      %v906 = vpow.pop %v905
      %v907 = vmul.f32 %v887, 1.442695
      %v908 = vpow.pop %v907
      %v909 = vmul.f32 %v888, 1.442695
      %v910 = vpow.pop %v909
      %v911 = vmul.f32 %v889, 1.442695
      %v912 = vpow.pop %v911
      %v913 = vmul.f32 %v890, 1.442695
      %v914 = vpow.pop %v913
      %v915 = vmul.f32 %v891, 1.442695
      %v916 = vpow.pop %v915
      %v917 = vmul.f32 %v892, 1.442695
      %v918 = vpow.pop %v917
      %v919 = vmul.f32 %v893, 1.442695
      %v920 = vpow.pop %v919
      %v921 = vmul.f32 %v894, 1.442695
      %v922 = vpow.pop %v921
      %v923 = vmul.f32 %v895, 1.442695
      %v924 = vpow.pop %v923
      %v925 = vmul.f32 %v896, 1.442695
      %v926 = vpow.pop %v925
      %v927 = vmul.f32 %v897, 1.442695
      %v928 = vpow.pop %v927
      %v929 = vmul.f32 %v898, 1.442695
      %v930 = vpow.pop %v929
      %v931 = vadd.f32 %v900, 1.0
      %v932 = vadd.f32 %v902, 1.0
      %v933 = vadd.f32 %v904, 1.0
      %v934 = vadd.f32 %v906, 1.0
      %v935 = vadd.f32 %v908, 1.0
      %v936 = vadd.f32 %v910, 1.0
      %v937 = vadd.f32 %v912, 1.0
      %v938 = vadd.f32 %v914, 1.0
      %v939 = vadd.f32 %v916, 1.0
      %v940 = vadd.f32 %v918, 1.0
      %v941 = vadd.f32 %v920, 1.0
      %v942 = vadd.f32 %v922, 1.0
      %v943 = vadd.f32 %v924, 1.0
      %v944 = vadd.f32 %v926, 1.0
      %v945 = vadd.f32 %v928, 1.0
      %v946 = vadd.f32 %v930, 1.0
      %v947 = vrcp.pop %v931
      %v948 = vmul.f32 1.0, %v947
      %v949 = vrcp.pop %v932
      %v950 = vmul.f32 1.0, %v949
      %v951 = vrcp.pop %v933
      %v952 = vmul.f32 1.0, %v951
      %v953 = vrcp.pop %v934
      %v954 = vmul.f32 1.0, %v953
      %v955 = vrcp.pop %v935
      %v956 = vmul.f32 1.0, %v955
      %v957 = vrcp.pop %v936
      %v958 = vmul.f32 1.0, %v957
      %v959 = vrcp.pop %v937
      %v960 = vmul.f32 1.0, %v959
      %v961 = vrcp.pop %v938
      %v962 = vmul.f32 1.0, %v961
      %v963 = vrcp.pop %v939
      %v964 = vmul.f32 1.0, %v963
      %v965 = vrcp.pop %v940
      %v966 = vmul.f32 1.0, %v965
      %v967 = vrcp.pop %v941
      %v968 = vmul.f32 1.0, %v967
      %v969 = vrcp.pop %v942
      %v970 = vmul.f32 1.0, %v969
      %v971 = vrcp.pop %v943
      %v972 = vmul.f32 1.0, %v971
      %v973 = vrcp.pop %v944
      %v974 = vmul.f32 1.0, %v973
      %v975 = vrcp.pop %v945
      %v976 = vmul.f32 1.0, %v975
      %v977 = vrcp.pop %v946
      %v978 = vmul.f32 1.0, %v977
      %v979 = vpack.c.bf16 %v950, %v948
      %v980 = vpack.c.bf16 %v954, %v952
      %v981 = vpack.c.bf16 %v958, %v956
      %v982 = vpack.c.bf16 %v962, %v960
      %v983 = vpack.c.bf16 %v966, %v964
      %v984 = vpack.c.bf16 %v970, %v968
      %v985 = vpack.c.bf16 %v974, %v972
      %v986 = vpack.c.bf16 %v978, %v976
      %v995 = vunpack.c.l.b16 %v979
      %v996 = vunpack.c.h.b16 %v979
      %v997 = vunpack.c.l.b16 %v980
      %v998 = vunpack.c.h.b16 %v980
      %v999 = vunpack.c.l.b16 %v981
      %v1000 = vunpack.c.h.b16 %v981
      %v1001 = vunpack.c.l.b16 %v982
      %v1002 = vunpack.c.h.b16 %v982
      %v1003 = vunpack.c.l.b16 %v983
      %v1004 = vunpack.c.h.b16 %v983
      %v1005 = vunpack.c.l.b16 %v984
      %v1006 = vunpack.c.h.b16 %v984
      %v1007 = vunpack.c.l.b16 %v985
      %v1008 = vunpack.c.h.b16 %v985
      %v1009 = vunpack.c.l.b16 %v986
      %v1010 = vunpack.c.h.b16 %v986
      %v1011 = vpack.c.b16 %v995, %v995
      %v1012 = vpack.c.b16 %v996, %v996
      %v1013 = vpack.c.b16 %v997, %v997
      %v1014 = vpack.c.b16 %v998, %v998
      %v1015 = vpack.c.b16 %v999, %v999
      %v1016 = vpack.c.b16 %v1000, %v1000
      %v1017 = vpack.c.b16 %v1001, %v1001
      %v1018 = vpack.c.b16 %v1002, %v1002
      %v1019 = vpack.c.b16 %v1003, %v1003
      %v1020 = vpack.c.b16 %v1004, %v1004
      %v1021 = vpack.c.b16 %v1005, %v1005
      %v1022 = vpack.c.b16 %v1006, %v1006
      %v1023 = vpack.c.b16 %v1007, %v1007
      %v1024 = vpack.c.b16 %v1008, %v1008
      %v1025 = vpack.c.b16 %v1009, %v1009
      %v1026 = vpack.c.b16 %v1010, %v1010
      %1043 = vst [vmem:[%s231] sm:$0xf] %v1011
      %1044 = vst [vmem:[%s231 + $0x4] sm:$0xf] %v1012
      %1045 = vst [vmem:[%s231 + $0x8] sm:$0xf] %v1013
      %1046 = vst [vmem:[%s231 + $0xc] sm:$0xf] %v1014
      %1047 = vst [vmem:[%s231 + $0x10] sm:$0xf] %v1015
      %1048 = vst [vmem:[%s231 + $0x14] sm:$0xf] %v1016
      %1049 = vst [vmem:[%s231 + $0x18] sm:$0xf] %v1017
      %1050 = vst [vmem:[%s231 + $0x1c] sm:$0xf] %v1018
      %1051 = vst [vmem:[%s231 + $0x20] sm:$0xf] %v1019
      %1052 = vst [vmem:[%s231 + $0x24] sm:$0xf] %v1020
      %1053 = vst [vmem:[%s231 + $0x28] sm:$0xf] %v1021
      %1054 = vst [vmem:[%s231 + $0x2c] sm:$0xf] %v1022
      %1055 = vst [vmem:[%s231 + $0x30] sm:$0xf] %v1023
      %1056 = vst [vmem:[%s231 + $0x34] sm:$0xf] %v1024
      %1057 = vst [vmem:[%s231 + $0x38] sm:$0xf] %v1025
      %1058 = vst [vmem:[%s231 + $0x3c] sm:$0xf] %v1026
      %s1059 = smul.u32 16, %s19
      %p1060 = scmp.lt.s32.totalorder %s18, 3
      %s1061 = scalar_select %p1060, %s18, 3
      %p1062 = scmp.lt.s32.totalorder %s1059, 15
      %s1063 = scalar_select %p1062, %s1059, 15
      %s1064 = smul.addr %s1061, 16
      %s1065 = sadd.s32 %s1063, %s1064
      %s1066 = smul.addr %s1065, 4
      %s1067 = scalar_lea.vmem %s3, %s1066
      // Predicated region
      $region33: #{_lambda_.37} parent=31 // pred_check
        %p1068 = pneg %p121
      $region34: #{_lambda_.37} parent=31 // pred_check_branch
        %1070 = sbr.rel (%p1068) target = $region36
      $region35: #{_lambda_.37} parent=31 // pred_region
        %s1071 = smul.u32 16, %s19
      $region36: #{_lambda_.37} parent=31 // pred_fallthru
        _
    $region32: #{_lambda_.37} parent=5 // pred_fallthru
      _
    %p1072 = scmp.le.s32.totalorder 2, %s9
    // Predicated region
    $region37: #{_lambda_.37} parent=5 // pred_check
      %p1073 = pneg %p1072
    $region38: #{_lambda_.37} parent=5 // pred_check_branch
      %1075 = sbr.rel (%p1073) target = $region40
    $region39: #{_lambda_.37} parent=5 // pred_region
      %s1076 = ssub.s32 %s9, 2
      // Predicated region
      $region41: #{_lambda_.37} parent=39 // pred_check
        %p1077 = pneg %p127
      $region42: #{_lambda_.37} parent=39 // pred_check_branch
        %1079 = sbr.rel (%p1077) target = $region44
      $region43: #{_lambda_.37} parent=39 // pred_region
        %s1080 = smul.u32 16, %s21
        %p1081 = scmp.lt.s32.totalorder %s20, 3
        %s1082 = scalar_select %p1081, %s20, 3
        %p1083 = scmp.lt.s32.totalorder %s1080, 15
        %s1084 = scalar_select %p1083, %s1080, 15
        %s1085 = smul.addr %s1082, 16
        %s1086 = sadd.s32 %s1084, %s1085
        %s1087 = smul.addr %s1086, 4
        %s1088 = scalar_lea.vmem %s3, %s1087
      $region44: #{_lambda_.37} parent=39 // pred_fallthru
        _
    $region40: #{_lambda_.37} parent=5 // pred_fallthru
      _
  $region6: #{_lambda_.37} parent=0 // loop_footer
    %s13 = sadd.s32 1, %s9
  $region7: #{_lambda_.37} parent=0 // loop_footer_branch
    %8 = sbr.rel target = $region3
  $region8: #{_lambda_.37} parent=0 // loop_exit
    _

</llo_original>
